<compile_context>
chip_gen: v7x
topology: tpu7x:2x2x1
jax: 0.10.0
libtpu: 0.0.40
codegen_flags: <defaults>
</compile_context>

<pallas_src>
import functools

import jax
import jax.numpy as jnp
from jax import lax
from jax.experimental import pallas as pl
from jax.experimental.pallas import tpu as pltpu

NEG_SLOPE = 0.2                          # LeakyReLU(0.2)
RESIDENT_A_MAX_BYTES = 8 * 1024 * 1024   # bf16 A resident threshold (~N <= 2048)
_FALLBACK_VMEM_LIMIT = 32 * 1024 * 1024  # safe on v5e/v6e/v7x if HW query fails


def _leaky_relu(x):
    return jnp.where(x > 0, x, NEG_SLOPE * x)


def _round_up(x, m):
    return ((x + m - 1) // m) * m


def _vmem_limit_bytes():
    """Per-generation scoped-VMEM budget (v7x: 64 MiB physical; v5e/v6e: 128 MiB)."""
    try:
        phys = int(getattr(pltpu.get_tpu_info(), "vmem_capacity_bytes", 0))
    except Exception:
        phys = 0
    if phys <= 0:
        return _FALLBACK_VMEM_LIMIT
    return int(min(100 * 1024 * 1024, phys * 3 // 4))


def _pick_tile_m(n, vmem_limit):
    """Keep the double-buffered bf16 A row tile (2*tile*n*2 B) well under budget."""
    tile = 256
    while tile > 64 and 4 * tile * n > vmem_limit // 3:
        tile //= 2
    return tile


# ---------------------------------------------------------------------------
# Encoder kernels
# ---------------------------------------------------------------------------
def _encoder_fused_kernel(a_ref, x_ref, w1_ref, w2_ref, wh_ref, eps_ref,
                          mulv_ref, z_ref, *, latent):
    """Whole encoder in one shot; A is VMEM-resident so it is read from HBM once."""
    a = a_ref[...]                                                   # bf16 (N, N)
    ax = jnp.dot(a, x_ref[...], preferred_element_type=jnp.float32)
    h1 = _leaky_relu(jnp.dot(ax, w1_ref[...],
                             preferred_element_type=jnp.float32))
    ah1 = jnp.dot(a, h1.astype(a.dtype), preferred_element_type=jnp.float32)
    h2 = _leaky_relu(jnp.dot(ah1, w2_ref[...],
                             preferred_element_type=jnp.float32))
    ah2 = jnp.dot(a, h2.astype(a.dtype), preferred_element_type=jnp.float32)
    heads = jnp.dot(ah2, wh_ref[...], preferred_element_type=jnp.float32)
    mu = heads[:, :latent]
    logvar = heads[:, latent:]
    mulv_ref[...] = heads
    z_ref[...] = eps_ref[...] * jnp.exp(logvar) + mu                 # reparameterize


def _gcn_layer_kernel(a_ref, h_ref, w_ref, o_ref):
    """o[rows] = LeakyReLU((A[rows] @ H) @ W); A row-tiled, H/W resident."""
    ah = jnp.dot(a_ref[...], h_ref[...], preferred_element_type=jnp.float32)
    o_ref[...] = _leaky_relu(
        jnp.dot(ah, w_ref[...], preferred_element_type=jnp.float32)
    ).astype(o_ref.dtype)


def _gcn_heads_kernel(a_ref, h_ref, wh_ref, eps_ref, mulv_ref, z_ref, *, latent):
    """mu|logvar slab + z for one row tile; Wmu|Wlv fused into wh."""
    ah = jnp.dot(a_ref[...], h_ref[...], preferred_element_type=jnp.float32)
    heads = jnp.dot(ah, wh_ref[...], preferred_element_type=jnp.float32)
    mu = heads[:, :latent]
    logvar = heads[:, latent:]
    mulv_ref[...] = heads
    z_ref[...] = eps_ref[...] * jnp.exp(logvar) + mu


# ---------------------------------------------------------------------------
# Decoder kernel: recon tile (i, j) = sigmoid(Z_i @ Z_j^T); z fully VMEM-resident.
# ---------------------------------------------------------------------------
def _decoder_kernel(z_ref, o_ref, *, tile_m, tile_n):
    i = pl.program_id(0)
    j = pl.program_id(1)
    ri = i * tile_m
    rj = j * tile_n
    if tile_m % 8 == 0:
        ri = pl.multiple_of(ri, tile_m)
    if tile_n % 8 == 0:
        rj = pl.multiple_of(rj, tile_n)
    zi = z_ref[pl.ds(ri, tile_m), :]
    zj = z_ref[pl.ds(rj, tile_n), :]
    logits = lax.dot_general(zi, zj, (((1,), (1,)), ((), ())),
                             preferred_element_type=jnp.float32)
    o_ref[...] = jax.nn.sigmoid(logits).astype(o_ref.dtype)


# ---------------------------------------------------------------------------
# pallas_call wrappers
# ---------------------------------------------------------------------------
def _encode_resident(a_bf, x_bf, w1, w2, wh, eps, *, latent, vmem_limit):
    n = a_bf.shape[0]

    def full(arr):
        return pl.BlockSpec(arr.shape, lambda i: (0, 0))

    return pl.pallas_call(
        functools.partial(_encoder_fused_kernel, latent=latent),
        out_shape=(jax.ShapeDtypeStruct((n, 2 * latent), jnp.float32),
                   jax.ShapeDtypeStruct((n, latent), jnp.float32)),
        grid=(1,),
        in_specs=[full(a_bf), full(x_bf), full(w1), full(w2), full(wh), full(eps)],
        out_specs=(pl.BlockSpec((n, 2 * latent), lambda i: (0, 0)),
                   pl.BlockSpec((n, latent), lambda i: (0, 0))),
        compiler_params=pltpu.CompilerParams(
            dimension_semantics=("arbitrary",),
            vmem_limit_bytes=vmem_limit),
    )(a_bf, x_bf, w1, w2, wh, eps)


def _propagate_tiled(a_p, h, w, *, tile_m, vmem_limit):
    n_pad = a_p.shape[0]
    out_dim = w.shape[1]
    return pl.pallas_call(
        _gcn_layer_kernel,
        out_shape=jax.ShapeDtypeStruct((n_pad, out_dim), jnp.bfloat16),
        grid=(n_pad // tile_m,),
        in_specs=[
            pl.BlockSpec((tile_m, n_pad), lambda i: (i, 0)),      # A row tile (streamed)
            pl.BlockSpec((n_pad, h.shape[1]), lambda i: (0, 0)),  # H resident
            pl.BlockSpec(w.shape, lambda i: (0, 0)),              # W resident
        ],
        out_specs=pl.BlockSpec((tile_m, out_dim), lambda i: (i, 0)),
        compiler_params=pltpu.CompilerParams(
            dimension_semantics=("parallel",),                    # megacore shards rows
            vmem_limit_bytes=vmem_limit),
    )(a_p, h, w)


def _heads_tiled(a_p, h2, wh, eps_p, *, tile_m, latent, vmem_limit):
    n_pad = a_p.shape[0]
    return pl.pallas_call(
        functools.partial(_gcn_heads_kernel, latent=latent),
        out_shape=(jax.ShapeDtypeStruct((n_pad, 2 * latent), jnp.float32),
                   jax.ShapeDtypeStruct((n_pad, latent), jnp.float32)),
        grid=(n_pad // tile_m,),
        in_specs=[
            pl.BlockSpec((tile_m, n_pad), lambda i: (i, 0)),
            pl.BlockSpec((n_pad, h2.shape[1]), lambda i: (0, 0)),
            pl.BlockSpec(wh.shape, lambda i: (0, 0)),
            pl.BlockSpec((tile_m, latent), lambda i: (i, 0)),
        ],
        out_specs=(pl.BlockSpec((tile_m, 2 * latent), lambda i: (i, 0)),
                   pl.BlockSpec((tile_m, latent), lambda i: (i, 0))),
        compiler_params=pltpu.CompilerParams(
            dimension_semantics=("parallel",),
            vmem_limit_bytes=vmem_limit),
    )(a_p, h2, wh, eps_p)


def _decode(z, *, vmem_limit, recon_dtype):
    n, latent = z.shape
    if n % 512 == 0:
        tile = 512
    elif n % 256 == 0:
        tile = 256
    elif n % 128 == 0:
        tile = 128
    elif n <= 1024:
        tile = n                              # single full-extent block
    else:
        # TODO(synk): mask the ragged last tile in-kernel instead of padding the
        # NxN recon and slicing it back (costs one extra recon copy).
        tile = 256
        z = jnp.pad(z, ((0, _round_up(n, tile) - n), (0, 0)))
    n_dec = z.shape[0]
    recon = pl.pallas_call(
        functools.partial(_decoder_kernel, tile_m=tile, tile_n=tile),
        out_shape=jax.ShapeDtypeStruct((n_dec, n_dec), recon_dtype),
        grid=(n_dec // tile, n_dec // tile),
        in_specs=[pl.BlockSpec((n_dec, latent), lambda i, j: (0, 0))],  # z resident
        out_specs=pl.BlockSpec((tile, tile), lambda i, j: (i, j)),
        compiler_params=pltpu.CompilerParams(
            dimension_semantics=("parallel", "parallel"),
            vmem_limit_bytes=vmem_limit),
    )(z)
    if n_dec != n:
        recon = recon[:n, :n]
    return recon


# ---------------------------------------------------------------------------
# Forward wrapper
# ---------------------------------------------------------------------------
def gvade_forward(params, X, A, eps, *, force_tiled=False, tile_m=None,
                  recon_dtype=jnp.float32):
    N, _ = X.shape
    latent = params["Wmu"].shape[1]
    vmem_limit = _vmem_limit_bytes()

    # bf16 for the bandwidth-heavy MXU operands; weights stay f32 (tiny, resident).
    a_bf = A.astype(jnp.bfloat16)
    x_bf = X.astype(jnp.bfloat16)
    w1 = params["W1"].astype(jnp.float32)
    w2 = params["W2"].astype(jnp.float32)
    wh = jnp.concatenate([params["Wmu"], params["Wlv"]], axis=1).astype(jnp.float32)
    eps = eps.astype(jnp.float32)

    use_resident = (not force_tiled) and (N * N * 2 <= RESIDENT_A_MAX_BYTES)
    if use_resident:
        # A read from HBM exactly once for the whole encoder.
        mulv, z = _encode_resident(a_bf, x_bf, w1, w2, wh, eps,
                                   latent=latent, vmem_limit=vmem_limit)
    else:
        tile = tile_m if tile_m is not None else _pick_tile_m(N, vmem_limit)
        n_pad = _round_up(N, tile)
        if n_pad != N:
            a_bf = jnp.pad(a_bf, ((0, n_pad - N), (0, n_pad - N)))
            x_bf = jnp.pad(x_bf, ((0, n_pad - N), (0, 0)))
            eps_p = jnp.pad(eps, ((0, n_pad - N), (0, 0)))
        else:
            eps_p = eps
        h1 = _propagate_tiled(a_bf, x_bf, w1, tile_m=tile, vmem_limit=vmem_limit)
        h2 = _propagate_tiled(a_bf, h1, w2, tile_m=tile, vmem_limit=vmem_limit)
        mulv, z = _heads_tiled(a_bf, h2, wh, eps_p, tile_m=tile, latent=latent,
                               vmem_limit=vmem_limit)
        if n_pad != N:
            mulv = mulv[:N]
            z = z[:N]

    mu = mulv[:, :latent]
    logvar = mulv[:, latent:]
    recon = _decode(z, vmem_limit=vmem_limit, recon_dtype=recon_dtype)
    return recon, mu, logvar


# ---------------------------------------------------------------------------
# Pure-JAX reference (for correctness check)
# ---------------------------------------------------------------------------
def _reference_forward(params, X, A, eps):
    dot = functools.partial(jnp.dot, precision=lax.Precision.HIGHEST)
    h1 = _leaky_relu(dot(A, dot(X, params["W1"])))
    h2 = _leaky_relu(dot(A, dot(h1, params["W2"])))
    mu = dot(A, dot(h2, params["Wmu"]))
    logvar = dot(A, dot(h2, params["Wlv"]))
    z = eps * jnp.exp(logvar) + mu
    recon = jax.nn.sigmoid(dot(z, z.T))
    return recon, mu, logvar


# ---------------------------------------------------------------------------
# Deterministic parameter / input construction
# ---------------------------------------------------------------------------
def init_params(key, in_channels, hidden1, hidden2, latent):
    k1, k2, k3, k4 = jax.random.split(key, 4)

    def glorot(k, shape):
        lim = jnp.sqrt(6.0 / (shape[0] + shape[1]))
        return jax.random.uniform(k, shape, jnp.float32, -lim, lim)

    return {
        "W1": glorot(k1, (in_channels, hidden1)),
        "W2": glorot(k2, (hidden1, hidden2)),
        "Wmu": glorot(k3, (hidden2, latent)),
        "Wlv": glorot(k4, (hidden2, latent)),
    }


def make_inputs(key, n_nodes, in_channels):
    kx, ka = jax.random.split(key)
    X = jax.random.normal(kx, (n_nodes, in_channels), jnp.float32)
    # Random symmetric adjacency with self-loops, symmetrically normalized.
    edges = (jax.random.uniform(ka, (n_nodes, n_nodes)) < 0.1).astype(jnp.float32)
    adj = jnp.maximum(edges, edges.T)
    adj = adj + jnp.eye(n_nodes, dtype=jnp.float32)
    d_inv_sqrt = 1.0 / jnp.sqrt(jnp.sum(adj, axis=1))
    A = adj * d_inv_sqrt[:, None] * d_inv_sqrt[None, :]
    return X, A


if __name__ == "__main__":
    n_nodes = 512
    in_channels = 16
    hidden1_channels = 32
    hidden2_channels = 16
    latent_channels = 8

    key = jax.random.PRNGKey(0)
    k_params, k_inputs, k_eps = jax.random.split(key, 3)

    params = init_params(k_params, in_channels, hidden1_channels,
                         hidden2_channels, latent_channels)
    X, A = make_inputs(k_inputs, n_nodes, in_channels)
    # Deterministic stand-in for torch.randn_like in reparameterize().
    eps = jax.random.normal(k_eps, (n_nodes, latent_channels), jnp.float32)

    recon_ref, mu_ref, logvar_ref = _reference_forward(params, X, A, eps)

    # Path 1: small-N fused encoder with VMEM-resident A (A read from HBM once).
    out_resident = jax.jit(gvade_forward)(params, X, A, eps)
    jax.block_until_ready(out_resident)
    # Path 2: per-stage tiled encoder (forced, to exercise the large-N code path).
    out_tiled = jax.jit(functools.partial(gvade_forward, force_tiled=True))(
        params, X, A, eps)
    jax.block_until_ready(out_tiled)

    for recon, mu, logvar in (out_resident, out_tiled):
        assert recon.shape == (n_nodes, n_nodes)
        assert mu.shape == (n_nodes, latent_channels)
        assert logvar.shape == (n_nodes, latent_channels)
        assert bool(jnp.all(jnp.isfinite(recon)))
        assert bool(jnp.allclose(mu, mu_ref, rtol=3e-2, atol=3e-2))
        assert bool(jnp.allclose(logvar, logvar_ref, rtol=3e-2, atol=3e-2))
        assert bool(jnp.allclose(recon, recon_ref, rtol=3e-2, atol=3e-2))
    print("KERNEL_OK")
</pallas_src>

<mosaic_0001>
module attributes {stable_mosaic.version = 11 : i64} {
  func.func @_encoder_fused_kernel(%arg0: i32, %arg1: memref<512x512xbf16, #tpu.memory_space<vmem>>, %arg2: memref<512x16xbf16, #tpu.memory_space<vmem>>, %arg3: memref<16x32xf32, #tpu.memory_space<vmem>>, %arg4: memref<32x16xf32, #tpu.memory_space<vmem>>, %arg5: memref<16x16xf32, #tpu.memory_space<vmem>>, %arg6: memref<512x8xf32, #tpu.memory_space<vmem>>, %arg7: memref<512x16xf32, #tpu.memory_space<vmem>>, %arg8: memref<512x8xf32, #tpu.memory_space<vmem>>) attributes {dimension_semantics = [#tpu.dimension_semantics<arbitrary>], iteration_bounds = array<i64: 1>, scalar_prefetch = 0 : i64, scratch_operands = 0 : i64, tpu.core_type = #tpu.core_type<tc>, window_params = [{pipeline_mode = #tpu.pipeline_mode<synchronous>, transform_indices = @transform_0, window_bounds = array<i64: 512, 512>}, {pipeline_mode = #tpu.pipeline_mode<synchronous>, transform_indices = @transform_1, window_bounds = array<i64: 512, 16>}, {pipeline_mode = #tpu.pipeline_mode<synchronous>, transform_indices = @transform_2, window_bounds = array<i64: 16, 32>}, {pipeline_mode = #tpu.pipeline_mode<synchronous>, transform_indices = @transform_3, window_bounds = array<i64: 32, 16>}, {pipeline_mode = #tpu.pipeline_mode<synchronous>, transform_indices = @transform_4, window_bounds = array<i64: 16, 16>}, {pipeline_mode = #tpu.pipeline_mode<synchronous>, transform_indices = @transform_5, window_bounds = array<i64: 512, 8>}, {pipeline_mode = #tpu.pipeline_mode<synchronous>, transform_indices = @transform_6, window_bounds = array<i64: 512, 16>}, {pipeline_mode = #tpu.pipeline_mode<synchronous>, transform_indices = @transform_7, window_bounds = array<i64: 512, 8>}]} {
    %c0 = arith.constant 0 : index
    %c0_0 = arith.constant 0 : index
    %0 = vector.load %arg1[%c0, %c0_0] : memref<512x512xbf16, #tpu.memory_space<vmem>>, vector<512x512xbf16>
    %c0_1 = arith.constant 0 : index
    %c0_2 = arith.constant 0 : index
    %1 = vector.load %arg2[%c0_1, %c0_2] : memref<512x16xbf16, #tpu.memory_space<vmem>>, vector<512x16xbf16>
    %cst = arith.constant dense<0.000000e+00> : vector<512x16xf32>
    %2 = tpu.matmul %0, %1, %cst {dimension_numbers = #tpu.dot_dimension_numbers<[1], [0], [0], [1], [0, 0, 1, 1], [], []>} : vector<512x512xbf16>, vector<512x16xbf16>, vector<512x16xf32> -> vector<512x16xf32>
    %c0_3 = arith.constant 0 : index
    %c0_4 = arith.constant 0 : index
    %3 = vector.load %arg3[%c0_3, %c0_4] : memref<16x32xf32, #tpu.memory_space<vmem>>, vector<16x32xf32>
    %cst_5 = arith.constant dense<0.000000e+00> : vector<512x32xf32>
    %4 = tpu.matmul %2, %3, %cst_5 {dimension_numbers = #tpu.dot_dimension_numbers<[1], [0], [0], [1], [0, 0, 1, 1], [], []>} : vector<512x16xf32>, vector<16x32xf32>, vector<512x32xf32> -> vector<512x32xf32>
    %cst_6 = arith.constant 0.000000e+00 : f32
    %5 = vector.broadcast %cst_6 : f32 to vector<512x32xf32>
    %6 = arith.cmpf ogt, %4, %5 : vector<512x32xf32>
    %cst_7 = arith.constant 2.000000e-01 : f32
    %7 = vector.broadcast %cst_7 : f32 to vector<512x32xf32>
    %8 = arith.mulf %7, %4 : vector<512x32xf32>
    %9 = arith.select %6, %4, %8 : vector<512x32xi1>, vector<512x32xf32>
    %10 = arith.truncf %9 : vector<512x32xf32> to vector<512x32xbf16>
    %cst_8 = arith.constant dense<0.000000e+00> : vector<512x32xf32>
    %11 = tpu.matmul %0, %10, %cst_8 {dimension_numbers = #tpu.dot_dimension_numbers<[1], [0], [0], [1], [0, 0, 1, 1], [], []>} : vector<512x512xbf16>, vector<512x32xbf16>, vector<512x32xf32> -> vector<512x32xf32>
    %c0_9 = arith.constant 0 : index
    %c0_10 = arith.constant 0 : index
    %12 = vector.load %arg4[%c0_9, %c0_10] : memref<32x16xf32, #tpu.memory_space<vmem>>, vector<32x16xf32>
    %cst_11 = arith.constant dense<0.000000e+00> : vector<512x16xf32>
    %13 = tpu.matmul %11, %12, %cst_11 {dimension_numbers = #tpu.dot_dimension_numbers<[1], [0], [0], [1], [0, 0, 1, 1], [], []>} : vector<512x32xf32>, vector<32x16xf32>, vector<512x16xf32> -> vector<512x16xf32>
    %cst_12 = arith.constant 0.000000e+00 : f32
    %14 = vector.broadcast %cst_12 : f32 to vector<512x16xf32>
    %15 = arith.cmpf ogt, %13, %14 : vector<512x16xf32>
    %cst_13 = arith.constant 2.000000e-01 : f32
    %16 = vector.broadcast %cst_13 : f32 to vector<512x16xf32>
    %17 = arith.mulf %16, %13 : vector<512x16xf32>
    %18 = arith.select %15, %13, %17 : vector<512x16xi1>, vector<512x16xf32>
    %19 = arith.truncf %18 : vector<512x16xf32> to vector<512x16xbf16>
    %cst_14 = arith.constant dense<0.000000e+00> : vector<512x16xf32>
    %20 = tpu.matmul %0, %19, %cst_14 {dimension_numbers = #tpu.dot_dimension_numbers<[1], [0], [0], [1], [0, 0, 1, 1], [], []>} : vector<512x512xbf16>, vector<512x16xbf16>, vector<512x16xf32> -> vector<512x16xf32>
    %c0_15 = arith.constant 0 : index
    %c0_16 = arith.constant 0 : index
    %21 = vector.load %arg5[%c0_15, %c0_16] : memref<16x16xf32, #tpu.memory_space<vmem>>, vector<16x16xf32>
    %cst_17 = arith.constant dense<0.000000e+00> : vector<512x16xf32>
    %22 = tpu.matmul %20, %21, %cst_17 {dimension_numbers = #tpu.dot_dimension_numbers<[1], [0], [0], [1], [0, 0, 1, 1], [], []>} : vector<512x16xf32>, vector<16x16xf32>, vector<512x16xf32> -> vector<512x16xf32>
    %23 = vector.extract_strided_slice %22 {offsets = [0, 0], sizes = [512, 8], strides = [1, 1]} : vector<512x16xf32> to vector<512x8xf32>
    %24 = vector.extract_strided_slice %22 {offsets = [0, 8], sizes = [512, 8], strides = [1, 1]} : vector<512x16xf32> to vector<512x8xf32>
    %c0_18 = arith.constant 0 : index
    %c0_19 = arith.constant 0 : index
    %25 = vector.load %arg7[%c0_18, %c0_19] : memref<512x16xf32, #tpu.memory_space<vmem>>, vector<512x16xf32>
    tpu.vector_store %arg7[%c0_18, %c0_19], %22 {strides = array<i32>} : memref<512x16xf32, #tpu.memory_space<vmem>>, vector<512x16xf32>,
    %c0_20 = arith.constant 0 : index
    %c0_21 = arith.constant 0 : index
    %26 = vector.load %arg6[%c0_20, %c0_21] : memref<512x8xf32, #tpu.memory_space<vmem>>, vector<512x8xf32>
    %27 = math.exp %24 : vector<512x8xf32>
    %28 = arith.mulf %26, %27 : vector<512x8xf32>
    %29 = arith.addf %28, %23 : vector<512x8xf32>
    %c0_22 = arith.constant 0 : index
    %c0_23 = arith.constant 0 : index
    %30 = vector.load %arg8[%c0_22, %c0_23] : memref<512x8xf32, #tpu.memory_space<vmem>>, vector<512x8xf32>
    tpu.vector_store %arg8[%c0_22, %c0_23], %29 {strides = array<i32>} : memref<512x8xf32, #tpu.memory_space<vmem>>, vector<512x8xf32>,
    return
  }
  func.func @transform_0(%arg0: i32) -> (i32, i32) {
    %c0_i32 = arith.constant 0 : i32
    %c0_i32_0 = arith.constant 0 : i32
    %c0_i32_1 = arith.constant 0 : i32
    return %c0_i32, %c0_i32_0 : i32, i32
  }
  func.func @transform_1(%arg0: i32) -> (i32, i32) {
    %c0_i32 = arith.constant 0 : i32
    %c0_i32_0 = arith.constant 0 : i32
    %c0_i32_1 = arith.constant 0 : i32
    return %c0_i32, %c0_i32_0 : i32, i32
  }
  func.func @transform_2(%arg0: i32) -> (i32, i32) {
    %c0_i32 = arith.constant 0 : i32
    %c0_i32_0 = arith.constant 0 : i32
    %c0_i32_1 = arith.constant 0 : i32
    return %c0_i32, %c0_i32_0 : i32, i32
  }
  func.func @transform_3(%arg0: i32) -> (i32, i32) {
    %c0_i32 = arith.constant 0 : i32
    %c0_i32_0 = arith.constant 0 : i32
    %c0_i32_1 = arith.constant 0 : i32
    return %c0_i32, %c0_i32_0 : i32, i32
  }
  func.func @transform_4(%arg0: i32) -> (i32, i32) {
    %c0_i32 = arith.constant 0 : i32
    %c0_i32_0 = arith.constant 0 : i32
    %c0_i32_1 = arith.constant 0 : i32
    return %c0_i32, %c0_i32_0 : i32, i32
  }
  func.func @transform_5(%arg0: i32) -> (i32, i32) {
    %c0_i32 = arith.constant 0 : i32
    %c0_i32_0 = arith.constant 0 : i32
    %c0_i32_1 = arith.constant 0 : i32
    return %c0_i32, %c0_i32_0 : i32, i32
  }
  func.func @transform_6(%arg0: i32) -> (i32, i32) {
    %c0_i32 = arith.constant 0 : i32
    %c0_i32_0 = arith.constant 0 : i32
    %c0_i32_1 = arith.constant 0 : i32
    return %c0_i32, %c0_i32_0 : i32, i32
  }
  func.func @transform_7(%arg0: i32) -> (i32, i32) {
    %c0_i32 = arith.constant 0 : i32
    %c0_i32_0 = arith.constant 0 : i32
    %c0_i32_1 = arith.constant 0 : i32
    return %c0_i32, %c0_i32_0 : i32, i32
  }
}

module attributes {stable_mosaic.version = 11 : i64} {
  func.func @_decoder_kernel(%arg0: i32, %arg1: i32, %arg2: memref<512x8xf32, #tpu.memory_space<vmem>>, %arg3: memref<512x512xf32, #tpu.memory_space<vmem>>) attributes {dimension_semantics = [#tpu.dimension_semantics<parallel>, #tpu.dimension_semantics<parallel>], iteration_bounds = array<i64: 1, 1>, scalar_prefetch = 0 : i64, scratch_operands = 0 : i64, tpu.core_type = #tpu.core_type<tc>, window_params = [{pipeline_mode = #tpu.pipeline_mode<synchronous>, transform_indices = @transform_0, window_bounds = array<i64: 512, 8>}, {transform_indices = @transform_1, window_bounds = array<i64: 512, 512>}]} {
    %c512_i32 = arith.constant 512 : i32
    %0 = arith.muli %arg0, %c512_i32 : i32
    %c512_i32_0 = arith.constant 512 : i32
    %1 = arith.muli %arg1, %c512_i32_0 : i32
    %2 = tpu.assume_multiple %0, 512 : i32
    %3 = tpu.assume_multiple %1, 512 : i32
    %4 = arith.index_cast %2 : i32 to index
    %c0 = arith.constant 0 : index
    %5 = vector.load %arg2[%4, %c0] : memref<512x8xf32, #tpu.memory_space<vmem>>, vector<512x8xf32>
    %6 = arith.index_cast %3 : i32 to index
    %c0_1 = arith.constant 0 : index
    %7 = vector.load %arg2[%6, %c0_1] : memref<512x8xf32, #tpu.memory_space<vmem>>, vector<512x8xf32>
    %cst = arith.constant dense<0.000000e+00> : vector<512x512xf32>
    %8 = tpu.matmul %5, %7, %cst {dimension_numbers = #tpu.dot_dimension_numbers<[1], [1], [0], [0], [0, 0, 1, 0], [], []>} : vector<512x8xf32>, vector<512x8xf32>, vector<512x512xf32> -> vector<512x512xf32>
    %9 = arith.negf %8 : vector<512x512xf32>
    %10 = math.exp %9 : vector<512x512xf32>
    %cst_2 = arith.constant 1.000000e+00 : f32
    %11 = vector.broadcast %cst_2 : f32 to vector<512x512xf32>
    %12 = arith.addf %11, %10 : vector<512x512xf32>
    %13 = arith.divf %11, %12 : vector<512x512xf32>
    %c0_3 = arith.constant 0 : index
    %c0_4 = arith.constant 0 : index
    %14 = vector.load %arg3[%c0_3, %c0_4] : memref<512x512xf32, #tpu.memory_space<vmem>>, vector<512x512xf32>
    tpu.vector_store %arg3[%c0_3, %c0_4], %13 {strides = array<i32>} : memref<512x512xf32, #tpu.memory_space<vmem>>, vector<512x512xf32>,
    return
  }
  func.func @transform_0(%arg0: i32, %arg1: i32) -> (i32, i32) {
    %c0_i32 = arith.constant 0 : i32
    %c0_i32_0 = arith.constant 0 : i32
    %c0_i32_1 = arith.constant 0 : i32
    return %c0_i32, %c0_i32_0 : i32, i32
  }
  func.func @transform_1(%arg0: i32, %arg1: i32) -> (i32, i32) {
    %c0_i32 = arith.constant 0 : i32
    return %arg0, %arg1 : i32, i32
  }
}

</mosaic_0001>

<llo_original>
// kernel: gvade_forward.3
$region0: #{gvade_forward.3}
  #allocation0 [shape = 'u32[]', space=smem, size = 0x4, offset = 0x4, fixed_abs, tag = 'smem constant byte address 0x4 - core index']
  #allocation1 [shape = 'u32[144,128]{1,0:T(1,128)}', space=vmem, size = 0x12000, scoped, tag = 'internal scratch']
  %s0 = inlined_call_operand.vmem [shape: f32[512,8], index: 0, kind: input, shape index: {}]
  %s1 = inlined_call_operand.hbm [shape: f32[512,512], index: 1, kind: output, shape index: {}]
  %s2 = sld [smem:[#allocation0]]
  $region14: #{gvade_forward.3} parent=0
    _
  %s4 = ssub.s32 1, %s2
  %s5 = scalar_select 0, %s4, %s2
  $region1: #{gvade_forward.3} parent=0
    #allocation2 [shape = 'u8[1048576]{0}', space=vmem, size = 0x100000, scoped, tag = 'output window, operand 0, single buffered']
    #allocation3 [shape = 's32[1]{0}', space=sflag, size = 0x4, scoped, tag = 'scoped memory for gvade_forward.3']
    %6 = vsyncpa [#allocation3], 0
    // Predicated region
    $region2: #{gvade_forward.3} parent=1 // pred_check
      _
    $region3: #{gvade_forward.3} parent=1 // pred_check_branch
      %8 = sbr.rel (0) target = $region5
    $region4: #{gvade_forward.3} parent=1 // pred_region
      _
    $region5: #{gvade_forward.3} parent=1 // pred_fallthru
      _
    %s9 = smul.u32 0, 512
    %s10 = smul.u32 0, 512
    %s11 = scalar_lea.vmem %s0, %s9
    %v12 = vld [vmem:[%s11] sm:$0xff]
    %v13 = vld [vmem:[%s11 + $0x8] sm:$0xff]
    %v14 = vld [vmem:[%s11 + $0x10] sm:$0xff]
    %v15 = vld [vmem:[%s11 + $0x18] sm:$0xff]
    %v16 = vld [vmem:[%s11 + $0x20] sm:$0xff]
    %v17 = vld [vmem:[%s11 + $0x28] sm:$0xff]
    %v18 = vld [vmem:[%s11 + $0x30] sm:$0xff]
    %v19 = vld [vmem:[%s11 + $0x38] sm:$0xff]
    %v20 = vld [vmem:[%s11 + $0x40] sm:$0xff]
    %v21 = vld [vmem:[%s11 + $0x48] sm:$0xff]
    %v22 = vld [vmem:[%s11 + $0x50] sm:$0xff]
    %v23 = vld [vmem:[%s11 + $0x58] sm:$0xff]
    %v24 = vld [vmem:[%s11 + $0x60] sm:$0xff]
    %v25 = vld [vmem:[%s11 + $0x68] sm:$0xff]
    %v26 = vld [vmem:[%s11 + $0x70] sm:$0xff]
    %v27 = vld [vmem:[%s11 + $0x78] sm:$0xff]
    %v28 = vld [vmem:[%s11 + $0x80] sm:$0xff]
    %v29 = vld [vmem:[%s11 + $0x88] sm:$0xff]
    %v30 = vld [vmem:[%s11 + $0x90] sm:$0xff]
    %v31 = vld [vmem:[%s11 + $0x98] sm:$0xff]
    %v32 = vld [vmem:[%s11 + $0xa0] sm:$0xff]
    %v33 = vld [vmem:[%s11 + $0xa8] sm:$0xff]
    %v34 = vld [vmem:[%s11 + $0xb0] sm:$0xff]
    %v35 = vld [vmem:[%s11 + $0xb8] sm:$0xff]
    %v36 = vld [vmem:[%s11 + $0xc0] sm:$0xff]
    %v37 = vld [vmem:[%s11 + $0xc8] sm:$0xff]
    %v38 = vld [vmem:[%s11 + $0xd0] sm:$0xff]
    %v39 = vld [vmem:[%s11 + $0xd8] sm:$0xff]
    %v40 = vld [vmem:[%s11 + $0xe0] sm:$0xff]
    %v41 = vld [vmem:[%s11 + $0xe8] sm:$0xff]
    %v42 = vld [vmem:[%s11 + $0xf0] sm:$0xff]
    %v43 = vld [vmem:[%s11 + $0xf8] sm:$0xff]
    %v44 = vld [vmem:[%s11 + $0x100] sm:$0xff]
    %v45 = vld [vmem:[%s11 + $0x108] sm:$0xff]
    %v46 = vld [vmem:[%s11 + $0x110] sm:$0xff]
    %v47 = vld [vmem:[%s11 + $0x118] sm:$0xff]
    %v48 = vld [vmem:[%s11 + $0x120] sm:$0xff]
    %v49 = vld [vmem:[%s11 + $0x128] sm:$0xff]
    %v50 = vld [vmem:[%s11 + $0x130] sm:$0xff]
    %v51 = vld [vmem:[%s11 + $0x138] sm:$0xff]
    %v52 = vld [vmem:[%s11 + $0x140] sm:$0xff]
    %v53 = vld [vmem:[%s11 + $0x148] sm:$0xff]
    %v54 = vld [vmem:[%s11 + $0x150] sm:$0xff]
    %v55 = vld [vmem:[%s11 + $0x158] sm:$0xff]
    %v56 = vld [vmem:[%s11 + $0x160] sm:$0xff]
    %v57 = vld [vmem:[%s11 + $0x168] sm:$0xff]
    %v58 = vld [vmem:[%s11 + $0x170] sm:$0xff]
    %v59 = vld [vmem:[%s11 + $0x178] sm:$0xff]
    %v60 = vld [vmem:[%s11 + $0x180] sm:$0xff]
    %v61 = vld [vmem:[%s11 + $0x188] sm:$0xff]
    %v62 = vld [vmem:[%s11 + $0x190] sm:$0xff]
    %v63 = vld [vmem:[%s11 + $0x198] sm:$0xff]
    %v64 = vld [vmem:[%s11 + $0x1a0] sm:$0xff]
    %v65 = vld [vmem:[%s11 + $0x1a8] sm:$0xff]
    %v66 = vld [vmem:[%s11 + $0x1b0] sm:$0xff]
    %v67 = vld [vmem:[%s11 + $0x1b8] sm:$0xff]
    %v68 = vld [vmem:[%s11 + $0x1c0] sm:$0xff]
    %v69 = vld [vmem:[%s11 + $0x1c8] sm:$0xff]
    %v70 = vld [vmem:[%s11 + $0x1d0] sm:$0xff]
    %v71 = vld [vmem:[%s11 + $0x1d8] sm:$0xff]
    %v72 = vld [vmem:[%s11 + $0x1e0] sm:$0xff]
    %v73 = vld [vmem:[%s11 + $0x1e8] sm:$0xff]
    %v74 = vld [vmem:[%s11 + $0x1f0] sm:$0xff]
    %v75 = vld [vmem:[%s11 + $0x1f8] sm:$0xff]
    %s76 = scalar_lea.vmem %s0, %s10
    %v77 = vld [vmem:[%s76] sm:$0xff]
    %v78 = vld [vmem:[%s76 + $0x8] sm:$0xff]
    %v79 = vld [vmem:[%s76 + $0x10] sm:$0xff]
    %v80 = vld [vmem:[%s76 + $0x18] sm:$0xff]
    %v81 = vld [vmem:[%s76 + $0x20] sm:$0xff]
    %v82 = vld [vmem:[%s76 + $0x28] sm:$0xff]
    %v83 = vld [vmem:[%s76 + $0x30] sm:$0xff]
    %v84 = vld [vmem:[%s76 + $0x38] sm:$0xff]
    %v85 = vld [vmem:[%s76 + $0x40] sm:$0xff]
    %v86 = vld [vmem:[%s76 + $0x48] sm:$0xff]
    %v87 = vld [vmem:[%s76 + $0x50] sm:$0xff]
    %v88 = vld [vmem:[%s76 + $0x58] sm:$0xff]
    %v89 = vld [vmem:[%s76 + $0x60] sm:$0xff]
    %v90 = vld [vmem:[%s76 + $0x68] sm:$0xff]
    %v91 = vld [vmem:[%s76 + $0x70] sm:$0xff]
    %v92 = vld [vmem:[%s76 + $0x78] sm:$0xff]
    %v93 = vld [vmem:[%s76 + $0x80] sm:$0xff]
    %v94 = vld [vmem:[%s76 + $0x88] sm:$0xff]
    %v95 = vld [vmem:[%s76 + $0x90] sm:$0xff]
    %v96 = vld [vmem:[%s76 + $0x98] sm:$0xff]
    %v97 = vld [vmem:[%s76 + $0xa0] sm:$0xff]
    %v98 = vld [vmem:[%s76 + $0xa8] sm:$0xff]
    %v99 = vld [vmem:[%s76 + $0xb0] sm:$0xff]
    %v100 = vld [vmem:[%s76 + $0xb8] sm:$0xff]
    %v101 = vld [vmem:[%s76 + $0xc0] sm:$0xff]
    %v102 = vld [vmem:[%s76 + $0xc8] sm:$0xff]
    %v103 = vld [vmem:[%s76 + $0xd0] sm:$0xff]
    %v104 = vld [vmem:[%s76 + $0xd8] sm:$0xff]
    %v105 = vld [vmem:[%s76 + $0xe0] sm:$0xff]
    %v106 = vld [vmem:[%s76 + $0xe8] sm:$0xff]
    %v107 = vld [vmem:[%s76 + $0xf0] sm:$0xff]
    %v108 = vld [vmem:[%s76 + $0xf8] sm:$0xff]
    %v109 = vld [vmem:[%s76 + $0x100] sm:$0xff]
    %v110 = vld [vmem:[%s76 + $0x108] sm:$0xff]
    %v111 = vld [vmem:[%s76 + $0x110] sm:$0xff]
    %v112 = vld [vmem:[%s76 + $0x118] sm:$0xff]
    %v113 = vld [vmem:[%s76 + $0x120] sm:$0xff]
    %v114 = vld [vmem:[%s76 + $0x128] sm:$0xff]
    %v115 = vld [vmem:[%s76 + $0x130] sm:$0xff]
    %v116 = vld [vmem:[%s76 + $0x138] sm:$0xff]
    %v117 = vld [vmem:[%s76 + $0x140] sm:$0xff]
    %v118 = vld [vmem:[%s76 + $0x148] sm:$0xff]
    %v119 = vld [vmem:[%s76 + $0x150] sm:$0xff]
    %v120 = vld [vmem:[%s76 + $0x158] sm:$0xff]
    %v121 = vld [vmem:[%s76 + $0x160] sm:$0xff]
    %v122 = vld [vmem:[%s76 + $0x168] sm:$0xff]
    %v123 = vld [vmem:[%s76 + $0x170] sm:$0xff]
    %v124 = vld [vmem:[%s76 + $0x178] sm:$0xff]
    %v125 = vld [vmem:[%s76 + $0x180] sm:$0xff]
    %v126 = vld [vmem:[%s76 + $0x188] sm:$0xff]
    %v127 = vld [vmem:[%s76 + $0x190] sm:$0xff]
    %v128 = vld [vmem:[%s76 + $0x198] sm:$0xff]
    %v129 = vld [vmem:[%s76 + $0x1a0] sm:$0xff]
    %v130 = vld [vmem:[%s76 + $0x1a8] sm:$0xff]
    %v131 = vld [vmem:[%s76 + $0x1b0] sm:$0xff]
    %v132 = vld [vmem:[%s76 + $0x1b8] sm:$0xff]
    %v133 = vld [vmem:[%s76 + $0x1c0] sm:$0xff]
    %v134 = vld [vmem:[%s76 + $0x1c8] sm:$0xff]
    %v135 = vld [vmem:[%s76 + $0x1d0] sm:$0xff]
    %v136 = vld [vmem:[%s76 + $0x1d8] sm:$0xff]
    %v137 = vld [vmem:[%s76 + $0x1e0] sm:$0xff]
    %v138 = vld [vmem:[%s76 + $0x1e8] sm:$0xff]
    %v139 = vld [vmem:[%s76 + $0x1f0] sm:$0xff]
    %v140 = vld [vmem:[%s76 + $0x1f8] sm:$0xff]
    %vm141 = vcmask 64512
    %v143 = vsel %vm141, %v12, 0
    %v146 = vsel %vm141, %v13, 0
    %v149 = vsel %vm141, %v14, 0
    %v152 = vsel %vm141, %v15, 0
    %v155 = vsel %vm141, %v16, 0
    %v158 = vsel %vm141, %v17, 0
    %v161 = vsel %vm141, %v18, 0
    %v164 = vsel %vm141, %v19, 0
    %v167 = vsel %vm141, %v20, 0
    %v170 = vsel %vm141, %v21, 0
    %v173 = vsel %vm141, %v22, 0
    %v176 = vsel %vm141, %v23, 0
    %v179 = vsel %vm141, %v24, 0
    %v182 = vsel %vm141, %v25, 0
    %v185 = vsel %vm141, %v26, 0
    %v188 = vsel %vm141, %v27, 0
    %v191 = vsel %vm141, %v28, 0
    %v194 = vsel %vm141, %v29, 0
    %v197 = vsel %vm141, %v30, 0
    %v200 = vsel %vm141, %v31, 0
    %v203 = vsel %vm141, %v32, 0
    %v206 = vsel %vm141, %v33, 0
    %v209 = vsel %vm141, %v34, 0
    %v212 = vsel %vm141, %v35, 0
    %v215 = vsel %vm141, %v36, 0
    %v218 = vsel %vm141, %v37, 0
    %v221 = vsel %vm141, %v38, 0
    %v224 = vsel %vm141, %v39, 0
    %v227 = vsel %vm141, %v40, 0
    %v230 = vsel %vm141, %v41, 0
    %v233 = vsel %vm141, %v42, 0
    %v236 = vsel %vm141, %v43, 0
    %v239 = vsel %vm141, %v44, 0
    %v242 = vsel %vm141, %v45, 0
    %v245 = vsel %vm141, %v46, 0
    %v248 = vsel %vm141, %v47, 0
    %v251 = vsel %vm141, %v48, 0
    %v254 = vsel %vm141, %v49, 0
    %v257 = vsel %vm141, %v50, 0
    %v260 = vsel %vm141, %v51, 0
    %v263 = vsel %vm141, %v52, 0
    %v266 = vsel %vm141, %v53, 0
    %v269 = vsel %vm141, %v54, 0
    %v272 = vsel %vm141, %v55, 0
    %v275 = vsel %vm141, %v56, 0
    %v278 = vsel %vm141, %v57, 0
    %v281 = vsel %vm141, %v58, 0
    %v284 = vsel %vm141, %v59, 0
    %v287 = vsel %vm141, %v60, 0
    %v290 = vsel %vm141, %v61, 0
    %v293 = vsel %vm141, %v62, 0
    %v296 = vsel %vm141, %v63, 0
    %v299 = vsel %vm141, %v64, 0
    %v302 = vsel %vm141, %v65, 0
    %v305 = vsel %vm141, %v66, 0
    %v308 = vsel %vm141, %v67, 0
    %v311 = vsel %vm141, %v68, 0
    %v314 = vsel %vm141, %v69, 0
    %v317 = vsel %vm141, %v70, 0
    %v320 = vsel %vm141, %v71, 0
    %v323 = vsel %vm141, %v72, 0
    %v326 = vsel %vm141, %v73, 0
    %v329 = vsel %vm141, %v74, 0
    %v332 = vsel %vm141, %v75, 0
    %v335 = vsel %vm141, %v77, 0
    %v338 = vsel %vm141, %v78, 0
    %v341 = vsel %vm141, %v79, 0
    %v344 = vsel %vm141, %v80, 0
    %v347 = vsel %vm141, %v81, 0
    %v350 = vsel %vm141, %v82, 0
    %v353 = vsel %vm141, %v83, 0
    %v356 = vsel %vm141, %v84, 0
    %v359 = vsel %vm141, %v85, 0
    %v362 = vsel %vm141, %v86, 0
    %v365 = vsel %vm141, %v87, 0
    %v368 = vsel %vm141, %v88, 0
    %v371 = vsel %vm141, %v89, 0
    %v374 = vsel %vm141, %v90, 0
    %v377 = vsel %vm141, %v91, 0
    %v380 = vsel %vm141, %v92, 0
    %v383 = vsel %vm141, %v93, 0
    %v386 = vsel %vm141, %v94, 0
    %v389 = vsel %vm141, %v95, 0
    %v392 = vsel %vm141, %v96, 0
    %v395 = vsel %vm141, %v97, 0
    %v398 = vsel %vm141, %v98, 0
    %v401 = vsel %vm141, %v99, 0
    %v404 = vsel %vm141, %v100, 0
    %v407 = vsel %vm141, %v101, 0
    %v410 = vsel %vm141, %v102, 0
    %v413 = vsel %vm141, %v103, 0
    %v416 = vsel %vm141, %v104, 0
    %v419 = vsel %vm141, %v105, 0
    %v422 = vsel %vm141, %v106, 0
    %v425 = vsel %vm141, %v107, 0
    %v428 = vsel %vm141, %v108, 0
    %v431 = vsel %vm141, %v109, 0
    %v434 = vsel %vm141, %v110, 0
    %v437 = vsel %vm141, %v111, 0
    %v440 = vsel %vm141, %v112, 0
    %v443 = vsel %vm141, %v113, 0
    %v446 = vsel %vm141, %v114, 0
    %v449 = vsel %vm141, %v115, 0
    %v452 = vsel %vm141, %v116, 0
    %v455 = vsel %vm141, %v117, 0
    %v458 = vsel %vm141, %v118, 0
    %v461 = vsel %vm141, %v119, 0
    %v464 = vsel %vm141, %v120, 0
    %v467 = vsel %vm141, %v121, 0
    %v470 = vsel %vm141, %v122, 0
    %v473 = vsel %vm141, %v123, 0
    %v476 = vsel %vm141, %v124, 0
    %v479 = vsel %vm141, %v125, 0
    %v482 = vsel %vm141, %v126, 0
    %v485 = vsel %vm141, %v127, 0
    %v488 = vsel %vm141, %v128, 0
    %v491 = vsel %vm141, %v129, 0
    %v494 = vsel %vm141, %v130, 0
    %v497 = vsel %vm141, %v131, 0
    %v500 = vsel %vm141, %v132, 0
    %v503 = vsel %vm141, %v133, 0
    %v506 = vsel %vm141, %v134, 0
    %v509 = vsel %vm141, %v135, 0
    %v512 = vsel %vm141, %v136, 0
    %v515 = vsel %vm141, %v137, 0
    %v518 = vsel %vm141, %v138, 0
    %v521 = vsel %vm141, %v139, 0
    %v524 = vsel %vm141, %v140, 0
    %526 = vmatprep.subr.mxu0 0.0
    %527 = vmatpush1.xpose.msra.mxu0 %v335
    %528 = vmatprep.subr.mxu0 0.0
    %529 = vmatpush1.xpose.msra.mxu0 %v338
    %530 = vmatprep.subr.mxu0 0.0
    %531 = vmatpush1.xpose.msra.mxu0 %v341
    %532 = vmatprep.subr.mxu0 0.0
    %533 = vmatpush1.xpose.msra.mxu0 %v344
    %534 = vmatprep.subr.mxu0 0.0
    %535 = vmatpush1.xpose.msra.mxu0 %v347
    %536 = vmatprep.subr.mxu0 0.0
    %537 = vmatpush1.xpose.msra.mxu0 %v350
    %538 = vmatprep.subr.mxu0 0.0
    %539 = vmatpush1.xpose.msra.mxu0 %v353
    %540 = vmatprep.subr.mxu0 0.0
    %541 = vmatpush1.xpose.msra.mxu0 %v356
    %542 = vmatprep.subr.mxu0 0.0
    %543 = vmatpush1.xpose.msra.mxu0 %v359
    %544 = vmatprep.subr.mxu0 0.0
    %545 = vmatpush1.xpose.msra.mxu0 %v362
    %546 = vmatprep.subr.mxu0 0.0
    %547 = vmatpush1.xpose.msra.mxu0 %v365
    %548 = vmatprep.subr.mxu0 0.0
    %549 = vmatpush1.xpose.msra.mxu0 %v368
    %550 = vmatprep.subr.mxu0 0.0
    %551 = vmatpush1.xpose.msra.mxu0 %v371
    %552 = vmatprep.subr.mxu0 0.0
    %553 = vmatpush1.xpose.msra.mxu0 %v374
    %554 = vmatprep.subr.mxu0 0.0
    %555 = vmatpush1.xpose.msra.mxu0 %v377
    %556 = vmatprep.subr.mxu0 0.0
    %557 = vmatpush1.xpose.msra.mxu0 %v380
    %558 = vmatprep.subr.mxu0 0.0
    %559 = vmatpush1.xpose.msra.mxu0 %v383
    %560 = vmatprep.subr.mxu0 0.0
    %561 = vmatpush1.xpose.msra.mxu0 %v386
    %562 = vmatprep.subr.mxu0 0.0
    %563 = vmatpush1.xpose.msra.mxu0 %v389
    %564 = vmatprep.subr.mxu0 0.0
    %565 = vmatpush1.xpose.msra.mxu0 %v392
    %566 = vmatprep.subr.mxu0 0.0
    %567 = vmatpush1.xpose.msra.mxu0 %v395
    %568 = vmatprep.subr.mxu0 0.0
    %569 = vmatpush1.xpose.msra.mxu0 %v398
    %570 = vmatprep.subr.mxu0 0.0
    %571 = vmatpush1.xpose.msra.mxu0 %v401
    %572 = vmatprep.subr.mxu0 0.0
    %573 = vmatpush1.xpose.msra.mxu0 %v404
    %574 = vmatprep.subr.mxu0 0.0
    %575 = vmatpush1.xpose.msra.mxu0 %v407
    %576 = vmatprep.subr.mxu0 0.0
    %577 = vmatpush1.xpose.msra.mxu0 %v410
    %578 = vmatprep.subr.mxu0 0.0
    %579 = vmatpush1.xpose.msra.mxu0 %v413
    %580 = vmatprep.subr.mxu0 0.0
    %581 = vmatpush1.xpose.msra.mxu0 %v416
    %582 = vmatprep.subr.mxu0 0.0
    %583 = vmatpush1.xpose.msra.mxu0 %v419
    %584 = vmatprep.subr.mxu0 0.0
    %585 = vmatpush1.xpose.msra.mxu0 %v422
    %586 = vmatprep.subr.mxu0 0.0
    %587 = vmatpush1.xpose.msra.mxu0 %v425
    %588 = vmatprep.subr.mxu0 0.0
    %589 = vmatpush1.xpose.msra.mxu0 %v428
    %590 = vmatprep.mubr.f32.mxu0 0.0
    %591 = vmatmul.mubr.f32.gmra.mrb[0].mxu0 %v143
    %v592 = vpop.f32.mrb[0].mxu0
    %v593 = vadd.f32 0.0, %v592
    %v594 = vpop.f32.mrb[0].mxu0
    %v595 = vadd.f32 0.0, %v594
    %596 = vmatprep.mubr.f32.mxu0 0.0
    %597 = vmatmul.mubr.f32.gmra.mrb[0].mxu0 %v146
    %v598 = vpop.f32.mrb[0].mxu0
    %v599 = vadd.f32 0.0, %v598
    %v600 = vpop.f32.mrb[0].mxu0
    %v601 = vadd.f32 0.0, %v600
    %602 = vmatprep.mubr.f32.mxu0 0.0
    %603 = vmatmul.mubr.f32.gmra.mrb[0].mxu0 %v149
    %v604 = vpop.f32.mrb[0].mxu0
    %v605 = vadd.f32 0.0, %v604
    %v606 = vpop.f32.mrb[0].mxu0
    %v607 = vadd.f32 0.0, %v606
    %608 = vmatprep.mubr.f32.mxu0 0.0
    %609 = vmatmul.mubr.f32.gmra.mrb[0].mxu0 %v152
    %v610 = vpop.f32.mrb[0].mxu0
    %v611 = vadd.f32 0.0, %v610
    %v612 = vpop.f32.mrb[0].mxu0
    %v613 = vadd.f32 0.0, %v612
    %614 = vmatprep.mubr.f32.mxu0 0.0
    %615 = vmatmul.mubr.f32.gmra.mrb[0].mxu0 %v155
    %v616 = vpop.f32.mrb[0].mxu0
    %v617 = vadd.f32 0.0, %v616
    %v618 = vpop.f32.mrb[0].mxu0
    %v619 = vadd.f32 0.0, %v618
    %620 = vmatprep.mubr.f32.mxu0 0.0
    %621 = vmatmul.mubr.f32.gmra.mrb[0].mxu0 %v158
    %v622 = vpop.f32.mrb[0].mxu0
    %v623 = vadd.f32 0.0, %v622
    %v624 = vpop.f32.mrb[0].mxu0
    %v625 = vadd.f32 0.0, %v624
    %626 = vmatprep.mubr.f32.mxu0 0.0
    %627 = vmatmul.mubr.f32.gmra.mrb[0].mxu0 %v161
    %v628 = vpop.f32.mrb[0].mxu0
    %v629 = vadd.f32 0.0, %v628
    %v630 = vpop.f32.mrb[0].mxu0
    %v631 = vadd.f32 0.0, %v630
    %632 = vmatprep.mubr.f32.mxu0 0.0
    %633 = vmatmul.mubr.f32.gmra.mrb[0].mxu0 %v164
    %v634 = vpop.f32.mrb[0].mxu0
    %v635 = vadd.f32 0.0, %v634
    %v636 = vpop.f32.mrb[0].mxu0
    %v637 = vadd.f32 0.0, %v636
    %638 = vmatprep.mubr.f32.mxu0 0.0
    %639 = vmatmul.mubr.f32.gmra.mrb[0].mxu0 %v167
    %v640 = vpop.f32.mrb[0].mxu0
    %v641 = vadd.f32 0.0, %v640
    %v642 = vpop.f32.mrb[0].mxu0
    %v643 = vadd.f32 0.0, %v642
    %644 = vmatprep.mubr.f32.mxu0 0.0
    %645 = vmatmul.mubr.f32.gmra.mrb[0].mxu0 %v170
    %v646 = vpop.f32.mrb[0].mxu0
    %v647 = vadd.f32 0.0, %v646
    %v648 = vpop.f32.mrb[0].mxu0
    %v649 = vadd.f32 0.0, %v648
    %650 = vmatprep.mubr.f32.mxu0 0.0
    %651 = vmatmul.mubr.f32.gmra.mrb[0].mxu0 %v173
    %v652 = vpop.f32.mrb[0].mxu0
    %v653 = vadd.f32 0.0, %v652
    %v654 = vpop.f32.mrb[0].mxu0
    %v655 = vadd.f32 0.0, %v654
    %656 = vmatprep.mubr.f32.mxu0 0.0
    %657 = vmatmul.mubr.f32.gmra.mrb[0].mxu0 %v176
    %v658 = vpop.f32.mrb[0].mxu0
    %v659 = vadd.f32 0.0, %v658
    %v660 = vpop.f32.mrb[0].mxu0
    %v661 = vadd.f32 0.0, %v660
    %662 = vmatprep.mubr.f32.mxu0 0.0
    %663 = vmatmul.mubr.f32.gmra.mrb[0].mxu0 %v179
    %v664 = vpop.f32.mrb[0].mxu0
    %v665 = vadd.f32 0.0, %v664
    %v666 = vpop.f32.mrb[0].mxu0
    %v667 = vadd.f32 0.0, %v666
    %668 = vmatprep.mubr.f32.mxu0 0.0
    %669 = vmatmul.mubr.f32.gmra.mrb[0].mxu0 %v182
    %v670 = vpop.f32.mrb[0].mxu0
    %v671 = vadd.f32 0.0, %v670
    %v672 = vpop.f32.mrb[0].mxu0
    %v673 = vadd.f32 0.0, %v672
    %674 = vmatprep.mubr.f32.mxu0 0.0
    %675 = vmatmul.mubr.f32.gmra.mrb[0].mxu0 %v185
    %v676 = vpop.f32.mrb[0].mxu0
    %v677 = vadd.f32 0.0, %v676
    %v678 = vpop.f32.mrb[0].mxu0
    %v679 = vadd.f32 0.0, %v678
    %680 = vmatprep.mubr.f32.mxu0 0.0
    %681 = vmatmul.mubr.f32.gmra.mrb[0].mxu0 %v188
    %v682 = vpop.f32.mrb[0].mxu0
    %v683 = vadd.f32 0.0, %v682
    %v684 = vpop.f32.mrb[0].mxu0
    %v685 = vadd.f32 0.0, %v684
    %686 = vmatprep.mubr.f32.mxu0 0.0
    %687 = vmatmul.mubr.f32.gmra.mrb[0].mxu0 %v191
    %v688 = vpop.f32.mrb[0].mxu0
    %v689 = vadd.f32 0.0, %v688
    %v690 = vpop.f32.mrb[0].mxu0
    %v691 = vadd.f32 0.0, %v690
    %692 = vmatprep.mubr.f32.mxu0 0.0
    %693 = vmatmul.mubr.f32.gmra.mrb[0].mxu0 %v194
    %v694 = vpop.f32.mrb[0].mxu0
    %v695 = vadd.f32 0.0, %v694
    %v696 = vpop.f32.mrb[0].mxu0
    %v697 = vadd.f32 0.0, %v696
    %698 = vmatprep.mubr.f32.mxu0 0.0
    %699 = vmatmul.mubr.f32.gmra.mrb[0].mxu0 %v197
    %v700 = vpop.f32.mrb[0].mxu0
    %v701 = vadd.f32 0.0, %v700
    %v702 = vpop.f32.mrb[0].mxu0
    %v703 = vadd.f32 0.0, %v702
    %704 = vmatprep.mubr.f32.mxu0 0.0
    %705 = vmatmul.mubr.f32.gmra.mrb[0].mxu0 %v200
    %v706 = vpop.f32.mrb[0].mxu0
    %v707 = vadd.f32 0.0, %v706
    %v708 = vpop.f32.mrb[0].mxu0
    %v709 = vadd.f32 0.0, %v708
    %710 = vmatprep.mubr.f32.mxu0 0.0
    %711 = vmatmul.mubr.f32.gmra.mrb[0].mxu0 %v203
    %v712 = vpop.f32.mrb[0].mxu0
    %v713 = vadd.f32 0.0, %v712
    %v714 = vpop.f32.mrb[0].mxu0
    %v715 = vadd.f32 0.0, %v714
    %716 = vmatprep.mubr.f32.mxu0 0.0
    %717 = vmatmul.mubr.f32.gmra.mrb[0].mxu0 %v206
    %v718 = vpop.f32.mrb[0].mxu0
    %v719 = vadd.f32 0.0, %v718
    %v720 = vpop.f32.mrb[0].mxu0
    %v721 = vadd.f32 0.0, %v720
    %722 = vmatprep.mubr.f32.mxu0 0.0
    %723 = vmatmul.mubr.f32.gmra.mrb[0].mxu0 %v209
    %v724 = vpop.f32.mrb[0].mxu0
    %v725 = vadd.f32 0.0, %v724
    %v726 = vpop.f32.mrb[0].mxu0
    %v727 = vadd.f32 0.0, %v726
    %728 = vmatprep.mubr.f32.mxu0 0.0
    %729 = vmatmul.mubr.f32.gmra.mrb[0].mxu0 %v212
    %v730 = vpop.f32.mrb[0].mxu0
    %v731 = vadd.f32 0.0, %v730
    %v732 = vpop.f32.mrb[0].mxu0
    %v733 = vadd.f32 0.0, %v732
    %734 = vmatprep.mubr.f32.mxu0 0.0
    %735 = vmatmul.mubr.f32.gmra.mrb[0].mxu0 %v215
    %v736 = vpop.f32.mrb[0].mxu0
    %v737 = vadd.f32 0.0, %v736
    %v738 = vpop.f32.mrb[0].mxu0
    %v739 = vadd.f32 0.0, %v738
    %740 = vmatprep.mubr.f32.mxu0 0.0
    %741 = vmatmul.mubr.f32.gmra.mrb[0].mxu0 %v218
    %v742 = vpop.f32.mrb[0].mxu0
    %v743 = vadd.f32 0.0, %v742
    %v744 = vpop.f32.mrb[0].mxu0
    %v745 = vadd.f32 0.0, %v744
    %746 = vmatprep.mubr.f32.mxu0 0.0
    %747 = vmatmul.mubr.f32.gmra.mrb[0].mxu0 %v221
    %v748 = vpop.f32.mrb[0].mxu0
    %v749 = vadd.f32 0.0, %v748
    %v750 = vpop.f32.mrb[0].mxu0
    %v751 = vadd.f32 0.0, %v750
    %752 = vmatprep.mubr.f32.mxu0 0.0
    %753 = vmatmul.mubr.f32.gmra.mrb[0].mxu0 %v224
    %v754 = vpop.f32.mrb[0].mxu0
    %v755 = vadd.f32 0.0, %v754
    %v756 = vpop.f32.mrb[0].mxu0
    %v757 = vadd.f32 0.0, %v756
    %758 = vmatprep.mubr.f32.mxu0 0.0
    %759 = vmatmul.mubr.f32.gmra.mrb[0].mxu0 %v227
    %v760 = vpop.f32.mrb[0].mxu0
    %v761 = vadd.f32 0.0, %v760
    %v762 = vpop.f32.mrb[0].mxu0
    %v763 = vadd.f32 0.0, %v762
    %764 = vmatprep.mubr.f32.mxu0 0.0
    %765 = vmatmul.mubr.f32.gmra.mrb[0].mxu0 %v230
    %v766 = vpop.f32.mrb[0].mxu0
    %v767 = vadd.f32 0.0, %v766
    %v768 = vpop.f32.mrb[0].mxu0
    %v769 = vadd.f32 0.0, %v768
    %770 = vmatprep.mubr.f32.mxu0 0.0
    %771 = vmatmul.mubr.f32.gmra.mrb[0].mxu0 %v233
    %v772 = vpop.f32.mrb[0].mxu0
    %v773 = vadd.f32 0.0, %v772
    %v774 = vpop.f32.mrb[0].mxu0
    %v775 = vadd.f32 0.0, %v774
    %776 = vmatprep.mubr.f32.mxu0 0.0
    %777 = vmatmul.mubr.f32.gmra.mrb[0].mxu0 %v236
    %v778 = vpop.f32.mrb[0].mxu0
    %v779 = vadd.f32 0.0, %v778
    %v780 = vpop.f32.mrb[0].mxu0
    %v781 = vadd.f32 0.0, %v780
    %782 = vmatprep.mubr.f32.mxu0 0.0
    %783 = vmatmul.mubr.f32.gmra.mrb[0].mxu0 %v239
    %v784 = vpop.f32.mrb[0].mxu0
    %v785 = vadd.f32 0.0, %v784
    %v786 = vpop.f32.mrb[0].mxu0
    %v787 = vadd.f32 0.0, %v786
    %788 = vmatprep.mubr.f32.mxu0 0.0
    %789 = vmatmul.mubr.f32.gmra.mrb[0].mxu0 %v242
    %v790 = vpop.f32.mrb[0].mxu0
    %v791 = vadd.f32 0.0, %v790
    %v792 = vpop.f32.mrb[0].mxu0
    %v793 = vadd.f32 0.0, %v792
    %794 = vmatprep.mubr.f32.mxu0 0.0
    %795 = vmatmul.mubr.f32.gmra.mrb[0].mxu0 %v245
    %v796 = vpop.f32.mrb[0].mxu0
    %v797 = vadd.f32 0.0, %v796
    %v798 = vpop.f32.mrb[0].mxu0
    %v799 = vadd.f32 0.0, %v798
    %800 = vmatprep.mubr.f32.mxu0 0.0
    %801 = vmatmul.mubr.f32.gmra.mrb[0].mxu0 %v248
    %v802 = vpop.f32.mrb[0].mxu0
    %v803 = vadd.f32 0.0, %v802
    %v804 = vpop.f32.mrb[0].mxu0
    %v805 = vadd.f32 0.0, %v804
    %806 = vmatprep.mubr.f32.mxu0 0.0
    %807 = vmatmul.mubr.f32.gmra.mrb[0].mxu0 %v251
    %v808 = vpop.f32.mrb[0].mxu0
    %v809 = vadd.f32 0.0, %v808
    %v810 = vpop.f32.mrb[0].mxu0
    %v811 = vadd.f32 0.0, %v810
    %812 = vmatprep.mubr.f32.mxu0 0.0
    %813 = vmatmul.mubr.f32.gmra.mrb[0].mxu0 %v254
    %v814 = vpop.f32.mrb[0].mxu0
    %v815 = vadd.f32 0.0, %v814
    %v816 = vpop.f32.mrb[0].mxu0
    %v817 = vadd.f32 0.0, %v816
    %818 = vmatprep.mubr.f32.mxu0 0.0
    %819 = vmatmul.mubr.f32.gmra.mrb[0].mxu0 %v257
    %v820 = vpop.f32.mrb[0].mxu0
    %v821 = vadd.f32 0.0, %v820
    %v822 = vpop.f32.mrb[0].mxu0
    %v823 = vadd.f32 0.0, %v822
    %824 = vmatprep.mubr.f32.mxu0 0.0
    %825 = vmatmul.mubr.f32.gmra.mrb[0].mxu0 %v260
    %v826 = vpop.f32.mrb[0].mxu0
    %v827 = vadd.f32 0.0, %v826
    %v828 = vpop.f32.mrb[0].mxu0
    %v829 = vadd.f32 0.0, %v828
    %830 = vmatprep.mubr.f32.mxu0 0.0
    %831 = vmatmul.mubr.f32.gmra.mrb[0].mxu0 %v263
    %v832 = vpop.f32.mrb[0].mxu0
    %v833 = vadd.f32 0.0, %v832
    %v834 = vpop.f32.mrb[0].mxu0
    %v835 = vadd.f32 0.0, %v834
    %836 = vmatprep.mubr.f32.mxu0 0.0
    %837 = vmatmul.mubr.f32.gmra.mrb[0].mxu0 %v266
    %v838 = vpop.f32.mrb[0].mxu0
    %v839 = vadd.f32 0.0, %v838
    %v840 = vpop.f32.mrb[0].mxu0
    %v841 = vadd.f32 0.0, %v840
    %842 = vmatprep.mubr.f32.mxu0 0.0
    %843 = vmatmul.mubr.f32.gmra.mrb[0].mxu0 %v269
    %v844 = vpop.f32.mrb[0].mxu0
    %v845 = vadd.f32 0.0, %v844
    %v846 = vpop.f32.mrb[0].mxu0
    %v847 = vadd.f32 0.0, %v846
    %848 = vmatprep.mubr.f32.mxu0 0.0
    %849 = vmatmul.mubr.f32.gmra.mrb[0].mxu0 %v272
    %v850 = vpop.f32.mrb[0].mxu0
    %v851 = vadd.f32 0.0, %v850
    %v852 = vpop.f32.mrb[0].mxu0
    %v853 = vadd.f32 0.0, %v852
    %854 = vmatprep.mubr.f32.mxu0 0.0
    %855 = vmatmul.mubr.f32.gmra.mrb[0].mxu0 %v275
    %v856 = vpop.f32.mrb[0].mxu0
    %v857 = vadd.f32 0.0, %v856
    %v858 = vpop.f32.mrb[0].mxu0
    %v859 = vadd.f32 0.0, %v858
    %860 = vmatprep.mubr.f32.mxu0 0.0
    %861 = vmatmul.mubr.f32.gmra.mrb[0].mxu0 %v278
    %v862 = vpop.f32.mrb[0].mxu0
    %v863 = vadd.f32 0.0, %v862
    %v864 = vpop.f32.mrb[0].mxu0
    %v865 = vadd.f32 0.0, %v864
    %866 = vmatprep.mubr.f32.mxu0 0.0
    %867 = vmatmul.mubr.f32.gmra.mrb[0].mxu0 %v281
    %v868 = vpop.f32.mrb[0].mxu0
    %v869 = vadd.f32 0.0, %v868
    %v870 = vpop.f32.mrb[0].mxu0
    %v871 = vadd.f32 0.0, %v870
    %872 = vmatprep.mubr.f32.mxu0 0.0
    %873 = vmatmul.mubr.f32.gmra.mrb[0].mxu0 %v284
    %v874 = vpop.f32.mrb[0].mxu0
    %v875 = vadd.f32 0.0, %v874
    %v876 = vpop.f32.mrb[0].mxu0
    %v877 = vadd.f32 0.0, %v876
    %878 = vmatprep.mubr.f32.mxu0 0.0
    %879 = vmatmul.mubr.f32.gmra.mrb[0].mxu0 %v287
    %v880 = vpop.f32.mrb[0].mxu0
    %v881 = vadd.f32 0.0, %v880
    %v882 = vpop.f32.mrb[0].mxu0
    %v883 = vadd.f32 0.0, %v882
    %884 = vmatprep.mubr.f32.mxu0 0.0
    %885 = vmatmul.mubr.f32.gmra.mrb[0].mxu0 %v290
    %v886 = vpop.f32.mrb[0].mxu0
    %v887 = vadd.f32 0.0, %v886
    %v888 = vpop.f32.mrb[0].mxu0
    %v889 = vadd.f32 0.0, %v888
    %890 = vmatprep.mubr.f32.mxu0 0.0
    %891 = vmatmul.mubr.f32.gmra.mrb[0].mxu0 %v293
    %v892 = vpop.f32.mrb[0].mxu0
    %v893 = vadd.f32 0.0, %v892
    %v894 = vpop.f32.mrb[0].mxu0
    %v895 = vadd.f32 0.0, %v894
    %896 = vmatprep.mubr.f32.mxu0 0.0
    %897 = vmatmul.mubr.f32.gmra.mrb[0].mxu0 %v296
    %v898 = vpop.f32.mrb[0].mxu0
    %v899 = vadd.f32 0.0, %v898
    %v900 = vpop.f32.mrb[0].mxu0
    %v901 = vadd.f32 0.0, %v900
    %902 = vmatprep.mubr.f32.mxu0 0.0
    %903 = vmatmul.mubr.f32.gmra.mrb[0].mxu0 %v299
    %v904 = vpop.f32.mrb[0].mxu0
    %v905 = vadd.f32 0.0, %v904
    %v906 = vpop.f32.mrb[0].mxu0
    %v907 = vadd.f32 0.0, %v906
    %908 = vmatprep.mubr.f32.mxu0 0.0
    %909 = vmatmul.mubr.f32.gmra.mrb[0].mxu0 %v302
    %v910 = vpop.f32.mrb[0].mxu0
    %v911 = vadd.f32 0.0, %v910
    %v912 = vpop.f32.mrb[0].mxu0
    %v913 = vadd.f32 0.0, %v912
    %914 = vmatprep.mubr.f32.mxu0 0.0
    %915 = vmatmul.mubr.f32.gmra.mrb[0].mxu0 %v305
    %v916 = vpop.f32.mrb[0].mxu0
    %v917 = vadd.f32 0.0, %v916
    %v918 = vpop.f32.mrb[0].mxu0
    %v919 = vadd.f32 0.0, %v918
    %920 = vmatprep.mubr.f32.mxu0 0.0
    %921 = vmatmul.mubr.f32.gmra.mrb[0].mxu0 %v308
    %v922 = vpop.f32.mrb[0].mxu0
    %v923 = vadd.f32 0.0, %v922
    %v924 = vpop.f32.mrb[0].mxu0
    %v925 = vadd.f32 0.0, %v924
    %926 = vmatprep.mubr.f32.mxu0 0.0
    %927 = vmatmul.mubr.f32.gmra.mrb[0].mxu0 %v311
    %v928 = vpop.f32.mrb[0].mxu0
    %v929 = vadd.f32 0.0, %v928
    %v930 = vpop.f32.mrb[0].mxu0
    %v931 = vadd.f32 0.0, %v930
    %932 = vmatprep.mubr.f32.mxu0 0.0
    %933 = vmatmul.mubr.f32.gmra.mrb[0].mxu0 %v314
    %v934 = vpop.f32.mrb[0].mxu0
    %v935 = vadd.f32 0.0, %v934
    %v936 = vpop.f32.mrb[0].mxu0
    %v937 = vadd.f32 0.0, %v936
    %938 = vmatprep.mubr.f32.mxu0 0.0
    %939 = vmatmul.mubr.f32.gmra.mrb[0].mxu0 %v317
    %v940 = vpop.f32.mrb[0].mxu0
    %v941 = vadd.f32 0.0, %v940
    %v942 = vpop.f32.mrb[0].mxu0
    %v943 = vadd.f32 0.0, %v942
    %944 = vmatprep.mubr.f32.mxu0 0.0
    %945 = vmatmul.mubr.f32.gmra.mrb[0].mxu0 %v320
    %v946 = vpop.f32.mrb[0].mxu0
    %v947 = vadd.f32 0.0, %v946
    %v948 = vpop.f32.mrb[0].mxu0
    %v949 = vadd.f32 0.0, %v948
    %950 = vmatprep.mubr.f32.mxu0 0.0
    %951 = vmatmul.mubr.f32.gmra.mrb[0].mxu0 %v323
    %v952 = vpop.f32.mrb[0].mxu0
    %v953 = vadd.f32 0.0, %v952
    %v954 = vpop.f32.mrb[0].mxu0
    %v955 = vadd.f32 0.0, %v954
    %956 = vmatprep.mubr.f32.mxu0 0.0
    %957 = vmatmul.mubr.f32.gmra.mrb[0].mxu0 %v326
    %v958 = vpop.f32.mrb[0].mxu0
    %v959 = vadd.f32 0.0, %v958
    %v960 = vpop.f32.mrb[0].mxu0
    %v961 = vadd.f32 0.0, %v960
    %962 = vmatprep.mubr.f32.mxu0 0.0
    %963 = vmatmul.mubr.f32.gmra.mrb[0].mxu0 %v329
    %v964 = vpop.f32.mrb[0].mxu0
    %v965 = vadd.f32 0.0, %v964
    %v966 = vpop.f32.mrb[0].mxu0
    %v967 = vadd.f32 0.0, %v966
    %968 = vmatprep.mubr.f32.mxu0 0.0
    %969 = vmatmul.mubr.f32.gmra.mrb[0].mxu0 %v332
    %v970 = vpop.f32.mrb[0].mxu0
    %v971 = vadd.f32 0.0, %v970
    %v972 = vpop.f32.mrb[0].mxu0
    %v973 = vadd.f32 0.0, %v972
    %974 = vdwg.mxu0
    %975 = vmatprep.subr.mxu0 0.0
    %976 = vmatpush1.xpose.msra.mxu0 %v431
    %977 = vmatprep.subr.mxu0 0.0
    %978 = vmatpush1.xpose.msra.mxu0 %v434
    %979 = vmatprep.subr.mxu0 0.0
    %980 = vmatpush1.xpose.msra.mxu0 %v437
    %981 = vmatprep.subr.mxu0 0.0
    %982 = vmatpush1.xpose.msra.mxu0 %v440
    %983 = vmatprep.subr.mxu0 0.0
    %984 = vmatpush1.xpose.msra.mxu0 %v443
    %985 = vmatprep.subr.mxu0 0.0
    %986 = vmatpush1.xpose.msra.mxu0 %v446
    %987 = vmatprep.subr.mxu0 0.0
    %988 = vmatpush1.xpose.msra.mxu0 %v449
    %989 = vmatprep.subr.mxu0 0.0
    %990 = vmatpush1.xpose.msra.mxu0 %v452
    %991 = vmatprep.subr.mxu0 0.0
    %992 = vmatpush1.xpose.msra.mxu0 %v455
    %993 = vmatprep.subr.mxu0 0.0
    %994 = vmatpush1.xpose.msra.mxu0 %v458
    %995 = vmatprep.subr.mxu0 0.0
    %996 = vmatpush1.xpose.msra.mxu0 %v461
    %997 = vmatprep.subr.mxu0 0.0
    %998 = vmatpush1.xpose.msra.mxu0 %v464
    %999 = vmatprep.subr.mxu0 0.0
    %1000 = vmatpush1.xpose.msra.mxu0 %v467
    %1001 = vmatprep.subr.mxu0 0.0
    %1002 = vmatpush1.xpose.msra.mxu0 %v470
    %1003 = vmatprep.subr.mxu0 0.0
    %1004 = vmatpush1.xpose.msra.mxu0 %v473
    %1005 = vmatprep.subr.mxu0 0.0
    %1006 = vmatpush1.xpose.msra.mxu0 %v476
    %1007 = vmatprep.subr.mxu0 0.0
    %1008 = vmatpush1.xpose.msra.mxu0 %v479
    %1009 = vmatprep.subr.mxu0 0.0
    %1010 = vmatpush1.xpose.msra.mxu0 %v482
    %1011 = vmatprep.subr.mxu0 0.0
    %1012 = vmatpush1.xpose.msra.mxu0 %v485
    %1013 = vmatprep.subr.mxu0 0.0
    %1014 = vmatpush1.xpose.msra.mxu0 %v488
    %1015 = vmatprep.subr.mxu0 0.0
    %1016 = vmatpush1.xpose.msra.mxu0 %v491
    %1017 = vmatprep.subr.mxu0 0.0
    %1018 = vmatpush1.xpose.msra.mxu0 %v494
    %1019 = vmatprep.subr.mxu0 0.0
    %1020 = vmatpush1.xpose.msra.mxu0 %v497
    %1021 = vmatprep.subr.mxu0 0.0
    %1022 = vmatpush1.xpose.msra.mxu0 %v500
    %1023 = vmatprep.subr.mxu0 0.0
    %1024 = vmatpush1.xpose.msra.mxu0 %v503
    %1025 = vmatprep.subr.mxu0 0.0
    %1026 = vmatpush1.xpose.msra.mxu0 %v506
    %1027 = vmatprep.subr.mxu0 0.0
    %1028 = vmatpush1.xpose.msra.mxu0 %v509
    %1029 = vmatprep.subr.mxu0 0.0
    %1030 = vmatpush1.xpose.msra.mxu0 %v512
    %1031 = vmatprep.subr.mxu0 0.0
    %1032 = vmatpush1.xpose.msra.mxu0 %v515
    %1033 = vmatprep.subr.mxu0 0.0
    %1034 = vmatpush1.xpose.msra.mxu0 %v518
    %1035 = vmatprep.subr.mxu0 0.0
    %1036 = vmatpush1.xpose.msra.mxu0 %v521
    %1037 = vmatprep.subr.mxu0 0.0
    %1038 = vmatpush1.xpose.msra.mxu0 %v524
    %1039 = vmatprep.mubr.f32.mxu0 0.0
    %1040 = vmatmul.mubr.f32.gmra.mrb[0].mxu0 %v143
    %v1041 = vpop.f32.mrb[0].mxu0
    %v1042 = vadd.f32 0.0, %v1041
    %v1043 = vpop.f32.mrb[0].mxu0
    %v1044 = vadd.f32 0.0, %v1043
    %1045 = vmatprep.mubr.f32.mxu0 0.0
    %1046 = vmatmul.mubr.f32.gmra.mrb[0].mxu0 %v146
    %v1047 = vpop.f32.mrb[0].mxu0
    %v1048 = vadd.f32 0.0, %v1047
    %v1049 = vpop.f32.mrb[0].mxu0
    %v1050 = vadd.f32 0.0, %v1049
    %1051 = vmatprep.mubr.f32.mxu0 0.0
    %1052 = vmatmul.mubr.f32.gmra.mrb[0].mxu0 %v149
    %v1053 = vpop.f32.mrb[0].mxu0
    %v1054 = vadd.f32 0.0, %v1053
    %v1055 = vpop.f32.mrb[0].mxu0
    %v1056 = vadd.f32 0.0, %v1055
    %1057 = vmatprep.mubr.f32.mxu0 0.0
    %1058 = vmatmul.mubr.f32.gmra.mrb[0].mxu0 %v152
    %v1059 = vpop.f32.mrb[0].mxu0
    %v1060 = vadd.f32 0.0, %v1059
    %v1061 = vpop.f32.mrb[0].mxu0
    %v1062 = vadd.f32 0.0, %v1061
    %1063 = vmatprep.mubr.f32.mxu0 0.0
    %1064 = vmatmul.mubr.f32.gmra.mrb[0].mxu0 %v155
    %v1065 = vpop.f32.mrb[0].mxu0
    %v1066 = vadd.f32 0.0, %v1065
    %v1067 = vpop.f32.mrb[0].mxu0
    %v1068 = vadd.f32 0.0, %v1067
    %1069 = vmatprep.mubr.f32.mxu0 0.0
    %1070 = vmatmul.mubr.f32.gmra.mrb[0].mxu0 %v158
    %v1071 = vpop.f32.mrb[0].mxu0
    %v1072 = vadd.f32 0.0, %v1071
    %v1073 = vpop.f32.mrb[0].mxu0
    %v1074 = vadd.f32 0.0, %v1073
    %1075 = vmatprep.mubr.f32.mxu0 0.0
    %1076 = vmatmul.mubr.f32.gmra.mrb[0].mxu0 %v161
    %v1077 = vpop.f32.mrb[0].mxu0
    %v1078 = vadd.f32 0.0, %v1077
    %v1079 = vpop.f32.mrb[0].mxu0
    %v1080 = vadd.f32 0.0, %v1079
    %1081 = vmatprep.mubr.f32.mxu0 0.0
    %1082 = vmatmul.mubr.f32.gmra.mrb[0].mxu0 %v164
    %v1083 = vpop.f32.mrb[0].mxu0
    %v1084 = vadd.f32 0.0, %v1083
    %v1085 = vpop.f32.mrb[0].mxu0
    %v1086 = vadd.f32 0.0, %v1085
    %1087 = vmatprep.mubr.f32.mxu0 0.0
    %1088 = vmatmul.mubr.f32.gmra.mrb[0].mxu0 %v167
    %v1089 = vpop.f32.mrb[0].mxu0
    %v1090 = vadd.f32 0.0, %v1089
    %v1091 = vpop.f32.mrb[0].mxu0
    %v1092 = vadd.f32 0.0, %v1091
    %1093 = vmatprep.mubr.f32.mxu0 0.0
    %1094 = vmatmul.mubr.f32.gmra.mrb[0].mxu0 %v170
    %v1095 = vpop.f32.mrb[0].mxu0
    %v1096 = vadd.f32 0.0, %v1095
    %v1097 = vpop.f32.mrb[0].mxu0
    %v1098 = vadd.f32 0.0, %v1097
    %1099 = vmatprep.mubr.f32.mxu0 0.0
    %1100 = vmatmul.mubr.f32.gmra.mrb[0].mxu0 %v173
    %v1101 = vpop.f32.mrb[0].mxu0
    %v1102 = vadd.f32 0.0, %v1101
    %v1103 = vpop.f32.mrb[0].mxu0
    %v1104 = vadd.f32 0.0, %v1103
    %1105 = vmatprep.mubr.f32.mxu0 0.0
    %1106 = vmatmul.mubr.f32.gmra.mrb[0].mxu0 %v176
    %v1107 = vpop.f32.mrb[0].mxu0
    %v1108 = vadd.f32 0.0, %v1107
    %v1109 = vpop.f32.mrb[0].mxu0
    %v1110 = vadd.f32 0.0, %v1109
    %1111 = vmatprep.mubr.f32.mxu0 0.0
    %1112 = vmatmul.mubr.f32.gmra.mrb[0].mxu0 %v179
    %v1113 = vpop.f32.mrb[0].mxu0
    %v1114 = vadd.f32 0.0, %v1113
    %v1115 = vpop.f32.mrb[0].mxu0
    %v1116 = vadd.f32 0.0, %v1115
    %1117 = vmatprep.mubr.f32.mxu0 0.0
    %1118 = vmatmul.mubr.f32.gmra.mrb[0].mxu0 %v182
    %v1119 = vpop.f32.mrb[0].mxu0
    %v1120 = vadd.f32 0.0, %v1119
    %v1121 = vpop.f32.mrb[0].mxu0
    %v1122 = vadd.f32 0.0, %v1121
    %1123 = vmatprep.mubr.f32.mxu0 0.0
    %1124 = vmatmul.mubr.f32.gmra.mrb[0].mxu0 %v185
    %v1125 = vpop.f32.mrb[0].mxu0
    %v1126 = vadd.f32 0.0, %v1125
    %v1127 = vpop.f32.mrb[0].mxu0
    %v1128 = vadd.f32 0.0, %v1127
    %1129 = vmatprep.mubr.f32.mxu0 0.0
    %1130 = vmatmul.mubr.f32.gmra.mrb[0].mxu0 %v188
    %v1131 = vpop.f32.mrb[0].mxu0
    %v1132 = vadd.f32 0.0, %v1131
    %v1133 = vpop.f32.mrb[0].mxu0
    %v1134 = vadd.f32 0.0, %v1133
    %1135 = vmatprep.mubr.f32.mxu0 0.0
    %1136 = vmatmul.mubr.f32.gmra.mrb[0].mxu0 %v191
    %v1137 = vpop.f32.mrb[0].mxu0
    %v1138 = vadd.f32 0.0, %v1137
    %v1139 = vpop.f32.mrb[0].mxu0
    %v1140 = vadd.f32 0.0, %v1139
    %1141 = vmatprep.mubr.f32.mxu0 0.0
    %1142 = vmatmul.mubr.f32.gmra.mrb[0].mxu0 %v194
    %v1143 = vpop.f32.mrb[0].mxu0
    %v1144 = vadd.f32 0.0, %v1143
    %v1145 = vpop.f32.mrb[0].mxu0
    %v1146 = vadd.f32 0.0, %v1145
    %1147 = vmatprep.mubr.f32.mxu0 0.0
    %1148 = vmatmul.mubr.f32.gmra.mrb[0].mxu0 %v197
    %v1149 = vpop.f32.mrb[0].mxu0
    %v1150 = vadd.f32 0.0, %v1149
    %v1151 = vpop.f32.mrb[0].mxu0
    %v1152 = vadd.f32 0.0, %v1151
    %1153 = vmatprep.mubr.f32.mxu0 0.0
    %1154 = vmatmul.mubr.f32.gmra.mrb[0].mxu0 %v200
    %v1155 = vpop.f32.mrb[0].mxu0
    %v1156 = vadd.f32 0.0, %v1155
    %v1157 = vpop.f32.mrb[0].mxu0
    %v1158 = vadd.f32 0.0, %v1157
    %1159 = vmatprep.mubr.f32.mxu0 0.0
    %1160 = vmatmul.mubr.f32.gmra.mrb[0].mxu0 %v203
    %v1161 = vpop.f32.mrb[0].mxu0
    %v1162 = vadd.f32 0.0, %v1161
    %v1163 = vpop.f32.mrb[0].mxu0
    %v1164 = vadd.f32 0.0, %v1163
    %1165 = vmatprep.mubr.f32.mxu0 0.0
    %1166 = vmatmul.mubr.f32.gmra.mrb[0].mxu0 %v206
    %v1167 = vpop.f32.mrb[0].mxu0
    %v1168 = vadd.f32 0.0, %v1167
    %v1169 = vpop.f32.mrb[0].mxu0
    %v1170 = vadd.f32 0.0, %v1169
    %1171 = vmatprep.mubr.f32.mxu0 0.0
    %1172 = vmatmul.mubr.f32.gmra.mrb[0].mxu0 %v209
    %v1173 = vpop.f32.mrb[0].mxu0
    %v1174 = vadd.f32 0.0, %v1173
    %v1175 = vpop.f32.mrb[0].mxu0
    %v1176 = vadd.f32 0.0, %v1175
    %1177 = vmatprep.mubr.f32.mxu0 0.0
    %1178 = vmatmul.mubr.f32.gmra.mrb[0].mxu0 %v212
    %v1179 = vpop.f32.mrb[0].mxu0
    %v1180 = vadd.f32 0.0, %v1179
    %v1181 = vpop.f32.mrb[0].mxu0
    %v1182 = vadd.f32 0.0, %v1181
    %1183 = vmatprep.mubr.f32.mxu0 0.0
    %1184 = vmatmul.mubr.f32.gmra.mrb[0].mxu0 %v215
    %v1185 = vpop.f32.mrb[0].mxu0
    %v1186 = vadd.f32 0.0, %v1185
    %v1187 = vpop.f32.mrb[0].mxu0
    %v1188 = vadd.f32 0.0, %v1187
    %1189 = vmatprep.mubr.f32.mxu0 0.0
    %1190 = vmatmul.mubr.f32.gmra.mrb[0].mxu0 %v218
    %v1191 = vpop.f32.mrb[0].mxu0
    %v1192 = vadd.f32 0.0, %v1191
    %v1193 = vpop.f32.mrb[0].mxu0
    %v1194 = vadd.f32 0.0, %v1193
    %1195 = vmatprep.mubr.f32.mxu0 0.0
    %1196 = vmatmul.mubr.f32.gmra.mrb[0].mxu0 %v221
    %v1197 = vpop.f32.mrb[0].mxu0
    %v1198 = vadd.f32 0.0, %v1197
    %v1199 = vpop.f32.mrb[0].mxu0
    %v1200 = vadd.f32 0.0, %v1199
    %1201 = vmatprep.mubr.f32.mxu0 0.0
    %1202 = vmatmul.mubr.f32.gmra.mrb[0].mxu0 %v224
    %v1203 = vpop.f32.mrb[0].mxu0
    %v1204 = vadd.f32 0.0, %v1203
    %v1205 = vpop.f32.mrb[0].mxu0
    %v1206 = vadd.f32 0.0, %v1205
    %1207 = vmatprep.mubr.f32.mxu0 0.0
    %1208 = vmatmul.mubr.f32.gmra.mrb[0].mxu0 %v227
    %v1209 = vpop.f32.mrb[0].mxu0
    %v1210 = vadd.f32 0.0, %v1209
    %v1211 = vpop.f32.mrb[0].mxu0
    %v1212 = vadd.f32 0.0, %v1211
    %1213 = vmatprep.mubr.f32.mxu0 0.0
    %1214 = vmatmul.mubr.f32.gmra.mrb[0].mxu0 %v230
    %v1215 = vpop.f32.mrb[0].mxu0
    %v1216 = vadd.f32 0.0, %v1215
    %v1217 = vpop.f32.mrb[0].mxu0
    %v1218 = vadd.f32 0.0, %v1217
    %1219 = vmatprep.mubr.f32.mxu0 0.0
    %1220 = vmatmul.mubr.f32.gmra.mrb[0].mxu0 %v233
    %v1221 = vpop.f32.mrb[0].mxu0
    %v1222 = vadd.f32 0.0, %v1221
    %v1223 = vpop.f32.mrb[0].mxu0
    %v1224 = vadd.f32 0.0, %v1223
    %1225 = vmatprep.mubr.f32.mxu0 0.0
    %1226 = vmatmul.mubr.f32.gmra.mrb[0].mxu0 %v236
    %v1227 = vpop.f32.mrb[0].mxu0
    %v1228 = vadd.f32 0.0, %v1227
    %v1229 = vpop.f32.mrb[0].mxu0
    %v1230 = vadd.f32 0.0, %v1229
    %1231 = vmatprep.mubr.f32.mxu0 0.0
    %1232 = vmatmul.mubr.f32.gmra.mrb[0].mxu0 %v239
    %v1233 = vpop.f32.mrb[0].mxu0
    %v1234 = vadd.f32 0.0, %v1233
    %v1235 = vpop.f32.mrb[0].mxu0
    %v1236 = vadd.f32 0.0, %v1235
    %1237 = vmatprep.mubr.f32.mxu0 0.0
    %1238 = vmatmul.mubr.f32.gmra.mrb[0].mxu0 %v242
    %v1239 = vpop.f32.mrb[0].mxu0
    %v1240 = vadd.f32 0.0, %v1239
    %v1241 = vpop.f32.mrb[0].mxu0
    %v1242 = vadd.f32 0.0, %v1241
    %1243 = vmatprep.mubr.f32.mxu0 0.0
    %1244 = vmatmul.mubr.f32.gmra.mrb[0].mxu0 %v245
    %v1245 = vpop.f32.mrb[0].mxu0
    %v1246 = vadd.f32 0.0, %v1245
    %v1247 = vpop.f32.mrb[0].mxu0
    %v1248 = vadd.f32 0.0, %v1247
    %1249 = vmatprep.mubr.f32.mxu0 0.0
    %1250 = vmatmul.mubr.f32.gmra.mrb[0].mxu0 %v248
    %v1251 = vpop.f32.mrb[0].mxu0
    %v1252 = vadd.f32 0.0, %v1251
    %v1253 = vpop.f32.mrb[0].mxu0
    %v1254 = vadd.f32 0.0, %v1253
    %1255 = vmatprep.mubr.f32.mxu0 0.0
    %1256 = vmatmul.mubr.f32.gmra.mrb[0].mxu0 %v251
    %v1257 = vpop.f32.mrb[0].mxu0
    %v1258 = vadd.f32 0.0, %v1257
    %v1259 = vpop.f32.mrb[0].mxu0
    %v1260 = vadd.f32 0.0, %v1259
    %1261 = vmatprep.mubr.f32.mxu0 0.0
    %1262 = vmatmul.mubr.f32.gmra.mrb[0].mxu0 %v254
    %v1263 = vpop.f32.mrb[0].mxu0
    %v1264 = vadd.f32 0.0, %v1263
    %v1265 = vpop.f32.mrb[0].mxu0
    %v1266 = vadd.f32 0.0, %v1265
    %1267 = vmatprep.mubr.f32.mxu0 0.0
    %1268 = vmatmul.mubr.f32.gmra.mrb[0].mxu0 %v257
    %v1269 = vpop.f32.mrb[0].mxu0
    %v1270 = vadd.f32 0.0, %v1269
    %v1271 = vpop.f32.mrb[0].mxu0
    %v1272 = vadd.f32 0.0, %v1271
    %1273 = vmatprep.mubr.f32.mxu0 0.0
    %1274 = vmatmul.mubr.f32.gmra.mrb[0].mxu0 %v260
    %v1275 = vpop.f32.mrb[0].mxu0
    %v1276 = vadd.f32 0.0, %v1275
    %v1277 = vpop.f32.mrb[0].mxu0
    %v1278 = vadd.f32 0.0, %v1277
    %1279 = vmatprep.mubr.f32.mxu0 0.0
    %1280 = vmatmul.mubr.f32.gmra.mrb[0].mxu0 %v263
    %v1281 = vpop.f32.mrb[0].mxu0
    %v1282 = vadd.f32 0.0, %v1281
    %v1283 = vpop.f32.mrb[0].mxu0
    %v1284 = vadd.f32 0.0, %v1283
    %1285 = vmatprep.mubr.f32.mxu0 0.0
    %1286 = vmatmul.mubr.f32.gmra.mrb[0].mxu0 %v266
    %v1287 = vpop.f32.mrb[0].mxu0
    %v1288 = vadd.f32 0.0, %v1287
    %v1289 = vpop.f32.mrb[0].mxu0
    %v1290 = vadd.f32 0.0, %v1289
    %1291 = vmatprep.mubr.f32.mxu0 0.0
    %1292 = vmatmul.mubr.f32.gmra.mrb[0].mxu0 %v269
    %v1293 = vpop.f32.mrb[0].mxu0
    %v1294 = vadd.f32 0.0, %v1293
    %v1295 = vpop.f32.mrb[0].mxu0
    %v1296 = vadd.f32 0.0, %v1295
    %1297 = vmatprep.mubr.f32.mxu0 0.0
    %1298 = vmatmul.mubr.f32.gmra.mrb[0].mxu0 %v272
    %v1299 = vpop.f32.mrb[0].mxu0
    %v1300 = vadd.f32 0.0, %v1299
    %v1301 = vpop.f32.mrb[0].mxu0
    %v1302 = vadd.f32 0.0, %v1301
    %1303 = vmatprep.mubr.f32.mxu0 0.0
    %1304 = vmatmul.mubr.f32.gmra.mrb[0].mxu0 %v275
    %v1305 = vpop.f32.mrb[0].mxu0
    %v1306 = vadd.f32 0.0, %v1305
    %v1307 = vpop.f32.mrb[0].mxu0
    %v1308 = vadd.f32 0.0, %v1307
    %1309 = vmatprep.mubr.f32.mxu0 0.0
    %1310 = vmatmul.mubr.f32.gmra.mrb[0].mxu0 %v278
    %v1311 = vpop.f32.mrb[0].mxu0
    %v1312 = vadd.f32 0.0, %v1311
    %v1313 = vpop.f32.mrb[0].mxu0
    %v1314 = vadd.f32 0.0, %v1313
    %1315 = vmatprep.mubr.f32.mxu0 0.0
    %1316 = vmatmul.mubr.f32.gmra.mrb[0].mxu0 %v281
    %v1317 = vpop.f32.mrb[0].mxu0
    %v1318 = vadd.f32 0.0, %v1317
    %v1319 = vpop.f32.mrb[0].mxu0
    %v1320 = vadd.f32 0.0, %v1319
    %1321 = vmatprep.mubr.f32.mxu0 0.0
    %1322 = vmatmul.mubr.f32.gmra.mrb[0].mxu0 %v284
    %v1323 = vpop.f32.mrb[0].mxu0
    %v1324 = vadd.f32 0.0, %v1323
    %v1325 = vpop.f32.mrb[0].mxu0
    %v1326 = vadd.f32 0.0, %v1325
    %1327 = vmatprep.mubr.f32.mxu0 0.0
    %1328 = vmatmul.mubr.f32.gmra.mrb[0].mxu0 %v287
    %v1329 = vpop.f32.mrb[0].mxu0
    %v1330 = vadd.f32 0.0, %v1329
    %v1331 = vpop.f32.mrb[0].mxu0
    %v1332 = vadd.f32 0.0, %v1331
    %1333 = vmatprep.mubr.f32.mxu0 0.0
    %1334 = vmatmul.mubr.f32.gmra.mrb[0].mxu0 %v290
    %v1335 = vpop.f32.mrb[0].mxu0
    %v1336 = vadd.f32 0.0, %v1335
    %v1337 = vpop.f32.mrb[0].mxu0
    %v1338 = vadd.f32 0.0, %v1337
    %1339 = vmatprep.mubr.f32.mxu0 0.0
    %1340 = vmatmul.mubr.f32.gmra.mrb[0].mxu0 %v293
    %v1341 = vpop.f32.mrb[0].mxu0
    %v1342 = vadd.f32 0.0, %v1341
    %v1343 = vpop.f32.mrb[0].mxu0
    %v1344 = vadd.f32 0.0, %v1343
    %1345 = vmatprep.mubr.f32.mxu0 0.0
    %1346 = vmatmul.mubr.f32.gmra.mrb[0].mxu0 %v296
    %v1347 = vpop.f32.mrb[0].mxu0
    %v1348 = vadd.f32 0.0, %v1347
    %v1349 = vpop.f32.mrb[0].mxu0
    %v1350 = vadd.f32 0.0, %v1349
    %1351 = vmatprep.mubr.f32.mxu0 0.0
    %1352 = vmatmul.mubr.f32.gmra.mrb[0].mxu0 %v299
    %v1353 = vpop.f32.mrb[0].mxu0
    %v1354 = vadd.f32 0.0, %v1353
    %v1355 = vpop.f32.mrb[0].mxu0
    %v1356 = vadd.f32 0.0, %v1355
    %1357 = vmatprep.mubr.f32.mxu0 0.0
    %1358 = vmatmul.mubr.f32.gmra.mrb[0].mxu0 %v302
    %v1359 = vpop.f32.mrb[0].mxu0
    %v1360 = vadd.f32 0.0, %v1359
    %v1361 = vpop.f32.mrb[0].mxu0
    %v1362 = vadd.f32 0.0, %v1361
    %1363 = vmatprep.mubr.f32.mxu0 0.0
    %1364 = vmatmul.mubr.f32.gmra.mrb[0].mxu0 %v305
    %v1365 = vpop.f32.mrb[0].mxu0
    %v1366 = vadd.f32 0.0, %v1365
    %v1367 = vpop.f32.mrb[0].mxu0
    %v1368 = vadd.f32 0.0, %v1367
    %1369 = vmatprep.mubr.f32.mxu0 0.0
    %1370 = vmatmul.mubr.f32.gmra.mrb[0].mxu0 %v308
    %v1371 = vpop.f32.mrb[0].mxu0
    %v1372 = vadd.f32 0.0, %v1371
    %v1373 = vpop.f32.mrb[0].mxu0
    %v1374 = vadd.f32 0.0, %v1373
    %1375 = vmatprep.mubr.f32.mxu0 0.0
    %1376 = vmatmul.mubr.f32.gmra.mrb[0].mxu0 %v311
    %v1377 = vpop.f32.mrb[0].mxu0
    %v1378 = vadd.f32 0.0, %v1377
    %v1379 = vpop.f32.mrb[0].mxu0
    %v1380 = vadd.f32 0.0, %v1379
    %1381 = vmatprep.mubr.f32.mxu0 0.0
    %1382 = vmatmul.mubr.f32.gmra.mrb[0].mxu0 %v314
    %v1383 = vpop.f32.mrb[0].mxu0
    %v1384 = vadd.f32 0.0, %v1383
    %v1385 = vpop.f32.mrb[0].mxu0
    %v1386 = vadd.f32 0.0, %v1385
    %1387 = vmatprep.mubr.f32.mxu0 0.0
    %1388 = vmatmul.mubr.f32.gmra.mrb[0].mxu0 %v317
    %v1389 = vpop.f32.mrb[0].mxu0
    %v1390 = vadd.f32 0.0, %v1389
    %v1391 = vpop.f32.mrb[0].mxu0
    %v1392 = vadd.f32 0.0, %v1391
    %1393 = vmatprep.mubr.f32.mxu0 0.0
    %1394 = vmatmul.mubr.f32.gmra.mrb[0].mxu0 %v320
    %v1395 = vpop.f32.mrb[0].mxu0
    %v1396 = vadd.f32 0.0, %v1395
    %v1397 = vpop.f32.mrb[0].mxu0
    %v1398 = vadd.f32 0.0, %v1397
    %1399 = vmatprep.mubr.f32.mxu0 0.0
    %1400 = vmatmul.mubr.f32.gmra.mrb[0].mxu0 %v323
    %v1401 = vpop.f32.mrb[0].mxu0
    %v1402 = vadd.f32 0.0, %v1401
    %v1403 = vpop.f32.mrb[0].mxu0
    %v1404 = vadd.f32 0.0, %v1403
    %1405 = vmatprep.mubr.f32.mxu0 0.0
    %1406 = vmatmul.mubr.f32.gmra.mrb[0].mxu0 %v326
    %v1407 = vpop.f32.mrb[0].mxu0
    %v1408 = vadd.f32 0.0, %v1407
    %v1409 = vpop.f32.mrb[0].mxu0
    %v1410 = vadd.f32 0.0, %v1409
    %1411 = vmatprep.mubr.f32.mxu0 0.0
    %1412 = vmatmul.mubr.f32.gmra.mrb[0].mxu0 %v329
    %v1413 = vpop.f32.mrb[0].mxu0
    %v1414 = vadd.f32 0.0, %v1413
    %v1415 = vpop.f32.mrb[0].mxu0
    %v1416 = vadd.f32 0.0, %v1415
    %1417 = vmatprep.mubr.f32.mxu0 0.0
    %1418 = vmatmul.mubr.f32.gmra.mrb[0].mxu0 %v332
    %v1419 = vpop.f32.mrb[0].mxu0
    %v1420 = vadd.f32 0.0, %v1419
    %v1421 = vpop.f32.mrb[0].mxu0
    %v1422 = vadd.f32 0.0, %v1421
    %1423 = vdwg.mxu0
    %v1424 = vxor.u32 %v593, 2147483648
    %v1425 = vxor.u32 %v595, 2147483648
    %v1426 = vxor.u32 %v1042, 2147483648
    %v1427 = vxor.u32 %v1044, 2147483648
    %v1428 = vxor.u32 %v599, 2147483648
    %v1429 = vxor.u32 %v601, 2147483648
    %v1430 = vxor.u32 %v1048, 2147483648
    %v1431 = vxor.u32 %v1050, 2147483648
    %v1432 = vxor.u32 %v605, 2147483648
    %v1433 = vxor.u32 %v607, 2147483648
    %v1434 = vxor.u32 %v1054, 2147483648
    %v1435 = vxor.u32 %v1056, 2147483648
    %v1436 = vxor.u32 %v611, 2147483648
    %v1437 = vxor.u32 %v613, 2147483648
    %v1438 = vxor.u32 %v1060, 2147483648
    %v1439 = vxor.u32 %v1062, 2147483648
    %v1440 = vxor.u32 %v617, 2147483648
    %v1441 = vxor.u32 %v619, 2147483648
    %v1442 = vxor.u32 %v1066, 2147483648
    %v1443 = vxor.u32 %v1068, 2147483648
    %v1444 = vxor.u32 %v623, 2147483648
    %v1445 = vxor.u32 %v625, 2147483648
    %v1446 = vxor.u32 %v1072, 2147483648
    %v1447 = vxor.u32 %v1074, 2147483648
    %v1448 = vxor.u32 %v629, 2147483648
    %v1449 = vxor.u32 %v631, 2147483648
    %v1450 = vxor.u32 %v1078, 2147483648
    %v1451 = vxor.u32 %v1080, 2147483648
    %v1452 = vxor.u32 %v635, 2147483648
    %v1453 = vxor.u32 %v637, 2147483648
    %v1454 = vxor.u32 %v1084, 2147483648
    %v1455 = vxor.u32 %v1086, 2147483648
    %v1456 = vxor.u32 %v641, 2147483648
    %v1457 = vxor.u32 %v643, 2147483648
    %v1458 = vxor.u32 %v1090, 2147483648
    %v1459 = vxor.u32 %v1092, 2147483648
    %v1460 = vxor.u32 %v647, 2147483648
    %v1461 = vxor.u32 %v649, 2147483648
    %v1462 = vxor.u32 %v1096, 2147483648
    %v1463 = vxor.u32 %v1098, 2147483648
    %v1464 = vxor.u32 %v653, 2147483648
    %v1465 = vxor.u32 %v655, 2147483648
    %v1466 = vxor.u32 %v1102, 2147483648
    %v1467 = vxor.u32 %v1104, 2147483648
    %v1468 = vxor.u32 %v659, 2147483648
    %v1469 = vxor.u32 %v661, 2147483648
    %v1470 = vxor.u32 %v1108, 2147483648
    %v1471 = vxor.u32 %v1110, 2147483648
    %v1472 = vxor.u32 %v665, 2147483648
    %v1473 = vxor.u32 %v667, 2147483648
    %v1474 = vxor.u32 %v1114, 2147483648
    %v1475 = vxor.u32 %v1116, 2147483648
    %v1476 = vxor.u32 %v671, 2147483648
    %v1477 = vxor.u32 %v673, 2147483648
    %v1478 = vxor.u32 %v1120, 2147483648
    %v1479 = vxor.u32 %v1122, 2147483648
    %v1480 = vxor.u32 %v677, 2147483648
    %v1481 = vxor.u32 %v679, 2147483648
    %v1482 = vxor.u32 %v1126, 2147483648
    %v1483 = vxor.u32 %v1128, 2147483648
    %v1484 = vxor.u32 %v683, 2147483648
    %v1485 = vxor.u32 %v685, 2147483648
    %v1486 = vxor.u32 %v1132, 2147483648
    %v1487 = vxor.u32 %v1134, 2147483648
    %v1488 = vxor.u32 %v689, 2147483648
    %v1489 = vxor.u32 %v691, 2147483648
    %v1490 = vxor.u32 %v1138, 2147483648
    %v1491 = vxor.u32 %v1140, 2147483648
    %v1492 = vxor.u32 %v695, 2147483648
    %v1493 = vxor.u32 %v697, 2147483648
    %v1494 = vxor.u32 %v1144, 2147483648
    %v1495 = vxor.u32 %v1146, 2147483648
    %v1496 = vxor.u32 %v701, 2147483648
    %v1497 = vxor.u32 %v703, 2147483648
    %v1498 = vxor.u32 %v1150, 2147483648
    %v1499 = vxor.u32 %v1152, 2147483648
    %v1500 = vxor.u32 %v707, 2147483648
    %v1501 = vxor.u32 %v709, 2147483648
    %v1502 = vxor.u32 %v1156, 2147483648
    %v1503 = vxor.u32 %v1158, 2147483648
    %v1504 = vxor.u32 %v713, 2147483648
    %v1505 = vxor.u32 %v715, 2147483648
    %v1506 = vxor.u32 %v1162, 2147483648
    %v1507 = vxor.u32 %v1164, 2147483648
    %v1508 = vxor.u32 %v719, 2147483648
    %v1509 = vxor.u32 %v721, 2147483648
    %v1510 = vxor.u32 %v1168, 2147483648
    %v1511 = vxor.u32 %v1170, 2147483648
    %v1512 = vxor.u32 %v725, 2147483648
    %v1513 = vxor.u32 %v727, 2147483648
    %v1514 = vxor.u32 %v1174, 2147483648
    %v1515 = vxor.u32 %v1176, 2147483648
    %v1516 = vxor.u32 %v731, 2147483648
    %v1517 = vxor.u32 %v733, 2147483648
    %v1518 = vxor.u32 %v1180, 2147483648
    %v1519 = vxor.u32 %v1182, 2147483648
    %v1520 = vxor.u32 %v737, 2147483648
    %v1521 = vxor.u32 %v739, 2147483648
    %v1522 = vxor.u32 %v1186, 2147483648
    %v1523 = vxor.u32 %v1188, 2147483648
    %v1524 = vxor.u32 %v743, 2147483648
    %v1525 = vxor.u32 %v745, 2147483648
    %v1526 = vxor.u32 %v1192, 2147483648
    %v1527 = vxor.u32 %v1194, 2147483648
    %v1528 = vxor.u32 %v749, 2147483648
    %v1529 = vxor.u32 %v751, 2147483648
    %v1530 = vxor.u32 %v1198, 2147483648
    %v1531 = vxor.u32 %v1200, 2147483648
    %v1532 = vxor.u32 %v755, 2147483648
    %v1533 = vxor.u32 %v757, 2147483648
    %v1534 = vxor.u32 %v1204, 2147483648
    %v1535 = vxor.u32 %v1206, 2147483648
    %v1536 = vxor.u32 %v761, 2147483648
    %v1537 = vxor.u32 %v763, 2147483648
    %v1538 = vxor.u32 %v1210, 2147483648
    %v1539 = vxor.u32 %v1212, 2147483648
    %v1540 = vxor.u32 %v767, 2147483648
    %v1541 = vxor.u32 %v769, 2147483648
    %v1542 = vxor.u32 %v1216, 2147483648
    %v1543 = vxor.u32 %v1218, 2147483648
    %v1544 = vxor.u32 %v773, 2147483648
    %v1545 = vxor.u32 %v775, 2147483648
    %v1546 = vxor.u32 %v1222, 2147483648
    %v1547 = vxor.u32 %v1224, 2147483648
    %v1548 = vxor.u32 %v779, 2147483648
    %v1549 = vxor.u32 %v781, 2147483648
    %v1550 = vxor.u32 %v1228, 2147483648
    %v1551 = vxor.u32 %v1230, 2147483648
    %v1552 = vxor.u32 %v785, 2147483648
    %v1553 = vxor.u32 %v787, 2147483648
    %v1554 = vxor.u32 %v1234, 2147483648
    %v1555 = vxor.u32 %v1236, 2147483648
    %v1556 = vxor.u32 %v791, 2147483648
    %v1557 = vxor.u32 %v793, 2147483648
    %v1558 = vxor.u32 %v1240, 2147483648
    %v1559 = vxor.u32 %v1242, 2147483648
    %v1560 = vxor.u32 %v797, 2147483648
    %v1561 = vxor.u32 %v799, 2147483648
    %v1562 = vxor.u32 %v1246, 2147483648
    %v1563 = vxor.u32 %v1248, 2147483648
    %v1564 = vxor.u32 %v803, 2147483648
    %v1565 = vxor.u32 %v805, 2147483648
    %v1566 = vxor.u32 %v1252, 2147483648
    %v1567 = vxor.u32 %v1254, 2147483648
    %v1568 = vxor.u32 %v809, 2147483648
    %v1569 = vxor.u32 %v811, 2147483648
    %v1570 = vxor.u32 %v1258, 2147483648
    %v1571 = vxor.u32 %v1260, 2147483648
    %v1572 = vxor.u32 %v815, 2147483648
    %v1573 = vxor.u32 %v817, 2147483648
    %v1574 = vxor.u32 %v1264, 2147483648
    %v1575 = vxor.u32 %v1266, 2147483648
    %v1576 = vxor.u32 %v821, 2147483648
    %v1577 = vxor.u32 %v823, 2147483648
    %v1578 = vxor.u32 %v1270, 2147483648
    %v1579 = vxor.u32 %v1272, 2147483648
    %v1580 = vxor.u32 %v827, 2147483648
    %v1581 = vxor.u32 %v829, 2147483648
    %v1582 = vxor.u32 %v1276, 2147483648
    %v1583 = vxor.u32 %v1278, 2147483648
    %v1584 = vxor.u32 %v833, 2147483648
    %v1585 = vxor.u32 %v835, 2147483648
    %v1586 = vxor.u32 %v1282, 2147483648
    %v1587 = vxor.u32 %v1284, 2147483648
    %v1588 = vxor.u32 %v839, 2147483648
    %v1589 = vxor.u32 %v841, 2147483648
    %v1590 = vxor.u32 %v1288, 2147483648
    %v1591 = vxor.u32 %v1290, 2147483648
    %v1592 = vxor.u32 %v845, 2147483648
    %v1593 = vxor.u32 %v847, 2147483648
    %v1594 = vxor.u32 %v1294, 2147483648
    %v1595 = vxor.u32 %v1296, 2147483648
    %v1596 = vxor.u32 %v851, 2147483648
    %v1597 = vxor.u32 %v853, 2147483648
    %v1598 = vxor.u32 %v1300, 2147483648
    %v1599 = vxor.u32 %v1302, 2147483648
    %v1600 = vxor.u32 %v857, 2147483648
    %v1601 = vxor.u32 %v859, 2147483648
    %v1602 = vxor.u32 %v1306, 2147483648
    %v1603 = vxor.u32 %v1308, 2147483648
    %v1604 = vxor.u32 %v863, 2147483648
    %v1605 = vxor.u32 %v865, 2147483648
    %v1606 = vxor.u32 %v1312, 2147483648
    %v1607 = vxor.u32 %v1314, 2147483648
    %v1608 = vxor.u32 %v869, 2147483648
    %v1609 = vxor.u32 %v871, 2147483648
    %v1610 = vxor.u32 %v1318, 2147483648
    %v1611 = vxor.u32 %v1320, 2147483648
    %v1612 = vxor.u32 %v875, 2147483648
    %v1613 = vxor.u32 %v877, 2147483648
    %v1614 = vxor.u32 %v1324, 2147483648
    %v1615 = vxor.u32 %v1326, 2147483648
    %v1616 = vxor.u32 %v881, 2147483648
    %v1617 = vxor.u32 %v883, 2147483648
    %v1618 = vxor.u32 %v1330, 2147483648
    %v1619 = vxor.u32 %v1332, 2147483648
    %v1620 = vxor.u32 %v887, 2147483648
    %v1621 = vxor.u32 %v889, 2147483648
    %v1622 = vxor.u32 %v1336, 2147483648
    %v1623 = vxor.u32 %v1338, 2147483648
    %v1624 = vxor.u32 %v893, 2147483648
    %v1625 = vxor.u32 %v895, 2147483648
    %v1626 = vxor.u32 %v1342, 2147483648
    %v1627 = vxor.u32 %v1344, 2147483648
    %v1628 = vxor.u32 %v899, 2147483648
    %v1629 = vxor.u32 %v901, 2147483648
    %v1630 = vxor.u32 %v1348, 2147483648
    %v1631 = vxor.u32 %v1350, 2147483648
    %v1632 = vxor.u32 %v905, 2147483648
    %v1633 = vxor.u32 %v907, 2147483648
    %v1634 = vxor.u32 %v1354, 2147483648
    %v1635 = vxor.u32 %v1356, 2147483648
    %v1636 = vxor.u32 %v911, 2147483648
    %v1637 = vxor.u32 %v913, 2147483648
    %v1638 = vxor.u32 %v1360, 2147483648
    %v1639 = vxor.u32 %v1362, 2147483648
    %v1640 = vxor.u32 %v917, 2147483648
    %v1641 = vxor.u32 %v919, 2147483648
    %v1642 = vxor.u32 %v1366, 2147483648
    %v1643 = vxor.u32 %v1368, 2147483648
    %v1644 = vxor.u32 %v923, 2147483648
    %v1645 = vxor.u32 %v925, 2147483648
    %v1646 = vxor.u32 %v1372, 2147483648
    %v1647 = vxor.u32 %v1374, 2147483648
    %v1648 = vxor.u32 %v929, 2147483648
    %v1649 = vxor.u32 %v931, 2147483648
    %v1650 = vxor.u32 %v1378, 2147483648
    %v1651 = vxor.u32 %v1380, 2147483648
    %v1652 = vxor.u32 %v935, 2147483648
    %v1653 = vxor.u32 %v937, 2147483648
    %v1654 = vxor.u32 %v1384, 2147483648
    %v1655 = vxor.u32 %v1386, 2147483648
    %v1656 = vxor.u32 %v941, 2147483648
    %v1657 = vxor.u32 %v943, 2147483648
    %v1658 = vxor.u32 %v1390, 2147483648
    %v1659 = vxor.u32 %v1392, 2147483648
    %v1660 = vxor.u32 %v947, 2147483648
    %v1661 = vxor.u32 %v949, 2147483648
    %v1662 = vxor.u32 %v1396, 2147483648
    %v1663 = vxor.u32 %v1398, 2147483648
    %v1664 = vxor.u32 %v953, 2147483648
    %v1665 = vxor.u32 %v955, 2147483648
    %v1666 = vxor.u32 %v1402, 2147483648
    %v1667 = vxor.u32 %v1404, 2147483648
    %v1668 = vxor.u32 %v959, 2147483648
    %v1669 = vxor.u32 %v961, 2147483648
    %v1670 = vxor.u32 %v1408, 2147483648
    %v1671 = vxor.u32 %v1410, 2147483648
    %v1672 = vxor.u32 %v965, 2147483648
    %v1673 = vxor.u32 %v967, 2147483648
    %v1674 = vxor.u32 %v1414, 2147483648
    %v1675 = vxor.u32 %v1416, 2147483648
    %v1676 = vxor.u32 %v971, 2147483648
    %v1677 = vxor.u32 %v973, 2147483648
    %v1678 = vxor.u32 %v1420, 2147483648
    %v1679 = vxor.u32 %v1422, 2147483648
    %v1680 = vmul.f32 %v1424, 1.442695
    %v1681 = vpow.pop %v1680
    %v1682 = vmul.f32 %v1425, 1.442695
    %v1683 = vpow.pop %v1682
    %v1684 = vmul.f32 %v1426, 1.442695
    %v1685 = vpow.pop %v1684
    %v1686 = vmul.f32 %v1427, 1.442695
    %v1687 = vpow.pop %v1686
    %v1688 = vmul.f32 %v1428, 1.442695
    %v1689 = vpow.pop %v1688
    %v1690 = vmul.f32 %v1429, 1.442695
    %v1691 = vpow.pop %v1690
    %v1692 = vmul.f32 %v1430, 1.442695
    %v1693 = vpow.pop %v1692
    %v1694 = vmul.f32 %v1431, 1.442695
    %v1695 = vpow.pop %v1694
    %v1696 = vmul.f32 %v1432, 1.442695
    %v1697 = vpow.pop %v1696
    %v1698 = vmul.f32 %v1433, 1.442695
    %v1699 = vpow.pop %v1698
    %v1700 = vmul.f32 %v1434, 1.442695
    %v1701 = vpow.pop %v1700
    %v1702 = vmul.f32 %v1435, 1.442695
    %v1703 = vpow.pop %v1702
    %v1704 = vmul.f32 %v1436, 1.442695
    %v1705 = vpow.pop %v1704
    %v1706 = vmul.f32 %v1437, 1.442695
    %v1707 = vpow.pop %v1706
    %v1708 = vmul.f32 %v1438, 1.442695
    %v1709 = vpow.pop %v1708
    %v1710 = vmul.f32 %v1439, 1.442695
    %v1711 = vpow.pop %v1710
    %v1712 = vmul.f32 %v1440, 1.442695
    %v1713 = vpow.pop %v1712
    %v1714 = vmul.f32 %v1441, 1.442695
    %v1715 = vpow.pop %v1714
    %v1716 = vmul.f32 %v1442, 1.442695
    %v1717 = vpow.pop %v1716
    %v1718 = vmul.f32 %v1443, 1.442695
    %v1719 = vpow.pop %v1718
    %v1720 = vmul.f32 %v1444, 1.442695
    %v1721 = vpow.pop %v1720
    %v1722 = vmul.f32 %v1445, 1.442695
    %v1723 = vpow.pop %v1722
    %v1724 = vmul.f32 %v1446, 1.442695
    %v1725 = vpow.pop %v1724
    %v1726 = vmul.f32 %v1447, 1.442695
    %v1727 = vpow.pop %v1726
    %v1728 = vmul.f32 %v1448, 1.442695
    %v1729 = vpow.pop %v1728
    %v1730 = vmul.f32 %v1449, 1.442695
    %v1731 = vpow.pop %v1730
    %v1732 = vmul.f32 %v1450, 1.442695
    %v1733 = vpow.pop %v1732
    %v1734 = vmul.f32 %v1451, 1.442695
    %v1735 = vpow.pop %v1734
    %v1736 = vmul.f32 %v1452, 1.442695
    %v1737 = vpow.pop %v1736
    %v1738 = vmul.f32 %v1453, 1.442695
    %v1739 = vpow.pop %v1738
    %v1740 = vmul.f32 %v1454, 1.442695
    %v1741 = vpow.pop %v1740
    %v1742 = vmul.f32 %v1455, 1.442695
    %v1743 = vpow.pop %v1742
    %v1744 = vmul.f32 %v1456, 1.442695
    %v1745 = vpow.pop %v1744
    %v1746 = vmul.f32 %v1457, 1.442695
    %v1747 = vpow.pop %v1746
    %v1748 = vmul.f32 %v1458, 1.442695
    %v1749 = vpow.pop %v1748
    %v1750 = vmul.f32 %v1459, 1.442695
    %v1751 = vpow.pop %v1750
    %v1752 = vmul.f32 %v1460, 1.442695
    %v1753 = vpow.pop %v1752
    %v1754 = vmul.f32 %v1461, 1.442695
    %v1755 = vpow.pop %v1754
    %v1756 = vmul.f32 %v1462, 1.442695
    %v1757 = vpow.pop %v1756
    %v1758 = vmul.f32 %v1463, 1.442695
    %v1759 = vpow.pop %v1758
    %v1760 = vmul.f32 %v1464, 1.442695
    %v1761 = vpow.pop %v1760
    %v1762 = vmul.f32 %v1465, 1.442695
    %v1763 = vpow.pop %v1762
    %v1764 = vmul.f32 %v1466, 1.442695
    %v1765 = vpow.pop %v1764
    %v1766 = vmul.f32 %v1467, 1.442695
    %v1767 = vpow.pop %v1766
    %v1768 = vmul.f32 %v1468, 1.442695
    %v1769 = vpow.pop %v1768
    %v1770 = vmul.f32 %v1469, 1.442695
    %v1771 = vpow.pop %v1770
    %v1772 = vmul.f32 %v1470, 1.442695
    %v1773 = vpow.pop %v1772
    %v1774 = vmul.f32 %v1471, 1.442695
    %v1775 = vpow.pop %v1774
    %v1776 = vmul.f32 %v1472, 1.442695
    %v1777 = vpow.pop %v1776
    %v1778 = vmul.f32 %v1473, 1.442695
    %v1779 = vpow.pop %v1778
    %v1780 = vmul.f32 %v1474, 1.442695
    %v1781 = vpow.pop %v1780
    %v1782 = vmul.f32 %v1475, 1.442695
    %v1783 = vpow.pop %v1782
    %v1784 = vmul.f32 %v1476, 1.442695
    %v1785 = vpow.pop %v1784
    %v1786 = vmul.f32 %v1477, 1.442695
    %v1787 = vpow.pop %v1786
    %v1788 = vmul.f32 %v1478, 1.442695
    %v1789 = vpow.pop %v1788
    %v1790 = vmul.f32 %v1479, 1.442695
    %v1791 = vpow.pop %v1790
    %v1792 = vmul.f32 %v1480, 1.442695
    %v1793 = vpow.pop %v1792
    %v1794 = vmul.f32 %v1481, 1.442695
    %v1795 = vpow.pop %v1794
    %v1796 = vmul.f32 %v1482, 1.442695
    %v1797 = vpow.pop %v1796
    %v1798 = vmul.f32 %v1483, 1.442695
    %v1799 = vpow.pop %v1798
    %v1800 = vmul.f32 %v1484, 1.442695
    %v1801 = vpow.pop %v1800
    %v1802 = vmul.f32 %v1485, 1.442695
    %v1803 = vpow.pop %v1802
    %v1804 = vmul.f32 %v1486, 1.442695
    %v1805 = vpow.pop %v1804
    %v1806 = vmul.f32 %v1487, 1.442695
    %v1807 = vpow.pop %v1806
    %v1808 = vmul.f32 %v1488, 1.442695
    %v1809 = vpow.pop %v1808
    %v1810 = vmul.f32 %v1489, 1.442695
    %v1811 = vpow.pop %v1810
    %v1812 = vmul.f32 %v1490, 1.442695
    %v1813 = vpow.pop %v1812
    %v1814 = vmul.f32 %v1491, 1.442695
    %v1815 = vpow.pop %v1814
    %v1816 = vmul.f32 %v1492, 1.442695
    %v1817 = vpow.pop %v1816
    %v1818 = vmul.f32 %v1493, 1.442695
    %v1819 = vpow.pop %v1818
    %v1820 = vmul.f32 %v1494, 1.442695
    %v1821 = vpow.pop %v1820
    %v1822 = vmul.f32 %v1495, 1.442695
    %v1823 = vpow.pop %v1822
    %v1824 = vmul.f32 %v1496, 1.442695
    %v1825 = vpow.pop %v1824
    %v1826 = vmul.f32 %v1497, 1.442695
    %v1827 = vpow.pop %v1826
    %v1828 = vmul.f32 %v1498, 1.442695
    %v1829 = vpow.pop %v1828
    %v1830 = vmul.f32 %v1499, 1.442695
    %v1831 = vpow.pop %v1830
    %v1832 = vmul.f32 %v1500, 1.442695
    %v1833 = vpow.pop %v1832
    %v1834 = vmul.f32 %v1501, 1.442695
    %v1835 = vpow.pop %v1834
    %v1836 = vmul.f32 %v1502, 1.442695
    %v1837 = vpow.pop %v1836
    %v1838 = vmul.f32 %v1503, 1.442695
    %v1839 = vpow.pop %v1838
    %v1840 = vmul.f32 %v1504, 1.442695
    %v1841 = vpow.pop %v1840
    %v1842 = vmul.f32 %v1505, 1.442695
    %v1843 = vpow.pop %v1842
    %v1844 = vmul.f32 %v1506, 1.442695
    %v1845 = vpow.pop %v1844
    %v1846 = vmul.f32 %v1507, 1.442695
    %v1847 = vpow.pop %v1846
    %v1848 = vmul.f32 %v1508, 1.442695
    %v1849 = vpow.pop %v1848
    %v1850 = vmul.f32 %v1509, 1.442695
    %v1851 = vpow.pop %v1850
    %v1852 = vmul.f32 %v1510, 1.442695
    %v1853 = vpow.pop %v1852
    %v1854 = vmul.f32 %v1511, 1.442695
    %v1855 = vpow.pop %v1854
    %v1856 = vmul.f32 %v1512, 1.442695
    %v1857 = vpow.pop %v1856
    %v1858 = vmul.f32 %v1513, 1.442695
    %v1859 = vpow.pop %v1858
    %v1860 = vmul.f32 %v1514, 1.442695
    %v1861 = vpow.pop %v1860
    %v1862 = vmul.f32 %v1515, 1.442695
    %v1863 = vpow.pop %v1862
    %v1864 = vmul.f32 %v1516, 1.442695
    %v1865 = vpow.pop %v1864
    %v1866 = vmul.f32 %v1517, 1.442695
    %v1867 = vpow.pop %v1866
    %v1868 = vmul.f32 %v1518, 1.442695
    %v1869 = vpow.pop %v1868
    %v1870 = vmul.f32 %v1519, 1.442695
    %v1871 = vpow.pop %v1870
    %v1872 = vmul.f32 %v1520, 1.442695
    %v1873 = vpow.pop %v1872
    %v1874 = vmul.f32 %v1521, 1.442695
    %v1875 = vpow.pop %v1874
    %v1876 = vmul.f32 %v1522, 1.442695
    %v1877 = vpow.pop %v1876
    %v1878 = vmul.f32 %v1523, 1.442695
    %v1879 = vpow.pop %v1878
    %v1880 = vmul.f32 %v1524, 1.442695
    %v1881 = vpow.pop %v1880
    %v1882 = vmul.f32 %v1525, 1.442695
    %v1883 = vpow.pop %v1882
    %v1884 = vmul.f32 %v1526, 1.442695
    %v1885 = vpow.pop %v1884
    %v1886 = vmul.f32 %v1527, 1.442695
    %v1887 = vpow.pop %v1886
    %v1888 = vmul.f32 %v1528, 1.442695
    %v1889 = vpow.pop %v1888
    %v1890 = vmul.f32 %v1529, 1.442695
    %v1891 = vpow.pop %v1890
    %v1892 = vmul.f32 %v1530, 1.442695
    %v1893 = vpow.pop %v1892
    %v1894 = vmul.f32 %v1531, 1.442695
    %v1895 = vpow.pop %v1894
    %v1896 = vmul.f32 %v1532, 1.442695
    %v1897 = vpow.pop %v1896
    %v1898 = vmul.f32 %v1533, 1.442695
    %v1899 = vpow.pop %v1898
    %v1900 = vmul.f32 %v1534, 1.442695
    %v1901 = vpow.pop %v1900
    %v1902 = vmul.f32 %v1535, 1.442695
    %v1903 = vpow.pop %v1902
    %v1904 = vmul.f32 %v1536, 1.442695
    %v1905 = vpow.pop %v1904
    %v1906 = vmul.f32 %v1537, 1.442695
    %v1907 = vpow.pop %v1906
    %v1908 = vmul.f32 %v1538, 1.442695
    %v1909 = vpow.pop %v1908
    %v1910 = vmul.f32 %v1539, 1.442695
    %v1911 = vpow.pop %v1910
    %v1912 = vmul.f32 %v1540, 1.442695
    %v1913 = vpow.pop %v1912
    %v1914 = vmul.f32 %v1541, 1.442695
    %v1915 = vpow.pop %v1914
    %v1916 = vmul.f32 %v1542, 1.442695
    %v1917 = vpow.pop %v1916
    %v1918 = vmul.f32 %v1543, 1.442695
    %v1919 = vpow.pop %v1918
    %v1920 = vmul.f32 %v1544, 1.442695
    %v1921 = vpow.pop %v1920
    %v1922 = vmul.f32 %v1545, 1.442695
    %v1923 = vpow.pop %v1922
    %v1924 = vmul.f32 %v1546, 1.442695
    %v1925 = vpow.pop %v1924
    %v1926 = vmul.f32 %v1547, 1.442695
    %v1927 = vpow.pop %v1926
    %v1928 = vmul.f32 %v1548, 1.442695
    %v1929 = vpow.pop %v1928
    %v1930 = vmul.f32 %v1549, 1.442695
    %v1931 = vpow.pop %v1930
    %v1932 = vmul.f32 %v1550, 1.442695
    %v1933 = vpow.pop %v1932
    %v1934 = vmul.f32 %v1551, 1.442695
    %v1935 = vpow.pop %v1934
    %v1936 = vmul.f32 %v1552, 1.442695
    %v1937 = vpow.pop %v1936
    %v1938 = vmul.f32 %v1553, 1.442695
    %v1939 = vpow.pop %v1938
    %v1940 = vmul.f32 %v1554, 1.442695
    %v1941 = vpow.pop %v1940
    %v1942 = vmul.f32 %v1555, 1.442695
    %v1943 = vpow.pop %v1942
    %v1944 = vmul.f32 %v1556, 1.442695
    %v1945 = vpow.pop %v1944
    %v1946 = vmul.f32 %v1557, 1.442695
    %v1947 = vpow.pop %v1946
    %v1948 = vmul.f32 %v1558, 1.442695
    %v1949 = vpow.pop %v1948
    %v1950 = vmul.f32 %v1559, 1.442695
    %v1951 = vpow.pop %v1950
    %v1952 = vmul.f32 %v1560, 1.442695
    %v1953 = vpow.pop %v1952
    %v1954 = vmul.f32 %v1561, 1.442695
    %v1955 = vpow.pop %v1954
    %v1956 = vmul.f32 %v1562, 1.442695
    %v1957 = vpow.pop %v1956
    %v1958 = vmul.f32 %v1563, 1.442695
    %v1959 = vpow.pop %v1958
    %v1960 = vmul.f32 %v1564, 1.442695
    %v1961 = vpow.pop %v1960
    %v1962 = vmul.f32 %v1565, 1.442695
    %v1963 = vpow.pop %v1962
    %v1964 = vmul.f32 %v1566, 1.442695
    %v1965 = vpow.pop %v1964
    %v1966 = vmul.f32 %v1567, 1.442695
    %v1967 = vpow.pop %v1966
    %v1968 = vmul.f32 %v1568, 1.442695
    %v1969 = vpow.pop %v1968
    %v1970 = vmul.f32 %v1569, 1.442695
    %v1971 = vpow.pop %v1970
    %v1972 = vmul.f32 %v1570, 1.442695
    %v1973 = vpow.pop %v1972
    %v1974 = vmul.f32 %v1571, 1.442695
    %v1975 = vpow.pop %v1974
    %v1976 = vmul.f32 %v1572, 1.442695
    %v1977 = vpow.pop %v1976
    %v1978 = vmul.f32 %v1573, 1.442695
    %v1979 = vpow.pop %v1978
    %v1980 = vmul.f32 %v1574, 1.442695
    %v1981 = vpow.pop %v1980
    %v1982 = vmul.f32 %v1575, 1.442695
    %v1983 = vpow.pop %v1982
    %v1984 = vmul.f32 %v1576, 1.442695
    %v1985 = vpow.pop %v1984
    %v1986 = vmul.f32 %v1577, 1.442695
    %v1987 = vpow.pop %v1986
    %v1988 = vmul.f32 %v1578, 1.442695
    %v1989 = vpow.pop %v1988
    %v1990 = vmul.f32 %v1579, 1.442695
    %v1991 = vpow.pop %v1990
    %v1992 = vmul.f32 %v1580, 1.442695
    %v1993 = vpow.pop %v1992
    %v1994 = vmul.f32 %v1581, 1.442695
    %v1995 = vpow.pop %v1994
    %v1996 = vmul.f32 %v1582, 1.442695
    %v1997 = vpow.pop %v1996
    %v1998 = vmul.f32 %v1583, 1.442695
    %v1999 = vpow.pop %v1998
    %v2000 = vmul.f32 %v1584, 1.442695
    %v2001 = vpow.pop %v2000
    %v2002 = vmul.f32 %v1585, 1.442695
    %v2003 = vpow.pop %v2002
    %v2004 = vmul.f32 %v1586, 1.442695
    %v2005 = vpow.pop %v2004
    %v2006 = vmul.f32 %v1587, 1.442695
    %v2007 = vpow.pop %v2006
    %v2008 = vmul.f32 %v1588, 1.442695
    %v2009 = vpow.pop %v2008
    %v2010 = vmul.f32 %v1589, 1.442695
    %v2011 = vpow.pop %v2010
    %v2012 = vmul.f32 %v1590, 1.442695
    %v2013 = vpow.pop %v2012
    %v2014 = vmul.f32 %v1591, 1.442695
    %v2015 = vpow.pop %v2014
    %v2016 = vmul.f32 %v1592, 1.442695
    %v2017 = vpow.pop %v2016
    %v2018 = vmul.f32 %v1593, 1.442695
    %v2019 = vpow.pop %v2018
    %v2020 = vmul.f32 %v1594, 1.442695
    %v2021 = vpow.pop %v2020
    %v2022 = vmul.f32 %v1595, 1.442695
    %v2023 = vpow.pop %v2022
    %v2024 = vmul.f32 %v1596, 1.442695
    %v2025 = vpow.pop %v2024
    %v2026 = vmul.f32 %v1597, 1.442695
    %v2027 = vpow.pop %v2026
    %v2028 = vmul.f32 %v1598, 1.442695
    %v2029 = vpow.pop %v2028
    %v2030 = vmul.f32 %v1599, 1.442695
    %v2031 = vpow.pop %v2030
    %v2032 = vmul.f32 %v1600, 1.442695
    %v2033 = vpow.pop %v2032
    %v2034 = vmul.f32 %v1601, 1.442695
    %v2035 = vpow.pop %v2034
    %v2036 = vmul.f32 %v1602, 1.442695
    %v2037 = vpow.pop %v2036
    %v2038 = vmul.f32 %v1603, 1.442695
    %v2039 = vpow.pop %v2038
    %v2040 = vmul.f32 %v1604, 1.442695
    %v2041 = vpow.pop %v2040
    %v2042 = vmul.f32 %v1605, 1.442695
    %v2043 = vpow.pop %v2042
    %v2044 = vmul.f32 %v1606, 1.442695
    %v2045 = vpow.pop %v2044
    %v2046 = vmul.f32 %v1607, 1.442695
    %v2047 = vpow.pop %v2046
    %v2048 = vmul.f32 %v1608, 1.442695
    %v2049 = vpow.pop %v2048
    %v2050 = vmul.f32 %v1609, 1.442695
    %v2051 = vpow.pop %v2050
    %v2052 = vmul.f32 %v1610, 1.442695
    %v2053 = vpow.pop %v2052
    %v2054 = vmul.f32 %v1611, 1.442695
    %v2055 = vpow.pop %v2054
    %v2056 = vmul.f32 %v1612, 1.442695
    %v2057 = vpow.pop %v2056
    %v2058 = vmul.f32 %v1613, 1.442695
    %v2059 = vpow.pop %v2058
    %v2060 = vmul.f32 %v1614, 1.442695
    %v2061 = vpow.pop %v2060
    %v2062 = vmul.f32 %v1615, 1.442695
    %v2063 = vpow.pop %v2062
    %v2064 = vmul.f32 %v1616, 1.442695
    %v2065 = vpow.pop %v2064
    %v2066 = vmul.f32 %v1617, 1.442695
    %v2067 = vpow.pop %v2066
    %v2068 = vmul.f32 %v1618, 1.442695
    %v2069 = vpow.pop %v2068
    %v2070 = vmul.f32 %v1619, 1.442695
    %v2071 = vpow.pop %v2070
    %v2072 = vmul.f32 %v1620, 1.442695
    %v2073 = vpow.pop %v2072
    %v2074 = vmul.f32 %v1621, 1.442695
    %v2075 = vpow.pop %v2074
    %v2076 = vmul.f32 %v1622, 1.442695
    %v2077 = vpow.pop %v2076
    %v2078 = vmul.f32 %v1623, 1.442695
    %v2079 = vpow.pop %v2078
    %v2080 = vmul.f32 %v1624, 1.442695
    %v2081 = vpow.pop %v2080
    %v2082 = vmul.f32 %v1625, 1.442695
    %v2083 = vpow.pop %v2082
    %v2084 = vmul.f32 %v1626, 1.442695
    %v2085 = vpow.pop %v2084
    %v2086 = vmul.f32 %v1627, 1.442695
    %v2087 = vpow.pop %v2086
    %v2088 = vmul.f32 %v1628, 1.442695
    %v2089 = vpow.pop %v2088
    %v2090 = vmul.f32 %v1629, 1.442695
    %v2091 = vpow.pop %v2090
    %v2092 = vmul.f32 %v1630, 1.442695
    %v2093 = vpow.pop %v2092
    %v2094 = vmul.f32 %v1631, 1.442695
    %v2095 = vpow.pop %v2094
    %v2096 = vmul.f32 %v1632, 1.442695
    %v2097 = vpow.pop %v2096
    %v2098 = vmul.f32 %v1633, 1.442695
    %v2099 = vpow.pop %v2098
    %v2100 = vmul.f32 %v1634, 1.442695
    %v2101 = vpow.pop %v2100
    %v2102 = vmul.f32 %v1635, 1.442695
    %v2103 = vpow.pop %v2102
    %v2104 = vmul.f32 %v1636, 1.442695
    %v2105 = vpow.pop %v2104
    %v2106 = vmul.f32 %v1637, 1.442695
    %v2107 = vpow.pop %v2106
    %v2108 = vmul.f32 %v1638, 1.442695
    %v2109 = vpow.pop %v2108
    %v2110 = vmul.f32 %v1639, 1.442695
    %v2111 = vpow.pop %v2110
    %v2112 = vmul.f32 %v1640, 1.442695
    %v2113 = vpow.pop %v2112
    %v2114 = vmul.f32 %v1641, 1.442695
    %v2115 = vpow.pop %v2114
    %v2116 = vmul.f32 %v1642, 1.442695
    %v2117 = vpow.pop %v2116
    %v2118 = vmul.f32 %v1643, 1.442695
    %v2119 = vpow.pop %v2118
    %v2120 = vmul.f32 %v1644, 1.442695
    %v2121 = vpow.pop %v2120
    %v2122 = vmul.f32 %v1645, 1.442695
    %v2123 = vpow.pop %v2122
    %v2124 = vmul.f32 %v1646, 1.442695
    %v2125 = vpow.pop %v2124
    %v2126 = vmul.f32 %v1647, 1.442695
    %v2127 = vpow.pop %v2126
    %v2128 = vmul.f32 %v1648, 1.442695
    %v2129 = vpow.pop %v2128
    %v2130 = vmul.f32 %v1649, 1.442695
    %v2131 = vpow.pop %v2130
    %v2132 = vmul.f32 %v1650, 1.442695
    %v2133 = vpow.pop %v2132
    %v2134 = vmul.f32 %v1651, 1.442695
    %v2135 = vpow.pop %v2134
    %v2136 = vmul.f32 %v1652, 1.442695
    %v2137 = vpow.pop %v2136
    %v2138 = vmul.f32 %v1653, 1.442695
    %v2139 = vpow.pop %v2138
    %v2140 = vmul.f32 %v1654, 1.442695
    %v2141 = vpow.pop %v2140
    %v2142 = vmul.f32 %v1655, 1.442695
    %v2143 = vpow.pop %v2142
    %v2144 = vmul.f32 %v1656, 1.442695
    %v2145 = vpow.pop %v2144
    %v2146 = vmul.f32 %v1657, 1.442695
    %v2147 = vpow.pop %v2146
    %v2148 = vmul.f32 %v1658, 1.442695
    %v2149 = vpow.pop %v2148
    %v2150 = vmul.f32 %v1659, 1.442695
    %v2151 = vpow.pop %v2150
    %v2152 = vmul.f32 %v1660, 1.442695
    %v2153 = vpow.pop %v2152
    %v2154 = vmul.f32 %v1661, 1.442695
    %v2155 = vpow.pop %v2154
    %v2156 = vmul.f32 %v1662, 1.442695
    %v2157 = vpow.pop %v2156
    %v2158 = vmul.f32 %v1663, 1.442695
    %v2159 = vpow.pop %v2158
    %v2160 = vmul.f32 %v1664, 1.442695
    %v2161 = vpow.pop %v2160
    %v2162 = vmul.f32 %v1665, 1.442695
    %v2163 = vpow.pop %v2162
    %v2164 = vmul.f32 %v1666, 1.442695
    %v2165 = vpow.pop %v2164
    %v2166 = vmul.f32 %v1667, 1.442695
    %v2167 = vpow.pop %v2166
    %v2168 = vmul.f32 %v1668, 1.442695
    %v2169 = vpow.pop %v2168
    %v2170 = vmul.f32 %v1669, 1.442695
    %v2171 = vpow.pop %v2170
    %v2172 = vmul.f32 %v1670, 1.442695
    %v2173 = vpow.pop %v2172
    %v2174 = vmul.f32 %v1671, 1.442695
    %v2175 = vpow.pop %v2174
    %v2176 = vmul.f32 %v1672, 1.442695
    %v2177 = vpow.pop %v2176
    %v2178 = vmul.f32 %v1673, 1.442695
    %v2179 = vpow.pop %v2178
    %v2180 = vmul.f32 %v1674, 1.442695
    %v2181 = vpow.pop %v2180
    %v2182 = vmul.f32 %v1675, 1.442695
    %v2183 = vpow.pop %v2182
    %v2184 = vmul.f32 %v1676, 1.442695
    %v2185 = vpow.pop %v2184
    %v2186 = vmul.f32 %v1677, 1.442695
    %v2187 = vpow.pop %v2186
    %v2188 = vmul.f32 %v1678, 1.442695
    %v2189 = vpow.pop %v2188
    %v2190 = vmul.f32 %v1679, 1.442695
    %v2191 = vpow.pop %v2190
    %v2192 = vadd.f32 %v1681, 1.0
    %v2193 = vadd.f32 %v1683, 1.0
    %v2194 = vadd.f32 %v1685, 1.0
    %v2195 = vadd.f32 %v1687, 1.0
    %v2196 = vadd.f32 %v1689, 1.0
    %v2197 = vadd.f32 %v1691, 1.0
    %v2198 = vadd.f32 %v1693, 1.0
    %v2199 = vadd.f32 %v1695, 1.0
    %v2200 = vadd.f32 %v1697, 1.0
    %v2201 = vadd.f32 %v1699, 1.0
    %v2202 = vadd.f32 %v1701, 1.0
    %v2203 = vadd.f32 %v1703, 1.0
    %v2204 = vadd.f32 %v1705, 1.0
    %v2205 = vadd.f32 %v1707, 1.0
    %v2206 = vadd.f32 %v1709, 1.0
    %v2207 = vadd.f32 %v1711, 1.0
    %v2208 = vadd.f32 %v1713, 1.0
    %v2209 = vadd.f32 %v1715, 1.0
    %v2210 = vadd.f32 %v1717, 1.0
    %v2211 = vadd.f32 %v1719, 1.0
    %v2212 = vadd.f32 %v1721, 1.0
    %v2213 = vadd.f32 %v1723, 1.0
    %v2214 = vadd.f32 %v1725, 1.0
    %v2215 = vadd.f32 %v1727, 1.0
    %v2216 = vadd.f32 %v1729, 1.0
    %v2217 = vadd.f32 %v1731, 1.0
    %v2218 = vadd.f32 %v1733, 1.0
    %v2219 = vadd.f32 %v1735, 1.0
    %v2220 = vadd.f32 %v1737, 1.0
    %v2221 = vadd.f32 %v1739, 1.0
    %v2222 = vadd.f32 %v1741, 1.0
    %v2223 = vadd.f32 %v1743, 1.0
    %v2224 = vadd.f32 %v1745, 1.0
    %v2225 = vadd.f32 %v1747, 1.0
    %v2226 = vadd.f32 %v1749, 1.0
    %v2227 = vadd.f32 %v1751, 1.0
    %v2228 = vadd.f32 %v1753, 1.0
    %v2229 = vadd.f32 %v1755, 1.0
    %v2230 = vadd.f32 %v1757, 1.0
    %v2231 = vadd.f32 %v1759, 1.0
    %v2232 = vadd.f32 %v1761, 1.0
    %v2233 = vadd.f32 %v1763, 1.0
    %v2234 = vadd.f32 %v1765, 1.0
    %v2235 = vadd.f32 %v1767, 1.0
    %v2236 = vadd.f32 %v1769, 1.0
    %v2237 = vadd.f32 %v1771, 1.0
    %v2238 = vadd.f32 %v1773, 1.0
    %v2239 = vadd.f32 %v1775, 1.0
    %v2240 = vadd.f32 %v1777, 1.0
    %v2241 = vadd.f32 %v1779, 1.0
    %v2242 = vadd.f32 %v1781, 1.0
    %v2243 = vadd.f32 %v1783, 1.0
    %v2244 = vadd.f32 %v1785, 1.0
    %v2245 = vadd.f32 %v1787, 1.0
    %v2246 = vadd.f32 %v1789, 1.0
    %v2247 = vadd.f32 %v1791, 1.0
    %v2248 = vadd.f32 %v1793, 1.0
    %v2249 = vadd.f32 %v1795, 1.0
    %v2250 = vadd.f32 %v1797, 1.0
    %v2251 = vadd.f32 %v1799, 1.0
    %v2252 = vadd.f32 %v1801, 1.0
    %v2253 = vadd.f32 %v1803, 1.0
    %v2254 = vadd.f32 %v1805, 1.0
    %v2255 = vadd.f32 %v1807, 1.0
    %v2256 = vadd.f32 %v1809, 1.0
    %v2257 = vadd.f32 %v1811, 1.0
    %v2258 = vadd.f32 %v1813, 1.0
    %v2259 = vadd.f32 %v1815, 1.0
    %v2260 = vadd.f32 %v1817, 1.0
    %v2261 = vadd.f32 %v1819, 1.0
    %v2262 = vadd.f32 %v1821, 1.0
    %v2263 = vadd.f32 %v1823, 1.0
    %v2264 = vadd.f32 %v1825, 1.0
    %v2265 = vadd.f32 %v1827, 1.0
    %v2266 = vadd.f32 %v1829, 1.0
    %v2267 = vadd.f32 %v1831, 1.0
    %v2268 = vadd.f32 %v1833, 1.0
    %v2269 = vadd.f32 %v1835, 1.0
    %v2270 = vadd.f32 %v1837, 1.0
    %v2271 = vadd.f32 %v1839, 1.0
    %v2272 = vadd.f32 %v1841, 1.0
    %v2273 = vadd.f32 %v1843, 1.0
    %v2274 = vadd.f32 %v1845, 1.0
    %v2275 = vadd.f32 %v1847, 1.0
    %v2276 = vadd.f32 %v1849, 1.0
    %v2277 = vadd.f32 %v1851, 1.0
    %v2278 = vadd.f32 %v1853, 1.0
    %v2279 = vadd.f32 %v1855, 1.0
    %v2280 = vadd.f32 %v1857, 1.0
    %v2281 = vadd.f32 %v1859, 1.0
    %v2282 = vadd.f32 %v1861, 1.0
    %v2283 = vadd.f32 %v1863, 1.0
    %v2284 = vadd.f32 %v1865, 1.0
    %v2285 = vadd.f32 %v1867, 1.0
    %v2286 = vadd.f32 %v1869, 1.0
    %v2287 = vadd.f32 %v1871, 1.0
    %v2288 = vadd.f32 %v1873, 1.0
    %v2289 = vadd.f32 %v1875, 1.0
    %v2290 = vadd.f32 %v1877, 1.0
    %v2291 = vadd.f32 %v1879, 1.0
    %v2292 = vadd.f32 %v1881, 1.0
    %v2293 = vadd.f32 %v1883, 1.0
    %v2294 = vadd.f32 %v1885, 1.0
    %v2295 = vadd.f32 %v1887, 1.0
    %v2296 = vadd.f32 %v1889, 1.0
    %v2297 = vadd.f32 %v1891, 1.0
    %v2298 = vadd.f32 %v1893, 1.0
    %v2299 = vadd.f32 %v1895, 1.0
    %v2300 = vadd.f32 %v1897, 1.0
    %v2301 = vadd.f32 %v1899, 1.0
    %v2302 = vadd.f32 %v1901, 1.0
    %v2303 = vadd.f32 %v1903, 1.0
    %v2304 = vadd.f32 %v1905, 1.0
    %v2305 = vadd.f32 %v1907, 1.0
    %v2306 = vadd.f32 %v1909, 1.0
    %v2307 = vadd.f32 %v1911, 1.0
    %v2308 = vadd.f32 %v1913, 1.0
    %v2309 = vadd.f32 %v1915, 1.0
    %v2310 = vadd.f32 %v1917, 1.0
    %v2311 = vadd.f32 %v1919, 1.0
    %v2312 = vadd.f32 %v1921, 1.0
    %v2313 = vadd.f32 %v1923, 1.0
    %v2314 = vadd.f32 %v1925, 1.0
    %v2315 = vadd.f32 %v1927, 1.0
    %v2316 = vadd.f32 %v1929, 1.0
    %v2317 = vadd.f32 %v1931, 1.0
    %v2318 = vadd.f32 %v1933, 1.0
    %v2319 = vadd.f32 %v1935, 1.0
    %v2320 = vadd.f32 %v1937, 1.0
    %v2321 = vadd.f32 %v1939, 1.0
    %v2322 = vadd.f32 %v1941, 1.0
    %v2323 = vadd.f32 %v1943, 1.0
    %v2324 = vadd.f32 %v1945, 1.0
    %v2325 = vadd.f32 %v1947, 1.0
    %v2326 = vadd.f32 %v1949, 1.0
    %v2327 = vadd.f32 %v1951, 1.0
    %v2328 = vadd.f32 %v1953, 1.0
    %v2329 = vadd.f32 %v1955, 1.0
    %v2330 = vadd.f32 %v1957, 1.0
    %v2331 = vadd.f32 %v1959, 1.0
    %v2332 = vadd.f32 %v1961, 1.0
    %v2333 = vadd.f32 %v1963, 1.0
    %v2334 = vadd.f32 %v1965, 1.0
    %v2335 = vadd.f32 %v1967, 1.0
    %v2336 = vadd.f32 %v1969, 1.0
    %v2337 = vadd.f32 %v1971, 1.0
    %v2338 = vadd.f32 %v1973, 1.0
    %v2339 = vadd.f32 %v1975, 1.0
    %v2340 = vadd.f32 %v1977, 1.0
    %v2341 = vadd.f32 %v1979, 1.0
    %v2342 = vadd.f32 %v1981, 1.0
    %v2343 = vadd.f32 %v1983, 1.0
    %v2344 = vadd.f32 %v1985, 1.0
    %v2345 = vadd.f32 %v1987, 1.0
    %v2346 = vadd.f32 %v1989, 1.0
    %v2347 = vadd.f32 %v1991, 1.0
    %v2348 = vadd.f32 %v1993, 1.0
    %v2349 = vadd.f32 %v1995, 1.0
    %v2350 = vadd.f32 %v1997, 1.0
    %v2351 = vadd.f32 %v1999, 1.0
    %v2352 = vadd.f32 %v2001, 1.0
    %v2353 = vadd.f32 %v2003, 1.0
    %v2354 = vadd.f32 %v2005, 1.0
    %v2355 = vadd.f32 %v2007, 1.0
    %v2356 = vadd.f32 %v2009, 1.0
    %v2357 = vadd.f32 %v2011, 1.0
    %v2358 = vadd.f32 %v2013, 1.0
    %v2359 = vadd.f32 %v2015, 1.0
    %v2360 = vadd.f32 %v2017, 1.0
    %v2361 = vadd.f32 %v2019, 1.0
    %v2362 = vadd.f32 %v2021, 1.0
    %v2363 = vadd.f32 %v2023, 1.0
    %v2364 = vadd.f32 %v2025, 1.0
    %v2365 = vadd.f32 %v2027, 1.0
    %v2366 = vadd.f32 %v2029, 1.0
    %v2367 = vadd.f32 %v2031, 1.0
    %v2368 = vadd.f32 %v2033, 1.0
    %v2369 = vadd.f32 %v2035, 1.0
    %v2370 = vadd.f32 %v2037, 1.0
    %v2371 = vadd.f32 %v2039, 1.0
    %v2372 = vadd.f32 %v2041, 1.0
    %v2373 = vadd.f32 %v2043, 1.0
    %v2374 = vadd.f32 %v2045, 1.0
    %v2375 = vadd.f32 %v2047, 1.0
    %v2376 = vadd.f32 %v2049, 1.0
    %v2377 = vadd.f32 %v2051, 1.0
    %v2378 = vadd.f32 %v2053, 1.0
    %v2379 = vadd.f32 %v2055, 1.0
    %v2380 = vadd.f32 %v2057, 1.0
    %v2381 = vadd.f32 %v2059, 1.0
    %v2382 = vadd.f32 %v2061, 1.0
    %v2383 = vadd.f32 %v2063, 1.0
    %v2384 = vadd.f32 %v2065, 1.0
    %v2385 = vadd.f32 %v2067, 1.0
    %v2386 = vadd.f32 %v2069, 1.0
    %v2387 = vadd.f32 %v2071, 1.0
    %v2388 = vadd.f32 %v2073, 1.0
    %v2389 = vadd.f32 %v2075, 1.0
    %v2390 = vadd.f32 %v2077, 1.0
    %v2391 = vadd.f32 %v2079, 1.0
    %v2392 = vadd.f32 %v2081, 1.0
    %v2393 = vadd.f32 %v2083, 1.0
    %v2394 = vadd.f32 %v2085, 1.0
    %v2395 = vadd.f32 %v2087, 1.0
    %v2396 = vadd.f32 %v2089, 1.0
    %v2397 = vadd.f32 %v2091, 1.0
    %v2398 = vadd.f32 %v2093, 1.0
    %v2399 = vadd.f32 %v2095, 1.0
    %v2400 = vadd.f32 %v2097, 1.0
    %v2401 = vadd.f32 %v2099, 1.0
    %v2402 = vadd.f32 %v2101, 1.0
    %v2403 = vadd.f32 %v2103, 1.0
    %v2404 = vadd.f32 %v2105, 1.0
    %v2405 = vadd.f32 %v2107, 1.0
    %v2406 = vadd.f32 %v2109, 1.0
    %v2407 = vadd.f32 %v2111, 1.0
    %v2408 = vadd.f32 %v2113, 1.0
    %v2409 = vadd.f32 %v2115, 1.0
    %v2410 = vadd.f32 %v2117, 1.0
    %v2411 = vadd.f32 %v2119, 1.0
    %v2412 = vadd.f32 %v2121, 1.0
    %v2413 = vadd.f32 %v2123, 1.0
    %v2414 = vadd.f32 %v2125, 1.0
    %v2415 = vadd.f32 %v2127, 1.0
    %v2416 = vadd.f32 %v2129, 1.0
    %v2417 = vadd.f32 %v2131, 1.0
    %v2418 = vadd.f32 %v2133, 1.0
    %v2419 = vadd.f32 %v2135, 1.0
    %v2420 = vadd.f32 %v2137, 1.0
    %v2421 = vadd.f32 %v2139, 1.0
    %v2422 = vadd.f32 %v2141, 1.0
    %v2423 = vadd.f32 %v2143, 1.0
    %v2424 = vadd.f32 %v2145, 1.0
    %v2425 = vadd.f32 %v2147, 1.0
    %v2426 = vadd.f32 %v2149, 1.0
    %v2427 = vadd.f32 %v2151, 1.0
    %v2428 = vadd.f32 %v2153, 1.0
    %v2429 = vadd.f32 %v2155, 1.0
    %v2430 = vadd.f32 %v2157, 1.0
    %v2431 = vadd.f32 %v2159, 1.0
    %v2432 = vadd.f32 %v2161, 1.0
    %v2433 = vadd.f32 %v2163, 1.0
    %v2434 = vadd.f32 %v2165, 1.0
    %v2435 = vadd.f32 %v2167, 1.0
    %v2436 = vadd.f32 %v2169, 1.0
    %v2437 = vadd.f32 %v2171, 1.0
    %v2438 = vadd.f32 %v2173, 1.0
    %v2439 = vadd.f32 %v2175, 1.0
    %v2440 = vadd.f32 %v2177, 1.0
    %v2441 = vadd.f32 %v2179, 1.0
    %v2442 = vadd.f32 %v2181, 1.0
    %v2443 = vadd.f32 %v2183, 1.0
    %v2444 = vadd.f32 %v2185, 1.0
    %v2445 = vadd.f32 %v2187, 1.0
    %v2446 = vadd.f32 %v2189, 1.0
    %v2447 = vadd.f32 %v2191, 1.0
    %v2448 = vrcp.pop %v2192
    %v2449 = vmul.f32 1.0, %v2448
    %v2450 = vrcp.pop %v2193
    %v2451 = vmul.f32 1.0, %v2450
    %v2452 = vrcp.pop %v2194
    %v2453 = vmul.f32 1.0, %v2452
    %v2454 = vrcp.pop %v2195
    %v2455 = vmul.f32 1.0, %v2454
    %v2456 = vrcp.pop %v2196
    %v2457 = vmul.f32 1.0, %v2456
    %v2458 = vrcp.pop %v2197
    %v2459 = vmul.f32 1.0, %v2458
    %v2460 = vrcp.pop %v2198
    %v2461 = vmul.f32 1.0, %v2460
    %v2462 = vrcp.pop %v2199
    %v2463 = vmul.f32 1.0, %v2462
    %v2464 = vrcp.pop %v2200
    %v2465 = vmul.f32 1.0, %v2464
    %v2466 = vrcp.pop %v2201
    %v2467 = vmul.f32 1.0, %v2466
    %v2468 = vrcp.pop %v2202
    %v2469 = vmul.f32 1.0, %v2468
    %v2470 = vrcp.pop %v2203
    %v2471 = vmul.f32 1.0, %v2470
    %v2472 = vrcp.pop %v2204
    %v2473 = vmul.f32 1.0, %v2472
    %v2474 = vrcp.pop %v2205
    %v2475 = vmul.f32 1.0, %v2474
    %v2476 = vrcp.pop %v2206
    %v2477 = vmul.f32 1.0, %v2476
    %v2478 = vrcp.pop %v2207
    %v2479 = vmul.f32 1.0, %v2478
    %v2480 = vrcp.pop %v2208
    %v2481 = vmul.f32 1.0, %v2480
    %v2482 = vrcp.pop %v2209
    %v2483 = vmul.f32 1.0, %v2482
    %v2484 = vrcp.pop %v2210
    %v2485 = vmul.f32 1.0, %v2484
    %v2486 = vrcp.pop %v2211
    %v2487 = vmul.f32 1.0, %v2486
    %v2488 = vrcp.pop %v2212
    %v2489 = vmul.f32 1.0, %v2488
    %v2490 = vrcp.pop %v2213
    %v2491 = vmul.f32 1.0, %v2490
    %v2492 = vrcp.pop %v2214
    %v2493 = vmul.f32 1.0, %v2492
    %v2494 = vrcp.pop %v2215
    %v2495 = vmul.f32 1.0, %v2494
    %v2496 = vrcp.pop %v2216
    %v2497 = vmul.f32 1.0, %v2496
    %v2498 = vrcp.pop %v2217
    %v2499 = vmul.f32 1.0, %v2498
    %v2500 = vrcp.pop %v2218
    %v2501 = vmul.f32 1.0, %v2500
    %v2502 = vrcp.pop %v2219
    %v2503 = vmul.f32 1.0, %v2502
    %v2504 = vrcp.pop %v2220
    %v2505 = vmul.f32 1.0, %v2504
    %v2506 = vrcp.pop %v2221
    %v2507 = vmul.f32 1.0, %v2506
    %v2508 = vrcp.pop %v2222
    %v2509 = vmul.f32 1.0, %v2508
    %v2510 = vrcp.pop %v2223
    %v2511 = vmul.f32 1.0, %v2510
    %v2512 = vrcp.pop %v2224
    %v2513 = vmul.f32 1.0, %v2512
    %v2514 = vrcp.pop %v2225
    %v2515 = vmul.f32 1.0, %v2514
    %v2516 = vrcp.pop %v2226
    %v2517 = vmul.f32 1.0, %v2516
    %v2518 = vrcp.pop %v2227
    %v2519 = vmul.f32 1.0, %v2518
    %v2520 = vrcp.pop %v2228
    %v2521 = vmul.f32 1.0, %v2520
    %v2522 = vrcp.pop %v2229
    %v2523 = vmul.f32 1.0, %v2522
    %v2524 = vrcp.pop %v2230
    %v2525 = vmul.f32 1.0, %v2524
    %v2526 = vrcp.pop %v2231
    %v2527 = vmul.f32 1.0, %v2526
    %v2528 = vrcp.pop %v2232
    %v2529 = vmul.f32 1.0, %v2528
    %v2530 = vrcp.pop %v2233
    %v2531 = vmul.f32 1.0, %v2530
    %v2532 = vrcp.pop %v2234
    %v2533 = vmul.f32 1.0, %v2532
    %v2534 = vrcp.pop %v2235
    %v2535 = vmul.f32 1.0, %v2534
    %v2536 = vrcp.pop %v2236
    %v2537 = vmul.f32 1.0, %v2536
    %v2538 = vrcp.pop %v2237
    %v2539 = vmul.f32 1.0, %v2538
    %v2540 = vrcp.pop %v2238
    %v2541 = vmul.f32 1.0, %v2540
    %v2542 = vrcp.pop %v2239
    %v2543 = vmul.f32 1.0, %v2542
    %v2544 = vrcp.pop %v2240
    %v2545 = vmul.f32 1.0, %v2544
    %v2546 = vrcp.pop %v2241
    %v2547 = vmul.f32 1.0, %v2546
    %v2548 = vrcp.pop %v2242
    %v2549 = vmul.f32 1.0, %v2548
    %v2550 = vrcp.pop %v2243
    %v2551 = vmul.f32 1.0, %v2550
    %v2552 = vrcp.pop %v2244
    %v2553 = vmul.f32 1.0, %v2552
    %v2554 = vrcp.pop %v2245
    %v2555 = vmul.f32 1.0, %v2554
    %v2556 = vrcp.pop %v2246
    %v2557 = vmul.f32 1.0, %v2556
    %v2558 = vrcp.pop %v2247
    %v2559 = vmul.f32 1.0, %v2558
    %v2560 = vrcp.pop %v2248
    %v2561 = vmul.f32 1.0, %v2560
    %v2562 = vrcp.pop %v2249
    %v2563 = vmul.f32 1.0, %v2562
    %v2564 = vrcp.pop %v2250
    %v2565 = vmul.f32 1.0, %v2564
    %v2566 = vrcp.pop %v2251
    %v2567 = vmul.f32 1.0, %v2566
    %v2568 = vrcp.pop %v2252
    %v2569 = vmul.f32 1.0, %v2568
    %v2570 = vrcp.pop %v2253
    %v2571 = vmul.f32 1.0, %v2570
    %v2572 = vrcp.pop %v2254
    %v2573 = vmul.f32 1.0, %v2572
    %v2574 = vrcp.pop %v2255
    %v2575 = vmul.f32 1.0, %v2574
    %v2576 = vrcp.pop %v2256
    %v2577 = vmul.f32 1.0, %v2576
    %v2578 = vrcp.pop %v2257
    %v2579 = vmul.f32 1.0, %v2578
    %v2580 = vrcp.pop %v2258
    %v2581 = vmul.f32 1.0, %v2580
    %v2582 = vrcp.pop %v2259
    %v2583 = vmul.f32 1.0, %v2582
    %v2584 = vrcp.pop %v2260
    %v2585 = vmul.f32 1.0, %v2584
    %v2586 = vrcp.pop %v2261
    %v2587 = vmul.f32 1.0, %v2586
    %v2588 = vrcp.pop %v2262
    %v2589 = vmul.f32 1.0, %v2588
    %v2590 = vrcp.pop %v2263
    %v2591 = vmul.f32 1.0, %v2590
    %v2592 = vrcp.pop %v2264
    %v2593 = vmul.f32 1.0, %v2592
    %v2594 = vrcp.pop %v2265
    %v2595 = vmul.f32 1.0, %v2594
    %v2596 = vrcp.pop %v2266
    %v2597 = vmul.f32 1.0, %v2596
    %v2598 = vrcp.pop %v2267
    %v2599 = vmul.f32 1.0, %v2598
    %v2600 = vrcp.pop %v2268
    %v2601 = vmul.f32 1.0, %v2600
    %v2602 = vrcp.pop %v2269
    %v2603 = vmul.f32 1.0, %v2602
    %v2604 = vrcp.pop %v2270
    %v2605 = vmul.f32 1.0, %v2604
    %v2606 = vrcp.pop %v2271
    %v2607 = vmul.f32 1.0, %v2606
    %v2608 = vrcp.pop %v2272
    %v2609 = vmul.f32 1.0, %v2608
    %v2610 = vrcp.pop %v2273
    %v2611 = vmul.f32 1.0, %v2610
    %v2612 = vrcp.pop %v2274
    %v2613 = vmul.f32 1.0, %v2612
    %v2614 = vrcp.pop %v2275
    %v2615 = vmul.f32 1.0, %v2614
    %v2616 = vrcp.pop %v2276
    %v2617 = vmul.f32 1.0, %v2616
    %v2618 = vrcp.pop %v2277
    %v2619 = vmul.f32 1.0, %v2618
    %v2620 = vrcp.pop %v2278
    %v2621 = vmul.f32 1.0, %v2620
    %v2622 = vrcp.pop %v2279
    %v2623 = vmul.f32 1.0, %v2622
    %v2624 = vrcp.pop %v2280
    %v2625 = vmul.f32 1.0, %v2624
    %v2626 = vrcp.pop %v2281
    %v2627 = vmul.f32 1.0, %v2626
    %v2628 = vrcp.pop %v2282
    %v2629 = vmul.f32 1.0, %v2628
    %v2630 = vrcp.pop %v2283
    %v2631 = vmul.f32 1.0, %v2630
    %v2632 = vrcp.pop %v2284
    %v2633 = vmul.f32 1.0, %v2632
    %v2634 = vrcp.pop %v2285
    %v2635 = vmul.f32 1.0, %v2634
    %v2636 = vrcp.pop %v2286
    %v2637 = vmul.f32 1.0, %v2636
    %v2638 = vrcp.pop %v2287
    %v2639 = vmul.f32 1.0, %v2638
    %v2640 = vrcp.pop %v2288
    %v2641 = vmul.f32 1.0, %v2640
    %v2642 = vrcp.pop %v2289
    %v2643 = vmul.f32 1.0, %v2642
    %v2644 = vrcp.pop %v2290
    %v2645 = vmul.f32 1.0, %v2644
    %v2646 = vrcp.pop %v2291
    %v2647 = vmul.f32 1.0, %v2646
    %v2648 = vrcp.pop %v2292
    %v2649 = vmul.f32 1.0, %v2648
    %v2650 = vrcp.pop %v2293
    %v2651 = vmul.f32 1.0, %v2650
    %v2652 = vrcp.pop %v2294
    %v2653 = vmul.f32 1.0, %v2652
    %v2654 = vrcp.pop %v2295
    %v2655 = vmul.f32 1.0, %v2654
    %v2656 = vrcp.pop %v2296
    %v2657 = vmul.f32 1.0, %v2656
    %v2658 = vrcp.pop %v2297
    %v2659 = vmul.f32 1.0, %v2658
    %v2660 = vrcp.pop %v2298
    %v2661 = vmul.f32 1.0, %v2660
    %v2662 = vrcp.pop %v2299
    %v2663 = vmul.f32 1.0, %v2662
    %v2664 = vrcp.pop %v2300
    %v2665 = vmul.f32 1.0, %v2664
    %v2666 = vrcp.pop %v2301
    %v2667 = vmul.f32 1.0, %v2666
    %v2668 = vrcp.pop %v2302
    %v2669 = vmul.f32 1.0, %v2668
    %v2670 = vrcp.pop %v2303
    %v2671 = vmul.f32 1.0, %v2670
    %v2672 = vrcp.pop %v2304
    %v2673 = vmul.f32 1.0, %v2672
    %v2674 = vrcp.pop %v2305
    %v2675 = vmul.f32 1.0, %v2674
    %v2676 = vrcp.pop %v2306
    %v2677 = vmul.f32 1.0, %v2676
    %v2678 = vrcp.pop %v2307
    %v2679 = vmul.f32 1.0, %v2678
    %v2680 = vrcp.pop %v2308
    %v2681 = vmul.f32 1.0, %v2680
    %v2682 = vrcp.pop %v2309
    %v2683 = vmul.f32 1.0, %v2682
    %v2684 = vrcp.pop %v2310
    %v2685 = vmul.f32 1.0, %v2684
    %v2686 = vrcp.pop %v2311
    %v2687 = vmul.f32 1.0, %v2686
    %v2688 = vrcp.pop %v2312
    %v2689 = vmul.f32 1.0, %v2688
    %v2690 = vrcp.pop %v2313
    %v2691 = vmul.f32 1.0, %v2690
    %v2692 = vrcp.pop %v2314
    %v2693 = vmul.f32 1.0, %v2692
    %v2694 = vrcp.pop %v2315
    %v2695 = vmul.f32 1.0, %v2694
    %v2696 = vrcp.pop %v2316
    %v2697 = vmul.f32 1.0, %v2696
    %v2698 = vrcp.pop %v2317
    %v2699 = vmul.f32 1.0, %v2698
    %v2700 = vrcp.pop %v2318
    %v2701 = vmul.f32 1.0, %v2700
    %v2702 = vrcp.pop %v2319
    %v2703 = vmul.f32 1.0, %v2702
    %v2704 = vrcp.pop %v2320
    %v2705 = vmul.f32 1.0, %v2704
    %v2706 = vrcp.pop %v2321
    %v2707 = vmul.f32 1.0, %v2706
    %v2708 = vrcp.pop %v2322
    %v2709 = vmul.f32 1.0, %v2708
    %v2710 = vrcp.pop %v2323
    %v2711 = vmul.f32 1.0, %v2710
    %v2712 = vrcp.pop %v2324
    %v2713 = vmul.f32 1.0, %v2712
    %v2714 = vrcp.pop %v2325
    %v2715 = vmul.f32 1.0, %v2714
    %v2716 = vrcp.pop %v2326
    %v2717 = vmul.f32 1.0, %v2716
    %v2718 = vrcp.pop %v2327
    %v2719 = vmul.f32 1.0, %v2718
    %v2720 = vrcp.pop %v2328
    %v2721 = vmul.f32 1.0, %v2720
    %v2722 = vrcp.pop %v2329
    %v2723 = vmul.f32 1.0, %v2722
    %v2724 = vrcp.pop %v2330
    %v2725 = vmul.f32 1.0, %v2724
    %v2726 = vrcp.pop %v2331
    %v2727 = vmul.f32 1.0, %v2726
    %v2728 = vrcp.pop %v2332
    %v2729 = vmul.f32 1.0, %v2728
    %v2730 = vrcp.pop %v2333
    %v2731 = vmul.f32 1.0, %v2730
    %v2732 = vrcp.pop %v2334
    %v2733 = vmul.f32 1.0, %v2732
    %v2734 = vrcp.pop %v2335
    %v2735 = vmul.f32 1.0, %v2734
    %v2736 = vrcp.pop %v2336
    %v2737 = vmul.f32 1.0, %v2736
    %v2738 = vrcp.pop %v2337
    %v2739 = vmul.f32 1.0, %v2738
    %v2740 = vrcp.pop %v2338
    %v2741 = vmul.f32 1.0, %v2740
    %v2742 = vrcp.pop %v2339
    %v2743 = vmul.f32 1.0, %v2742
    %v2744 = vrcp.pop %v2340
    %v2745 = vmul.f32 1.0, %v2744
    %v2746 = vrcp.pop %v2341
    %v2747 = vmul.f32 1.0, %v2746
    %v2748 = vrcp.pop %v2342
    %v2749 = vmul.f32 1.0, %v2748
    %v2750 = vrcp.pop %v2343
    %v2751 = vmul.f32 1.0, %v2750
    %v2752 = vrcp.pop %v2344
    %v2753 = vmul.f32 1.0, %v2752
    %v2754 = vrcp.pop %v2345
    %v2755 = vmul.f32 1.0, %v2754
    %v2756 = vrcp.pop %v2346
    %v2757 = vmul.f32 1.0, %v2756
    %v2758 = vrcp.pop %v2347
    %v2759 = vmul.f32 1.0, %v2758
    %v2760 = vrcp.pop %v2348
    %v2761 = vmul.f32 1.0, %v2760
    %v2762 = vrcp.pop %v2349
    %v2763 = vmul.f32 1.0, %v2762
    %v2764 = vrcp.pop %v2350
    %v2765 = vmul.f32 1.0, %v2764
    %v2766 = vrcp.pop %v2351
    %v2767 = vmul.f32 1.0, %v2766
    %v2768 = vrcp.pop %v2352
    %v2769 = vmul.f32 1.0, %v2768
    %v2770 = vrcp.pop %v2353
    %v2771 = vmul.f32 1.0, %v2770
    %v2772 = vrcp.pop %v2354
    %v2773 = vmul.f32 1.0, %v2772
    %v2774 = vrcp.pop %v2355
    %v2775 = vmul.f32 1.0, %v2774
    %v2776 = vrcp.pop %v2356
    %v2777 = vmul.f32 1.0, %v2776
    %v2778 = vrcp.pop %v2357
    %v2779 = vmul.f32 1.0, %v2778
    %v2780 = vrcp.pop %v2358
    %v2781 = vmul.f32 1.0, %v2780
    %v2782 = vrcp.pop %v2359
    %v2783 = vmul.f32 1.0, %v2782
    %v2784 = vrcp.pop %v2360
    %v2785 = vmul.f32 1.0, %v2784
    %v2786 = vrcp.pop %v2361
    %v2787 = vmul.f32 1.0, %v2786
    %v2788 = vrcp.pop %v2362
    %v2789 = vmul.f32 1.0, %v2788
    %v2790 = vrcp.pop %v2363
    %v2791 = vmul.f32 1.0, %v2790
    %v2792 = vrcp.pop %v2364
    %v2793 = vmul.f32 1.0, %v2792
    %v2794 = vrcp.pop %v2365
    %v2795 = vmul.f32 1.0, %v2794
    %v2796 = vrcp.pop %v2366
    %v2797 = vmul.f32 1.0, %v2796
    %v2798 = vrcp.pop %v2367
    %v2799 = vmul.f32 1.0, %v2798
    %v2800 = vrcp.pop %v2368
    %v2801 = vmul.f32 1.0, %v2800
    %v2802 = vrcp.pop %v2369
    %v2803 = vmul.f32 1.0, %v2802
    %v2804 = vrcp.pop %v2370
    %v2805 = vmul.f32 1.0, %v2804
    %v2806 = vrcp.pop %v2371
    %v2807 = vmul.f32 1.0, %v2806
    %v2808 = vrcp.pop %v2372
    %v2809 = vmul.f32 1.0, %v2808
    %v2810 = vrcp.pop %v2373
    %v2811 = vmul.f32 1.0, %v2810
    %v2812 = vrcp.pop %v2374
    %v2813 = vmul.f32 1.0, %v2812
    %v2814 = vrcp.pop %v2375
    %v2815 = vmul.f32 1.0, %v2814
    %v2816 = vrcp.pop %v2376
    %v2817 = vmul.f32 1.0, %v2816
    %v2818 = vrcp.pop %v2377
    %v2819 = vmul.f32 1.0, %v2818
    %v2820 = vrcp.pop %v2378
    %v2821 = vmul.f32 1.0, %v2820
    %v2822 = vrcp.pop %v2379
    %v2823 = vmul.f32 1.0, %v2822
    %v2824 = vrcp.pop %v2380
    %v2825 = vmul.f32 1.0, %v2824
    %v2826 = vrcp.pop %v2381
    %v2827 = vmul.f32 1.0, %v2826
    %v2828 = vrcp.pop %v2382
    %v2829 = vmul.f32 1.0, %v2828
    %v2830 = vrcp.pop %v2383
    %v2831 = vmul.f32 1.0, %v2830
    %v2832 = vrcp.pop %v2384
    %v2833 = vmul.f32 1.0, %v2832
    %v2834 = vrcp.pop %v2385
    %v2835 = vmul.f32 1.0, %v2834
    %v2836 = vrcp.pop %v2386
    %v2837 = vmul.f32 1.0, %v2836
    %v2838 = vrcp.pop %v2387
    %v2839 = vmul.f32 1.0, %v2838
    %v2840 = vrcp.pop %v2388
    %v2841 = vmul.f32 1.0, %v2840
    %v2842 = vrcp.pop %v2389
    %v2843 = vmul.f32 1.0, %v2842
    %v2844 = vrcp.pop %v2390
    %v2845 = vmul.f32 1.0, %v2844
    %v2846 = vrcp.pop %v2391
    %v2847 = vmul.f32 1.0, %v2846
    %v2848 = vrcp.pop %v2392
    %v2849 = vmul.f32 1.0, %v2848
    %v2850 = vrcp.pop %v2393
    %v2851 = vmul.f32 1.0, %v2850
    %v2852 = vrcp.pop %v2394
    %v2853 = vmul.f32 1.0, %v2852
    %v2854 = vrcp.pop %v2395
    %v2855 = vmul.f32 1.0, %v2854
    %v2856 = vrcp.pop %v2396
    %v2857 = vmul.f32 1.0, %v2856
    %v2858 = vrcp.pop %v2397
    %v2859 = vmul.f32 1.0, %v2858
    %v2860 = vrcp.pop %v2398
    %v2861 = vmul.f32 1.0, %v2860
    %v2862 = vrcp.pop %v2399
    %v2863 = vmul.f32 1.0, %v2862
    %v2864 = vrcp.pop %v2400
    %v2865 = vmul.f32 1.0, %v2864
    %v2866 = vrcp.pop %v2401
    %v2867 = vmul.f32 1.0, %v2866
    %v2868 = vrcp.pop %v2402
    %v2869 = vmul.f32 1.0, %v2868
    %v2870 = vrcp.pop %v2403
    %v2871 = vmul.f32 1.0, %v2870
    %v2872 = vrcp.pop %v2404
    %v2873 = vmul.f32 1.0, %v2872
    %v2874 = vrcp.pop %v2405
    %v2875 = vmul.f32 1.0, %v2874
    %v2876 = vrcp.pop %v2406
    %v2877 = vmul.f32 1.0, %v2876
    %v2878 = vrcp.pop %v2407
    %v2879 = vmul.f32 1.0, %v2878
    %v2880 = vrcp.pop %v2408
    %v2881 = vmul.f32 1.0, %v2880
    %v2882 = vrcp.pop %v2409
    %v2883 = vmul.f32 1.0, %v2882
    %v2884 = vrcp.pop %v2410
    %v2885 = vmul.f32 1.0, %v2884
    %v2886 = vrcp.pop %v2411
    %v2887 = vmul.f32 1.0, %v2886
    %v2888 = vrcp.pop %v2412
    %v2889 = vmul.f32 1.0, %v2888
    %v2890 = vrcp.pop %v2413
    %v2891 = vmul.f32 1.0, %v2890
    %v2892 = vrcp.pop %v2414
    %v2893 = vmul.f32 1.0, %v2892
    %v2894 = vrcp.pop %v2415
    %v2895 = vmul.f32 1.0, %v2894
    %v2896 = vrcp.pop %v2416
    %v2897 = vmul.f32 1.0, %v2896
    %v2898 = vrcp.pop %v2417
    %v2899 = vmul.f32 1.0, %v2898
    %v2900 = vrcp.pop %v2418
    %v2901 = vmul.f32 1.0, %v2900
    %v2902 = vrcp.pop %v2419
    %v2903 = vmul.f32 1.0, %v2902
    %v2904 = vrcp.pop %v2420
    %v2905 = vmul.f32 1.0, %v2904
    %v2906 = vrcp.pop %v2421
    %v2907 = vmul.f32 1.0, %v2906
    %v2908 = vrcp.pop %v2422
    %v2909 = vmul.f32 1.0, %v2908
    %v2910 = vrcp.pop %v2423
    %v2911 = vmul.f32 1.0, %v2910
    %v2912 = vrcp.pop %v2424
    %v2913 = vmul.f32 1.0, %v2912
    %v2914 = vrcp.pop %v2425
    %v2915 = vmul.f32 1.0, %v2914
    %v2916 = vrcp.pop %v2426
    %v2917 = vmul.f32 1.0, %v2916
    %v2918 = vrcp.pop %v2427
    %v2919 = vmul.f32 1.0, %v2918
    %v2920 = vrcp.pop %v2428
    %v2921 = vmul.f32 1.0, %v2920
    %v2922 = vrcp.pop %v2429
    %v2923 = vmul.f32 1.0, %v2922
    %v2924 = vrcp.pop %v2430
    %v2925 = vmul.f32 1.0, %v2924
    %v2926 = vrcp.pop %v2431
    %v2927 = vmul.f32 1.0, %v2926
    %v2928 = vrcp.pop %v2432
    %v2929 = vmul.f32 1.0, %v2928
    %v2930 = vrcp.pop %v2433
    %v2931 = vmul.f32 1.0, %v2930
    %v2932 = vrcp.pop %v2434
    %v2933 = vmul.f32 1.0, %v2932
    %v2934 = vrcp.pop %v2435
    %v2935 = vmul.f32 1.0, %v2934
    %v2936 = vrcp.pop %v2436
    %v2937 = vmul.f32 1.0, %v2936
    %v2938 = vrcp.pop %v2437
    %v2939 = vmul.f32 1.0, %v2938
    %v2940 = vrcp.pop %v2438
    %v2941 = vmul.f32 1.0, %v2940
    %v2942 = vrcp.pop %v2439
    %v2943 = vmul.f32 1.0, %v2942
    %v2944 = vrcp.pop %v2440
    %v2945 = vmul.f32 1.0, %v2944
    %v2946 = vrcp.pop %v2441
    %v2947 = vmul.f32 1.0, %v2946
    %v2948 = vrcp.pop %v2442
    %v2949 = vmul.f32 1.0, %v2948
    %v2950 = vrcp.pop %v2443
    %v2951 = vmul.f32 1.0, %v2950
    %v2952 = vrcp.pop %v2444
    %v2953 = vmul.f32 1.0, %v2952
    %v2954 = vrcp.pop %v2445
    %v2955 = vmul.f32 1.0, %v2954
    %v2956 = vrcp.pop %v2446
    %v2957 = vmul.f32 1.0, %v2956
    %v2958 = vrcp.pop %v2447
    %v2959 = vmul.f32 1.0, %v2958
    %2960 = vst [vmem:[#allocation2] sm:$0xff] %v2449
    %2961 = vst [vmem:[#allocation2 + $0x8] sm:$0xff] %v2451
    %2962 = vst [vmem:[#allocation2 + $0x10] sm:$0xff] %v2453
    %2963 = vst [vmem:[#allocation2 + $0x18] sm:$0xff] %v2455
    %2964 = vst [vmem:[#allocation2 + $0x20] sm:$0xff] %v2457
    %2965 = vst [vmem:[#allocation2 + $0x28] sm:$0xff] %v2459
    %2966 = vst [vmem:[#allocation2 + $0x30] sm:$0xff] %v2461
    %2967 = vst [vmem:[#allocation2 + $0x38] sm:$0xff] %v2463
    %2968 = vst [vmem:[#allocation2 + $0x40] sm:$0xff] %v2465
    %2969 = vst [vmem:[#allocation2 + $0x48] sm:$0xff] %v2467
    %2970 = vst [vmem:[#allocation2 + $0x50] sm:$0xff] %v2469
    %2971 = vst [vmem:[#allocation2 + $0x58] sm:$0xff] %v2471
    %2972 = vst [vmem:[#allocation2 + $0x60] sm:$0xff] %v2473
    %2973 = vst [vmem:[#allocation2 + $0x68] sm:$0xff] %v2475
    %2974 = vst [vmem:[#allocation2 + $0x70] sm:$0xff] %v2477
    %2975 = vst [vmem:[#allocation2 + $0x78] sm:$0xff] %v2479
    %2976 = vst [vmem:[#allocation2 + $0x80] sm:$0xff] %v2481
    %2977 = vst [vmem:[#allocation2 + $0x88] sm:$0xff] %v2483
    %2978 = vst [vmem:[#allocation2 + $0x90] sm:$0xff] %v2485
    %2979 = vst [vmem:[#allocation2 + $0x98] sm:$0xff] %v2487
    %2980 = vst [vmem:[#allocation2 + $0xa0] sm:$0xff] %v2489
    %2981 = vst [vmem:[#allocation2 + $0xa8] sm:$0xff] %v2491
    %2982 = vst [vmem:[#allocation2 + $0xb0] sm:$0xff] %v2493
    %2983 = vst [vmem:[#allocation2 + $0xb8] sm:$0xff] %v2495
    %2984 = vst [vmem:[#allocation2 + $0xc0] sm:$0xff] %v2497
    %2985 = vst [vmem:[#allocation2 + $0xc8] sm:$0xff] %v2499
    %2986 = vst [vmem:[#allocation2 + $0xd0] sm:$0xff] %v2501
    %2987 = vst [vmem:[#allocation2 + $0xd8] sm:$0xff] %v2503
    %2988 = vst [vmem:[#allocation2 + $0xe0] sm:$0xff] %v2505
    %2989 = vst [vmem:[#allocation2 + $0xe8] sm:$0xff] %v2507
    %2990 = vst [vmem:[#allocation2 + $0xf0] sm:$0xff] %v2509
    %2991 = vst [vmem:[#allocation2 + $0xf8] sm:$0xff] %v2511
    %2992 = vst [vmem:[#allocation2 + $0x100] sm:$0xff] %v2513
    %2993 = vst [vmem:[#allocation2 + $0x108] sm:$0xff] %v2515
    %2994 = vst [vmem:[#allocation2 + $0x110] sm:$0xff] %v2517
    %2995 = vst [vmem:[#allocation2 + $0x118] sm:$0xff] %v2519
    %2996 = vst [vmem:[#allocation2 + $0x120] sm:$0xff] %v2521
    %2997 = vst [vmem:[#allocation2 + $0x128] sm:$0xff] %v2523
    %2998 = vst [vmem:[#allocation2 + $0x130] sm:$0xff] %v2525
    %2999 = vst [vmem:[#allocation2 + $0x138] sm:$0xff] %v2527
    %3000 = vst [vmem:[#allocation2 + $0x140] sm:$0xff] %v2529
    %3001 = vst [vmem:[#allocation2 + $0x148] sm:$0xff] %v2531
    %3002 = vst [vmem:[#allocation2 + $0x150] sm:$0xff] %v2533
    %3003 = vst [vmem:[#allocation2 + $0x158] sm:$0xff] %v2535
    %3004 = vst [vmem:[#allocation2 + $0x160] sm:$0xff] %v2537
    %3005 = vst [vmem:[#allocation2 + $0x168] sm:$0xff] %v2539
    %3006 = vst [vmem:[#allocation2 + $0x170] sm:$0xff] %v2541
    %3007 = vst [vmem:[#allocation2 + $0x178] sm:$0xff] %v2543
    %3008 = vst [vmem:[#allocation2 + $0x180] sm:$0xff] %v2545
    %3009 = vst [vmem:[#allocation2 + $0x188] sm:$0xff] %v2547
    %3010 = vst [vmem:[#allocation2 + $0x190] sm:$0xff] %v2549
    %3011 = vst [vmem:[#allocation2 + $0x198] sm:$0xff] %v2551
    %3012 = vst [vmem:[#allocation2 + $0x1a0] sm:$0xff] %v2553
    %3013 = vst [vmem:[#allocation2 + $0x1a8] sm:$0xff] %v2555
    %3014 = vst [vmem:[#allocation2 + $0x1b0] sm:$0xff] %v2557
    %3015 = vst [vmem:[#allocation2 + $0x1b8] sm:$0xff] %v2559
    %3016 = vst [vmem:[#allocation2 + $0x1c0] sm:$0xff] %v2561
    %3017 = vst [vmem:[#allocation2 + $0x1c8] sm:$0xff] %v2563
    %3018 = vst [vmem:[#allocation2 + $0x1d0] sm:$0xff] %v2565
    %3019 = vst [vmem:[#allocation2 + $0x1d8] sm:$0xff] %v2567
    %3020 = vst [vmem:[#allocation2 + $0x1e0] sm:$0xff] %v2569
    %3021 = vst [vmem:[#allocation2 + $0x1e8] sm:$0xff] %v2571
    %3022 = vst [vmem:[#allocation2 + $0x1f0] sm:$0xff] %v2573
    %3023 = vst [vmem:[#allocation2 + $0x1f8] sm:$0xff] %v2575
    %3024 = vst [vmem:[#allocation2 + $0x200] sm:$0xff] %v2577
    %3025 = vst [vmem:[#allocation2 + $0x208] sm:$0xff] %v2579
    %3026 = vst [vmem:[#allocation2 + $0x210] sm:$0xff] %v2581
    %3027 = vst [vmem:[#allocation2 + $0x218] sm:$0xff] %v2583
    %3028 = vst [vmem:[#allocation2 + $0x220] sm:$0xff] %v2585
    %3029 = vst [vmem:[#allocation2 + $0x228] sm:$0xff] %v2587
    %3030 = vst [vmem:[#allocation2 + $0x230] sm:$0xff] %v2589
    %3031 = vst [vmem:[#allocation2 + $0x238] sm:$0xff] %v2591
    %3032 = vst [vmem:[#allocation2 + $0x240] sm:$0xff] %v2593
    %3033 = vst [vmem:[#allocation2 + $0x248] sm:$0xff] %v2595
    %3034 = vst [vmem:[#allocation2 + $0x250] sm:$0xff] %v2597
    %3035 = vst [vmem:[#allocation2 + $0x258] sm:$0xff] %v2599
    %3036 = vst [vmem:[#allocation2 + $0x260] sm:$0xff] %v2601
    %3037 = vst [vmem:[#allocation2 + $0x268] sm:$0xff] %v2603
    %3038 = vst [vmem:[#allocation2 + $0x270] sm:$0xff] %v2605
    %3039 = vst [vmem:[#allocation2 + $0x278] sm:$0xff] %v2607
    %3040 = vst [vmem:[#allocation2 + $0x280] sm:$0xff] %v2609
    %3041 = vst [vmem:[#allocation2 + $0x288] sm:$0xff] %v2611
    %3042 = vst [vmem:[#allocation2 + $0x290] sm:$0xff] %v2613
    %3043 = vst [vmem:[#allocation2 + $0x298] sm:$0xff] %v2615
    %3044 = vst [vmem:[#allocation2 + $0x2a0] sm:$0xff] %v2617
    %3045 = vst [vmem:[#allocation2 + $0x2a8] sm:$0xff] %v2619
    %3046 = vst [vmem:[#allocation2 + $0x2b0] sm:$0xff] %v2621
    %3047 = vst [vmem:[#allocation2 + $0x2b8] sm:$0xff] %v2623
    %3048 = vst [vmem:[#allocation2 + $0x2c0] sm:$0xff] %v2625
    %3049 = vst [vmem:[#allocation2 + $0x2c8] sm:$0xff] %v2627
    %3050 = vst [vmem:[#allocation2 + $0x2d0] sm:$0xff] %v2629
    %3051 = vst [vmem:[#allocation2 + $0x2d8] sm:$0xff] %v2631
    %3052 = vst [vmem:[#allocation2 + $0x2e0] sm:$0xff] %v2633
    %3053 = vst [vmem:[#allocation2 + $0x2e8] sm:$0xff] %v2635
    %3054 = vst [vmem:[#allocation2 + $0x2f0] sm:$0xff] %v2637
    %3055 = vst [vmem:[#allocation2 + $0x2f8] sm:$0xff] %v2639
    %3056 = vst [vmem:[#allocation2 + $0x300] sm:$0xff] %v2641
    %3057 = vst [vmem:[#allocation2 + $0x308] sm:$0xff] %v2643
    %3058 = vst [vmem:[#allocation2 + $0x310] sm:$0xff] %v2645
    %3059 = vst [vmem:[#allocation2 + $0x318] sm:$0xff] %v2647
    %3060 = vst [vmem:[#allocation2 + $0x320] sm:$0xff] %v2649
    %3061 = vst [vmem:[#allocation2 + $0x328] sm:$0xff] %v2651
    %3062 = vst [vmem:[#allocation2 + $0x330] sm:$0xff] %v2653
    %3063 = vst [vmem:[#allocation2 + $0x338] sm:$0xff] %v2655
    %3064 = vst [vmem:[#allocation2 + $0x340] sm:$0xff] %v2657
    %3065 = vst [vmem:[#allocation2 + $0x348] sm:$0xff] %v2659
    %3066 = vst [vmem:[#allocation2 + $0x350] sm:$0xff] %v2661
    %3067 = vst [vmem:[#allocation2 + $0x358] sm:$0xff] %v2663
    %3068 = vst [vmem:[#allocation2 + $0x360] sm:$0xff] %v2665
    %3069 = vst [vmem:[#allocation2 + $0x368] sm:$0xff] %v2667
    %3070 = vst [vmem:[#allocation2 + $0x370] sm:$0xff] %v2669
    %3071 = vst [vmem:[#allocation2 + $0x378] sm:$0xff] %v2671
    %3072 = vst [vmem:[#allocation2 + $0x380] sm:$0xff] %v2673
    %3073 = vst [vmem:[#allocation2 + $0x388] sm:$0xff] %v2675
    %3074 = vst [vmem:[#allocation2 + $0x390] sm:$0xff] %v2677
    %3075 = vst [vmem:[#allocation2 + $0x398] sm:$0xff] %v2679
    %3076 = vst [vmem:[#allocation2 + $0x3a0] sm:$0xff] %v2681
    %3077 = vst [vmem:[#allocation2 + $0x3a8] sm:$0xff] %v2683
    %3078 = vst [vmem:[#allocation2 + $0x3b0] sm:$0xff] %v2685
    %3079 = vst [vmem:[#allocation2 + $0x3b8] sm:$0xff] %v2687
    %3080 = vst [vmem:[#allocation2 + $0x3c0] sm:$0xff] %v2689
    %3081 = vst [vmem:[#allocation2 + $0x3c8] sm:$0xff] %v2691
    %3082 = vst [vmem:[#allocation2 + $0x3d0] sm:$0xff] %v2693
    %3083 = vst [vmem:[#allocation2 + $0x3d8] sm:$0xff] %v2695
    %3084 = vst [vmem:[#allocation2 + $0x3e0] sm:$0xff] %v2697
    %3085 = vst [vmem:[#allocation2 + $0x3e8] sm:$0xff] %v2699
    %3086 = vst [vmem:[#allocation2 + $0x3f0] sm:$0xff] %v2701
    %3087 = vst [vmem:[#allocation2 + $0x3f8] sm:$0xff] %v2703
    %3088 = vst [vmem:[#allocation2 + $0x400] sm:$0xff] %v2705
    %3089 = vst [vmem:[#allocation2 + $0x408] sm:$0xff] %v2707
    %3090 = vst [vmem:[#allocation2 + $0x410] sm:$0xff] %v2709
    %3091 = vst [vmem:[#allocation2 + $0x418] sm:$0xff] %v2711
    %3092 = vst [vmem:[#allocation2 + $0x420] sm:$0xff] %v2713
    %3093 = vst [vmem:[#allocation2 + $0x428] sm:$0xff] %v2715
    %3094 = vst [vmem:[#allocation2 + $0x430] sm:$0xff] %v2717
    %3095 = vst [vmem:[#allocation2 + $0x438] sm:$0xff] %v2719
    %3096 = vst [vmem:[#allocation2 + $0x440] sm:$0xff] %v2721
    %3097 = vst [vmem:[#allocation2 + $0x448] sm:$0xff] %v2723
    %3098 = vst [vmem:[#allocation2 + $0x450] sm:$0xff] %v2725
    %3099 = vst [vmem:[#allocation2 + $0x458] sm:$0xff] %v2727
    %3100 = vst [vmem:[#allocation2 + $0x460] sm:$0xff] %v2729
    %3101 = vst [vmem:[#allocation2 + $0x468] sm:$0xff] %v2731
    %3102 = vst [vmem:[#allocation2 + $0x470] sm:$0xff] %v2733
    %3103 = vst [vmem:[#allocation2 + $0x478] sm:$0xff] %v2735
    %3104 = vst [vmem:[#allocation2 + $0x480] sm:$0xff] %v2737
    %3105 = vst [vmem:[#allocation2 + $0x488] sm:$0xff] %v2739
    %3106 = vst [vmem:[#allocation2 + $0x490] sm:$0xff] %v2741
    %3107 = vst [vmem:[#allocation2 + $0x498] sm:$0xff] %v2743
    %3108 = vst [vmem:[#allocation2 + $0x4a0] sm:$0xff] %v2745
    %3109 = vst [vmem:[#allocation2 + $0x4a8] sm:$0xff] %v2747
    %3110 = vst [vmem:[#allocation2 + $0x4b0] sm:$0xff] %v2749
    %3111 = vst [vmem:[#allocation2 + $0x4b8] sm:$0xff] %v2751
    %3112 = vst [vmem:[#allocation2 + $0x4c0] sm:$0xff] %v2753
    %3113 = vst [vmem:[#allocation2 + $0x4c8] sm:$0xff] %v2755
    %3114 = vst [vmem:[#allocation2 + $0x4d0] sm:$0xff] %v2757
    %3115 = vst [vmem:[#allocation2 + $0x4d8] sm:$0xff] %v2759
    %3116 = vst [vmem:[#allocation2 + $0x4e0] sm:$0xff] %v2761
    %3117 = vst [vmem:[#allocation2 + $0x4e8] sm:$0xff] %v2763
    %3118 = vst [vmem:[#allocation2 + $0x4f0] sm:$0xff] %v2765
    %3119 = vst [vmem:[#allocation2 + $0x4f8] sm:$0xff] %v2767
    %3120 = vst [vmem:[#allocation2 + $0x500] sm:$0xff] %v2769
    %3121 = vst [vmem:[#allocation2 + $0x508] sm:$0xff] %v2771
    %3122 = vst [vmem:[#allocation2 + $0x510] sm:$0xff] %v2773
    %3123 = vst [vmem:[#allocation2 + $0x518] sm:$0xff] %v2775
    %3124 = vst [vmem:[#allocation2 + $0x520] sm:$0xff] %v2777
    %3125 = vst [vmem:[#allocation2 + $0x528] sm:$0xff] %v2779
    %3126 = vst [vmem:[#allocation2 + $0x530] sm:$0xff] %v2781
    %3127 = vst [vmem:[#allocation2 + $0x538] sm:$0xff] %v2783
    %3128 = vst [vmem:[#allocation2 + $0x540] sm:$0xff] %v2785
    %3129 = vst [vmem:[#allocation2 + $0x548] sm:$0xff] %v2787
    %3130 = vst [vmem:[#allocation2 + $0x550] sm:$0xff] %v2789
    %3131 = vst [vmem:[#allocation2 + $0x558] sm:$0xff] %v2791
    %3132 = vst [vmem:[#allocation2 + $0x560] sm:$0xff] %v2793
    %3133 = vst [vmem:[#allocation2 + $0x568] sm:$0xff] %v2795
    %3134 = vst [vmem:[#allocation2 + $0x570] sm:$0xff] %v2797
    %3135 = vst [vmem:[#allocation2 + $0x578] sm:$0xff] %v2799
    %3136 = vst [vmem:[#allocation2 + $0x580] sm:$0xff] %v2801
    %3137 = vst [vmem:[#allocation2 + $0x588] sm:$0xff] %v2803
    %3138 = vst [vmem:[#allocation2 + $0x590] sm:$0xff] %v2805
    %3139 = vst [vmem:[#allocation2 + $0x598] sm:$0xff] %v2807
    %3140 = vst [vmem:[#allocation2 + $0x5a0] sm:$0xff] %v2809
    %3141 = vst [vmem:[#allocation2 + $0x5a8] sm:$0xff] %v2811
    %3142 = vst [vmem:[#allocation2 + $0x5b0] sm:$0xff] %v2813
    %3143 = vst [vmem:[#allocation2 + $0x5b8] sm:$0xff] %v2815
    %3144 = vst [vmem:[#allocation2 + $0x5c0] sm:$0xff] %v2817
    %3145 = vst [vmem:[#allocation2 + $0x5c8] sm:$0xff] %v2819
    %3146 = vst [vmem:[#allocation2 + $0x5d0] sm:$0xff] %v2821
    %3147 = vst [vmem:[#allocation2 + $0x5d8] sm:$0xff] %v2823
    %3148 = vst [vmem:[#allocation2 + $0x5e0] sm:$0xff] %v2825
    %3149 = vst [vmem:[#allocation2 + $0x5e8] sm:$0xff] %v2827
    %3150 = vst [vmem:[#allocation2 + $0x5f0] sm:$0xff] %v2829
    %3151 = vst [vmem:[#allocation2 + $0x5f8] sm:$0xff] %v2831
    %3152 = vst [vmem:[#allocation2 + $0x600] sm:$0xff] %v2833
    %3153 = vst [vmem:[#allocation2 + $0x608] sm:$0xff] %v2835
    %3154 = vst [vmem:[#allocation2 + $0x610] sm:$0xff] %v2837
    %3155 = vst [vmem:[#allocation2 + $0x618] sm:$0xff] %v2839
    %3156 = vst [vmem:[#allocation2 + $0x620] sm:$0xff] %v2841
    %3157 = vst [vmem:[#allocation2 + $0x628] sm:$0xff] %v2843
    %3158 = vst [vmem:[#allocation2 + $0x630] sm:$0xff] %v2845
    %3159 = vst [vmem:[#allocation2 + $0x638] sm:$0xff] %v2847
    %3160 = vst [vmem:[#allocation2 + $0x640] sm:$0xff] %v2849
    %3161 = vst [vmem:[#allocation2 + $0x648] sm:$0xff] %v2851
    %3162 = vst [vmem:[#allocation2 + $0x650] sm:$0xff] %v2853
    %3163 = vst [vmem:[#allocation2 + $0x658] sm:$0xff] %v2855
    %3164 = vst [vmem:[#allocation2 + $0x660] sm:$0xff] %v2857
    %3165 = vst [vmem:[#allocation2 + $0x668] sm:$0xff] %v2859
    %3166 = vst [vmem:[#allocation2 + $0x670] sm:$0xff] %v2861
    %3167 = vst [vmem:[#allocation2 + $0x678] sm:$0xff] %v2863
    %3168 = vst [vmem:[#allocation2 + $0x680] sm:$0xff] %v2865
    %3169 = vst [vmem:[#allocation2 + $0x688] sm:$0xff] %v2867
    %3170 = vst [vmem:[#allocation2 + $0x690] sm:$0xff] %v2869
    %3171 = vst [vmem:[#allocation2 + $0x698] sm:$0xff] %v2871
    %3172 = vst [vmem:[#allocation2 + $0x6a0] sm:$0xff] %v2873
    %3173 = vst [vmem:[#allocation2 + $0x6a8] sm:$0xff] %v2875
    %3174 = vst [vmem:[#allocation2 + $0x6b0] sm:$0xff] %v2877
    %3175 = vst [vmem:[#allocation2 + $0x6b8] sm:$0xff] %v2879
    %3176 = vst [vmem:[#allocation2 + $0x6c0] sm:$0xff] %v2881
    %3177 = vst [vmem:[#allocation2 + $0x6c8] sm:$0xff] %v2883
    %3178 = vst [vmem:[#allocation2 + $0x6d0] sm:$0xff] %v2885
    %3179 = vst [vmem:[#allocation2 + $0x6d8] sm:$0xff] %v2887
    %3180 = vst [vmem:[#allocation2 + $0x6e0] sm:$0xff] %v2889
    %3181 = vst [vmem:[#allocation2 + $0x6e8] sm:$0xff] %v2891
    %3182 = vst [vmem:[#allocation2 + $0x6f0] sm:$0xff] %v2893
    %3183 = vst [vmem:[#allocation2 + $0x6f8] sm:$0xff] %v2895
    %3184 = vst [vmem:[#allocation2 + $0x700] sm:$0xff] %v2897
    %3185 = vst [vmem:[#allocation2 + $0x708] sm:$0xff] %v2899
    %3186 = vst [vmem:[#allocation2 + $0x710] sm:$0xff] %v2901
    %3187 = vst [vmem:[#allocation2 + $0x718] sm:$0xff] %v2903
    %3188 = vst [vmem:[#allocation2 + $0x720] sm:$0xff] %v2905
    %3189 = vst [vmem:[#allocation2 + $0x728] sm:$0xff] %v2907
    %3190 = vst [vmem:[#allocation2 + $0x730] sm:$0xff] %v2909
    %3191 = vst [vmem:[#allocation2 + $0x738] sm:$0xff] %v2911
    %3192 = vst [vmem:[#allocation2 + $0x740] sm:$0xff] %v2913
    %3193 = vst [vmem:[#allocation2 + $0x748] sm:$0xff] %v2915
    %3194 = vst [vmem:[#allocation2 + $0x750] sm:$0xff] %v2917
    %3195 = vst [vmem:[#allocation2 + $0x758] sm:$0xff] %v2919
    %3196 = vst [vmem:[#allocation2 + $0x760] sm:$0xff] %v2921
    %3197 = vst [vmem:[#allocation2 + $0x768] sm:$0xff] %v2923
    %3198 = vst [vmem:[#allocation2 + $0x770] sm:$0xff] %v2925
    %3199 = vst [vmem:[#allocation2 + $0x778] sm:$0xff] %v2927
    %3200 = vst [vmem:[#allocation2 + $0x780] sm:$0xff] %v2929
    %3201 = vst [vmem:[#allocation2 + $0x788] sm:$0xff] %v2931
    %3202 = vst [vmem:[#allocation2 + $0x790] sm:$0xff] %v2933
    %3203 = vst [vmem:[#allocation2 + $0x798] sm:$0xff] %v2935
    %3204 = vst [vmem:[#allocation2 + $0x7a0] sm:$0xff] %v2937
    %3205 = vst [vmem:[#allocation2 + $0x7a8] sm:$0xff] %v2939
    %3206 = vst [vmem:[#allocation2 + $0x7b0] sm:$0xff] %v2941
    %3207 = vst [vmem:[#allocation2 + $0x7b8] sm:$0xff] %v2943
    %3208 = vst [vmem:[#allocation2 + $0x7c0] sm:$0xff] %v2945
    %3209 = vst [vmem:[#allocation2 + $0x7c8] sm:$0xff] %v2947
    %3210 = vst [vmem:[#allocation2 + $0x7d0] sm:$0xff] %v2949
    %3211 = vst [vmem:[#allocation2 + $0x7d8] sm:$0xff] %v2951
    %3212 = vst [vmem:[#allocation2 + $0x7e0] sm:$0xff] %v2953
    %3213 = vst [vmem:[#allocation2 + $0x7e8] sm:$0xff] %v2955
    %3214 = vst [vmem:[#allocation2 + $0x7f0] sm:$0xff] %v2957
    %3215 = vst [vmem:[#allocation2 + $0x7f8] sm:$0xff] %v2959
    // Predicated region
    $region6: #{gvade_forward.3} parent=1 // pred_check
      _
    $region7: #{gvade_forward.3} parent=1 // pred_check_branch
      %3217 = sbr.rel (0) target = $region9
    $region8: #{gvade_forward.3} parent=1 // pred_region
      %s3219 = ssub.s32 32768, 32768
      %3220 = vsyncadd [#allocation3], %s3219
      %s3221 = sshll.u32 [#allocation2], 4
      %s3222 = int_to_ptr.vmem [resolvable:$true] %s3221
      %3227 = dma.vmem_to_hbm [thread:$0]  %s3222, 32768, %s1, [#allocation3], 512, 512, 32
    $region9: #{gvade_forward.3} parent=1 // pred_fallthru
      _
    // Predicated region
    $region10: #{gvade_forward.3} parent=1 // pred_check
      _
    $region11: #{gvade_forward.3} parent=1 // pred_check_branch
      %3229 = sbr.rel (0) target = $region13
    $region12: #{gvade_forward.3} parent=1 // pred_region
      %3230 = dma.done [#allocation3], 32768
    $region13: #{gvade_forward.3} parent=1 // pred_fallthru
      _
    %3231 = vsyncpa [#allocation3], 1

// kernel: gvade_forward.2
$region0: #{gvade_forward.2}
  #allocation0 [shape = 'u32[]', space=smem, size = 0x4, offset = 0x4, fixed_abs, tag = 'smem constant byte address 0x4 - core index']
  #allocation1 [shape = 'u32[144,128]{1,0:T(1,128)}', space=vmem, size = 0x12000, scoped, tag = 'internal scratch']
  %s0 = inlined_call_operand.vmem [shape: bf16[512,512], index: 0, kind: input, shape index: {}]
  %s1 = inlined_call_operand.vmem [shape: bf16[512,16], index: 1, kind: input, shape index: {}]
  %s2 = inlined_call_operand.vmem [shape: f32[16,32], index: 2, kind: input, shape index: {}]
  %s3 = inlined_call_operand.vmem [shape: f32[32,16], index: 3, kind: input, shape index: {}]
  %s4 = inlined_call_operand.vmem [shape: f32[16,16], index: 4, kind: input, shape index: {}]
  %s5 = inlined_call_operand.vmem [shape: f32[512,8], index: 5, kind: input, shape index: {}]
  %s6 = inlined_call_operand.vmem [shape: f32[512,16], index: 6, kind: output, shape index: {0}]
  %s7 = inlined_call_operand.vmem [shape: f32[512,8], index: 7, kind: output, shape index: {1}]
  %8 = xla_tuple %s6, %s7
  %s9 = sld [smem:[#allocation0]]
  $region42: #{gvade_forward.2} parent=0
    _
  %s11 = ssub.s32 1, %s9
  %s12 = scalar_select 0, %s11, %s9
  // Predicated region
  $region2: #{gvade_forward.2} parent=0 // pred_check
    _
  $region3: #{gvade_forward.2} parent=0 // pred_check_branch
    %14 = sbr.rel (0) target = $region5
  $region4: #{gvade_forward.2} parent=0 // pred_region
    _
  $region5: #{gvade_forward.2} parent=0 // pred_fallthru
    _
  // Predicated region
  $region6: #{gvade_forward.2} parent=0 // pred_check
    _
  $region7: #{gvade_forward.2} parent=0 // pred_check_branch
    %16 = sbr.rel (0) target = $region9
  $region8: #{gvade_forward.2} parent=0 // pred_region
    _
  $region9: #{gvade_forward.2} parent=0 // pred_fallthru
    _
  // Predicated region
  $region10: #{gvade_forward.2} parent=0 // pred_check
    _
  $region11: #{gvade_forward.2} parent=0 // pred_check_branch
    %18 = sbr.rel (0) target = $region13
  $region12: #{gvade_forward.2} parent=0 // pred_region
    _
  $region13: #{gvade_forward.2} parent=0 // pred_fallthru
    _
  // Predicated region
  $region14: #{gvade_forward.2} parent=0 // pred_check
    _
  $region15: #{gvade_forward.2} parent=0 // pred_check_branch
    %20 = sbr.rel (0) target = $region17
  $region16: #{gvade_forward.2} parent=0 // pred_region
    _
  $region17: #{gvade_forward.2} parent=0 // pred_fallthru
    _
  // Predicated region
  $region18: #{gvade_forward.2} parent=0 // pred_check
    _
  $region19: #{gvade_forward.2} parent=0 // pred_check_branch
    %22 = sbr.rel (0) target = $region21
  $region20: #{gvade_forward.2} parent=0 // pred_region
    _
  $region21: #{gvade_forward.2} parent=0 // pred_fallthru
    _
  // Predicated region
  $region22: #{gvade_forward.2} parent=0 // pred_check
    _
  $region23: #{gvade_forward.2} parent=0 // pred_check_branch
    %24 = sbr.rel (0) target = $region25
  $region24: #{gvade_forward.2} parent=0 // pred_region
    _
  $region25: #{gvade_forward.2} parent=0 // pred_fallthru
    _
  %v26 = vld [vmem:[%s0] sm:$0xff]
  %v27 = vld [vmem:[%s0 + $0x8] sm:$0xff]
  %v28 = vld [vmem:[%s0 + $0x10] sm:$0xff]
  %v29 = vld [vmem:[%s0 + $0x18] sm:$0xff]
  %v30 = vld [vmem:[%s0 + $0x20] sm:$0xff]
  %v31 = vld [vmem:[%s0 + $0x28] sm:$0xff]
  %v32 = vld [vmem:[%s0 + $0x30] sm:$0xff]
  %v33 = vld [vmem:[%s0 + $0x38] sm:$0xff]
  %v34 = vld [vmem:[%s0 + $0x40] sm:$0xff]
  %v35 = vld [vmem:[%s0 + $0x48] sm:$0xff]
  %v36 = vld [vmem:[%s0 + $0x50] sm:$0xff]
  %v37 = vld [vmem:[%s0 + $0x58] sm:$0xff]
  %v38 = vld [vmem:[%s0 + $0x60] sm:$0xff]
  %v39 = vld [vmem:[%s0 + $0x68] sm:$0xff]
  %v40 = vld [vmem:[%s0 + $0x70] sm:$0xff]
  %v41 = vld [vmem:[%s0 + $0x78] sm:$0xff]
  %v42 = vld [vmem:[%s0 + $0x80] sm:$0xff]
  %v43 = vld [vmem:[%s0 + $0x88] sm:$0xff]
  %v44 = vld [vmem:[%s0 + $0x90] sm:$0xff]
  %v45 = vld [vmem:[%s0 + $0x98] sm:$0xff]
  %v46 = vld [vmem:[%s0 + $0xa0] sm:$0xff]
  %v47 = vld [vmem:[%s0 + $0xa8] sm:$0xff]
  %v48 = vld [vmem:[%s0 + $0xb0] sm:$0xff]
  %v49 = vld [vmem:[%s0 + $0xb8] sm:$0xff]
  %v50 = vld [vmem:[%s0 + $0xc0] sm:$0xff]
  %v51 = vld [vmem:[%s0 + $0xc8] sm:$0xff]
  %v52 = vld [vmem:[%s0 + $0xd0] sm:$0xff]
  %v53 = vld [vmem:[%s0 + $0xd8] sm:$0xff]
  %v54 = vld [vmem:[%s0 + $0xe0] sm:$0xff]
  %v55 = vld [vmem:[%s0 + $0xe8] sm:$0xff]
  %v56 = vld [vmem:[%s0 + $0xf0] sm:$0xff]
  %v57 = vld [vmem:[%s0 + $0xf8] sm:$0xff]
  %v58 = vld [vmem:[%s0 + $0x100] sm:$0xff]
  %v59 = vld [vmem:[%s0 + $0x108] sm:$0xff]
  %v60 = vld [vmem:[%s0 + $0x110] sm:$0xff]
  %v61 = vld [vmem:[%s0 + $0x118] sm:$0xff]
  %v62 = vld [vmem:[%s0 + $0x120] sm:$0xff]
  %v63 = vld [vmem:[%s0 + $0x128] sm:$0xff]
  %v64 = vld [vmem:[%s0 + $0x130] sm:$0xff]
  %v65 = vld [vmem:[%s0 + $0x138] sm:$0xff]
  %v66 = vld [vmem:[%s0 + $0x140] sm:$0xff]
  %v67 = vld [vmem:[%s0 + $0x148] sm:$0xff]
  %v68 = vld [vmem:[%s0 + $0x150] sm:$0xff]
  %v69 = vld [vmem:[%s0 + $0x158] sm:$0xff]
  %v70 = vld [vmem:[%s0 + $0x160] sm:$0xff]
  %v71 = vld [vmem:[%s0 + $0x168] sm:$0xff]
  %v72 = vld [vmem:[%s0 + $0x170] sm:$0xff]
  %v73 = vld [vmem:[%s0 + $0x178] sm:$0xff]
  %v74 = vld [vmem:[%s0 + $0x180] sm:$0xff]
  %v75 = vld [vmem:[%s0 + $0x188] sm:$0xff]
  %v76 = vld [vmem:[%s0 + $0x190] sm:$0xff]
  %v77 = vld [vmem:[%s0 + $0x198] sm:$0xff]
  %v78 = vld [vmem:[%s0 + $0x1a0] sm:$0xff]
  %v79 = vld [vmem:[%s0 + $0x1a8] sm:$0xff]
  %v80 = vld [vmem:[%s0 + $0x1b0] sm:$0xff]
  %v81 = vld [vmem:[%s0 + $0x1b8] sm:$0xff]
  %v82 = vld [vmem:[%s0 + $0x1c0] sm:$0xff]
  %v83 = vld [vmem:[%s0 + $0x1c8] sm:$0xff]
  %v84 = vld [vmem:[%s0 + $0x1d0] sm:$0xff]
  %v85 = vld [vmem:[%s0 + $0x1d8] sm:$0xff]
  %v86 = vld [vmem:[%s0 + $0x1e0] sm:$0xff]
  %v87 = vld [vmem:[%s0 + $0x1e8] sm:$0xff]
  %v88 = vld [vmem:[%s0 + $0x1f0] sm:$0xff]
  %v89 = vld [vmem:[%s0 + $0x1f8] sm:$0xff]
  %v90 = vld [vmem:[%s0 + $0x200] sm:$0xff]
  %v91 = vld [vmem:[%s0 + $0x208] sm:$0xff]
  %v92 = vld [vmem:[%s0 + $0x210] sm:$0xff]
  %v93 = vld [vmem:[%s0 + $0x218] sm:$0xff]
  %v94 = vld [vmem:[%s0 + $0x220] sm:$0xff]
  %v95 = vld [vmem:[%s0 + $0x228] sm:$0xff]
  %v96 = vld [vmem:[%s0 + $0x230] sm:$0xff]
  %v97 = vld [vmem:[%s0 + $0x238] sm:$0xff]
  %v98 = vld [vmem:[%s0 + $0x240] sm:$0xff]
  %v99 = vld [vmem:[%s0 + $0x248] sm:$0xff]
  %v100 = vld [vmem:[%s0 + $0x250] sm:$0xff]
  %v101 = vld [vmem:[%s0 + $0x258] sm:$0xff]
  %v102 = vld [vmem:[%s0 + $0x260] sm:$0xff]
  %v103 = vld [vmem:[%s0 + $0x268] sm:$0xff]
  %v104 = vld [vmem:[%s0 + $0x270] sm:$0xff]
  %v105 = vld [vmem:[%s0 + $0x278] sm:$0xff]
  %v106 = vld [vmem:[%s0 + $0x280] sm:$0xff]
  %v107 = vld [vmem:[%s0 + $0x288] sm:$0xff]
  %v108 = vld [vmem:[%s0 + $0x290] sm:$0xff]
  %v109 = vld [vmem:[%s0 + $0x298] sm:$0xff]
  %v110 = vld [vmem:[%s0 + $0x2a0] sm:$0xff]
  %v111 = vld [vmem:[%s0 + $0x2a8] sm:$0xff]
  %v112 = vld [vmem:[%s0 + $0x2b0] sm:$0xff]
  %v113 = vld [vmem:[%s0 + $0x2b8] sm:$0xff]
  %v114 = vld [vmem:[%s0 + $0x2c0] sm:$0xff]
  %v115 = vld [vmem:[%s0 + $0x2c8] sm:$0xff]
  %v116 = vld [vmem:[%s0 + $0x2d0] sm:$0xff]
  %v117 = vld [vmem:[%s0 + $0x2d8] sm:$0xff]
  %v118 = vld [vmem:[%s0 + $0x2e0] sm:$0xff]
  %v119 = vld [vmem:[%s0 + $0x2e8] sm:$0xff]
  %v120 = vld [vmem:[%s0 + $0x2f0] sm:$0xff]
  %v121 = vld [vmem:[%s0 + $0x2f8] sm:$0xff]
  %v122 = vld [vmem:[%s0 + $0x300] sm:$0xff]
  %v123 = vld [vmem:[%s0 + $0x308] sm:$0xff]
  %v124 = vld [vmem:[%s0 + $0x310] sm:$0xff]
  %v125 = vld [vmem:[%s0 + $0x318] sm:$0xff]
  %v126 = vld [vmem:[%s0 + $0x320] sm:$0xff]
  %v127 = vld [vmem:[%s0 + $0x328] sm:$0xff]
  %v128 = vld [vmem:[%s0 + $0x330] sm:$0xff]
  %v129 = vld [vmem:[%s0 + $0x338] sm:$0xff]
  %v130 = vld [vmem:[%s0 + $0x340] sm:$0xff]
  %v131 = vld [vmem:[%s0 + $0x348] sm:$0xff]
  %v132 = vld [vmem:[%s0 + $0x350] sm:$0xff]
  %v133 = vld [vmem:[%s0 + $0x358] sm:$0xff]
  %v134 = vld [vmem:[%s0 + $0x360] sm:$0xff]
  %v135 = vld [vmem:[%s0 + $0x368] sm:$0xff]
  %v136 = vld [vmem:[%s0 + $0x370] sm:$0xff]
  %v137 = vld [vmem:[%s0 + $0x378] sm:$0xff]
  %v138 = vld [vmem:[%s0 + $0x380] sm:$0xff]
  %v139 = vld [vmem:[%s0 + $0x388] sm:$0xff]
  %v140 = vld [vmem:[%s0 + $0x390] sm:$0xff]
  %v141 = vld [vmem:[%s0 + $0x398] sm:$0xff]
  %v142 = vld [vmem:[%s0 + $0x3a0] sm:$0xff]
  %v143 = vld [vmem:[%s0 + $0x3a8] sm:$0xff]
  %v144 = vld [vmem:[%s0 + $0x3b0] sm:$0xff]
  %v145 = vld [vmem:[%s0 + $0x3b8] sm:$0xff]
  %v146 = vld [vmem:[%s0 + $0x3c0] sm:$0xff]
  %v147 = vld [vmem:[%s0 + $0x3c8] sm:$0xff]
  %v148 = vld [vmem:[%s0 + $0x3d0] sm:$0xff]
  %v149 = vld [vmem:[%s0 + $0x3d8] sm:$0xff]
  %v150 = vld [vmem:[%s0 + $0x3e0] sm:$0xff]
  %v151 = vld [vmem:[%s0 + $0x3e8] sm:$0xff]
  %v152 = vld [vmem:[%s0 + $0x3f0] sm:$0xff]
  %v153 = vld [vmem:[%s0 + $0x3f8] sm:$0xff]
  %v154 = vld [vmem:[%s1] sm:$0xf]
  %v155 = vld [vmem:[%s1 + $0x4] sm:$0xf]
  %v156 = vld [vmem:[%s1 + $0x8] sm:$0xf]
  %v157 = vld [vmem:[%s1 + $0xc] sm:$0xf]
  %v158 = vld [vmem:[%s1 + $0x10] sm:$0xf]
  %v159 = vld [vmem:[%s1 + $0x14] sm:$0xf]
  %v160 = vld [vmem:[%s1 + $0x18] sm:$0xf]
  %v161 = vld [vmem:[%s1 + $0x1c] sm:$0xf]
  %v162 = vld [vmem:[%s1 + $0x20] sm:$0xf]
  %v163 = vld [vmem:[%s1 + $0x24] sm:$0xf]
  %v164 = vld [vmem:[%s1 + $0x28] sm:$0xf]
  %v165 = vld [vmem:[%s1 + $0x2c] sm:$0xf]
  %v166 = vld [vmem:[%s1 + $0x30] sm:$0xf]
  %v167 = vld [vmem:[%s1 + $0x34] sm:$0xf]
  %v168 = vld [vmem:[%s1 + $0x38] sm:$0xf]
  %v169 = vld [vmem:[%s1 + $0x3c] sm:$0xf]
  %v170 = vld [vmem:[%s1 + $0x40] sm:$0xf]
  %v171 = vld [vmem:[%s1 + $0x44] sm:$0xf]
  %v172 = vld [vmem:[%s1 + $0x48] sm:$0xf]
  %v173 = vld [vmem:[%s1 + $0x4c] sm:$0xf]
  %v174 = vld [vmem:[%s1 + $0x50] sm:$0xf]
  %v175 = vld [vmem:[%s1 + $0x54] sm:$0xf]
  %v176 = vld [vmem:[%s1 + $0x58] sm:$0xf]
  %v177 = vld [vmem:[%s1 + $0x5c] sm:$0xf]
  %v178 = vld [vmem:[%s1 + $0x60] sm:$0xf]
  %v179 = vld [vmem:[%s1 + $0x64] sm:$0xf]
  %v180 = vld [vmem:[%s1 + $0x68] sm:$0xf]
  %v181 = vld [vmem:[%s1 + $0x6c] sm:$0xf]
  %v182 = vld [vmem:[%s1 + $0x70] sm:$0xf]
  %v183 = vld [vmem:[%s1 + $0x74] sm:$0xf]
  %v184 = vld [vmem:[%s1 + $0x78] sm:$0xf]
  %v185 = vld [vmem:[%s1 + $0x7c] sm:$0xf]
  %v186 = vld [vmem:[%s1 + $0x80] sm:$0xf]
  %v187 = vld [vmem:[%s1 + $0x84] sm:$0xf]
  %v188 = vld [vmem:[%s1 + $0x88] sm:$0xf]
  %v189 = vld [vmem:[%s1 + $0x8c] sm:$0xf]
  %v190 = vld [vmem:[%s1 + $0x90] sm:$0xf]
  %v191 = vld [vmem:[%s1 + $0x94] sm:$0xf]
  %v192 = vld [vmem:[%s1 + $0x98] sm:$0xf]
  %v193 = vld [vmem:[%s1 + $0x9c] sm:$0xf]
  %v194 = vld [vmem:[%s1 + $0xa0] sm:$0xf]
  %v195 = vld [vmem:[%s1 + $0xa4] sm:$0xf]
  %v196 = vld [vmem:[%s1 + $0xa8] sm:$0xf]
  %v197 = vld [vmem:[%s1 + $0xac] sm:$0xf]
  %v198 = vld [vmem:[%s1 + $0xb0] sm:$0xf]
  %v199 = vld [vmem:[%s1 + $0xb4] sm:$0xf]
  %v200 = vld [vmem:[%s1 + $0xb8] sm:$0xf]
  %v201 = vld [vmem:[%s1 + $0xbc] sm:$0xf]
  %v202 = vld [vmem:[%s1 + $0xc0] sm:$0xf]
  %v203 = vld [vmem:[%s1 + $0xc4] sm:$0xf]
  %v204 = vld [vmem:[%s1 + $0xc8] sm:$0xf]
  %v205 = vld [vmem:[%s1 + $0xcc] sm:$0xf]
  %v206 = vld [vmem:[%s1 + $0xd0] sm:$0xf]
  %v207 = vld [vmem:[%s1 + $0xd4] sm:$0xf]
  %v208 = vld [vmem:[%s1 + $0xd8] sm:$0xf]
  %v209 = vld [vmem:[%s1 + $0xdc] sm:$0xf]
  %v210 = vld [vmem:[%s1 + $0xe0] sm:$0xf]
  %v211 = vld [vmem:[%s1 + $0xe4] sm:$0xf]
  %v212 = vld [vmem:[%s1 + $0xe8] sm:$0xf]
  %v213 = vld [vmem:[%s1 + $0xec] sm:$0xf]
  %v214 = vld [vmem:[%s1 + $0xf0] sm:$0xf]
  %v215 = vld [vmem:[%s1 + $0xf4] sm:$0xf]
  %v216 = vld [vmem:[%s1 + $0xf8] sm:$0xf]
  %v217 = vld [vmem:[%s1 + $0xfc] sm:$0xf]
  %v346 = vunpack.c.l.b16 %v26
  %v347 = vunpack.c.h.b16 %v26
  %v348 = vunpack.c.l.b16 %v27
  %v349 = vunpack.c.h.b16 %v27
  %v350 = vunpack.c.l.b16 %v28
  %v351 = vunpack.c.h.b16 %v28
  %v352 = vunpack.c.l.b16 %v29
  %v353 = vunpack.c.h.b16 %v29
  %v354 = vunpack.c.l.b16 %v30
  %v355 = vunpack.c.h.b16 %v30
  %v356 = vunpack.c.l.b16 %v31
  %v357 = vunpack.c.h.b16 %v31
  %v358 = vunpack.c.l.b16 %v32
  %v359 = vunpack.c.h.b16 %v32
  %v360 = vunpack.c.l.b16 %v33
  %v361 = vunpack.c.h.b16 %v33
  %v362 = vunpack.c.l.b16 %v34
  %v363 = vunpack.c.h.b16 %v34
  %v364 = vunpack.c.l.b16 %v35
  %v365 = vunpack.c.h.b16 %v35
  %v366 = vunpack.c.l.b16 %v36
  %v367 = vunpack.c.h.b16 %v36
  %v368 = vunpack.c.l.b16 %v37
  %v369 = vunpack.c.h.b16 %v37
  %v370 = vunpack.c.l.b16 %v38
  %v371 = vunpack.c.h.b16 %v38
  %v372 = vunpack.c.l.b16 %v39
  %v373 = vunpack.c.h.b16 %v39
  %v374 = vunpack.c.l.b16 %v40
  %v375 = vunpack.c.h.b16 %v40
  %v376 = vunpack.c.l.b16 %v41
  %v377 = vunpack.c.h.b16 %v41
  %v378 = vunpack.c.l.b16 %v42
  %v379 = vunpack.c.h.b16 %v42
  %v380 = vunpack.c.l.b16 %v43
  %v381 = vunpack.c.h.b16 %v43
  %v382 = vunpack.c.l.b16 %v44
  %v383 = vunpack.c.h.b16 %v44
  %v384 = vunpack.c.l.b16 %v45
  %v385 = vunpack.c.h.b16 %v45
  %v386 = vunpack.c.l.b16 %v46
  %v387 = vunpack.c.h.b16 %v46
  %v388 = vunpack.c.l.b16 %v47
  %v389 = vunpack.c.h.b16 %v47
  %v390 = vunpack.c.l.b16 %v48
  %v391 = vunpack.c.h.b16 %v48
  %v392 = vunpack.c.l.b16 %v49
  %v393 = vunpack.c.h.b16 %v49
  %v394 = vunpack.c.l.b16 %v50
  %v395 = vunpack.c.h.b16 %v50
  %v396 = vunpack.c.l.b16 %v51
  %v397 = vunpack.c.h.b16 %v51
  %v398 = vunpack.c.l.b16 %v52
  %v399 = vunpack.c.h.b16 %v52
  %v400 = vunpack.c.l.b16 %v53
  %v401 = vunpack.c.h.b16 %v53
  %v402 = vunpack.c.l.b16 %v54
  %v403 = vunpack.c.h.b16 %v54
  %v404 = vunpack.c.l.b16 %v55
  %v405 = vunpack.c.h.b16 %v55
  %v406 = vunpack.c.l.b16 %v56
  %v407 = vunpack.c.h.b16 %v56
  %v408 = vunpack.c.l.b16 %v57
  %v409 = vunpack.c.h.b16 %v57
  %v410 = vunpack.c.l.b16 %v58
  %v411 = vunpack.c.h.b16 %v58
  %v412 = vunpack.c.l.b16 %v59
  %v413 = vunpack.c.h.b16 %v59
  %v414 = vunpack.c.l.b16 %v60
  %v415 = vunpack.c.h.b16 %v60
  %v416 = vunpack.c.l.b16 %v61
  %v417 = vunpack.c.h.b16 %v61
  %v418 = vunpack.c.l.b16 %v62
  %v419 = vunpack.c.h.b16 %v62
  %v420 = vunpack.c.l.b16 %v63
  %v421 = vunpack.c.h.b16 %v63
  %v422 = vunpack.c.l.b16 %v64
  %v423 = vunpack.c.h.b16 %v64
  %v424 = vunpack.c.l.b16 %v65
  %v425 = vunpack.c.h.b16 %v65
  %v426 = vunpack.c.l.b16 %v66
  %v427 = vunpack.c.h.b16 %v66
  %v428 = vunpack.c.l.b16 %v67
  %v429 = vunpack.c.h.b16 %v67
  %v430 = vunpack.c.l.b16 %v68
  %v431 = vunpack.c.h.b16 %v68
  %v432 = vunpack.c.l.b16 %v69
  %v433 = vunpack.c.h.b16 %v69
  %v434 = vunpack.c.l.b16 %v70
  %v435 = vunpack.c.h.b16 %v70
  %v436 = vunpack.c.l.b16 %v71
  %v437 = vunpack.c.h.b16 %v71
  %v438 = vunpack.c.l.b16 %v72
  %v439 = vunpack.c.h.b16 %v72
  %v440 = vunpack.c.l.b16 %v73
  %v441 = vunpack.c.h.b16 %v73
  %v442 = vunpack.c.l.b16 %v74
  %v443 = vunpack.c.h.b16 %v74
  %v444 = vunpack.c.l.b16 %v75
  %v445 = vunpack.c.h.b16 %v75
  %v446 = vunpack.c.l.b16 %v76
  %v447 = vunpack.c.h.b16 %v76
  %v448 = vunpack.c.l.b16 %v77
  %v449 = vunpack.c.h.b16 %v77
  %v450 = vunpack.c.l.b16 %v78
  %v451 = vunpack.c.h.b16 %v78
  %v452 = vunpack.c.l.b16 %v79
  %v453 = vunpack.c.h.b16 %v79
  %v454 = vunpack.c.l.b16 %v80
  %v455 = vunpack.c.h.b16 %v80
  %v456 = vunpack.c.l.b16 %v81
  %v457 = vunpack.c.h.b16 %v81
  %v458 = vunpack.c.l.b16 %v82
  %v459 = vunpack.c.h.b16 %v82
  %v460 = vunpack.c.l.b16 %v83
  %v461 = vunpack.c.h.b16 %v83
  %v462 = vunpack.c.l.b16 %v84
  %v463 = vunpack.c.h.b16 %v84
  %v464 = vunpack.c.l.b16 %v85
  %v465 = vunpack.c.h.b16 %v85
  %v466 = vunpack.c.l.b16 %v86
  %v467 = vunpack.c.h.b16 %v86
  %v468 = vunpack.c.l.b16 %v87
  %v469 = vunpack.c.h.b16 %v87
  %v470 = vunpack.c.l.b16 %v88
  %v471 = vunpack.c.h.b16 %v88
  %v472 = vunpack.c.l.b16 %v89
  %v473 = vunpack.c.h.b16 %v89
  %v474 = vunpack.c.l.b16 %v90
  %v475 = vunpack.c.h.b16 %v90
  %v476 = vunpack.c.l.b16 %v91
  %v477 = vunpack.c.h.b16 %v91
  %v478 = vunpack.c.l.b16 %v92
  %v479 = vunpack.c.h.b16 %v92
  %v480 = vunpack.c.l.b16 %v93
  %v481 = vunpack.c.h.b16 %v93
  %v482 = vunpack.c.l.b16 %v94
  %v483 = vunpack.c.h.b16 %v94
  %v484 = vunpack.c.l.b16 %v95
  %v485 = vunpack.c.h.b16 %v95
  %v486 = vunpack.c.l.b16 %v96
  %v487 = vunpack.c.h.b16 %v96
  %v488 = vunpack.c.l.b16 %v97
  %v489 = vunpack.c.h.b16 %v97
  %v490 = vunpack.c.l.b16 %v98
  %v491 = vunpack.c.h.b16 %v98
  %v492 = vunpack.c.l.b16 %v99
  %v493 = vunpack.c.h.b16 %v99
  %v494 = vunpack.c.l.b16 %v100
  %v495 = vunpack.c.h.b16 %v100
  %v496 = vunpack.c.l.b16 %v101
  %v497 = vunpack.c.h.b16 %v101
  %v498 = vunpack.c.l.b16 %v102
  %v499 = vunpack.c.h.b16 %v102
  %v500 = vunpack.c.l.b16 %v103
  %v501 = vunpack.c.h.b16 %v103
  %v502 = vunpack.c.l.b16 %v104
  %v503 = vunpack.c.h.b16 %v104
  %v504 = vunpack.c.l.b16 %v105
  %v505 = vunpack.c.h.b16 %v105
  %v506 = vunpack.c.l.b16 %v106
  %v507 = vunpack.c.h.b16 %v106
  %v508 = vunpack.c.l.b16 %v107
  %v509 = vunpack.c.h.b16 %v107
  %v510 = vunpack.c.l.b16 %v108
  %v511 = vunpack.c.h.b16 %v108
  %v512 = vunpack.c.l.b16 %v109
  %v513 = vunpack.c.h.b16 %v109
  %v514 = vunpack.c.l.b16 %v110
  %v515 = vunpack.c.h.b16 %v110
  %v516 = vunpack.c.l.b16 %v111
  %v517 = vunpack.c.h.b16 %v111
  %v518 = vunpack.c.l.b16 %v112
  %v519 = vunpack.c.h.b16 %v112
  %v520 = vunpack.c.l.b16 %v113
  %v521 = vunpack.c.h.b16 %v113
  %v522 = vunpack.c.l.b16 %v114
  %v523 = vunpack.c.h.b16 %v114
  %v524 = vunpack.c.l.b16 %v115
  %v525 = vunpack.c.h.b16 %v115
  %v526 = vunpack.c.l.b16 %v116
  %v527 = vunpack.c.h.b16 %v116
  %v528 = vunpack.c.l.b16 %v117
  %v529 = vunpack.c.h.b16 %v117
  %v530 = vunpack.c.l.b16 %v118
  %v531 = vunpack.c.h.b16 %v118
  %v532 = vunpack.c.l.b16 %v119
  %v533 = vunpack.c.h.b16 %v119
  %v534 = vunpack.c.l.b16 %v120
  %v535 = vunpack.c.h.b16 %v120
  %v536 = vunpack.c.l.b16 %v121
  %v537 = vunpack.c.h.b16 %v121
  %v538 = vunpack.c.l.b16 %v122
  %v539 = vunpack.c.h.b16 %v122
  %v540 = vunpack.c.l.b16 %v123
  %v541 = vunpack.c.h.b16 %v123
  %v542 = vunpack.c.l.b16 %v124
  %v543 = vunpack.c.h.b16 %v124
  %v544 = vunpack.c.l.b16 %v125
  %v545 = vunpack.c.h.b16 %v125
  %v546 = vunpack.c.l.b16 %v126
  %v547 = vunpack.c.h.b16 %v126
  %v548 = vunpack.c.l.b16 %v127
  %v549 = vunpack.c.h.b16 %v127
  %v550 = vunpack.c.l.b16 %v128
  %v551 = vunpack.c.h.b16 %v128
  %v552 = vunpack.c.l.b16 %v129
  %v553 = vunpack.c.h.b16 %v129
  %v554 = vunpack.c.l.b16 %v130
  %v555 = vunpack.c.h.b16 %v130
  %v556 = vunpack.c.l.b16 %v131
  %v557 = vunpack.c.h.b16 %v131
  %v558 = vunpack.c.l.b16 %v132
  %v559 = vunpack.c.h.b16 %v132
  %v560 = vunpack.c.l.b16 %v133
  %v561 = vunpack.c.h.b16 %v133
  %v562 = vunpack.c.l.b16 %v134
  %v563 = vunpack.c.h.b16 %v134
  %v564 = vunpack.c.l.b16 %v135
  %v565 = vunpack.c.h.b16 %v135
  %v566 = vunpack.c.l.b16 %v136
  %v567 = vunpack.c.h.b16 %v136
  %v568 = vunpack.c.l.b16 %v137
  %v569 = vunpack.c.h.b16 %v137
  %v570 = vunpack.c.l.b16 %v138
  %v571 = vunpack.c.h.b16 %v138
  %v572 = vunpack.c.l.b16 %v139
  %v573 = vunpack.c.h.b16 %v139
  %v574 = vunpack.c.l.b16 %v140
  %v575 = vunpack.c.h.b16 %v140
  %v576 = vunpack.c.l.b16 %v141
  %v577 = vunpack.c.h.b16 %v141
  %v578 = vunpack.c.l.b16 %v142
  %v579 = vunpack.c.h.b16 %v142
  %v580 = vunpack.c.l.b16 %v143
  %v581 = vunpack.c.h.b16 %v143
  %v582 = vunpack.c.l.b16 %v144
  %v583 = vunpack.c.h.b16 %v144
  %v584 = vunpack.c.l.b16 %v145
  %v585 = vunpack.c.h.b16 %v145
  %v586 = vunpack.c.l.b16 %v146
  %v587 = vunpack.c.h.b16 %v146
  %v588 = vunpack.c.l.b16 %v147
  %v589 = vunpack.c.h.b16 %v147
  %v590 = vunpack.c.l.b16 %v148
  %v591 = vunpack.c.h.b16 %v148
  %v592 = vunpack.c.l.b16 %v149
  %v593 = vunpack.c.h.b16 %v149
  %v594 = vunpack.c.l.b16 %v150
  %v595 = vunpack.c.h.b16 %v150
  %v596 = vunpack.c.l.b16 %v151
  %v597 = vunpack.c.h.b16 %v151
  %v598 = vunpack.c.l.b16 %v152
  %v599 = vunpack.c.h.b16 %v152
  %v600 = vunpack.c.l.b16 %v153
  %v601 = vunpack.c.h.b16 %v153
  %v602 = vpack.c.b16 %v350, %v346
  %v603 = vpack.c.b16 %v351, %v347
  %v604 = vpack.c.b16 %v352, %v348
  %v605 = vpack.c.b16 %v353, %v349
  %v606 = vpack.c.b16 %v358, %v354
  %v607 = vpack.c.b16 %v359, %v355
  %v608 = vpack.c.b16 %v360, %v356
  %v609 = vpack.c.b16 %v361, %v357
  %v610 = vpack.c.b16 %v366, %v362
  %v611 = vpack.c.b16 %v367, %v363
  %v612 = vpack.c.b16 %v368, %v364
  %v613 = vpack.c.b16 %v369, %v365
  %v614 = vpack.c.b16 %v374, %v370
  %v615 = vpack.c.b16 %v375, %v371
  %v616 = vpack.c.b16 %v376, %v372
  %v617 = vpack.c.b16 %v377, %v373
  %v618 = vpack.c.b16 %v382, %v378
  %v619 = vpack.c.b16 %v383, %v379
  %v620 = vpack.c.b16 %v384, %v380
  %v621 = vpack.c.b16 %v385, %v381
  %v622 = vpack.c.b16 %v390, %v386
  %v623 = vpack.c.b16 %v391, %v387
  %v624 = vpack.c.b16 %v392, %v388
  %v625 = vpack.c.b16 %v393, %v389
  %v626 = vpack.c.b16 %v398, %v394
  %v627 = vpack.c.b16 %v399, %v395
  %v628 = vpack.c.b16 %v400, %v396
  %v629 = vpack.c.b16 %v401, %v397
  %v630 = vpack.c.b16 %v406, %v402
  %v631 = vpack.c.b16 %v407, %v403
  %v632 = vpack.c.b16 %v408, %v404
  %v633 = vpack.c.b16 %v409, %v405
  %v634 = vpack.c.b16 %v414, %v410
  %v635 = vpack.c.b16 %v415, %v411
  %v636 = vpack.c.b16 %v416, %v412
  %v637 = vpack.c.b16 %v417, %v413
  %v638 = vpack.c.b16 %v422, %v418
  %v639 = vpack.c.b16 %v423, %v419
  %v640 = vpack.c.b16 %v424, %v420
  %v641 = vpack.c.b16 %v425, %v421
  %v642 = vpack.c.b16 %v430, %v426
  %v643 = vpack.c.b16 %v431, %v427
  %v644 = vpack.c.b16 %v432, %v428
  %v645 = vpack.c.b16 %v433, %v429
  %v646 = vpack.c.b16 %v438, %v434
  %v647 = vpack.c.b16 %v439, %v435
  %v648 = vpack.c.b16 %v440, %v436
  %v649 = vpack.c.b16 %v441, %v437
  %v650 = vpack.c.b16 %v446, %v442
  %v651 = vpack.c.b16 %v447, %v443
  %v652 = vpack.c.b16 %v448, %v444
  %v653 = vpack.c.b16 %v449, %v445
  %v654 = vpack.c.b16 %v454, %v450
  %v655 = vpack.c.b16 %v455, %v451
  %v656 = vpack.c.b16 %v456, %v452
  %v657 = vpack.c.b16 %v457, %v453
  %v658 = vpack.c.b16 %v462, %v458
  %v659 = vpack.c.b16 %v463, %v459
  %v660 = vpack.c.b16 %v464, %v460
  %v661 = vpack.c.b16 %v465, %v461
  %v662 = vpack.c.b16 %v470, %v466
  %v663 = vpack.c.b16 %v471, %v467
  %v664 = vpack.c.b16 %v472, %v468
  %v665 = vpack.c.b16 %v473, %v469
  %v666 = vpack.c.b16 %v478, %v474
  %v667 = vpack.c.b16 %v479, %v475
  %v668 = vpack.c.b16 %v480, %v476
  %v669 = vpack.c.b16 %v481, %v477
  %v670 = vpack.c.b16 %v486, %v482
  %v671 = vpack.c.b16 %v487, %v483
  %v672 = vpack.c.b16 %v488, %v484
  %v673 = vpack.c.b16 %v489, %v485
  %v674 = vpack.c.b16 %v494, %v490
  %v675 = vpack.c.b16 %v495, %v491
  %v676 = vpack.c.b16 %v496, %v492
  %v677 = vpack.c.b16 %v497, %v493
  %v678 = vpack.c.b16 %v502, %v498
  %v679 = vpack.c.b16 %v503, %v499
  %v680 = vpack.c.b16 %v504, %v500
  %v681 = vpack.c.b16 %v505, %v501
  %v682 = vpack.c.b16 %v510, %v506
  %v683 = vpack.c.b16 %v511, %v507
  %v684 = vpack.c.b16 %v512, %v508
  %v685 = vpack.c.b16 %v513, %v509
  %v686 = vpack.c.b16 %v518, %v514
  %v687 = vpack.c.b16 %v519, %v515
  %v688 = vpack.c.b16 %v520, %v516
  %v689 = vpack.c.b16 %v521, %v517
  %v690 = vpack.c.b16 %v526, %v522
  %v691 = vpack.c.b16 %v527, %v523
  %v692 = vpack.c.b16 %v528, %v524
  %v693 = vpack.c.b16 %v529, %v525
  %v694 = vpack.c.b16 %v534, %v530
  %v695 = vpack.c.b16 %v535, %v531
  %v696 = vpack.c.b16 %v536, %v532
  %v697 = vpack.c.b16 %v537, %v533
  %v698 = vpack.c.b16 %v542, %v538
  %v699 = vpack.c.b16 %v543, %v539
  %v700 = vpack.c.b16 %v544, %v540
  %v701 = vpack.c.b16 %v545, %v541
  %v702 = vpack.c.b16 %v550, %v546
  %v703 = vpack.c.b16 %v551, %v547
  %v704 = vpack.c.b16 %v552, %v548
  %v705 = vpack.c.b16 %v553, %v549
  %v706 = vpack.c.b16 %v558, %v554
  %v707 = vpack.c.b16 %v559, %v555
  %v708 = vpack.c.b16 %v560, %v556
  %v709 = vpack.c.b16 %v561, %v557
  %v710 = vpack.c.b16 %v566, %v562
  %v711 = vpack.c.b16 %v567, %v563
  %v712 = vpack.c.b16 %v568, %v564
  %v713 = vpack.c.b16 %v569, %v565
  %v714 = vpack.c.b16 %v574, %v570
  %v715 = vpack.c.b16 %v575, %v571
  %v716 = vpack.c.b16 %v576, %v572
  %v717 = vpack.c.b16 %v577, %v573
  %v718 = vpack.c.b16 %v582, %v578
  %v719 = vpack.c.b16 %v583, %v579
  %v720 = vpack.c.b16 %v584, %v580
  %v721 = vpack.c.b16 %v585, %v581
  %v722 = vpack.c.b16 %v590, %v586
  %v723 = vpack.c.b16 %v591, %v587
  %v724 = vpack.c.b16 %v592, %v588
  %v725 = vpack.c.b16 %v593, %v589
  %v726 = vpack.c.b16 %v598, %v594
  %v727 = vpack.c.b16 %v599, %v595
  %v728 = vpack.c.b16 %v600, %v596
  %v729 = vpack.c.b16 %v601, %v597
  %v922 = vunpack.c.l.b16 %v154
  %v923 = vunpack.c.l.b16 %v155
  %v924 = vunpack.c.l.b16 %v156
  %v925 = vunpack.c.l.b16 %v157
  %v926 = vunpack.c.l.b16 %v158
  %v927 = vunpack.c.l.b16 %v159
  %v928 = vunpack.c.l.b16 %v160
  %v929 = vunpack.c.l.b16 %v161
  %v930 = vunpack.c.l.b16 %v162
  %v931 = vunpack.c.l.b16 %v163
  %v932 = vunpack.c.l.b16 %v164
  %v933 = vunpack.c.l.b16 %v165
  %v934 = vunpack.c.l.b16 %v166
  %v935 = vunpack.c.l.b16 %v167
  %v936 = vunpack.c.l.b16 %v168
  %v937 = vunpack.c.l.b16 %v169
  %v938 = vunpack.c.l.b16 %v170
  %v939 = vunpack.c.l.b16 %v171
  %v940 = vunpack.c.l.b16 %v172
  %v941 = vunpack.c.l.b16 %v173
  %v942 = vunpack.c.l.b16 %v174
  %v943 = vunpack.c.l.b16 %v175
  %v944 = vunpack.c.l.b16 %v176
  %v945 = vunpack.c.l.b16 %v177
  %v946 = vunpack.c.l.b16 %v178
  %v947 = vunpack.c.l.b16 %v179
  %v948 = vunpack.c.l.b16 %v180
  %v949 = vunpack.c.l.b16 %v181
  %v950 = vunpack.c.l.b16 %v182
  %v951 = vunpack.c.l.b16 %v183
  %v952 = vunpack.c.l.b16 %v184
  %v953 = vunpack.c.l.b16 %v185
  %v954 = vunpack.c.l.b16 %v186
  %v955 = vunpack.c.l.b16 %v187
  %v956 = vunpack.c.l.b16 %v188
  %v957 = vunpack.c.l.b16 %v189
  %v958 = vunpack.c.l.b16 %v190
  %v959 = vunpack.c.l.b16 %v191
  %v960 = vunpack.c.l.b16 %v192
  %v961 = vunpack.c.l.b16 %v193
  %v962 = vunpack.c.l.b16 %v194
  %v963 = vunpack.c.l.b16 %v195
  %v964 = vunpack.c.l.b16 %v196
  %v965 = vunpack.c.l.b16 %v197
  %v966 = vunpack.c.l.b16 %v198
  %v967 = vunpack.c.l.b16 %v199
  %v968 = vunpack.c.l.b16 %v200
  %v969 = vunpack.c.l.b16 %v201
  %v970 = vunpack.c.l.b16 %v202
  %v971 = vunpack.c.l.b16 %v203
  %v972 = vunpack.c.l.b16 %v204
  %v973 = vunpack.c.l.b16 %v205
  %v974 = vunpack.c.l.b16 %v206
  %v975 = vunpack.c.l.b16 %v207
  %v976 = vunpack.c.l.b16 %v208
  %v977 = vunpack.c.l.b16 %v209
  %v978 = vunpack.c.l.b16 %v210
  %v979 = vunpack.c.l.b16 %v211
  %v980 = vunpack.c.l.b16 %v212
  %v981 = vunpack.c.l.b16 %v213
  %v982 = vunpack.c.l.b16 %v214
  %v983 = vunpack.c.l.b16 %v215
  %v984 = vunpack.c.l.b16 %v216
  %v985 = vunpack.c.l.b16 %v217
  %v986 = vpack.c.b16 %v923, %v922
  %v987 = vpack.c.b16 %v925, %v924
  %v988 = vpack.c.b16 %v927, %v926
  %v989 = vpack.c.b16 %v929, %v928
  %v990 = vpack.c.b16 %v931, %v930
  %v991 = vpack.c.b16 %v933, %v932
  %v992 = vpack.c.b16 %v935, %v934
  %v993 = vpack.c.b16 %v937, %v936
  %v994 = vpack.c.b16 %v939, %v938
  %v995 = vpack.c.b16 %v941, %v940
  %v996 = vpack.c.b16 %v943, %v942
  %v997 = vpack.c.b16 %v945, %v944
  %v998 = vpack.c.b16 %v947, %v946
  %v999 = vpack.c.b16 %v949, %v948
  %v1000 = vpack.c.b16 %v951, %v950
  %v1001 = vpack.c.b16 %v953, %v952
  %v1002 = vpack.c.b16 %v955, %v954
  %v1003 = vpack.c.b16 %v957, %v956
  %v1004 = vpack.c.b16 %v959, %v958
  %v1005 = vpack.c.b16 %v961, %v960
  %v1006 = vpack.c.b16 %v963, %v962
  %v1007 = vpack.c.b16 %v965, %v964
  %v1008 = vpack.c.b16 %v967, %v966
  %v1009 = vpack.c.b16 %v969, %v968
  %v1010 = vpack.c.b16 %v971, %v970
  %v1011 = vpack.c.b16 %v973, %v972
  %v1012 = vpack.c.b16 %v975, %v974
  %v1013 = vpack.c.b16 %v977, %v976
  %v1014 = vpack.c.b16 %v979, %v978
  %v1015 = vpack.c.b16 %v981, %v980
  %v1016 = vpack.c.b16 %v983, %v982
  %v1017 = vpack.c.b16 %v985, %v984
  %1050 = vmatprep.subr.bf16.mxu0 0
  %1051 = vmatpush1.bf16.msra.mxu0 %v986
  %1052 = vmatprep.subr.bf16.mxu0 0
  %1053 = vmatpush1.bf16.msra.mxu0 %v987
  %1054 = vmatprep.subr.bf16.mxu0 0
  %1055 = vmatpush1.bf16.msra.mxu0 %v988
  %1056 = vmatprep.subr.bf16.mxu0 0
  %1057 = vmatpush1.bf16.msra.mxu0 %v989
  %1058 = vmatprep.subr.bf16.mxu0 0
  %1059 = vmatpush1.bf16.msra.mxu0 %v990
  %1060 = vmatprep.subr.bf16.mxu0 0
  %1061 = vmatpush1.bf16.msra.mxu0 %v991
  %1062 = vmatprep.subr.bf16.mxu0 0
  %1063 = vmatpush1.bf16.msra.mxu0 %v992
  %1064 = vmatprep.subr.bf16.mxu0 0
  %1065 = vmatpush1.bf16.msra.mxu0 %v993
  %1066 = vmatprep.subr.bf16.mxu0 0
  %1067 = vmatpush1.bf16.msra.mxu0 %v994
  %1068 = vmatprep.subr.bf16.mxu0 0
  %1069 = vmatpush1.bf16.msra.mxu0 %v995
  %1070 = vmatprep.subr.bf16.mxu0 0
  %1071 = vmatpush1.bf16.msra.mxu0 %v996
  %1072 = vmatprep.subr.bf16.mxu0 0
  %1073 = vmatpush1.bf16.msra.mxu0 %v997
  %1074 = vmatprep.subr.bf16.mxu0 0
  %1075 = vmatpush1.bf16.msra.mxu0 %v998
  %1076 = vmatprep.subr.bf16.mxu0 0
  %1077 = vmatpush1.bf16.msra.mxu0 %v999
  %1078 = vmatprep.subr.bf16.mxu0 0
  %1079 = vmatpush1.bf16.msra.mxu0 %v1000
  %1080 = vmatprep.subr.bf16.mxu0 0
  %1081 = vmatpush1.bf16.msra.mxu0 %v1001
  %1082 = vmatprep.mubr.bf16.mxu0 %v603
  %1083 = vmatmul.mubr.bf16.gmra.mrb[0].mxu0 %v602
  %v1084 = vpop.f32.mrb[0].mxu0
  %v1085 = vadd.f32 0.0, %v1084
  %v1086 = vpop.f32.mrb[0].mxu0
  %v1087 = vpop.f32.mrb[0].mxu0
  %v1088 = vadd.f32 0.0, %v1087
  %v1089 = vpop.f32.mrb[0].mxu0
  %1090 = vmatprep.mubr.bf16.mxu0 %v607
  %1091 = vmatmul.mubr.bf16.gmra.mrb[0].mxu0 %v606
  %v1092 = vpop.f32.mrb[0].mxu0
  %v1093 = vadd.f32 0.0, %v1092
  %v1094 = vpop.f32.mrb[0].mxu0
  %v1095 = vpop.f32.mrb[0].mxu0
  %v1096 = vadd.f32 0.0, %v1095
  %v1097 = vpop.f32.mrb[0].mxu0
  %1098 = vmatprep.mubr.bf16.mxu0 %v611
  %1099 = vmatmul.mubr.bf16.gmra.mrb[0].mxu0 %v610
  %v1100 = vpop.f32.mrb[0].mxu0
  %v1101 = vadd.f32 0.0, %v1100
  %v1102 = vpop.f32.mrb[0].mxu0
  %v1103 = vpop.f32.mrb[0].mxu0
  %v1104 = vadd.f32 0.0, %v1103
  %v1105 = vpop.f32.mrb[0].mxu0
  %1106 = vmatprep.mubr.bf16.mxu0 %v615
  %1107 = vmatmul.mubr.bf16.gmra.mrb[0].mxu0 %v614
  %v1108 = vpop.f32.mrb[0].mxu0
  %v1109 = vadd.f32 0.0, %v1108
  %v1110 = vpop.f32.mrb[0].mxu0
  %v1111 = vpop.f32.mrb[0].mxu0
  %v1112 = vadd.f32 0.0, %v1111
  %v1113 = vpop.f32.mrb[0].mxu0
  %1114 = vmatprep.mubr.bf16.mxu0 %v619
  %1115 = vmatmul.mubr.bf16.gmra.mrb[0].mxu0 %v618
  %v1116 = vpop.f32.mrb[0].mxu0
  %v1117 = vadd.f32 0.0, %v1116
  %v1118 = vpop.f32.mrb[0].mxu0
  %v1119 = vpop.f32.mrb[0].mxu0
  %v1120 = vadd.f32 0.0, %v1119
  %v1121 = vpop.f32.mrb[0].mxu0
  %1122 = vmatprep.mubr.bf16.mxu0 %v623
  %1123 = vmatmul.mubr.bf16.gmra.mrb[0].mxu0 %v622
  %v1124 = vpop.f32.mrb[0].mxu0
  %v1125 = vadd.f32 0.0, %v1124
  %v1126 = vpop.f32.mrb[0].mxu0
  %v1127 = vpop.f32.mrb[0].mxu0
  %v1128 = vadd.f32 0.0, %v1127
  %v1129 = vpop.f32.mrb[0].mxu0
  %1130 = vmatprep.mubr.bf16.mxu0 %v627
  %1131 = vmatmul.mubr.bf16.gmra.mrb[0].mxu0 %v626
  %v1132 = vpop.f32.mrb[0].mxu0
  %v1133 = vadd.f32 0.0, %v1132
  %v1134 = vpop.f32.mrb[0].mxu0
  %v1135 = vpop.f32.mrb[0].mxu0
  %v1136 = vadd.f32 0.0, %v1135
  %v1137 = vpop.f32.mrb[0].mxu0
  %1138 = vmatprep.mubr.bf16.mxu0 %v631
  %1139 = vmatmul.mubr.bf16.gmra.mrb[0].mxu0 %v630
  %v1140 = vpop.f32.mrb[0].mxu0
  %v1141 = vadd.f32 0.0, %v1140
  %v1142 = vpop.f32.mrb[0].mxu0
  %v1143 = vpop.f32.mrb[0].mxu0
  %v1144 = vadd.f32 0.0, %v1143
  %v1145 = vpop.f32.mrb[0].mxu0
  %1146 = vmatprep.mubr.bf16.mxu0 %v635
  %1147 = vmatmul.mubr.bf16.gmra.mrb[0].mxu0 %v634
  %v1148 = vpop.f32.mrb[0].mxu0
  %v1149 = vadd.f32 0.0, %v1148
  %v1150 = vpop.f32.mrb[0].mxu0
  %v1151 = vpop.f32.mrb[0].mxu0
  %v1152 = vadd.f32 0.0, %v1151
  %v1153 = vpop.f32.mrb[0].mxu0
  %1154 = vmatprep.mubr.bf16.mxu0 %v639
  %1155 = vmatmul.mubr.bf16.gmra.mrb[0].mxu0 %v638
  %v1156 = vpop.f32.mrb[0].mxu0
  %v1157 = vadd.f32 0.0, %v1156
  %v1158 = vpop.f32.mrb[0].mxu0
  %v1159 = vpop.f32.mrb[0].mxu0
  %v1160 = vadd.f32 0.0, %v1159
  %v1161 = vpop.f32.mrb[0].mxu0
  %1162 = vmatprep.mubr.bf16.mxu0 %v643
  %1163 = vmatmul.mubr.bf16.gmra.mrb[0].mxu0 %v642
  %v1164 = vpop.f32.mrb[0].mxu0
  %v1165 = vadd.f32 0.0, %v1164
  %v1166 = vpop.f32.mrb[0].mxu0
  %v1167 = vpop.f32.mrb[0].mxu0
  %v1168 = vadd.f32 0.0, %v1167
  %v1169 = vpop.f32.mrb[0].mxu0
  %1170 = vmatprep.mubr.bf16.mxu0 %v647
  %1171 = vmatmul.mubr.bf16.gmra.mrb[0].mxu0 %v646
  %v1172 = vpop.f32.mrb[0].mxu0
  %v1173 = vadd.f32 0.0, %v1172
  %v1174 = vpop.f32.mrb[0].mxu0
  %v1175 = vpop.f32.mrb[0].mxu0
  %v1176 = vadd.f32 0.0, %v1175
  %v1177 = vpop.f32.mrb[0].mxu0
  %1178 = vmatprep.mubr.bf16.mxu0 %v651
  %1179 = vmatmul.mubr.bf16.gmra.mrb[0].mxu0 %v650
  %v1180 = vpop.f32.mrb[0].mxu0
  %v1181 = vadd.f32 0.0, %v1180
  %v1182 = vpop.f32.mrb[0].mxu0
  %v1183 = vpop.f32.mrb[0].mxu0
  %v1184 = vadd.f32 0.0, %v1183
  %v1185 = vpop.f32.mrb[0].mxu0
  %1186 = vmatprep.mubr.bf16.mxu0 %v655
  %1187 = vmatmul.mubr.bf16.gmra.mrb[0].mxu0 %v654
  %v1188 = vpop.f32.mrb[0].mxu0
  %v1189 = vadd.f32 0.0, %v1188
  %v1190 = vpop.f32.mrb[0].mxu0
  %v1191 = vpop.f32.mrb[0].mxu0
  %v1192 = vadd.f32 0.0, %v1191
  %v1193 = vpop.f32.mrb[0].mxu0
  %1194 = vmatprep.mubr.bf16.mxu0 %v659
  %1195 = vmatmul.mubr.bf16.gmra.mrb[0].mxu0 %v658
  %v1196 = vpop.f32.mrb[0].mxu0
  %v1197 = vadd.f32 0.0, %v1196
  %v1198 = vpop.f32.mrb[0].mxu0
  %v1199 = vpop.f32.mrb[0].mxu0
  %v1200 = vadd.f32 0.0, %v1199
  %v1201 = vpop.f32.mrb[0].mxu0
  %1202 = vmatprep.mubr.bf16.mxu0 %v663
  %1203 = vmatmul.mubr.bf16.gmra.mrb[0].mxu0 %v662
  %v1204 = vpop.f32.mrb[0].mxu0
  %v1205 = vadd.f32 0.0, %v1204
  %v1206 = vpop.f32.mrb[0].mxu0
  %v1207 = vpop.f32.mrb[0].mxu0
  %v1208 = vadd.f32 0.0, %v1207
  %v1209 = vpop.f32.mrb[0].mxu0
  %1210 = vmatprep.mubr.bf16.mxu0 %v667
  %1211 = vmatmul.mubr.bf16.gmra.mrb[0].mxu0 %v666
  %v1212 = vpop.f32.mrb[0].mxu0
  %v1213 = vadd.f32 0.0, %v1212
  %v1214 = vpop.f32.mrb[0].mxu0
  %v1215 = vpop.f32.mrb[0].mxu0
  %v1216 = vadd.f32 0.0, %v1215
  %v1217 = vpop.f32.mrb[0].mxu0
  %1218 = vmatprep.mubr.bf16.mxu0 %v671
  %1219 = vmatmul.mubr.bf16.gmra.mrb[0].mxu0 %v670
  %v1220 = vpop.f32.mrb[0].mxu0
  %v1221 = vadd.f32 0.0, %v1220
  %v1222 = vpop.f32.mrb[0].mxu0
  %v1223 = vpop.f32.mrb[0].mxu0
  %v1224 = vadd.f32 0.0, %v1223
  %v1225 = vpop.f32.mrb[0].mxu0
  %1226 = vmatprep.mubr.bf16.mxu0 %v675
  %1227 = vmatmul.mubr.bf16.gmra.mrb[0].mxu0 %v674
  %v1228 = vpop.f32.mrb[0].mxu0
  %v1229 = vadd.f32 0.0, %v1228
  %v1230 = vpop.f32.mrb[0].mxu0
  %v1231 = vpop.f32.mrb[0].mxu0
  %v1232 = vadd.f32 0.0, %v1231
  %v1233 = vpop.f32.mrb[0].mxu0
  %1234 = vmatprep.mubr.bf16.mxu0 %v679
  %1235 = vmatmul.mubr.bf16.gmra.mrb[0].mxu0 %v678
  %v1236 = vpop.f32.mrb[0].mxu0
  %v1237 = vadd.f32 0.0, %v1236
  %v1238 = vpop.f32.mrb[0].mxu0
  %v1239 = vpop.f32.mrb[0].mxu0
  %v1240 = vadd.f32 0.0, %v1239
  %v1241 = vpop.f32.mrb[0].mxu0
  %1242 = vmatprep.mubr.bf16.mxu0 %v683
  %1243 = vmatmul.mubr.bf16.gmra.mrb[0].mxu0 %v682
  %v1244 = vpop.f32.mrb[0].mxu0
  %v1245 = vadd.f32 0.0, %v1244
  %v1246 = vpop.f32.mrb[0].mxu0
  %v1247 = vpop.f32.mrb[0].mxu0
  %v1248 = vadd.f32 0.0, %v1247
  %v1249 = vpop.f32.mrb[0].mxu0
  %1250 = vmatprep.mubr.bf16.mxu0 %v687
  %1251 = vmatmul.mubr.bf16.gmra.mrb[0].mxu0 %v686
  %v1252 = vpop.f32.mrb[0].mxu0
  %v1253 = vadd.f32 0.0, %v1252
  %v1254 = vpop.f32.mrb[0].mxu0
  %v1255 = vpop.f32.mrb[0].mxu0
  %v1256 = vadd.f32 0.0, %v1255
  %v1257 = vpop.f32.mrb[0].mxu0
  %1258 = vmatprep.mubr.bf16.mxu0 %v691
  %1259 = vmatmul.mubr.bf16.gmra.mrb[0].mxu0 %v690
  %v1260 = vpop.f32.mrb[0].mxu0
  %v1261 = vadd.f32 0.0, %v1260
  %v1262 = vpop.f32.mrb[0].mxu0
  %v1263 = vpop.f32.mrb[0].mxu0
  %v1264 = vadd.f32 0.0, %v1263
  %v1265 = vpop.f32.mrb[0].mxu0
  %1266 = vmatprep.mubr.bf16.mxu0 %v695
  %1267 = vmatmul.mubr.bf16.gmra.mrb[0].mxu0 %v694
  %v1268 = vpop.f32.mrb[0].mxu0
  %v1269 = vadd.f32 0.0, %v1268
  %v1270 = vpop.f32.mrb[0].mxu0
  %v1271 = vpop.f32.mrb[0].mxu0
  %v1272 = vadd.f32 0.0, %v1271
  %v1273 = vpop.f32.mrb[0].mxu0
  %1274 = vmatprep.mubr.bf16.mxu0 %v699
  %1275 = vmatmul.mubr.bf16.gmra.mrb[0].mxu0 %v698
  %v1276 = vpop.f32.mrb[0].mxu0
  %v1277 = vadd.f32 0.0, %v1276
  %v1278 = vpop.f32.mrb[0].mxu0
  %v1279 = vpop.f32.mrb[0].mxu0
  %v1280 = vadd.f32 0.0, %v1279
  %v1281 = vpop.f32.mrb[0].mxu0
  %1282 = vmatprep.mubr.bf16.mxu0 %v703
  %1283 = vmatmul.mubr.bf16.gmra.mrb[0].mxu0 %v702
  %v1284 = vpop.f32.mrb[0].mxu0
  %v1285 = vadd.f32 0.0, %v1284
  %v1286 = vpop.f32.mrb[0].mxu0
  %v1287 = vpop.f32.mrb[0].mxu0
  %v1288 = vadd.f32 0.0, %v1287
  %v1289 = vpop.f32.mrb[0].mxu0
  %1290 = vmatprep.mubr.bf16.mxu0 %v707
  %1291 = vmatmul.mubr.bf16.gmra.mrb[0].mxu0 %v706
  %v1292 = vpop.f32.mrb[0].mxu0
  %v1293 = vadd.f32 0.0, %v1292
  %v1294 = vpop.f32.mrb[0].mxu0
  %v1295 = vpop.f32.mrb[0].mxu0
  %v1296 = vadd.f32 0.0, %v1295
  %v1297 = vpop.f32.mrb[0].mxu0
  %1298 = vmatprep.mubr.bf16.mxu0 %v711
  %1299 = vmatmul.mubr.bf16.gmra.mrb[0].mxu0 %v710
  %v1300 = vpop.f32.mrb[0].mxu0
  %v1301 = vadd.f32 0.0, %v1300
  %v1302 = vpop.f32.mrb[0].mxu0
  %v1303 = vpop.f32.mrb[0].mxu0
  %v1304 = vadd.f32 0.0, %v1303
  %v1305 = vpop.f32.mrb[0].mxu0
  %1306 = vmatprep.mubr.bf16.mxu0 %v715
  %1307 = vmatmul.mubr.bf16.gmra.mrb[0].mxu0 %v714
  %v1308 = vpop.f32.mrb[0].mxu0
  %v1309 = vadd.f32 0.0, %v1308
  %v1310 = vpop.f32.mrb[0].mxu0
  %v1311 = vpop.f32.mrb[0].mxu0
  %v1312 = vadd.f32 0.0, %v1311
  %v1313 = vpop.f32.mrb[0].mxu0
  %1314 = vmatprep.mubr.bf16.mxu0 %v719
  %1315 = vmatmul.mubr.bf16.gmra.mrb[0].mxu0 %v718
  %v1316 = vpop.f32.mrb[0].mxu0
  %v1317 = vadd.f32 0.0, %v1316
  %v1318 = vpop.f32.mrb[0].mxu0
  %v1319 = vpop.f32.mrb[0].mxu0
  %v1320 = vadd.f32 0.0, %v1319
  %v1321 = vpop.f32.mrb[0].mxu0
  %1322 = vmatprep.mubr.bf16.mxu0 %v723
  %1323 = vmatmul.mubr.bf16.gmra.mrb[0].mxu0 %v722
  %v1324 = vpop.f32.mrb[0].mxu0
  %v1325 = vadd.f32 0.0, %v1324
  %v1326 = vpop.f32.mrb[0].mxu0
  %v1327 = vpop.f32.mrb[0].mxu0
  %v1328 = vadd.f32 0.0, %v1327
  %v1329 = vpop.f32.mrb[0].mxu0
  %1330 = vmatprep.mubr.bf16.mxu0 %v727
  %1331 = vmatmul.mubr.bf16.gmra.mrb[0].mxu0 %v726
  %v1332 = vpop.f32.mrb[0].mxu0
  %v1333 = vadd.f32 0.0, %v1332
  %v1334 = vpop.f32.mrb[0].mxu0
  %v1335 = vpop.f32.mrb[0].mxu0
  %v1336 = vadd.f32 0.0, %v1335
  %v1337 = vpop.f32.mrb[0].mxu0
  %1338 = vdwg.mxu0
  %1339 = vmatprep.subr.bf16.mxu0 0
  %1340 = vmatpush1.bf16.msra.mxu0 %v1002
  %1341 = vmatprep.subr.bf16.mxu0 0
  %1342 = vmatpush1.bf16.msra.mxu0 %v1003
  %1343 = vmatprep.subr.bf16.mxu0 0
  %1344 = vmatpush1.bf16.msra.mxu0 %v1004
  %1345 = vmatprep.subr.bf16.mxu0 0
  %1346 = vmatpush1.bf16.msra.mxu0 %v1005
  %1347 = vmatprep.subr.bf16.mxu0 0
  %1348 = vmatpush1.bf16.msra.mxu0 %v1006
  %1349 = vmatprep.subr.bf16.mxu0 0
  %1350 = vmatpush1.bf16.msra.mxu0 %v1007
  %1351 = vmatprep.subr.bf16.mxu0 0
  %1352 = vmatpush1.bf16.msra.mxu0 %v1008
  %1353 = vmatprep.subr.bf16.mxu0 0
  %1354 = vmatpush1.bf16.msra.mxu0 %v1009
  %1355 = vmatprep.subr.bf16.mxu0 0
  %1356 = vmatpush1.bf16.msra.mxu0 %v1010
  %1357 = vmatprep.subr.bf16.mxu0 0
  %1358 = vmatpush1.bf16.msra.mxu0 %v1011
  %1359 = vmatprep.subr.bf16.mxu0 0
  %1360 = vmatpush1.bf16.msra.mxu0 %v1012
  %1361 = vmatprep.subr.bf16.mxu0 0
  %1362 = vmatpush1.bf16.msra.mxu0 %v1013
  %1363 = vmatprep.subr.bf16.mxu0 0
  %1364 = vmatpush1.bf16.msra.mxu0 %v1014
  %1365 = vmatprep.subr.bf16.mxu0 0
  %1366 = vmatpush1.bf16.msra.mxu0 %v1015
  %1367 = vmatprep.subr.bf16.mxu0 0
  %1368 = vmatpush1.bf16.msra.mxu0 %v1016
  %1369 = vmatprep.subr.bf16.mxu0 0
  %1370 = vmatpush1.bf16.msra.mxu0 %v1017
  %1371 = vmatprep.mubr.bf16.mxu0 %v605
  %1372 = vmatmul.mubr.bf16.gmra.mrb[0].mxu0 %v604
  %v1373 = vpop.f32.mrb[0].mxu0
  %v1374 = vadd.f32 %v1085, %v1373
  %v1375 = vpop.f32.mrb[0].mxu0
  %v1376 = vpop.f32.mrb[0].mxu0
  %v1377 = vadd.f32 %v1088, %v1376
  %v1378 = vpop.f32.mrb[0].mxu0
  %1379 = vmatprep.mubr.bf16.mxu0 %v609
  %1380 = vmatmul.mubr.bf16.gmra.mrb[0].mxu0 %v608
  %v1381 = vpop.f32.mrb[0].mxu0
  %v1382 = vadd.f32 %v1093, %v1381
  %v1383 = vpop.f32.mrb[0].mxu0
  %v1384 = vpop.f32.mrb[0].mxu0
  %v1385 = vadd.f32 %v1096, %v1384
  %v1386 = vpop.f32.mrb[0].mxu0
  %1387 = vmatprep.mubr.bf16.mxu0 %v613
  %1388 = vmatmul.mubr.bf16.gmra.mrb[0].mxu0 %v612
  %v1389 = vpop.f32.mrb[0].mxu0
  %v1390 = vadd.f32 %v1101, %v1389
  %v1391 = vpop.f32.mrb[0].mxu0
  %v1392 = vpop.f32.mrb[0].mxu0
  %v1393 = vadd.f32 %v1104, %v1392
  %v1394 = vpop.f32.mrb[0].mxu0
  %1395 = vmatprep.mubr.bf16.mxu0 %v617
  %1396 = vmatmul.mubr.bf16.gmra.mrb[0].mxu0 %v616
  %v1397 = vpop.f32.mrb[0].mxu0
  %v1398 = vadd.f32 %v1109, %v1397
  %v1399 = vpop.f32.mrb[0].mxu0
  %v1400 = vpop.f32.mrb[0].mxu0
  %v1401 = vadd.f32 %v1112, %v1400
  %v1402 = vpop.f32.mrb[0].mxu0
  %1403 = vmatprep.mubr.bf16.mxu0 %v621
  %1404 = vmatmul.mubr.bf16.gmra.mrb[0].mxu0 %v620
  %v1405 = vpop.f32.mrb[0].mxu0
  %v1406 = vadd.f32 %v1117, %v1405
  %v1407 = vpop.f32.mrb[0].mxu0
  %v1408 = vpop.f32.mrb[0].mxu0
  %v1409 = vadd.f32 %v1120, %v1408
  %v1410 = vpop.f32.mrb[0].mxu0
  %1411 = vmatprep.mubr.bf16.mxu0 %v625
  %1412 = vmatmul.mubr.bf16.gmra.mrb[0].mxu0 %v624
  %v1413 = vpop.f32.mrb[0].mxu0
  %v1414 = vadd.f32 %v1125, %v1413
  %v1415 = vpop.f32.mrb[0].mxu0
  %v1416 = vpop.f32.mrb[0].mxu0
  %v1417 = vadd.f32 %v1128, %v1416
  %v1418 = vpop.f32.mrb[0].mxu0
  %1419 = vmatprep.mubr.bf16.mxu0 %v629
  %1420 = vmatmul.mubr.bf16.gmra.mrb[0].mxu0 %v628
  %v1421 = vpop.f32.mrb[0].mxu0
  %v1422 = vadd.f32 %v1133, %v1421
  %v1423 = vpop.f32.mrb[0].mxu0
  %v1424 = vpop.f32.mrb[0].mxu0
  %v1425 = vadd.f32 %v1136, %v1424
  %v1426 = vpop.f32.mrb[0].mxu0
  %1427 = vmatprep.mubr.bf16.mxu0 %v633
  %1428 = vmatmul.mubr.bf16.gmra.mrb[0].mxu0 %v632
  %v1429 = vpop.f32.mrb[0].mxu0
  %v1430 = vadd.f32 %v1141, %v1429
  %v1431 = vpop.f32.mrb[0].mxu0
  %v1432 = vpop.f32.mrb[0].mxu0
  %v1433 = vadd.f32 %v1144, %v1432
  %v1434 = vpop.f32.mrb[0].mxu0
  %1435 = vmatprep.mubr.bf16.mxu0 %v637
  %1436 = vmatmul.mubr.bf16.gmra.mrb[0].mxu0 %v636
  %v1437 = vpop.f32.mrb[0].mxu0
  %v1438 = vadd.f32 %v1149, %v1437
  %v1439 = vpop.f32.mrb[0].mxu0
  %v1440 = vpop.f32.mrb[0].mxu0
  %v1441 = vadd.f32 %v1152, %v1440
  %v1442 = vpop.f32.mrb[0].mxu0
  %1443 = vmatprep.mubr.bf16.mxu0 %v641
  %1444 = vmatmul.mubr.bf16.gmra.mrb[0].mxu0 %v640
  %v1445 = vpop.f32.mrb[0].mxu0
  %v1446 = vadd.f32 %v1157, %v1445
  %v1447 = vpop.f32.mrb[0].mxu0
  %v1448 = vpop.f32.mrb[0].mxu0
  %v1449 = vadd.f32 %v1160, %v1448
  %v1450 = vpop.f32.mrb[0].mxu0
  %1451 = vmatprep.mubr.bf16.mxu0 %v645
  %1452 = vmatmul.mubr.bf16.gmra.mrb[0].mxu0 %v644
  %v1453 = vpop.f32.mrb[0].mxu0
  %v1454 = vadd.f32 %v1165, %v1453
  %v1455 = vpop.f32.mrb[0].mxu0
  %v1456 = vpop.f32.mrb[0].mxu0
  %v1457 = vadd.f32 %v1168, %v1456
  %v1458 = vpop.f32.mrb[0].mxu0
  %1459 = vmatprep.mubr.bf16.mxu0 %v649
  %1460 = vmatmul.mubr.bf16.gmra.mrb[0].mxu0 %v648
  %v1461 = vpop.f32.mrb[0].mxu0
  %v1462 = vadd.f32 %v1173, %v1461
  %v1463 = vpop.f32.mrb[0].mxu0
  %v1464 = vpop.f32.mrb[0].mxu0
  %v1465 = vadd.f32 %v1176, %v1464
  %v1466 = vpop.f32.mrb[0].mxu0
  %1467 = vmatprep.mubr.bf16.mxu0 %v653
  %1468 = vmatmul.mubr.bf16.gmra.mrb[0].mxu0 %v652
  %v1469 = vpop.f32.mrb[0].mxu0
  %v1470 = vadd.f32 %v1181, %v1469
  %v1471 = vpop.f32.mrb[0].mxu0
  %v1472 = vpop.f32.mrb[0].mxu0
  %v1473 = vadd.f32 %v1184, %v1472
  %v1474 = vpop.f32.mrb[0].mxu0
  %1475 = vmatprep.mubr.bf16.mxu0 %v657
  %1476 = vmatmul.mubr.bf16.gmra.mrb[0].mxu0 %v656
  %v1477 = vpop.f32.mrb[0].mxu0
  %v1478 = vadd.f32 %v1189, %v1477
  %v1479 = vpop.f32.mrb[0].mxu0
  %v1480 = vpop.f32.mrb[0].mxu0
  %v1481 = vadd.f32 %v1192, %v1480
  %v1482 = vpop.f32.mrb[0].mxu0
  %1483 = vmatprep.mubr.bf16.mxu0 %v661
  %1484 = vmatmul.mubr.bf16.gmra.mrb[0].mxu0 %v660
  %v1485 = vpop.f32.mrb[0].mxu0
  %v1486 = vadd.f32 %v1197, %v1485
  %v1487 = vpop.f32.mrb[0].mxu0
  %v1488 = vpop.f32.mrb[0].mxu0
  %v1489 = vadd.f32 %v1200, %v1488
  %v1490 = vpop.f32.mrb[0].mxu0
  %1491 = vmatprep.mubr.bf16.mxu0 %v665
  %1492 = vmatmul.mubr.bf16.gmra.mrb[0].mxu0 %v664
  %v1493 = vpop.f32.mrb[0].mxu0
  %v1494 = vadd.f32 %v1205, %v1493
  %v1495 = vpop.f32.mrb[0].mxu0
  %v1496 = vpop.f32.mrb[0].mxu0
  %v1497 = vadd.f32 %v1208, %v1496
  %v1498 = vpop.f32.mrb[0].mxu0
  %1499 = vmatprep.mubr.bf16.mxu0 %v669
  %1500 = vmatmul.mubr.bf16.gmra.mrb[0].mxu0 %v668
  %v1501 = vpop.f32.mrb[0].mxu0
  %v1502 = vadd.f32 %v1213, %v1501
  %v1503 = vpop.f32.mrb[0].mxu0
  %v1504 = vpop.f32.mrb[0].mxu0
  %v1505 = vadd.f32 %v1216, %v1504
  %v1506 = vpop.f32.mrb[0].mxu0
  %1507 = vmatprep.mubr.bf16.mxu0 %v673
  %1508 = vmatmul.mubr.bf16.gmra.mrb[0].mxu0 %v672
  %v1509 = vpop.f32.mrb[0].mxu0
  %v1510 = vadd.f32 %v1221, %v1509
  %v1511 = vpop.f32.mrb[0].mxu0
  %v1512 = vpop.f32.mrb[0].mxu0
  %v1513 = vadd.f32 %v1224, %v1512
  %v1514 = vpop.f32.mrb[0].mxu0
  %1515 = vmatprep.mubr.bf16.mxu0 %v677
  %1516 = vmatmul.mubr.bf16.gmra.mrb[0].mxu0 %v676
  %v1517 = vpop.f32.mrb[0].mxu0
  %v1518 = vadd.f32 %v1229, %v1517
  %v1519 = vpop.f32.mrb[0].mxu0
  %v1520 = vpop.f32.mrb[0].mxu0
  %v1521 = vadd.f32 %v1232, %v1520
  %v1522 = vpop.f32.mrb[0].mxu0
  %1523 = vmatprep.mubr.bf16.mxu0 %v681
  %1524 = vmatmul.mubr.bf16.gmra.mrb[0].mxu0 %v680
  %v1525 = vpop.f32.mrb[0].mxu0
  %v1526 = vadd.f32 %v1237, %v1525
  %v1527 = vpop.f32.mrb[0].mxu0
  %v1528 = vpop.f32.mrb[0].mxu0
  %v1529 = vadd.f32 %v1240, %v1528
  %v1530 = vpop.f32.mrb[0].mxu0
  %1531 = vmatprep.mubr.bf16.mxu0 %v685
  %1532 = vmatmul.mubr.bf16.gmra.mrb[0].mxu0 %v684
  %v1533 = vpop.f32.mrb[0].mxu0
  %v1534 = vadd.f32 %v1245, %v1533
  %v1535 = vpop.f32.mrb[0].mxu0
  %v1536 = vpop.f32.mrb[0].mxu0
  %v1537 = vadd.f32 %v1248, %v1536
  %v1538 = vpop.f32.mrb[0].mxu0
  %1539 = vmatprep.mubr.bf16.mxu0 %v689
  %1540 = vmatmul.mubr.bf16.gmra.mrb[0].mxu0 %v688
  %v1541 = vpop.f32.mrb[0].mxu0
  %v1542 = vadd.f32 %v1253, %v1541
  %v1543 = vpop.f32.mrb[0].mxu0
  %v1544 = vpop.f32.mrb[0].mxu0
  %v1545 = vadd.f32 %v1256, %v1544
  %v1546 = vpop.f32.mrb[0].mxu0
  %1547 = vmatprep.mubr.bf16.mxu0 %v693
  %1548 = vmatmul.mubr.bf16.gmra.mrb[0].mxu0 %v692
  %v1549 = vpop.f32.mrb[0].mxu0
  %v1550 = vadd.f32 %v1261, %v1549
  %v1551 = vpop.f32.mrb[0].mxu0
  %v1552 = vpop.f32.mrb[0].mxu0
  %v1553 = vadd.f32 %v1264, %v1552
  %v1554 = vpop.f32.mrb[0].mxu0
  %1555 = vmatprep.mubr.bf16.mxu0 %v697
  %1556 = vmatmul.mubr.bf16.gmra.mrb[0].mxu0 %v696
  %v1557 = vpop.f32.mrb[0].mxu0
  %v1558 = vadd.f32 %v1269, %v1557
  %v1559 = vpop.f32.mrb[0].mxu0
  %v1560 = vpop.f32.mrb[0].mxu0
  %v1561 = vadd.f32 %v1272, %v1560
  %v1562 = vpop.f32.mrb[0].mxu0
  %1563 = vmatprep.mubr.bf16.mxu0 %v701
  %1564 = vmatmul.mubr.bf16.gmra.mrb[0].mxu0 %v700
  %v1565 = vpop.f32.mrb[0].mxu0
  %v1566 = vadd.f32 %v1277, %v1565
  %v1567 = vpop.f32.mrb[0].mxu0
  %v1568 = vpop.f32.mrb[0].mxu0
  %v1569 = vadd.f32 %v1280, %v1568
  %v1570 = vpop.f32.mrb[0].mxu0
  %1571 = vmatprep.mubr.bf16.mxu0 %v705
  %1572 = vmatmul.mubr.bf16.gmra.mrb[0].mxu0 %v704
  %v1573 = vpop.f32.mrb[0].mxu0
  %v1574 = vadd.f32 %v1285, %v1573
  %v1575 = vpop.f32.mrb[0].mxu0
  %v1576 = vpop.f32.mrb[0].mxu0
  %v1577 = vadd.f32 %v1288, %v1576
  %v1578 = vpop.f32.mrb[0].mxu0
  %1579 = vmatprep.mubr.bf16.mxu0 %v709
  %1580 = vmatmul.mubr.bf16.gmra.mrb[0].mxu0 %v708
  %v1581 = vpop.f32.mrb[0].mxu0
  %v1582 = vadd.f32 %v1293, %v1581
  %v1583 = vpop.f32.mrb[0].mxu0
  %v1584 = vpop.f32.mrb[0].mxu0
  %v1585 = vadd.f32 %v1296, %v1584
  %v1586 = vpop.f32.mrb[0].mxu0
  %1587 = vmatprep.mubr.bf16.mxu0 %v713
  %1588 = vmatmul.mubr.bf16.gmra.mrb[0].mxu0 %v712
  %v1589 = vpop.f32.mrb[0].mxu0
  %v1590 = vadd.f32 %v1301, %v1589
  %v1591 = vpop.f32.mrb[0].mxu0
  %v1592 = vpop.f32.mrb[0].mxu0
  %v1593 = vadd.f32 %v1304, %v1592
  %v1594 = vpop.f32.mrb[0].mxu0
  %1595 = vmatprep.mubr.bf16.mxu0 %v717
  %1596 = vmatmul.mubr.bf16.gmra.mrb[0].mxu0 %v716
  %v1597 = vpop.f32.mrb[0].mxu0
  %v1598 = vadd.f32 %v1309, %v1597
  %v1599 = vpop.f32.mrb[0].mxu0
  %v1600 = vpop.f32.mrb[0].mxu0
  %v1601 = vadd.f32 %v1312, %v1600
  %v1602 = vpop.f32.mrb[0].mxu0
  %1603 = vmatprep.mubr.bf16.mxu0 %v721
  %1604 = vmatmul.mubr.bf16.gmra.mrb[0].mxu0 %v720
  %v1605 = vpop.f32.mrb[0].mxu0
  %v1606 = vadd.f32 %v1317, %v1605
  %v1607 = vpop.f32.mrb[0].mxu0
  %v1608 = vpop.f32.mrb[0].mxu0
  %v1609 = vadd.f32 %v1320, %v1608
  %v1610 = vpop.f32.mrb[0].mxu0
  %1611 = vmatprep.mubr.bf16.mxu0 %v725
  %1612 = vmatmul.mubr.bf16.gmra.mrb[0].mxu0 %v724
  %v1613 = vpop.f32.mrb[0].mxu0
  %v1614 = vadd.f32 %v1325, %v1613
  %v1615 = vpop.f32.mrb[0].mxu0
  %v1616 = vpop.f32.mrb[0].mxu0
  %v1617 = vadd.f32 %v1328, %v1616
  %v1618 = vpop.f32.mrb[0].mxu0
  %1619 = vmatprep.mubr.bf16.mxu0 %v729
  %1620 = vmatmul.mubr.bf16.gmra.mrb[0].mxu0 %v728
  %v1621 = vpop.f32.mrb[0].mxu0
  %v1622 = vadd.f32 %v1333, %v1621
  %v1623 = vpop.f32.mrb[0].mxu0
  %v1624 = vpop.f32.mrb[0].mxu0
  %v1625 = vadd.f32 %v1336, %v1624
  %v1626 = vpop.f32.mrb[0].mxu0
  %1627 = vdwg.mxu0
  %v1628 = vld [vmem:[%s2] sm:$0xff]
  %v1629 = vld [vmem:[%s2 + $0x8] sm:$0xff]
  %vm1630 = vcmask 130048
  %v1632 = vsel %vm1630, %v1374, 0
  %v1635 = vsel %vm1630, %v1377, 0
  %v1638 = vsel %vm1630, %v1382, 0
  %v1641 = vsel %vm1630, %v1385, 0
  %v1644 = vsel %vm1630, %v1390, 0
  %v1647 = vsel %vm1630, %v1393, 0
  %v1650 = vsel %vm1630, %v1398, 0
  %v1653 = vsel %vm1630, %v1401, 0
  %v1656 = vsel %vm1630, %v1406, 0
  %v1659 = vsel %vm1630, %v1409, 0
  %v1662 = vsel %vm1630, %v1414, 0
  %v1665 = vsel %vm1630, %v1417, 0
  %v1668 = vsel %vm1630, %v1422, 0
  %v1671 = vsel %vm1630, %v1425, 0
  %v1674 = vsel %vm1630, %v1430, 0
  %v1677 = vsel %vm1630, %v1433, 0
  %v1680 = vsel %vm1630, %v1438, 0
  %v1683 = vsel %vm1630, %v1441, 0
  %v1686 = vsel %vm1630, %v1446, 0
  %v1689 = vsel %vm1630, %v1449, 0
  %v1692 = vsel %vm1630, %v1454, 0
  %v1695 = vsel %vm1630, %v1457, 0
  %v1698 = vsel %vm1630, %v1462, 0
  %v1701 = vsel %vm1630, %v1465, 0
  %v1704 = vsel %vm1630, %v1470, 0
  %v1707 = vsel %vm1630, %v1473, 0
  %v1710 = vsel %vm1630, %v1478, 0
  %v1713 = vsel %vm1630, %v1481, 0
  %v1716 = vsel %vm1630, %v1486, 0
  %v1719 = vsel %vm1630, %v1489, 0
  %v1722 = vsel %vm1630, %v1494, 0
  %v1725 = vsel %vm1630, %v1497, 0
  %v1728 = vsel %vm1630, %v1502, 0
  %v1731 = vsel %vm1630, %v1505, 0
  %v1734 = vsel %vm1630, %v1510, 0
  %v1737 = vsel %vm1630, %v1513, 0
  %v1740 = vsel %vm1630, %v1518, 0
  %v1743 = vsel %vm1630, %v1521, 0
  %v1746 = vsel %vm1630, %v1526, 0
  %v1749 = vsel %vm1630, %v1529, 0
  %v1752 = vsel %vm1630, %v1534, 0
  %v1755 = vsel %vm1630, %v1537, 0
  %v1758 = vsel %vm1630, %v1542, 0
  %v1761 = vsel %vm1630, %v1545, 0
  %v1764 = vsel %vm1630, %v1550, 0
  %v1767 = vsel %vm1630, %v1553, 0
  %v1770 = vsel %vm1630, %v1558, 0
  %v1773 = vsel %vm1630, %v1561, 0
  %v1776 = vsel %vm1630, %v1566, 0
  %v1779 = vsel %vm1630, %v1569, 0
  %v1782 = vsel %vm1630, %v1574, 0
  %v1785 = vsel %vm1630, %v1577, 0
  %v1788 = vsel %vm1630, %v1582, 0
  %v1791 = vsel %vm1630, %v1585, 0
  %v1794 = vsel %vm1630, %v1590, 0
  %v1797 = vsel %vm1630, %v1593, 0
  %v1800 = vsel %vm1630, %v1598, 0
  %v1803 = vsel %vm1630, %v1601, 0
  %v1806 = vsel %vm1630, %v1606, 0
  %v1809 = vsel %vm1630, %v1609, 0
  %v1812 = vsel %vm1630, %v1614, 0
  %v1815 = vsel %vm1630, %v1617, 0
  %v1818 = vsel %vm1630, %v1622, 0
  %v1821 = vsel %vm1630, %v1625, 0
  %1823 = vmatprep.subr.mxu0 0.0
  %1824 = vmatpush1.msra.mxu0 %v1628
  %1825 = vmatprep.subr.mxu0 0.0
  %1826 = vmatpush1.msra.mxu0 %v1629
  %1827 = vmatprep.subr.mxu0 0.0
  %1828 = vmatpush1.msra.mxu0 0.0
  %1829 = vmatprep.subr.mxu0 0.0
  %1830 = vmatpush1.msra.mxu0 0.0
  %1831 = vmatprep.subr.mxu0 0.0
  %1832 = vmatpush1.msra.mxu0 0.0
  %1833 = vmatprep.subr.mxu0 0.0
  %1834 = vmatpush1.msra.mxu0 0.0
  %1835 = vmatprep.subr.mxu0 0.0
  %1836 = vmatpush1.msra.mxu0 0.0
  %1837 = vmatprep.subr.mxu0 0.0
  %1838 = vmatpush1.msra.mxu0 0.0
  %1839 = vmatprep.subr.mxu0 0.0
  %1840 = vmatpush1.msra.mxu0 0.0
  %1841 = vmatprep.subr.mxu0 0.0
  %1842 = vmatpush1.msra.mxu0 0.0
  %1843 = vmatprep.subr.mxu0 0.0
  %1844 = vmatpush1.msra.mxu0 0.0
  %1845 = vmatprep.subr.mxu0 0.0
  %1846 = vmatpush1.msra.mxu0 0.0
  %1847 = vmatprep.subr.mxu0 0.0
  %1848 = vmatpush1.msra.mxu0 0.0
  %1849 = vmatprep.subr.mxu0 0.0
  %1850 = vmatpush1.msra.mxu0 0.0
  %1851 = vmatprep.subr.mxu0 0.0
  %1852 = vmatpush1.msra.mxu0 0.0
  %1853 = vmatprep.subr.mxu0 0.0
  %1854 = vmatpush1.msra.mxu0 0.0
  %1855 = vmatprep.subr.mxu0 0.0
  %1856 = vmatpush1.msra.mxu0 0.0
  %1857 = vmatprep.subr.mxu0 0.0
  %1858 = vmatpush1.msra.mxu0 0.0
  %1859 = vmatprep.subr.mxu0 0.0
  %1860 = vmatpush1.msra.mxu0 0.0
  %1861 = vmatprep.subr.mxu0 0.0
  %1862 = vmatpush1.msra.mxu0 0.0
  %1863 = vmatprep.subr.mxu0 0.0
  %1864 = vmatpush1.msra.mxu0 0.0
  %1865 = vmatprep.subr.mxu0 0.0
  %1866 = vmatpush1.msra.mxu0 0.0
  %1867 = vmatprep.subr.mxu0 0.0
  %1868 = vmatpush1.msra.mxu0 0.0
  %1869 = vmatprep.subr.mxu0 0.0
  %1870 = vmatpush1.msra.mxu0 0.0
  %1871 = vmatprep.subr.mxu0 0.0
  %1872 = vmatpush1.msra.mxu0 0.0
  %1873 = vmatprep.subr.mxu0 0.0
  %1874 = vmatpush1.msra.mxu0 0.0
  %1875 = vmatprep.subr.mxu0 0.0
  %1876 = vmatpush1.msra.mxu0 0.0
  %1877 = vmatprep.subr.mxu0 0.0
  %1878 = vmatpush1.msra.mxu0 0.0
  %1879 = vmatprep.subr.mxu0 0.0
  %1880 = vmatpush1.msra.mxu0 0.0
  %1881 = vmatprep.subr.mxu0 0.0
  %1882 = vmatpush1.msra.mxu0 0.0
  %1883 = vmatprep.subr.mxu0 0.0
  %1884 = vmatpush1.msra.mxu0 0.0
  %1885 = vmatprep.subr.mxu0 0.0
  %1886 = vmatpush1.msra.mxu0 0.0
  %1887 = vmatprep.mubr.f32.mxu0 0.0
  %1888 = vmatmul.mubr.f32.gmra.mrb[0].mxu0 %v1632
  %v1889 = vpop.f32.mrb[0].mxu0
  %v1890 = vadd.f32 0.0, %v1889
  %v1891 = vpop.f32.mrb[0].mxu0
  %1892 = vmatprep.mubr.f32.mxu0 0.0
  %1893 = vmatmul.mubr.f32.gmra.mrb[0].mxu0 %v1635
  %v1894 = vpop.f32.mrb[0].mxu0
  %v1895 = vadd.f32 0.0, %v1894
  %v1896 = vpop.f32.mrb[0].mxu0
  %1897 = vmatprep.mubr.f32.mxu0 0.0
  %1898 = vmatmul.mubr.f32.gmra.mrb[0].mxu0 %v1638
  %v1899 = vpop.f32.mrb[0].mxu0
  %v1900 = vadd.f32 0.0, %v1899
  %v1901 = vpop.f32.mrb[0].mxu0
  %1902 = vmatprep.mubr.f32.mxu0 0.0
  %1903 = vmatmul.mubr.f32.gmra.mrb[0].mxu0 %v1641
  %v1904 = vpop.f32.mrb[0].mxu0
  %v1905 = vadd.f32 0.0, %v1904
  %v1906 = vpop.f32.mrb[0].mxu0
  %1907 = vmatprep.mubr.f32.mxu0 0.0
  %1908 = vmatmul.mubr.f32.gmra.mrb[0].mxu0 %v1644
  %v1909 = vpop.f32.mrb[0].mxu0
  %v1910 = vadd.f32 0.0, %v1909
  %v1911 = vpop.f32.mrb[0].mxu0
  %1912 = vmatprep.mubr.f32.mxu0 0.0
  %1913 = vmatmul.mubr.f32.gmra.mrb[0].mxu0 %v1647
  %v1914 = vpop.f32.mrb[0].mxu0
  %v1915 = vadd.f32 0.0, %v1914
  %v1916 = vpop.f32.mrb[0].mxu0
  %1917 = vmatprep.mubr.f32.mxu0 0.0
  %1918 = vmatmul.mubr.f32.gmra.mrb[0].mxu0 %v1650
  %v1919 = vpop.f32.mrb[0].mxu0
  %v1920 = vadd.f32 0.0, %v1919
  %v1921 = vpop.f32.mrb[0].mxu0
  %1922 = vmatprep.mubr.f32.mxu0 0.0
  %1923 = vmatmul.mubr.f32.gmra.mrb[0].mxu0 %v1653
  %v1924 = vpop.f32.mrb[0].mxu0
  %v1925 = vadd.f32 0.0, %v1924
  %v1926 = vpop.f32.mrb[0].mxu0
  %1927 = vmatprep.mubr.f32.mxu0 0.0
  %1928 = vmatmul.mubr.f32.gmra.mrb[0].mxu0 %v1656
  %v1929 = vpop.f32.mrb[0].mxu0
  %v1930 = vadd.f32 0.0, %v1929
  %v1931 = vpop.f32.mrb[0].mxu0
  %1932 = vmatprep.mubr.f32.mxu0 0.0
  %1933 = vmatmul.mubr.f32.gmra.mrb[0].mxu0 %v1659
  %v1934 = vpop.f32.mrb[0].mxu0
  %v1935 = vadd.f32 0.0, %v1934
  %v1936 = vpop.f32.mrb[0].mxu0
  %1937 = vmatprep.mubr.f32.mxu0 0.0
  %1938 = vmatmul.mubr.f32.gmra.mrb[0].mxu0 %v1662
  %v1939 = vpop.f32.mrb[0].mxu0
  %v1940 = vadd.f32 0.0, %v1939
  %v1941 = vpop.f32.mrb[0].mxu0
  %1942 = vmatprep.mubr.f32.mxu0 0.0
  %1943 = vmatmul.mubr.f32.gmra.mrb[0].mxu0 %v1665
  %v1944 = vpop.f32.mrb[0].mxu0
  %v1945 = vadd.f32 0.0, %v1944
  %v1946 = vpop.f32.mrb[0].mxu0
  %1947 = vmatprep.mubr.f32.mxu0 0.0
  %1948 = vmatmul.mubr.f32.gmra.mrb[0].mxu0 %v1668
  %v1949 = vpop.f32.mrb[0].mxu0
  %v1950 = vadd.f32 0.0, %v1949
  %v1951 = vpop.f32.mrb[0].mxu0
  %1952 = vmatprep.mubr.f32.mxu0 0.0
  %1953 = vmatmul.mubr.f32.gmra.mrb[0].mxu0 %v1671
  %v1954 = vpop.f32.mrb[0].mxu0
  %v1955 = vadd.f32 0.0, %v1954
  %v1956 = vpop.f32.mrb[0].mxu0
  %1957 = vmatprep.mubr.f32.mxu0 0.0
  %1958 = vmatmul.mubr.f32.gmra.mrb[0].mxu0 %v1674
  %v1959 = vpop.f32.mrb[0].mxu0
  %v1960 = vadd.f32 0.0, %v1959
  %v1961 = vpop.f32.mrb[0].mxu0
  %1962 = vmatprep.mubr.f32.mxu0 0.0
  %1963 = vmatmul.mubr.f32.gmra.mrb[0].mxu0 %v1677
  %v1964 = vpop.f32.mrb[0].mxu0
  %v1965 = vadd.f32 0.0, %v1964
  %v1966 = vpop.f32.mrb[0].mxu0
  %1967 = vmatprep.mubr.f32.mxu0 0.0
  %1968 = vmatmul.mubr.f32.gmra.mrb[0].mxu0 %v1680
  %v1969 = vpop.f32.mrb[0].mxu0
  %v1970 = vadd.f32 0.0, %v1969
  %v1971 = vpop.f32.mrb[0].mxu0
  %1972 = vmatprep.mubr.f32.mxu0 0.0
  %1973 = vmatmul.mubr.f32.gmra.mrb[0].mxu0 %v1683
  %v1974 = vpop.f32.mrb[0].mxu0
  %v1975 = vadd.f32 0.0, %v1974
  %v1976 = vpop.f32.mrb[0].mxu0
  %1977 = vmatprep.mubr.f32.mxu0 0.0
  %1978 = vmatmul.mubr.f32.gmra.mrb[0].mxu0 %v1686
  %v1979 = vpop.f32.mrb[0].mxu0
  %v1980 = vadd.f32 0.0, %v1979
  %v1981 = vpop.f32.mrb[0].mxu0
  %1982 = vmatprep.mubr.f32.mxu0 0.0
  %1983 = vmatmul.mubr.f32.gmra.mrb[0].mxu0 %v1689
  %v1984 = vpop.f32.mrb[0].mxu0
  %v1985 = vadd.f32 0.0, %v1984
  %v1986 = vpop.f32.mrb[0].mxu0
  %1987 = vmatprep.mubr.f32.mxu0 0.0
  %1988 = vmatmul.mubr.f32.gmra.mrb[0].mxu0 %v1692
  %v1989 = vpop.f32.mrb[0].mxu0
  %v1990 = vadd.f32 0.0, %v1989
  %v1991 = vpop.f32.mrb[0].mxu0
  %1992 = vmatprep.mubr.f32.mxu0 0.0
  %1993 = vmatmul.mubr.f32.gmra.mrb[0].mxu0 %v1695
  %v1994 = vpop.f32.mrb[0].mxu0
  %v1995 = vadd.f32 0.0, %v1994
  %v1996 = vpop.f32.mrb[0].mxu0
  %1997 = vmatprep.mubr.f32.mxu0 0.0
  %1998 = vmatmul.mubr.f32.gmra.mrb[0].mxu0 %v1698
  %v1999 = vpop.f32.mrb[0].mxu0
  %v2000 = vadd.f32 0.0, %v1999
  %v2001 = vpop.f32.mrb[0].mxu0
  %2002 = vmatprep.mubr.f32.mxu0 0.0
  %2003 = vmatmul.mubr.f32.gmra.mrb[0].mxu0 %v1701
  %v2004 = vpop.f32.mrb[0].mxu0
  %v2005 = vadd.f32 0.0, %v2004
  %v2006 = vpop.f32.mrb[0].mxu0
  %2007 = vmatprep.mubr.f32.mxu0 0.0
  %2008 = vmatmul.mubr.f32.gmra.mrb[0].mxu0 %v1704
  %v2009 = vpop.f32.mrb[0].mxu0
  %v2010 = vadd.f32 0.0, %v2009
  %v2011 = vpop.f32.mrb[0].mxu0
  %2012 = vmatprep.mubr.f32.mxu0 0.0
  %2013 = vmatmul.mubr.f32.gmra.mrb[0].mxu0 %v1707
  %v2014 = vpop.f32.mrb[0].mxu0
  %v2015 = vadd.f32 0.0, %v2014
  %v2016 = vpop.f32.mrb[0].mxu0
  %2017 = vmatprep.mubr.f32.mxu0 0.0
  %2018 = vmatmul.mubr.f32.gmra.mrb[0].mxu0 %v1710
  %v2019 = vpop.f32.mrb[0].mxu0
  %v2020 = vadd.f32 0.0, %v2019
  %v2021 = vpop.f32.mrb[0].mxu0
  %2022 = vmatprep.mubr.f32.mxu0 0.0
  %2023 = vmatmul.mubr.f32.gmra.mrb[0].mxu0 %v1713
  %v2024 = vpop.f32.mrb[0].mxu0
  %v2025 = vadd.f32 0.0, %v2024
  %v2026 = vpop.f32.mrb[0].mxu0
  %2027 = vmatprep.mubr.f32.mxu0 0.0
  %2028 = vmatmul.mubr.f32.gmra.mrb[0].mxu0 %v1716
  %v2029 = vpop.f32.mrb[0].mxu0
  %v2030 = vadd.f32 0.0, %v2029
  %v2031 = vpop.f32.mrb[0].mxu0
  %2032 = vmatprep.mubr.f32.mxu0 0.0
  %2033 = vmatmul.mubr.f32.gmra.mrb[0].mxu0 %v1719
  %v2034 = vpop.f32.mrb[0].mxu0
  %v2035 = vadd.f32 0.0, %v2034
  %v2036 = vpop.f32.mrb[0].mxu0
  %2037 = vmatprep.mubr.f32.mxu0 0.0
  %2038 = vmatmul.mubr.f32.gmra.mrb[0].mxu0 %v1722
  %v2039 = vpop.f32.mrb[0].mxu0
  %v2040 = vadd.f32 0.0, %v2039
  %v2041 = vpop.f32.mrb[0].mxu0
  %2042 = vmatprep.mubr.f32.mxu0 0.0
  %2043 = vmatmul.mubr.f32.gmra.mrb[0].mxu0 %v1725
  %v2044 = vpop.f32.mrb[0].mxu0
  %v2045 = vadd.f32 0.0, %v2044
  %v2046 = vpop.f32.mrb[0].mxu0
  %2047 = vmatprep.mubr.f32.mxu0 0.0
  %2048 = vmatmul.mubr.f32.gmra.mrb[0].mxu0 %v1728
  %v2049 = vpop.f32.mrb[0].mxu0
  %v2050 = vadd.f32 0.0, %v2049
  %v2051 = vpop.f32.mrb[0].mxu0
  %2052 = vmatprep.mubr.f32.mxu0 0.0
  %2053 = vmatmul.mubr.f32.gmra.mrb[0].mxu0 %v1731
  %v2054 = vpop.f32.mrb[0].mxu0
  %v2055 = vadd.f32 0.0, %v2054
  %v2056 = vpop.f32.mrb[0].mxu0
  %2057 = vmatprep.mubr.f32.mxu0 0.0
  %2058 = vmatmul.mubr.f32.gmra.mrb[0].mxu0 %v1734
  %v2059 = vpop.f32.mrb[0].mxu0
  %v2060 = vadd.f32 0.0, %v2059
  %v2061 = vpop.f32.mrb[0].mxu0
  %2062 = vmatprep.mubr.f32.mxu0 0.0
  %2063 = vmatmul.mubr.f32.gmra.mrb[0].mxu0 %v1737
  %v2064 = vpop.f32.mrb[0].mxu0
  %v2065 = vadd.f32 0.0, %v2064
  %v2066 = vpop.f32.mrb[0].mxu0
  %2067 = vmatprep.mubr.f32.mxu0 0.0
  %2068 = vmatmul.mubr.f32.gmra.mrb[0].mxu0 %v1740
  %v2069 = vpop.f32.mrb[0].mxu0
  %v2070 = vadd.f32 0.0, %v2069
  %v2071 = vpop.f32.mrb[0].mxu0
  %2072 = vmatprep.mubr.f32.mxu0 0.0
  %2073 = vmatmul.mubr.f32.gmra.mrb[0].mxu0 %v1743
  %v2074 = vpop.f32.mrb[0].mxu0
  %v2075 = vadd.f32 0.0, %v2074
  %v2076 = vpop.f32.mrb[0].mxu0
  %2077 = vmatprep.mubr.f32.mxu0 0.0
  %2078 = vmatmul.mubr.f32.gmra.mrb[0].mxu0 %v1746
  %v2079 = vpop.f32.mrb[0].mxu0
  %v2080 = vadd.f32 0.0, %v2079
  %v2081 = vpop.f32.mrb[0].mxu0
  %2082 = vmatprep.mubr.f32.mxu0 0.0
  %2083 = vmatmul.mubr.f32.gmra.mrb[0].mxu0 %v1749
  %v2084 = vpop.f32.mrb[0].mxu0
  %v2085 = vadd.f32 0.0, %v2084
  %v2086 = vpop.f32.mrb[0].mxu0
  %2087 = vmatprep.mubr.f32.mxu0 0.0
  %2088 = vmatmul.mubr.f32.gmra.mrb[0].mxu0 %v1752
  %v2089 = vpop.f32.mrb[0].mxu0
  %v2090 = vadd.f32 0.0, %v2089
  %v2091 = vpop.f32.mrb[0].mxu0
  %2092 = vmatprep.mubr.f32.mxu0 0.0
  %2093 = vmatmul.mubr.f32.gmra.mrb[0].mxu0 %v1755
  %v2094 = vpop.f32.mrb[0].mxu0
  %v2095 = vadd.f32 0.0, %v2094
  %v2096 = vpop.f32.mrb[0].mxu0
  %2097 = vmatprep.mubr.f32.mxu0 0.0
  %2098 = vmatmul.mubr.f32.gmra.mrb[0].mxu0 %v1758
  %v2099 = vpop.f32.mrb[0].mxu0
  %v2100 = vadd.f32 0.0, %v2099
  %v2101 = vpop.f32.mrb[0].mxu0
  %2102 = vmatprep.mubr.f32.mxu0 0.0
  %2103 = vmatmul.mubr.f32.gmra.mrb[0].mxu0 %v1761
  %v2104 = vpop.f32.mrb[0].mxu0
  %v2105 = vadd.f32 0.0, %v2104
  %v2106 = vpop.f32.mrb[0].mxu0
  %2107 = vmatprep.mubr.f32.mxu0 0.0
  %2108 = vmatmul.mubr.f32.gmra.mrb[0].mxu0 %v1764
  %v2109 = vpop.f32.mrb[0].mxu0
  %v2110 = vadd.f32 0.0, %v2109
  %v2111 = vpop.f32.mrb[0].mxu0
  %2112 = vmatprep.mubr.f32.mxu0 0.0
  %2113 = vmatmul.mubr.f32.gmra.mrb[0].mxu0 %v1767
  %v2114 = vpop.f32.mrb[0].mxu0
  %v2115 = vadd.f32 0.0, %v2114
  %v2116 = vpop.f32.mrb[0].mxu0
  %2117 = vmatprep.mubr.f32.mxu0 0.0
  %2118 = vmatmul.mubr.f32.gmra.mrb[0].mxu0 %v1770
  %v2119 = vpop.f32.mrb[0].mxu0
  %v2120 = vadd.f32 0.0, %v2119
  %v2121 = vpop.f32.mrb[0].mxu0
  %2122 = vmatprep.mubr.f32.mxu0 0.0
  %2123 = vmatmul.mubr.f32.gmra.mrb[0].mxu0 %v1773
  %v2124 = vpop.f32.mrb[0].mxu0
  %v2125 = vadd.f32 0.0, %v2124
  %v2126 = vpop.f32.mrb[0].mxu0
  %2127 = vmatprep.mubr.f32.mxu0 0.0
  %2128 = vmatmul.mubr.f32.gmra.mrb[0].mxu0 %v1776
  %v2129 = vpop.f32.mrb[0].mxu0
  %v2130 = vadd.f32 0.0, %v2129
  %v2131 = vpop.f32.mrb[0].mxu0
  %2132 = vmatprep.mubr.f32.mxu0 0.0
  %2133 = vmatmul.mubr.f32.gmra.mrb[0].mxu0 %v1779
  %v2134 = vpop.f32.mrb[0].mxu0
  %v2135 = vadd.f32 0.0, %v2134
  %v2136 = vpop.f32.mrb[0].mxu0
  %2137 = vmatprep.mubr.f32.mxu0 0.0
  %2138 = vmatmul.mubr.f32.gmra.mrb[0].mxu0 %v1782
  %v2139 = vpop.f32.mrb[0].mxu0
  %v2140 = vadd.f32 0.0, %v2139
  %v2141 = vpop.f32.mrb[0].mxu0
  %2142 = vmatprep.mubr.f32.mxu0 0.0
  %2143 = vmatmul.mubr.f32.gmra.mrb[0].mxu0 %v1785
  %v2144 = vpop.f32.mrb[0].mxu0
  %v2145 = vadd.f32 0.0, %v2144
  %v2146 = vpop.f32.mrb[0].mxu0
  %2147 = vmatprep.mubr.f32.mxu0 0.0
  %2148 = vmatmul.mubr.f32.gmra.mrb[0].mxu0 %v1788
  %v2149 = vpop.f32.mrb[0].mxu0
  %v2150 = vadd.f32 0.0, %v2149
  %v2151 = vpop.f32.mrb[0].mxu0
  %2152 = vmatprep.mubr.f32.mxu0 0.0
  %2153 = vmatmul.mubr.f32.gmra.mrb[0].mxu0 %v1791
  %v2154 = vpop.f32.mrb[0].mxu0
  %v2155 = vadd.f32 0.0, %v2154
  %v2156 = vpop.f32.mrb[0].mxu0
  %2157 = vmatprep.mubr.f32.mxu0 0.0
  %2158 = vmatmul.mubr.f32.gmra.mrb[0].mxu0 %v1794
  %v2159 = vpop.f32.mrb[0].mxu0
  %v2160 = vadd.f32 0.0, %v2159
  %v2161 = vpop.f32.mrb[0].mxu0
  %2162 = vmatprep.mubr.f32.mxu0 0.0
  %2163 = vmatmul.mubr.f32.gmra.mrb[0].mxu0 %v1797
  %v2164 = vpop.f32.mrb[0].mxu0
  %v2165 = vadd.f32 0.0, %v2164
  %v2166 = vpop.f32.mrb[0].mxu0
  %2167 = vmatprep.mubr.f32.mxu0 0.0
  %2168 = vmatmul.mubr.f32.gmra.mrb[0].mxu0 %v1800
  %v2169 = vpop.f32.mrb[0].mxu0
  %v2170 = vadd.f32 0.0, %v2169
  %v2171 = vpop.f32.mrb[0].mxu0
  %2172 = vmatprep.mubr.f32.mxu0 0.0
  %2173 = vmatmul.mubr.f32.gmra.mrb[0].mxu0 %v1803
  %v2174 = vpop.f32.mrb[0].mxu0
  %v2175 = vadd.f32 0.0, %v2174
  %v2176 = vpop.f32.mrb[0].mxu0
  %2177 = vmatprep.mubr.f32.mxu0 0.0
  %2178 = vmatmul.mubr.f32.gmra.mrb[0].mxu0 %v1806
  %v2179 = vpop.f32.mrb[0].mxu0
  %v2180 = vadd.f32 0.0, %v2179
  %v2181 = vpop.f32.mrb[0].mxu0
  %2182 = vmatprep.mubr.f32.mxu0 0.0
  %2183 = vmatmul.mubr.f32.gmra.mrb[0].mxu0 %v1809
  %v2184 = vpop.f32.mrb[0].mxu0
  %v2185 = vadd.f32 0.0, %v2184
  %v2186 = vpop.f32.mrb[0].mxu0
  %2187 = vmatprep.mubr.f32.mxu0 0.0
  %2188 = vmatmul.mubr.f32.gmra.mrb[0].mxu0 %v1812
  %v2189 = vpop.f32.mrb[0].mxu0
  %v2190 = vadd.f32 0.0, %v2189
  %v2191 = vpop.f32.mrb[0].mxu0
  %2192 = vmatprep.mubr.f32.mxu0 0.0
  %2193 = vmatmul.mubr.f32.gmra.mrb[0].mxu0 %v1815
  %v2194 = vpop.f32.mrb[0].mxu0
  %v2195 = vadd.f32 0.0, %v2194
  %v2196 = vpop.f32.mrb[0].mxu0
  %2197 = vmatprep.mubr.f32.mxu0 0.0
  %2198 = vmatmul.mubr.f32.gmra.mrb[0].mxu0 %v1818
  %v2199 = vpop.f32.mrb[0].mxu0
  %v2200 = vadd.f32 0.0, %v2199
  %v2201 = vpop.f32.mrb[0].mxu0
  %2202 = vmatprep.mubr.f32.mxu0 0.0
  %2203 = vmatmul.mubr.f32.gmra.mrb[0].mxu0 %v1821
  %v2204 = vpop.f32.mrb[0].mxu0
  %v2205 = vadd.f32 0.0, %v2204
  %v2206 = vpop.f32.mrb[0].mxu0
  %2207 = vdwg.mxu0
  %vm2208 = vcmp.gt.f32.partialorder %v1890, 0.0
  %vm2209 = vcmp.gt.f32.partialorder %v1895, 0.0
  %vm2210 = vcmp.gt.f32.partialorder %v1900, 0.0
  %vm2211 = vcmp.gt.f32.partialorder %v1905, 0.0
  %vm2212 = vcmp.gt.f32.partialorder %v1910, 0.0
  %vm2213 = vcmp.gt.f32.partialorder %v1915, 0.0
  %vm2214 = vcmp.gt.f32.partialorder %v1920, 0.0
  %vm2215 = vcmp.gt.f32.partialorder %v1925, 0.0
  %vm2216 = vcmp.gt.f32.partialorder %v1930, 0.0
  %vm2217 = vcmp.gt.f32.partialorder %v1935, 0.0
  %vm2218 = vcmp.gt.f32.partialorder %v1940, 0.0
  %vm2219 = vcmp.gt.f32.partialorder %v1945, 0.0
  %vm2220 = vcmp.gt.f32.partialorder %v1950, 0.0
  %vm2221 = vcmp.gt.f32.partialorder %v1955, 0.0
  %vm2222 = vcmp.gt.f32.partialorder %v1960, 0.0
  %vm2223 = vcmp.gt.f32.partialorder %v1965, 0.0
  %vm2224 = vcmp.gt.f32.partialorder %v1970, 0.0
  %vm2225 = vcmp.gt.f32.partialorder %v1975, 0.0
  %vm2226 = vcmp.gt.f32.partialorder %v1980, 0.0
  %vm2227 = vcmp.gt.f32.partialorder %v1985, 0.0
  %vm2228 = vcmp.gt.f32.partialorder %v1990, 0.0
  %vm2229 = vcmp.gt.f32.partialorder %v1995, 0.0
  %vm2230 = vcmp.gt.f32.partialorder %v2000, 0.0
  %vm2231 = vcmp.gt.f32.partialorder %v2005, 0.0
  %vm2232 = vcmp.gt.f32.partialorder %v2010, 0.0
  %vm2233 = vcmp.gt.f32.partialorder %v2015, 0.0
  %vm2234 = vcmp.gt.f32.partialorder %v2020, 0.0
  %vm2235 = vcmp.gt.f32.partialorder %v2025, 0.0
  %vm2236 = vcmp.gt.f32.partialorder %v2030, 0.0
  %vm2237 = vcmp.gt.f32.partialorder %v2035, 0.0
  %vm2238 = vcmp.gt.f32.partialorder %v2040, 0.0
  %vm2239 = vcmp.gt.f32.partialorder %v2045, 0.0
  %vm2240 = vcmp.gt.f32.partialorder %v2050, 0.0
  %vm2241 = vcmp.gt.f32.partialorder %v2055, 0.0
  %vm2242 = vcmp.gt.f32.partialorder %v2060, 0.0
  %vm2243 = vcmp.gt.f32.partialorder %v2065, 0.0
  %vm2244 = vcmp.gt.f32.partialorder %v2070, 0.0
  %vm2245 = vcmp.gt.f32.partialorder %v2075, 0.0
  %vm2246 = vcmp.gt.f32.partialorder %v2080, 0.0
  %vm2247 = vcmp.gt.f32.partialorder %v2085, 0.0
  %vm2248 = vcmp.gt.f32.partialorder %v2090, 0.0
  %vm2249 = vcmp.gt.f32.partialorder %v2095, 0.0
  %vm2250 = vcmp.gt.f32.partialorder %v2100, 0.0
  %vm2251 = vcmp.gt.f32.partialorder %v2105, 0.0
  %vm2252 = vcmp.gt.f32.partialorder %v2110, 0.0
  %vm2253 = vcmp.gt.f32.partialorder %v2115, 0.0
  %vm2254 = vcmp.gt.f32.partialorder %v2120, 0.0
  %vm2255 = vcmp.gt.f32.partialorder %v2125, 0.0
  %vm2256 = vcmp.gt.f32.partialorder %v2130, 0.0
  %vm2257 = vcmp.gt.f32.partialorder %v2135, 0.0
  %vm2258 = vcmp.gt.f32.partialorder %v2140, 0.0
  %vm2259 = vcmp.gt.f32.partialorder %v2145, 0.0
  %vm2260 = vcmp.gt.f32.partialorder %v2150, 0.0
  %vm2261 = vcmp.gt.f32.partialorder %v2155, 0.0
  %vm2262 = vcmp.gt.f32.partialorder %v2160, 0.0
  %vm2263 = vcmp.gt.f32.partialorder %v2165, 0.0
  %vm2264 = vcmp.gt.f32.partialorder %v2170, 0.0
  %vm2265 = vcmp.gt.f32.partialorder %v2175, 0.0
  %vm2266 = vcmp.gt.f32.partialorder %v2180, 0.0
  %vm2267 = vcmp.gt.f32.partialorder %v2185, 0.0
  %vm2268 = vcmp.gt.f32.partialorder %v2190, 0.0
  %vm2269 = vcmp.gt.f32.partialorder %v2195, 0.0
  %vm2270 = vcmp.gt.f32.partialorder %v2200, 0.0
  %vm2271 = vcmp.gt.f32.partialorder %v2205, 0.0
  %v2272 = vmul.f32 %v1890, 0.2
  %v2273 = vmul.f32 %v1895, 0.2
  %v2274 = vmul.f32 %v1900, 0.2
  %v2275 = vmul.f32 %v1905, 0.2
  %v2276 = vmul.f32 %v1910, 0.2
  %v2277 = vmul.f32 %v1915, 0.2
  %v2278 = vmul.f32 %v1920, 0.2
  %v2279 = vmul.f32 %v1925, 0.2
  %v2280 = vmul.f32 %v1930, 0.2
  %v2281 = vmul.f32 %v1935, 0.2
  %v2282 = vmul.f32 %v1940, 0.2
  %v2283 = vmul.f32 %v1945, 0.2
  %v2284 = vmul.f32 %v1950, 0.2
  %v2285 = vmul.f32 %v1955, 0.2
  %v2286 = vmul.f32 %v1960, 0.2
  %v2287 = vmul.f32 %v1965, 0.2
  %v2288 = vmul.f32 %v1970, 0.2
  %v2289 = vmul.f32 %v1975, 0.2
  %v2290 = vmul.f32 %v1980, 0.2
  %v2291 = vmul.f32 %v1985, 0.2
  %v2292 = vmul.f32 %v1990, 0.2
  %v2293 = vmul.f32 %v1995, 0.2
  %v2294 = vmul.f32 %v2000, 0.2
  %v2295 = vmul.f32 %v2005, 0.2
  %v2296 = vmul.f32 %v2010, 0.2
  %v2297 = vmul.f32 %v2015, 0.2
  %v2298 = vmul.f32 %v2020, 0.2
  %v2299 = vmul.f32 %v2025, 0.2
  %v2300 = vmul.f32 %v2030, 0.2
  %v2301 = vmul.f32 %v2035, 0.2
  %v2302 = vmul.f32 %v2040, 0.2
  %v2303 = vmul.f32 %v2045, 0.2
  %v2304 = vmul.f32 %v2050, 0.2
  %v2305 = vmul.f32 %v2055, 0.2
  %v2306 = vmul.f32 %v2060, 0.2
  %v2307 = vmul.f32 %v2065, 0.2
  %v2308 = vmul.f32 %v2070, 0.2
  %v2309 = vmul.f32 %v2075, 0.2
  %v2310 = vmul.f32 %v2080, 0.2
  %v2311 = vmul.f32 %v2085, 0.2
  %v2312 = vmul.f32 %v2090, 0.2
  %v2313 = vmul.f32 %v2095, 0.2
  %v2314 = vmul.f32 %v2100, 0.2
  %v2315 = vmul.f32 %v2105, 0.2
  %v2316 = vmul.f32 %v2110, 0.2
  %v2317 = vmul.f32 %v2115, 0.2
  %v2318 = vmul.f32 %v2120, 0.2
  %v2319 = vmul.f32 %v2125, 0.2
  %v2320 = vmul.f32 %v2130, 0.2
  %v2321 = vmul.f32 %v2135, 0.2
  %v2322 = vmul.f32 %v2140, 0.2
  %v2323 = vmul.f32 %v2145, 0.2
  %v2324 = vmul.f32 %v2150, 0.2
  %v2325 = vmul.f32 %v2155, 0.2
  %v2326 = vmul.f32 %v2160, 0.2
  %v2327 = vmul.f32 %v2165, 0.2
  %v2328 = vmul.f32 %v2170, 0.2
  %v2329 = vmul.f32 %v2175, 0.2
  %v2330 = vmul.f32 %v2180, 0.2
  %v2331 = vmul.f32 %v2185, 0.2
  %v2332 = vmul.f32 %v2190, 0.2
  %v2333 = vmul.f32 %v2195, 0.2
  %v2334 = vmul.f32 %v2200, 0.2
  %v2335 = vmul.f32 %v2205, 0.2
  %v2336 = vsel %vm2208, %v1890, %v2272
  %v2337 = vsel %vm2209, %v1895, %v2273
  %v2338 = vsel %vm2210, %v1900, %v2274
  %v2339 = vsel %vm2211, %v1905, %v2275
  %v2340 = vsel %vm2212, %v1910, %v2276
  %v2341 = vsel %vm2213, %v1915, %v2277
  %v2342 = vsel %vm2214, %v1920, %v2278
  %v2343 = vsel %vm2215, %v1925, %v2279
  %v2344 = vsel %vm2216, %v1930, %v2280
  %v2345 = vsel %vm2217, %v1935, %v2281
  %v2346 = vsel %vm2218, %v1940, %v2282
  %v2347 = vsel %vm2219, %v1945, %v2283
  %v2348 = vsel %vm2220, %v1950, %v2284
  %v2349 = vsel %vm2221, %v1955, %v2285
  %v2350 = vsel %vm2222, %v1960, %v2286
  %v2351 = vsel %vm2223, %v1965, %v2287
  %v2352 = vsel %vm2224, %v1970, %v2288
  %v2353 = vsel %vm2225, %v1975, %v2289
  %v2354 = vsel %vm2226, %v1980, %v2290
  %v2355 = vsel %vm2227, %v1985, %v2291
  %v2356 = vsel %vm2228, %v1990, %v2292
  %v2357 = vsel %vm2229, %v1995, %v2293
  %v2358 = vsel %vm2230, %v2000, %v2294
  %v2359 = vsel %vm2231, %v2005, %v2295
  %v2360 = vsel %vm2232, %v2010, %v2296
  %v2361 = vsel %vm2233, %v2015, %v2297
  %v2362 = vsel %vm2234, %v2020, %v2298
  %v2363 = vsel %vm2235, %v2025, %v2299
  %v2364 = vsel %vm2236, %v2030, %v2300
  %v2365 = vsel %vm2237, %v2035, %v2301
  %v2366 = vsel %vm2238, %v2040, %v2302
  %v2367 = vsel %vm2239, %v2045, %v2303
  %v2368 = vsel %vm2240, %v2050, %v2304
  %v2369 = vsel %vm2241, %v2055, %v2305
  %v2370 = vsel %vm2242, %v2060, %v2306
  %v2371 = vsel %vm2243, %v2065, %v2307
  %v2372 = vsel %vm2244, %v2070, %v2308
  %v2373 = vsel %vm2245, %v2075, %v2309
  %v2374 = vsel %vm2246, %v2080, %v2310
  %v2375 = vsel %vm2247, %v2085, %v2311
  %v2376 = vsel %vm2248, %v2090, %v2312
  %v2377 = vsel %vm2249, %v2095, %v2313
  %v2378 = vsel %vm2250, %v2100, %v2314
  %v2379 = vsel %vm2251, %v2105, %v2315
  %v2380 = vsel %vm2252, %v2110, %v2316
  %v2381 = vsel %vm2253, %v2115, %v2317
  %v2382 = vsel %vm2254, %v2120, %v2318
  %v2383 = vsel %vm2255, %v2125, %v2319
  %v2384 = vsel %vm2256, %v2130, %v2320
  %v2385 = vsel %vm2257, %v2135, %v2321
  %v2386 = vsel %vm2258, %v2140, %v2322
  %v2387 = vsel %vm2259, %v2145, %v2323
  %v2388 = vsel %vm2260, %v2150, %v2324
  %v2389 = vsel %vm2261, %v2155, %v2325
  %v2390 = vsel %vm2262, %v2160, %v2326
  %v2391 = vsel %vm2263, %v2165, %v2327
  %v2392 = vsel %vm2264, %v2170, %v2328
  %v2393 = vsel %vm2265, %v2175, %v2329
  %v2394 = vsel %vm2266, %v2180, %v2330
  %v2395 = vsel %vm2267, %v2185, %v2331
  %v2396 = vsel %vm2268, %v2190, %v2332
  %v2397 = vsel %vm2269, %v2195, %v2333
  %v2398 = vsel %vm2270, %v2200, %v2334
  %v2399 = vsel %vm2271, %v2205, %v2335
  %v2400 = vpack.c.bf16 %v2337, %v2336
  %v2401 = vpack.c.bf16 %v2339, %v2338
  %v2402 = vpack.c.bf16 %v2341, %v2340
  %v2403 = vpack.c.bf16 %v2343, %v2342
  %v2404 = vpack.c.bf16 %v2345, %v2344
  %v2405 = vpack.c.bf16 %v2347, %v2346
  %v2406 = vpack.c.bf16 %v2349, %v2348
  %v2407 = vpack.c.bf16 %v2351, %v2350
  %v2408 = vpack.c.bf16 %v2353, %v2352
  %v2409 = vpack.c.bf16 %v2355, %v2354
  %v2410 = vpack.c.bf16 %v2357, %v2356
  %v2411 = vpack.c.bf16 %v2359, %v2358
  %v2412 = vpack.c.bf16 %v2361, %v2360
  %v2413 = vpack.c.bf16 %v2363, %v2362
  %v2414 = vpack.c.bf16 %v2365, %v2364
  %v2415 = vpack.c.bf16 %v2367, %v2366
  %v2416 = vpack.c.bf16 %v2369, %v2368
  %v2417 = vpack.c.bf16 %v2371, %v2370
  %v2418 = vpack.c.bf16 %v2373, %v2372
  %v2419 = vpack.c.bf16 %v2375, %v2374
  %v2420 = vpack.c.bf16 %v2377, %v2376
  %v2421 = vpack.c.bf16 %v2379, %v2378
  %v2422 = vpack.c.bf16 %v2381, %v2380
  %v2423 = vpack.c.bf16 %v2383, %v2382
  %v2424 = vpack.c.bf16 %v2385, %v2384
  %v2425 = vpack.c.bf16 %v2387, %v2386
  %v2426 = vpack.c.bf16 %v2389, %v2388
  %v2427 = vpack.c.bf16 %v2391, %v2390
  %v2428 = vpack.c.bf16 %v2393, %v2392
  %v2429 = vpack.c.bf16 %v2395, %v2394
  %v2430 = vpack.c.bf16 %v2397, %v2396
  %v2431 = vpack.c.bf16 %v2399, %v2398
  %2432 = vmatprep.subr.bf16.mxu0 0
  %2433 = vmatpush1.bf16.msra.mxu0 %v2400
  %2434 = vmatprep.subr.bf16.mxu0 0
  %2435 = vmatpush1.bf16.msra.mxu0 %v2401
  %2436 = vmatprep.subr.bf16.mxu0 0
  %2437 = vmatpush1.bf16.msra.mxu0 %v2402
  %2438 = vmatprep.subr.bf16.mxu0 0
  %2439 = vmatpush1.bf16.msra.mxu0 %v2403
  %2440 = vmatprep.subr.bf16.mxu0 0
  %2441 = vmatpush1.bf16.msra.mxu0 %v2404
  %2442 = vmatprep.subr.bf16.mxu0 0
  %2443 = vmatpush1.bf16.msra.mxu0 %v2405
  %2444 = vmatprep.subr.bf16.mxu0 0
  %2445 = vmatpush1.bf16.msra.mxu0 %v2406
  %2446 = vmatprep.subr.bf16.mxu0 0
  %2447 = vmatpush1.bf16.msra.mxu0 %v2407
  %2448 = vmatprep.subr.bf16.mxu0 0
  %2449 = vmatpush1.bf16.msra.mxu0 %v2408
  %2450 = vmatprep.subr.bf16.mxu0 0
  %2451 = vmatpush1.bf16.msra.mxu0 %v2409
  %2452 = vmatprep.subr.bf16.mxu0 0
  %2453 = vmatpush1.bf16.msra.mxu0 %v2410
  %2454 = vmatprep.subr.bf16.mxu0 0
  %2455 = vmatpush1.bf16.msra.mxu0 %v2411
  %2456 = vmatprep.subr.bf16.mxu0 0
  %2457 = vmatpush1.bf16.msra.mxu0 %v2412
  %2458 = vmatprep.subr.bf16.mxu0 0
  %2459 = vmatpush1.bf16.msra.mxu0 %v2413
  %2460 = vmatprep.subr.bf16.mxu0 0
  %2461 = vmatpush1.bf16.msra.mxu0 %v2414
  %2462 = vmatprep.subr.bf16.mxu0 0
  %2463 = vmatpush1.bf16.msra.mxu0 %v2415
  %2464 = vmatprep.mubr.bf16.mxu0 %v603
  %2465 = vmatmul.mubr.bf16.gmra.mrb[0].mxu0 %v602
  %v2466 = vpop.f32.mrb[0].mxu0
  %v2467 = vadd.f32 0.0, %v2466
  %v2468 = vpop.f32.mrb[0].mxu0
  %v2469 = vpop.f32.mrb[0].mxu0
  %v2470 = vadd.f32 0.0, %v2469
  %v2471 = vpop.f32.mrb[0].mxu0
  %2472 = vmatprep.mubr.bf16.mxu0 %v607
  %2473 = vmatmul.mubr.bf16.gmra.mrb[0].mxu0 %v606
  %v2474 = vpop.f32.mrb[0].mxu0
  %v2475 = vadd.f32 0.0, %v2474
  %v2476 = vpop.f32.mrb[0].mxu0
  %v2477 = vpop.f32.mrb[0].mxu0
  %v2478 = vadd.f32 0.0, %v2477
  %v2479 = vpop.f32.mrb[0].mxu0
  %2480 = vmatprep.mubr.bf16.mxu0 %v611
  %2481 = vmatmul.mubr.bf16.gmra.mrb[0].mxu0 %v610
  %v2482 = vpop.f32.mrb[0].mxu0
  %v2483 = vadd.f32 0.0, %v2482
  %v2484 = vpop.f32.mrb[0].mxu0
  %v2485 = vpop.f32.mrb[0].mxu0
  %v2486 = vadd.f32 0.0, %v2485
  %v2487 = vpop.f32.mrb[0].mxu0
  %2488 = vmatprep.mubr.bf16.mxu0 %v615
  %2489 = vmatmul.mubr.bf16.gmra.mrb[0].mxu0 %v614
  %v2490 = vpop.f32.mrb[0].mxu0
  %v2491 = vadd.f32 0.0, %v2490
  %v2492 = vpop.f32.mrb[0].mxu0
  %v2493 = vpop.f32.mrb[0].mxu0
  %v2494 = vadd.f32 0.0, %v2493
  %v2495 = vpop.f32.mrb[0].mxu0
  %2496 = vmatprep.mubr.bf16.mxu0 %v619
  %2497 = vmatmul.mubr.bf16.gmra.mrb[0].mxu0 %v618
  %v2498 = vpop.f32.mrb[0].mxu0
  %v2499 = vadd.f32 0.0, %v2498
  %v2500 = vpop.f32.mrb[0].mxu0
  %v2501 = vpop.f32.mrb[0].mxu0
  %v2502 = vadd.f32 0.0, %v2501
  %v2503 = vpop.f32.mrb[0].mxu0
  %2504 = vmatprep.mubr.bf16.mxu0 %v623
  %2505 = vmatmul.mubr.bf16.gmra.mrb[0].mxu0 %v622
  %v2506 = vpop.f32.mrb[0].mxu0
  %v2507 = vadd.f32 0.0, %v2506
  %v2508 = vpop.f32.mrb[0].mxu0
  %v2509 = vpop.f32.mrb[0].mxu0
  %v2510 = vadd.f32 0.0, %v2509
  %v2511 = vpop.f32.mrb[0].mxu0
  %2512 = vmatprep.mubr.bf16.mxu0 %v627
  %2513 = vmatmul.mubr.bf16.gmra.mrb[0].mxu0 %v626
  %v2514 = vpop.f32.mrb[0].mxu0
  %v2515 = vadd.f32 0.0, %v2514
  %v2516 = vpop.f32.mrb[0].mxu0
  %v2517 = vpop.f32.mrb[0].mxu0
  %v2518 = vadd.f32 0.0, %v2517
  %v2519 = vpop.f32.mrb[0].mxu0
  %2520 = vmatprep.mubr.bf16.mxu0 %v631
  %2521 = vmatmul.mubr.bf16.gmra.mrb[0].mxu0 %v630
  %v2522 = vpop.f32.mrb[0].mxu0
  %v2523 = vadd.f32 0.0, %v2522
  %v2524 = vpop.f32.mrb[0].mxu0
  %v2525 = vpop.f32.mrb[0].mxu0
  %v2526 = vadd.f32 0.0, %v2525
  %v2527 = vpop.f32.mrb[0].mxu0
  %2528 = vmatprep.mubr.bf16.mxu0 %v635
  %2529 = vmatmul.mubr.bf16.gmra.mrb[0].mxu0 %v634
  %v2530 = vpop.f32.mrb[0].mxu0
  %v2531 = vadd.f32 0.0, %v2530
  %v2532 = vpop.f32.mrb[0].mxu0
  %v2533 = vpop.f32.mrb[0].mxu0
  %v2534 = vadd.f32 0.0, %v2533
  %v2535 = vpop.f32.mrb[0].mxu0
  %2536 = vmatprep.mubr.bf16.mxu0 %v639
  %2537 = vmatmul.mubr.bf16.gmra.mrb[0].mxu0 %v638
  %v2538 = vpop.f32.mrb[0].mxu0
  %v2539 = vadd.f32 0.0, %v2538
  %v2540 = vpop.f32.mrb[0].mxu0
  %v2541 = vpop.f32.mrb[0].mxu0
  %v2542 = vadd.f32 0.0, %v2541
  %v2543 = vpop.f32.mrb[0].mxu0
  %2544 = vmatprep.mubr.bf16.mxu0 %v643
  %2545 = vmatmul.mubr.bf16.gmra.mrb[0].mxu0 %v642
  %v2546 = vpop.f32.mrb[0].mxu0
  %v2547 = vadd.f32 0.0, %v2546
  %v2548 = vpop.f32.mrb[0].mxu0
  %v2549 = vpop.f32.mrb[0].mxu0
  %v2550 = vadd.f32 0.0, %v2549
  %v2551 = vpop.f32.mrb[0].mxu0
  %2552 = vmatprep.mubr.bf16.mxu0 %v647
  %2553 = vmatmul.mubr.bf16.gmra.mrb[0].mxu0 %v646
  %v2554 = vpop.f32.mrb[0].mxu0
  %v2555 = vadd.f32 0.0, %v2554
  %v2556 = vpop.f32.mrb[0].mxu0
  %v2557 = vpop.f32.mrb[0].mxu0
  %v2558 = vadd.f32 0.0, %v2557
  %v2559 = vpop.f32.mrb[0].mxu0
  %2560 = vmatprep.mubr.bf16.mxu0 %v651
  %2561 = vmatmul.mubr.bf16.gmra.mrb[0].mxu0 %v650
  %v2562 = vpop.f32.mrb[0].mxu0
  %v2563 = vadd.f32 0.0, %v2562
  %v2564 = vpop.f32.mrb[0].mxu0
  %v2565 = vpop.f32.mrb[0].mxu0
  %v2566 = vadd.f32 0.0, %v2565
  %v2567 = vpop.f32.mrb[0].mxu0
  %2568 = vmatprep.mubr.bf16.mxu0 %v655
  %2569 = vmatmul.mubr.bf16.gmra.mrb[0].mxu0 %v654
  %v2570 = vpop.f32.mrb[0].mxu0
  %v2571 = vadd.f32 0.0, %v2570
  %v2572 = vpop.f32.mrb[0].mxu0
  %v2573 = vpop.f32.mrb[0].mxu0
  %v2574 = vadd.f32 0.0, %v2573
  %v2575 = vpop.f32.mrb[0].mxu0
  %2576 = vmatprep.mubr.bf16.mxu0 %v659
  %2577 = vmatmul.mubr.bf16.gmra.mrb[0].mxu0 %v658
  %v2578 = vpop.f32.mrb[0].mxu0
  %v2579 = vadd.f32 0.0, %v2578
  %v2580 = vpop.f32.mrb[0].mxu0
  %v2581 = vpop.f32.mrb[0].mxu0
  %v2582 = vadd.f32 0.0, %v2581
  %v2583 = vpop.f32.mrb[0].mxu0
  %2584 = vmatprep.mubr.bf16.mxu0 %v663
  %2585 = vmatmul.mubr.bf16.gmra.mrb[0].mxu0 %v662
  %v2586 = vpop.f32.mrb[0].mxu0
  %v2587 = vadd.f32 0.0, %v2586
  %v2588 = vpop.f32.mrb[0].mxu0
  %v2589 = vpop.f32.mrb[0].mxu0
  %v2590 = vadd.f32 0.0, %v2589
  %v2591 = vpop.f32.mrb[0].mxu0
  %2592 = vmatprep.mubr.bf16.mxu0 %v667
  %2593 = vmatmul.mubr.bf16.gmra.mrb[0].mxu0 %v666
  %v2594 = vpop.f32.mrb[0].mxu0
  %v2595 = vadd.f32 0.0, %v2594
  %v2596 = vpop.f32.mrb[0].mxu0
  %v2597 = vpop.f32.mrb[0].mxu0
  %v2598 = vadd.f32 0.0, %v2597
  %v2599 = vpop.f32.mrb[0].mxu0
  %2600 = vmatprep.mubr.bf16.mxu0 %v671
  %2601 = vmatmul.mubr.bf16.gmra.mrb[0].mxu0 %v670
  %v2602 = vpop.f32.mrb[0].mxu0
  %v2603 = vadd.f32 0.0, %v2602
  %v2604 = vpop.f32.mrb[0].mxu0
  %v2605 = vpop.f32.mrb[0].mxu0
  %v2606 = vadd.f32 0.0, %v2605
  %v2607 = vpop.f32.mrb[0].mxu0
  %2608 = vmatprep.mubr.bf16.mxu0 %v675
  %2609 = vmatmul.mubr.bf16.gmra.mrb[0].mxu0 %v674
  %v2610 = vpop.f32.mrb[0].mxu0
  %v2611 = vadd.f32 0.0, %v2610
  %v2612 = vpop.f32.mrb[0].mxu0
  %v2613 = vpop.f32.mrb[0].mxu0
  %v2614 = vadd.f32 0.0, %v2613
  %v2615 = vpop.f32.mrb[0].mxu0
  %2616 = vmatprep.mubr.bf16.mxu0 %v679
  %2617 = vmatmul.mubr.bf16.gmra.mrb[0].mxu0 %v678
  %v2618 = vpop.f32.mrb[0].mxu0
  %v2619 = vadd.f32 0.0, %v2618
  %v2620 = vpop.f32.mrb[0].mxu0
  %v2621 = vpop.f32.mrb[0].mxu0
  %v2622 = vadd.f32 0.0, %v2621
  %v2623 = vpop.f32.mrb[0].mxu0
  %2624 = vmatprep.mubr.bf16.mxu0 %v683
  %2625 = vmatmul.mubr.bf16.gmra.mrb[0].mxu0 %v682
  %v2626 = vpop.f32.mrb[0].mxu0
  %v2627 = vadd.f32 0.0, %v2626
  %v2628 = vpop.f32.mrb[0].mxu0
  %v2629 = vpop.f32.mrb[0].mxu0
  %v2630 = vadd.f32 0.0, %v2629
  %v2631 = vpop.f32.mrb[0].mxu0
  %2632 = vmatprep.mubr.bf16.mxu0 %v687
  %2633 = vmatmul.mubr.bf16.gmra.mrb[0].mxu0 %v686
  %v2634 = vpop.f32.mrb[0].mxu0
  %v2635 = vadd.f32 0.0, %v2634
  %v2636 = vpop.f32.mrb[0].mxu0
  %v2637 = vpop.f32.mrb[0].mxu0
  %v2638 = vadd.f32 0.0, %v2637
  %v2639 = vpop.f32.mrb[0].mxu0
  %2640 = vmatprep.mubr.bf16.mxu0 %v691
  %2641 = vmatmul.mubr.bf16.gmra.mrb[0].mxu0 %v690
  %v2642 = vpop.f32.mrb[0].mxu0
  %v2643 = vadd.f32 0.0, %v2642
  %v2644 = vpop.f32.mrb[0].mxu0
  %v2645 = vpop.f32.mrb[0].mxu0
  %v2646 = vadd.f32 0.0, %v2645
  %v2647 = vpop.f32.mrb[0].mxu0
  %2648 = vmatprep.mubr.bf16.mxu0 %v695
  %2649 = vmatmul.mubr.bf16.gmra.mrb[0].mxu0 %v694
  %v2650 = vpop.f32.mrb[0].mxu0
  %v2651 = vadd.f32 0.0, %v2650
  %v2652 = vpop.f32.mrb[0].mxu0
  %v2653 = vpop.f32.mrb[0].mxu0
  %v2654 = vadd.f32 0.0, %v2653
  %v2655 = vpop.f32.mrb[0].mxu0
  %2656 = vmatprep.mubr.bf16.mxu0 %v699
  %2657 = vmatmul.mubr.bf16.gmra.mrb[0].mxu0 %v698
  %v2658 = vpop.f32.mrb[0].mxu0
  %v2659 = vadd.f32 0.0, %v2658
  %v2660 = vpop.f32.mrb[0].mxu0
  %v2661 = vpop.f32.mrb[0].mxu0
  %v2662 = vadd.f32 0.0, %v2661
  %v2663 = vpop.f32.mrb[0].mxu0
  %2664 = vmatprep.mubr.bf16.mxu0 %v703
  %2665 = vmatmul.mubr.bf16.gmra.mrb[0].mxu0 %v702
  %v2666 = vpop.f32.mrb[0].mxu0
  %v2667 = vadd.f32 0.0, %v2666
  %v2668 = vpop.f32.mrb[0].mxu0
  %v2669 = vpop.f32.mrb[0].mxu0
  %v2670 = vadd.f32 0.0, %v2669
  %v2671 = vpop.f32.mrb[0].mxu0
  %2672 = vmatprep.mubr.bf16.mxu0 %v707
  %2673 = vmatmul.mubr.bf16.gmra.mrb[0].mxu0 %v706
  %v2674 = vpop.f32.mrb[0].mxu0
  %v2675 = vadd.f32 0.0, %v2674
  %v2676 = vpop.f32.mrb[0].mxu0
  %v2677 = vpop.f32.mrb[0].mxu0
  %v2678 = vadd.f32 0.0, %v2677
  %v2679 = vpop.f32.mrb[0].mxu0
  %2680 = vmatprep.mubr.bf16.mxu0 %v711
  %2681 = vmatmul.mubr.bf16.gmra.mrb[0].mxu0 %v710
  %v2682 = vpop.f32.mrb[0].mxu0
  %v2683 = vadd.f32 0.0, %v2682
  %v2684 = vpop.f32.mrb[0].mxu0
  %v2685 = vpop.f32.mrb[0].mxu0
  %v2686 = vadd.f32 0.0, %v2685
  %v2687 = vpop.f32.mrb[0].mxu0
  %2688 = vmatprep.mubr.bf16.mxu0 %v715
  %2689 = vmatmul.mubr.bf16.gmra.mrb[0].mxu0 %v714
  %v2690 = vpop.f32.mrb[0].mxu0
  %v2691 = vadd.f32 0.0, %v2690
  %v2692 = vpop.f32.mrb[0].mxu0
  %v2693 = vpop.f32.mrb[0].mxu0
  %v2694 = vadd.f32 0.0, %v2693
  %v2695 = vpop.f32.mrb[0].mxu0
  %2696 = vmatprep.mubr.bf16.mxu0 %v719
  %2697 = vmatmul.mubr.bf16.gmra.mrb[0].mxu0 %v718
  %v2698 = vpop.f32.mrb[0].mxu0
  %v2699 = vadd.f32 0.0, %v2698
  %v2700 = vpop.f32.mrb[0].mxu0
  %v2701 = vpop.f32.mrb[0].mxu0
  %v2702 = vadd.f32 0.0, %v2701
  %v2703 = vpop.f32.mrb[0].mxu0
  %2704 = vmatprep.mubr.bf16.mxu0 %v723
  %2705 = vmatmul.mubr.bf16.gmra.mrb[0].mxu0 %v722
  %v2706 = vpop.f32.mrb[0].mxu0
  %v2707 = vadd.f32 0.0, %v2706
  %v2708 = vpop.f32.mrb[0].mxu0
  %v2709 = vpop.f32.mrb[0].mxu0
  %v2710 = vadd.f32 0.0, %v2709
  %v2711 = vpop.f32.mrb[0].mxu0
  %2712 = vmatprep.mubr.bf16.mxu0 %v727
  %2713 = vmatmul.mubr.bf16.gmra.mrb[0].mxu0 %v726
  %v2714 = vpop.f32.mrb[0].mxu0
  %v2715 = vadd.f32 0.0, %v2714
  %v2716 = vpop.f32.mrb[0].mxu0
  %v2717 = vpop.f32.mrb[0].mxu0
  %v2718 = vadd.f32 0.0, %v2717
  %v2719 = vpop.f32.mrb[0].mxu0
  %2720 = vdwg.mxu0
  %2721 = vmatprep.subr.bf16.mxu0 0
  %2722 = vmatpush1.bf16.msra.mxu0 %v2416
  %2723 = vmatprep.subr.bf16.mxu0 0
  %2724 = vmatpush1.bf16.msra.mxu0 %v2417
  %2725 = vmatprep.subr.bf16.mxu0 0
  %2726 = vmatpush1.bf16.msra.mxu0 %v2418
  %2727 = vmatprep.subr.bf16.mxu0 0
  %2728 = vmatpush1.bf16.msra.mxu0 %v2419
  %2729 = vmatprep.subr.bf16.mxu0 0
  %2730 = vmatpush1.bf16.msra.mxu0 %v2420
  %2731 = vmatprep.subr.bf16.mxu0 0
  %2732 = vmatpush1.bf16.msra.mxu0 %v2421
  %2733 = vmatprep.subr.bf16.mxu0 0
  %2734 = vmatpush1.bf16.msra.mxu0 %v2422
  %2735 = vmatprep.subr.bf16.mxu0 0
  %2736 = vmatpush1.bf16.msra.mxu0 %v2423
  %2737 = vmatprep.subr.bf16.mxu0 0
  %2738 = vmatpush1.bf16.msra.mxu0 %v2424
  %2739 = vmatprep.subr.bf16.mxu0 0
  %2740 = vmatpush1.bf16.msra.mxu0 %v2425
  %2741 = vmatprep.subr.bf16.mxu0 0
  %2742 = vmatpush1.bf16.msra.mxu0 %v2426
  %2743 = vmatprep.subr.bf16.mxu0 0
  %2744 = vmatpush1.bf16.msra.mxu0 %v2427
  %2745 = vmatprep.subr.bf16.mxu0 0
  %2746 = vmatpush1.bf16.msra.mxu0 %v2428
  %2747 = vmatprep.subr.bf16.mxu0 0
  %2748 = vmatpush1.bf16.msra.mxu0 %v2429
  %2749 = vmatprep.subr.bf16.mxu0 0
  %2750 = vmatpush1.bf16.msra.mxu0 %v2430
  %2751 = vmatprep.subr.bf16.mxu0 0
  %2752 = vmatpush1.bf16.msra.mxu0 %v2431
  %2753 = vmatprep.mubr.bf16.mxu0 %v605
  %2754 = vmatmul.mubr.bf16.gmra.mrb[0].mxu0 %v604
  %v2755 = vpop.f32.mrb[0].mxu0
  %v2756 = vadd.f32 %v2467, %v2755
  %v2757 = vpop.f32.mrb[0].mxu0
  %v2758 = vpop.f32.mrb[0].mxu0
  %v2759 = vadd.f32 %v2470, %v2758
  %v2760 = vpop.f32.mrb[0].mxu0
  %2761 = vmatprep.mubr.bf16.mxu0 %v609
  %2762 = vmatmul.mubr.bf16.gmra.mrb[0].mxu0 %v608
  %v2763 = vpop.f32.mrb[0].mxu0
  %v2764 = vadd.f32 %v2475, %v2763
  %v2765 = vpop.f32.mrb[0].mxu0
  %v2766 = vpop.f32.mrb[0].mxu0
  %v2767 = vadd.f32 %v2478, %v2766
  %v2768 = vpop.f32.mrb[0].mxu0
  %2769 = vmatprep.mubr.bf16.mxu0 %v613
  %2770 = vmatmul.mubr.bf16.gmra.mrb[0].mxu0 %v612
  %v2771 = vpop.f32.mrb[0].mxu0
  %v2772 = vadd.f32 %v2483, %v2771
  %v2773 = vpop.f32.mrb[0].mxu0
  %v2774 = vpop.f32.mrb[0].mxu0
  %v2775 = vadd.f32 %v2486, %v2774
  %v2776 = vpop.f32.mrb[0].mxu0
  %2777 = vmatprep.mubr.bf16.mxu0 %v617
  %2778 = vmatmul.mubr.bf16.gmra.mrb[0].mxu0 %v616
  %v2779 = vpop.f32.mrb[0].mxu0
  %v2780 = vadd.f32 %v2491, %v2779
  %v2781 = vpop.f32.mrb[0].mxu0
  %v2782 = vpop.f32.mrb[0].mxu0
  %v2783 = vadd.f32 %v2494, %v2782
  %v2784 = vpop.f32.mrb[0].mxu0
  %2785 = vmatprep.mubr.bf16.mxu0 %v621
  %2786 = vmatmul.mubr.bf16.gmra.mrb[0].mxu0 %v620
  %v2787 = vpop.f32.mrb[0].mxu0
  %v2788 = vadd.f32 %v2499, %v2787
  %v2789 = vpop.f32.mrb[0].mxu0
  %v2790 = vpop.f32.mrb[0].mxu0
  %v2791 = vadd.f32 %v2502, %v2790
  %v2792 = vpop.f32.mrb[0].mxu0
  %2793 = vmatprep.mubr.bf16.mxu0 %v625
  %2794 = vmatmul.mubr.bf16.gmra.mrb[0].mxu0 %v624
  %v2795 = vpop.f32.mrb[0].mxu0
  %v2796 = vadd.f32 %v2507, %v2795
  %v2797 = vpop.f32.mrb[0].mxu0
  %v2798 = vpop.f32.mrb[0].mxu0
  %v2799 = vadd.f32 %v2510, %v2798
  %v2800 = vpop.f32.mrb[0].mxu0
  %2801 = vmatprep.mubr.bf16.mxu0 %v629
  %2802 = vmatmul.mubr.bf16.gmra.mrb[0].mxu0 %v628
  %v2803 = vpop.f32.mrb[0].mxu0
  %v2804 = vadd.f32 %v2515, %v2803
  %v2805 = vpop.f32.mrb[0].mxu0
  %v2806 = vpop.f32.mrb[0].mxu0
  %v2807 = vadd.f32 %v2518, %v2806
  %v2808 = vpop.f32.mrb[0].mxu0
  %2809 = vmatprep.mubr.bf16.mxu0 %v633
  %2810 = vmatmul.mubr.bf16.gmra.mrb[0].mxu0 %v632
  %v2811 = vpop.f32.mrb[0].mxu0
  %v2812 = vadd.f32 %v2523, %v2811
  %v2813 = vpop.f32.mrb[0].mxu0
  %v2814 = vpop.f32.mrb[0].mxu0
  %v2815 = vadd.f32 %v2526, %v2814
  %v2816 = vpop.f32.mrb[0].mxu0
  %2817 = vmatprep.mubr.bf16.mxu0 %v637
  %2818 = vmatmul.mubr.bf16.gmra.mrb[0].mxu0 %v636
  %v2819 = vpop.f32.mrb[0].mxu0
  %v2820 = vadd.f32 %v2531, %v2819
  %v2821 = vpop.f32.mrb[0].mxu0
  %v2822 = vpop.f32.mrb[0].mxu0
  %v2823 = vadd.f32 %v2534, %v2822
  %v2824 = vpop.f32.mrb[0].mxu0
  %2825 = vmatprep.mubr.bf16.mxu0 %v641
  %2826 = vmatmul.mubr.bf16.gmra.mrb[0].mxu0 %v640
  %v2827 = vpop.f32.mrb[0].mxu0
  %v2828 = vadd.f32 %v2539, %v2827
  %v2829 = vpop.f32.mrb[0].mxu0
  %v2830 = vpop.f32.mrb[0].mxu0
  %v2831 = vadd.f32 %v2542, %v2830
  %v2832 = vpop.f32.mrb[0].mxu0
  %2833 = vmatprep.mubr.bf16.mxu0 %v645
  %2834 = vmatmul.mubr.bf16.gmra.mrb[0].mxu0 %v644
  %v2835 = vpop.f32.mrb[0].mxu0
  %v2836 = vadd.f32 %v2547, %v2835
  %v2837 = vpop.f32.mrb[0].mxu0
  %v2838 = vpop.f32.mrb[0].mxu0
  %v2839 = vadd.f32 %v2550, %v2838
  %v2840 = vpop.f32.mrb[0].mxu0
  %2841 = vmatprep.mubr.bf16.mxu0 %v649
  %2842 = vmatmul.mubr.bf16.gmra.mrb[0].mxu0 %v648
  %v2843 = vpop.f32.mrb[0].mxu0
  %v2844 = vadd.f32 %v2555, %v2843
  %v2845 = vpop.f32.mrb[0].mxu0
  %v2846 = vpop.f32.mrb[0].mxu0
  %v2847 = vadd.f32 %v2558, %v2846
  %v2848 = vpop.f32.mrb[0].mxu0
  %2849 = vmatprep.mubr.bf16.mxu0 %v653
  %2850 = vmatmul.mubr.bf16.gmra.mrb[0].mxu0 %v652
  %v2851 = vpop.f32.mrb[0].mxu0
  %v2852 = vadd.f32 %v2563, %v2851
  %v2853 = vpop.f32.mrb[0].mxu0
  %v2854 = vpop.f32.mrb[0].mxu0
  %v2855 = vadd.f32 %v2566, %v2854
  %v2856 = vpop.f32.mrb[0].mxu0
  %2857 = vmatprep.mubr.bf16.mxu0 %v657
  %2858 = vmatmul.mubr.bf16.gmra.mrb[0].mxu0 %v656
  %v2859 = vpop.f32.mrb[0].mxu0
  %v2860 = vadd.f32 %v2571, %v2859
  %v2861 = vpop.f32.mrb[0].mxu0
  %v2862 = vpop.f32.mrb[0].mxu0
  %v2863 = vadd.f32 %v2574, %v2862
  %v2864 = vpop.f32.mrb[0].mxu0
  %2865 = vmatprep.mubr.bf16.mxu0 %v661
  %2866 = vmatmul.mubr.bf16.gmra.mrb[0].mxu0 %v660
  %v2867 = vpop.f32.mrb[0].mxu0
  %v2868 = vadd.f32 %v2579, %v2867
  %v2869 = vpop.f32.mrb[0].mxu0
  %v2870 = vpop.f32.mrb[0].mxu0
  %v2871 = vadd.f32 %v2582, %v2870
  %v2872 = vpop.f32.mrb[0].mxu0
  %2873 = vmatprep.mubr.bf16.mxu0 %v665
  %2874 = vmatmul.mubr.bf16.gmra.mrb[0].mxu0 %v664
  %v2875 = vpop.f32.mrb[0].mxu0
  %v2876 = vadd.f32 %v2587, %v2875
  %v2877 = vpop.f32.mrb[0].mxu0
  %v2878 = vpop.f32.mrb[0].mxu0
  %v2879 = vadd.f32 %v2590, %v2878
  %v2880 = vpop.f32.mrb[0].mxu0
  %2881 = vmatprep.mubr.bf16.mxu0 %v669
  %2882 = vmatmul.mubr.bf16.gmra.mrb[0].mxu0 %v668
  %v2883 = vpop.f32.mrb[0].mxu0
  %v2884 = vadd.f32 %v2595, %v2883
  %v2885 = vpop.f32.mrb[0].mxu0
  %v2886 = vpop.f32.mrb[0].mxu0
  %v2887 = vadd.f32 %v2598, %v2886
  %v2888 = vpop.f32.mrb[0].mxu0
  %2889 = vmatprep.mubr.bf16.mxu0 %v673
  %2890 = vmatmul.mubr.bf16.gmra.mrb[0].mxu0 %v672
  %v2891 = vpop.f32.mrb[0].mxu0
  %v2892 = vadd.f32 %v2603, %v2891
  %v2893 = vpop.f32.mrb[0].mxu0
  %v2894 = vpop.f32.mrb[0].mxu0
  %v2895 = vadd.f32 %v2606, %v2894
  %v2896 = vpop.f32.mrb[0].mxu0
  %2897 = vmatprep.mubr.bf16.mxu0 %v677
  %2898 = vmatmul.mubr.bf16.gmra.mrb[0].mxu0 %v676
  %v2899 = vpop.f32.mrb[0].mxu0
  %v2900 = vadd.f32 %v2611, %v2899
  %v2901 = vpop.f32.mrb[0].mxu0
  %v2902 = vpop.f32.mrb[0].mxu0
  %v2903 = vadd.f32 %v2614, %v2902
  %v2904 = vpop.f32.mrb[0].mxu0
  %2905 = vmatprep.mubr.bf16.mxu0 %v681
  %2906 = vmatmul.mubr.bf16.gmra.mrb[0].mxu0 %v680
  %v2907 = vpop.f32.mrb[0].mxu0
  %v2908 = vadd.f32 %v2619, %v2907
  %v2909 = vpop.f32.mrb[0].mxu0
  %v2910 = vpop.f32.mrb[0].mxu0
  %v2911 = vadd.f32 %v2622, %v2910
  %v2912 = vpop.f32.mrb[0].mxu0
  %2913 = vmatprep.mubr.bf16.mxu0 %v685
  %2914 = vmatmul.mubr.bf16.gmra.mrb[0].mxu0 %v684
  %v2915 = vpop.f32.mrb[0].mxu0
  %v2916 = vadd.f32 %v2627, %v2915
  %v2917 = vpop.f32.mrb[0].mxu0
  %v2918 = vpop.f32.mrb[0].mxu0
  %v2919 = vadd.f32 %v2630, %v2918
  %v2920 = vpop.f32.mrb[0].mxu0
  %2921 = vmatprep.mubr.bf16.mxu0 %v689
  %2922 = vmatmul.mubr.bf16.gmra.mrb[0].mxu0 %v688
  %v2923 = vpop.f32.mrb[0].mxu0
  %v2924 = vadd.f32 %v2635, %v2923
  %v2925 = vpop.f32.mrb[0].mxu0
  %v2926 = vpop.f32.mrb[0].mxu0
  %v2927 = vadd.f32 %v2638, %v2926
  %v2928 = vpop.f32.mrb[0].mxu0
  %2929 = vmatprep.mubr.bf16.mxu0 %v693
  %2930 = vmatmul.mubr.bf16.gmra.mrb[0].mxu0 %v692
  %v2931 = vpop.f32.mrb[0].mxu0
  %v2932 = vadd.f32 %v2643, %v2931
  %v2933 = vpop.f32.mrb[0].mxu0
  %v2934 = vpop.f32.mrb[0].mxu0
  %v2935 = vadd.f32 %v2646, %v2934
  %v2936 = vpop.f32.mrb[0].mxu0
  %2937 = vmatprep.mubr.bf16.mxu0 %v697
  %2938 = vmatmul.mubr.bf16.gmra.mrb[0].mxu0 %v696
  %v2939 = vpop.f32.mrb[0].mxu0
  %v2940 = vadd.f32 %v2651, %v2939
  %v2941 = vpop.f32.mrb[0].mxu0
  %v2942 = vpop.f32.mrb[0].mxu0
  %v2943 = vadd.f32 %v2654, %v2942
  %v2944 = vpop.f32.mrb[0].mxu0
  %2945 = vmatprep.mubr.bf16.mxu0 %v701
  %2946 = vmatmul.mubr.bf16.gmra.mrb[0].mxu0 %v700
  %v2947 = vpop.f32.mrb[0].mxu0
  %v2948 = vadd.f32 %v2659, %v2947
  %v2949 = vpop.f32.mrb[0].mxu0
  %v2950 = vpop.f32.mrb[0].mxu0
  %v2951 = vadd.f32 %v2662, %v2950
  %v2952 = vpop.f32.mrb[0].mxu0
  %2953 = vmatprep.mubr.bf16.mxu0 %v705
  %2954 = vmatmul.mubr.bf16.gmra.mrb[0].mxu0 %v704
  %v2955 = vpop.f32.mrb[0].mxu0
  %v2956 = vadd.f32 %v2667, %v2955
  %v2957 = vpop.f32.mrb[0].mxu0
  %v2958 = vpop.f32.mrb[0].mxu0
  %v2959 = vadd.f32 %v2670, %v2958
  %v2960 = vpop.f32.mrb[0].mxu0
  %2961 = vmatprep.mubr.bf16.mxu0 %v709
  %2962 = vmatmul.mubr.bf16.gmra.mrb[0].mxu0 %v708
  %v2963 = vpop.f32.mrb[0].mxu0
  %v2964 = vadd.f32 %v2675, %v2963
  %v2965 = vpop.f32.mrb[0].mxu0
  %v2966 = vpop.f32.mrb[0].mxu0
  %v2967 = vadd.f32 %v2678, %v2966
  %v2968 = vpop.f32.mrb[0].mxu0
  %2969 = vmatprep.mubr.bf16.mxu0 %v713
  %2970 = vmatmul.mubr.bf16.gmra.mrb[0].mxu0 %v712
  %v2971 = vpop.f32.mrb[0].mxu0
  %v2972 = vadd.f32 %v2683, %v2971
  %v2973 = vpop.f32.mrb[0].mxu0
  %v2974 = vpop.f32.mrb[0].mxu0
  %v2975 = vadd.f32 %v2686, %v2974
  %v2976 = vpop.f32.mrb[0].mxu0
  %2977 = vmatprep.mubr.bf16.mxu0 %v717
  %2978 = vmatmul.mubr.bf16.gmra.mrb[0].mxu0 %v716
  %v2979 = vpop.f32.mrb[0].mxu0
  %v2980 = vadd.f32 %v2691, %v2979
  %v2981 = vpop.f32.mrb[0].mxu0
  %v2982 = vpop.f32.mrb[0].mxu0
  %v2983 = vadd.f32 %v2694, %v2982
  %v2984 = vpop.f32.mrb[0].mxu0
  %2985 = vmatprep.mubr.bf16.mxu0 %v721
  %2986 = vmatmul.mubr.bf16.gmra.mrb[0].mxu0 %v720
  %v2987 = vpop.f32.mrb[0].mxu0
  %v2988 = vadd.f32 %v2699, %v2987
  %v2989 = vpop.f32.mrb[0].mxu0
  %v2990 = vpop.f32.mrb[0].mxu0
  %v2991 = vadd.f32 %v2702, %v2990
  %v2992 = vpop.f32.mrb[0].mxu0
  %2993 = vmatprep.mubr.bf16.mxu0 %v725
  %2994 = vmatmul.mubr.bf16.gmra.mrb[0].mxu0 %v724
  %v2995 = vpop.f32.mrb[0].mxu0
  %v2996 = vadd.f32 %v2707, %v2995
  %v2997 = vpop.f32.mrb[0].mxu0
  %v2998 = vpop.f32.mrb[0].mxu0
  %v2999 = vadd.f32 %v2710, %v2998
  %v3000 = vpop.f32.mrb[0].mxu0
  %3001 = vmatprep.mubr.bf16.mxu0 %v729
  %3002 = vmatmul.mubr.bf16.gmra.mrb[0].mxu0 %v728
  %v3003 = vpop.f32.mrb[0].mxu0
  %v3004 = vadd.f32 %v2715, %v3003
  %v3005 = vpop.f32.mrb[0].mxu0
  %v3006 = vpop.f32.mrb[0].mxu0
  %v3007 = vadd.f32 %v2718, %v3006
  %v3008 = vpop.f32.mrb[0].mxu0
  %3009 = vdwg.mxu0
  %v3010 = vld [vmem:[%s3] sm:$0xff]
  %v3011 = vld [vmem:[%s3 + $0x8] sm:$0xff]
  %v3012 = vld [vmem:[%s3 + $0x10] sm:$0xff]
  %v3013 = vld [vmem:[%s3 + $0x18] sm:$0xff]
  %vm3014 = vcmask 261120
  %v3016 = vsel %vm3014, %v2756, 0
  %v3019 = vsel %vm3014, %v2759, 0
  %v3022 = vsel %vm3014, %v2764, 0
  %v3025 = vsel %vm3014, %v2767, 0
  %v3028 = vsel %vm3014, %v2772, 0
  %v3031 = vsel %vm3014, %v2775, 0
  %v3034 = vsel %vm3014, %v2780, 0
  %v3037 = vsel %vm3014, %v2783, 0
  %v3040 = vsel %vm3014, %v2788, 0
  %v3043 = vsel %vm3014, %v2791, 0
  %v3046 = vsel %vm3014, %v2796, 0
  %v3049 = vsel %vm3014, %v2799, 0
  %v3052 = vsel %vm3014, %v2804, 0
  %v3055 = vsel %vm3014, %v2807, 0
  %v3058 = vsel %vm3014, %v2812, 0
  %v3061 = vsel %vm3014, %v2815, 0
  %v3064 = vsel %vm3014, %v2820, 0
  %v3067 = vsel %vm3014, %v2823, 0
  %v3070 = vsel %vm3014, %v2828, 0
  %v3073 = vsel %vm3014, %v2831, 0
  %v3076 = vsel %vm3014, %v2836, 0
  %v3079 = vsel %vm3014, %v2839, 0
  %v3082 = vsel %vm3014, %v2844, 0
  %v3085 = vsel %vm3014, %v2847, 0
  %v3088 = vsel %vm3014, %v2852, 0
  %v3091 = vsel %vm3014, %v2855, 0
  %v3094 = vsel %vm3014, %v2860, 0
  %v3097 = vsel %vm3014, %v2863, 0
  %v3100 = vsel %vm3014, %v2868, 0
  %v3103 = vsel %vm3014, %v2871, 0
  %v3106 = vsel %vm3014, %v2876, 0
  %v3109 = vsel %vm3014, %v2879, 0
  %v3112 = vsel %vm3014, %v2884, 0
  %v3115 = vsel %vm3014, %v2887, 0
  %v3118 = vsel %vm3014, %v2892, 0
  %v3121 = vsel %vm3014, %v2895, 0
  %v3124 = vsel %vm3014, %v2900, 0
  %v3127 = vsel %vm3014, %v2903, 0
  %v3130 = vsel %vm3014, %v2908, 0
  %v3133 = vsel %vm3014, %v2911, 0
  %v3136 = vsel %vm3014, %v2916, 0
  %v3139 = vsel %vm3014, %v2919, 0
  %v3142 = vsel %vm3014, %v2924, 0
  %v3145 = vsel %vm3014, %v2927, 0
  %v3148 = vsel %vm3014, %v2932, 0
  %v3151 = vsel %vm3014, %v2935, 0
  %v3154 = vsel %vm3014, %v2940, 0
  %v3157 = vsel %vm3014, %v2943, 0
  %v3160 = vsel %vm3014, %v2948, 0
  %v3163 = vsel %vm3014, %v2951, 0
  %v3166 = vsel %vm3014, %v2956, 0
  %v3169 = vsel %vm3014, %v2959, 0
  %v3172 = vsel %vm3014, %v2964, 0
  %v3175 = vsel %vm3014, %v2967, 0
  %v3178 = vsel %vm3014, %v2972, 0
  %v3181 = vsel %vm3014, %v2975, 0
  %v3184 = vsel %vm3014, %v2980, 0
  %v3187 = vsel %vm3014, %v2983, 0
  %v3190 = vsel %vm3014, %v2988, 0
  %v3193 = vsel %vm3014, %v2991, 0
  %v3196 = vsel %vm3014, %v2996, 0
  %v3199 = vsel %vm3014, %v2999, 0
  %v3202 = vsel %vm3014, %v3004, 0
  %v3205 = vsel %vm3014, %v3007, 0
  %3207 = vmatprep.subr.mxu0 0.0
  %3208 = vmatpush1.msra.mxu0 %v3010
  %3209 = vmatprep.subr.mxu0 0.0
  %3210 = vmatpush1.msra.mxu0 %v3011
  %3211 = vmatprep.subr.mxu0 0.0
  %3212 = vmatpush1.msra.mxu0 %v3012
  %3213 = vmatprep.subr.mxu0 0.0
  %3214 = vmatpush1.msra.mxu0 %v3013
  %3215 = vmatprep.subr.mxu0 0.0
  %3216 = vmatpush1.msra.mxu0 0.0
  %3217 = vmatprep.subr.mxu0 0.0
  %3218 = vmatpush1.msra.mxu0 0.0
  %3219 = vmatprep.subr.mxu0 0.0
  %3220 = vmatpush1.msra.mxu0 0.0
  %3221 = vmatprep.subr.mxu0 0.0
  %3222 = vmatpush1.msra.mxu0 0.0
  %3223 = vmatprep.subr.mxu0 0.0
  %3224 = vmatpush1.msra.mxu0 0.0
  %3225 = vmatprep.subr.mxu0 0.0
  %3226 = vmatpush1.msra.mxu0 0.0
  %3227 = vmatprep.subr.mxu0 0.0
  %3228 = vmatpush1.msra.mxu0 0.0
  %3229 = vmatprep.subr.mxu0 0.0
  %3230 = vmatpush1.msra.mxu0 0.0
  %3231 = vmatprep.subr.mxu0 0.0
  %3232 = vmatpush1.msra.mxu0 0.0
  %3233 = vmatprep.subr.mxu0 0.0
  %3234 = vmatpush1.msra.mxu0 0.0
  %3235 = vmatprep.subr.mxu0 0.0
  %3236 = vmatpush1.msra.mxu0 0.0
  %3237 = vmatprep.subr.mxu0 0.0
  %3238 = vmatpush1.msra.mxu0 0.0
  %3239 = vmatprep.subr.mxu0 0.0
  %3240 = vmatpush1.msra.mxu0 0.0
  %3241 = vmatprep.subr.mxu0 0.0
  %3242 = vmatpush1.msra.mxu0 0.0
  %3243 = vmatprep.subr.mxu0 0.0
  %3244 = vmatpush1.msra.mxu0 0.0
  %3245 = vmatprep.subr.mxu0 0.0
  %3246 = vmatpush1.msra.mxu0 0.0
  %3247 = vmatprep.subr.mxu0 0.0
  %3248 = vmatpush1.msra.mxu0 0.0
  %3249 = vmatprep.subr.mxu0 0.0
  %3250 = vmatpush1.msra.mxu0 0.0
  %3251 = vmatprep.subr.mxu0 0.0
  %3252 = vmatpush1.msra.mxu0 0.0
  %3253 = vmatprep.subr.mxu0 0.0
  %3254 = vmatpush1.msra.mxu0 0.0
  %3255 = vmatprep.subr.mxu0 0.0
  %3256 = vmatpush1.msra.mxu0 0.0
  %3257 = vmatprep.subr.mxu0 0.0
  %3258 = vmatpush1.msra.mxu0 0.0
  %3259 = vmatprep.subr.mxu0 0.0
  %3260 = vmatpush1.msra.mxu0 0.0
  %3261 = vmatprep.subr.mxu0 0.0
  %3262 = vmatpush1.msra.mxu0 0.0
  %3263 = vmatprep.subr.mxu0 0.0
  %3264 = vmatpush1.msra.mxu0 0.0
  %3265 = vmatprep.subr.mxu0 0.0
  %3266 = vmatpush1.msra.mxu0 0.0
  %3267 = vmatprep.subr.mxu0 0.0
  %3268 = vmatpush1.msra.mxu0 0.0
  %3269 = vmatprep.subr.mxu0 0.0
  %3270 = vmatpush1.msra.mxu0 0.0
  %3271 = vmatprep.mubr.f32.mxu0 0.0
  %3272 = vmatmul.mubr.f32.gmra.mrb[0].mxu0 %v3016
  %v3273 = vpop.f32.mrb[0].mxu0
  %v3274 = vadd.f32 0.0, %v3273
  %v3275 = vpop.f32.mrb[0].mxu0
  %3276 = vmatprep.mubr.f32.mxu0 0.0
  %3277 = vmatmul.mubr.f32.gmra.mrb[0].mxu0 %v3019
  %v3278 = vpop.f32.mrb[0].mxu0
  %v3279 = vadd.f32 0.0, %v3278
  %v3280 = vpop.f32.mrb[0].mxu0
  %3281 = vmatprep.mubr.f32.mxu0 0.0
  %3282 = vmatmul.mubr.f32.gmra.mrb[0].mxu0 %v3022
  %v3283 = vpop.f32.mrb[0].mxu0
  %v3284 = vadd.f32 0.0, %v3283
  %v3285 = vpop.f32.mrb[0].mxu0
  %3286 = vmatprep.mubr.f32.mxu0 0.0
  %3287 = vmatmul.mubr.f32.gmra.mrb[0].mxu0 %v3025
  %v3288 = vpop.f32.mrb[0].mxu0
  %v3289 = vadd.f32 0.0, %v3288
  %v3290 = vpop.f32.mrb[0].mxu0
  %3291 = vmatprep.mubr.f32.mxu0 0.0
  %3292 = vmatmul.mubr.f32.gmra.mrb[0].mxu0 %v3028
  %v3293 = vpop.f32.mrb[0].mxu0
  %v3294 = vadd.f32 0.0, %v3293
  %v3295 = vpop.f32.mrb[0].mxu0
  %3296 = vmatprep.mubr.f32.mxu0 0.0
  %3297 = vmatmul.mubr.f32.gmra.mrb[0].mxu0 %v3031
  %v3298 = vpop.f32.mrb[0].mxu0
  %v3299 = vadd.f32 0.0, %v3298
  %v3300 = vpop.f32.mrb[0].mxu0
  %3301 = vmatprep.mubr.f32.mxu0 0.0
  %3302 = vmatmul.mubr.f32.gmra.mrb[0].mxu0 %v3034
  %v3303 = vpop.f32.mrb[0].mxu0
  %v3304 = vadd.f32 0.0, %v3303
  %v3305 = vpop.f32.mrb[0].mxu0
  %3306 = vmatprep.mubr.f32.mxu0 0.0
  %3307 = vmatmul.mubr.f32.gmra.mrb[0].mxu0 %v3037
  %v3308 = vpop.f32.mrb[0].mxu0
  %v3309 = vadd.f32 0.0, %v3308
  %v3310 = vpop.f32.mrb[0].mxu0
  %3311 = vmatprep.mubr.f32.mxu0 0.0
  %3312 = vmatmul.mubr.f32.gmra.mrb[0].mxu0 %v3040
  %v3313 = vpop.f32.mrb[0].mxu0
  %v3314 = vadd.f32 0.0, %v3313
  %v3315 = vpop.f32.mrb[0].mxu0
  %3316 = vmatprep.mubr.f32.mxu0 0.0
  %3317 = vmatmul.mubr.f32.gmra.mrb[0].mxu0 %v3043
  %v3318 = vpop.f32.mrb[0].mxu0
  %v3319 = vadd.f32 0.0, %v3318
  %v3320 = vpop.f32.mrb[0].mxu0
  %3321 = vmatprep.mubr.f32.mxu0 0.0
  %3322 = vmatmul.mubr.f32.gmra.mrb[0].mxu0 %v3046
  %v3323 = vpop.f32.mrb[0].mxu0
  %v3324 = vadd.f32 0.0, %v3323
  %v3325 = vpop.f32.mrb[0].mxu0
  %3326 = vmatprep.mubr.f32.mxu0 0.0
  %3327 = vmatmul.mubr.f32.gmra.mrb[0].mxu0 %v3049
  %v3328 = vpop.f32.mrb[0].mxu0
  %v3329 = vadd.f32 0.0, %v3328
  %v3330 = vpop.f32.mrb[0].mxu0
  %3331 = vmatprep.mubr.f32.mxu0 0.0
  %3332 = vmatmul.mubr.f32.gmra.mrb[0].mxu0 %v3052
  %v3333 = vpop.f32.mrb[0].mxu0
  %v3334 = vadd.f32 0.0, %v3333
  %v3335 = vpop.f32.mrb[0].mxu0
  %3336 = vmatprep.mubr.f32.mxu0 0.0
  %3337 = vmatmul.mubr.f32.gmra.mrb[0].mxu0 %v3055
  %v3338 = vpop.f32.mrb[0].mxu0
  %v3339 = vadd.f32 0.0, %v3338
  %v3340 = vpop.f32.mrb[0].mxu0
  %3341 = vmatprep.mubr.f32.mxu0 0.0
  %3342 = vmatmul.mubr.f32.gmra.mrb[0].mxu0 %v3058
  %v3343 = vpop.f32.mrb[0].mxu0
  %v3344 = vadd.f32 0.0, %v3343
  %v3345 = vpop.f32.mrb[0].mxu0
  %3346 = vmatprep.mubr.f32.mxu0 0.0
  %3347 = vmatmul.mubr.f32.gmra.mrb[0].mxu0 %v3061
  %v3348 = vpop.f32.mrb[0].mxu0
  %v3349 = vadd.f32 0.0, %v3348
  %v3350 = vpop.f32.mrb[0].mxu0
  %3351 = vmatprep.mubr.f32.mxu0 0.0
  %3352 = vmatmul.mubr.f32.gmra.mrb[0].mxu0 %v3064
  %v3353 = vpop.f32.mrb[0].mxu0
  %v3354 = vadd.f32 0.0, %v3353
  %v3355 = vpop.f32.mrb[0].mxu0
  %3356 = vmatprep.mubr.f32.mxu0 0.0
  %3357 = vmatmul.mubr.f32.gmra.mrb[0].mxu0 %v3067
  %v3358 = vpop.f32.mrb[0].mxu0
  %v3359 = vadd.f32 0.0, %v3358
  %v3360 = vpop.f32.mrb[0].mxu0
  %3361 = vmatprep.mubr.f32.mxu0 0.0
  %3362 = vmatmul.mubr.f32.gmra.mrb[0].mxu0 %v3070
  %v3363 = vpop.f32.mrb[0].mxu0
  %v3364 = vadd.f32 0.0, %v3363
  %v3365 = vpop.f32.mrb[0].mxu0
  %3366 = vmatprep.mubr.f32.mxu0 0.0
  %3367 = vmatmul.mubr.f32.gmra.mrb[0].mxu0 %v3073
  %v3368 = vpop.f32.mrb[0].mxu0
  %v3369 = vadd.f32 0.0, %v3368
  %v3370 = vpop.f32.mrb[0].mxu0
  %3371 = vmatprep.mubr.f32.mxu0 0.0
  %3372 = vmatmul.mubr.f32.gmra.mrb[0].mxu0 %v3076
  %v3373 = vpop.f32.mrb[0].mxu0
  %v3374 = vadd.f32 0.0, %v3373
  %v3375 = vpop.f32.mrb[0].mxu0
  %3376 = vmatprep.mubr.f32.mxu0 0.0
  %3377 = vmatmul.mubr.f32.gmra.mrb[0].mxu0 %v3079
  %v3378 = vpop.f32.mrb[0].mxu0
  %v3379 = vadd.f32 0.0, %v3378
  %v3380 = vpop.f32.mrb[0].mxu0
  %3381 = vmatprep.mubr.f32.mxu0 0.0
  %3382 = vmatmul.mubr.f32.gmra.mrb[0].mxu0 %v3082
  %v3383 = vpop.f32.mrb[0].mxu0
  %v3384 = vadd.f32 0.0, %v3383
  %v3385 = vpop.f32.mrb[0].mxu0
  %3386 = vmatprep.mubr.f32.mxu0 0.0
  %3387 = vmatmul.mubr.f32.gmra.mrb[0].mxu0 %v3085
  %v3388 = vpop.f32.mrb[0].mxu0
  %v3389 = vadd.f32 0.0, %v3388
  %v3390 = vpop.f32.mrb[0].mxu0
  %3391 = vmatprep.mubr.f32.mxu0 0.0
  %3392 = vmatmul.mubr.f32.gmra.mrb[0].mxu0 %v3088
  %v3393 = vpop.f32.mrb[0].mxu0
  %v3394 = vadd.f32 0.0, %v3393
  %v3395 = vpop.f32.mrb[0].mxu0
  %3396 = vmatprep.mubr.f32.mxu0 0.0
  %3397 = vmatmul.mubr.f32.gmra.mrb[0].mxu0 %v3091
  %v3398 = vpop.f32.mrb[0].mxu0
  %v3399 = vadd.f32 0.0, %v3398
  %v3400 = vpop.f32.mrb[0].mxu0
  %3401 = vmatprep.mubr.f32.mxu0 0.0
  %3402 = vmatmul.mubr.f32.gmra.mrb[0].mxu0 %v3094
  %v3403 = vpop.f32.mrb[0].mxu0
  %v3404 = vadd.f32 0.0, %v3403
  %v3405 = vpop.f32.mrb[0].mxu0
  %3406 = vmatprep.mubr.f32.mxu0 0.0
  %3407 = vmatmul.mubr.f32.gmra.mrb[0].mxu0 %v3097
  %v3408 = vpop.f32.mrb[0].mxu0
  %v3409 = vadd.f32 0.0, %v3408
  %v3410 = vpop.f32.mrb[0].mxu0
  %3411 = vmatprep.mubr.f32.mxu0 0.0
  %3412 = vmatmul.mubr.f32.gmra.mrb[0].mxu0 %v3100
  %v3413 = vpop.f32.mrb[0].mxu0
  %v3414 = vadd.f32 0.0, %v3413
  %v3415 = vpop.f32.mrb[0].mxu0
  %3416 = vmatprep.mubr.f32.mxu0 0.0
  %3417 = vmatmul.mubr.f32.gmra.mrb[0].mxu0 %v3103
  %v3418 = vpop.f32.mrb[0].mxu0
  %v3419 = vadd.f32 0.0, %v3418
  %v3420 = vpop.f32.mrb[0].mxu0
  %3421 = vmatprep.mubr.f32.mxu0 0.0
  %3422 = vmatmul.mubr.f32.gmra.mrb[0].mxu0 %v3106
  %v3423 = vpop.f32.mrb[0].mxu0
  %v3424 = vadd.f32 0.0, %v3423
  %v3425 = vpop.f32.mrb[0].mxu0
  %3426 = vmatprep.mubr.f32.mxu0 0.0
  %3427 = vmatmul.mubr.f32.gmra.mrb[0].mxu0 %v3109
  %v3428 = vpop.f32.mrb[0].mxu0
  %v3429 = vadd.f32 0.0, %v3428
  %v3430 = vpop.f32.mrb[0].mxu0
  %3431 = vmatprep.mubr.f32.mxu0 0.0
  %3432 = vmatmul.mubr.f32.gmra.mrb[0].mxu0 %v3112
  %v3433 = vpop.f32.mrb[0].mxu0
  %v3434 = vadd.f32 0.0, %v3433
  %v3435 = vpop.f32.mrb[0].mxu0
  %3436 = vmatprep.mubr.f32.mxu0 0.0
  %3437 = vmatmul.mubr.f32.gmra.mrb[0].mxu0 %v3115
  %v3438 = vpop.f32.mrb[0].mxu0
  %v3439 = vadd.f32 0.0, %v3438
  %v3440 = vpop.f32.mrb[0].mxu0
  %3441 = vmatprep.mubr.f32.mxu0 0.0
  %3442 = vmatmul.mubr.f32.gmra.mrb[0].mxu0 %v3118
  %v3443 = vpop.f32.mrb[0].mxu0
  %v3444 = vadd.f32 0.0, %v3443
  %v3445 = vpop.f32.mrb[0].mxu0
  %3446 = vmatprep.mubr.f32.mxu0 0.0
  %3447 = vmatmul.mubr.f32.gmra.mrb[0].mxu0 %v3121
  %v3448 = vpop.f32.mrb[0].mxu0
  %v3449 = vadd.f32 0.0, %v3448
  %v3450 = vpop.f32.mrb[0].mxu0
  %3451 = vmatprep.mubr.f32.mxu0 0.0
  %3452 = vmatmul.mubr.f32.gmra.mrb[0].mxu0 %v3124
  %v3453 = vpop.f32.mrb[0].mxu0
  %v3454 = vadd.f32 0.0, %v3453
  %v3455 = vpop.f32.mrb[0].mxu0
  %3456 = vmatprep.mubr.f32.mxu0 0.0
  %3457 = vmatmul.mubr.f32.gmra.mrb[0].mxu0 %v3127
  %v3458 = vpop.f32.mrb[0].mxu0
  %v3459 = vadd.f32 0.0, %v3458
  %v3460 = vpop.f32.mrb[0].mxu0
  %3461 = vmatprep.mubr.f32.mxu0 0.0
  %3462 = vmatmul.mubr.f32.gmra.mrb[0].mxu0 %v3130
  %v3463 = vpop.f32.mrb[0].mxu0
  %v3464 = vadd.f32 0.0, %v3463
  %v3465 = vpop.f32.mrb[0].mxu0
  %3466 = vmatprep.mubr.f32.mxu0 0.0
  %3467 = vmatmul.mubr.f32.gmra.mrb[0].mxu0 %v3133
  %v3468 = vpop.f32.mrb[0].mxu0
  %v3469 = vadd.f32 0.0, %v3468
  %v3470 = vpop.f32.mrb[0].mxu0
  %3471 = vmatprep.mubr.f32.mxu0 0.0
  %3472 = vmatmul.mubr.f32.gmra.mrb[0].mxu0 %v3136
  %v3473 = vpop.f32.mrb[0].mxu0
  %v3474 = vadd.f32 0.0, %v3473
  %v3475 = vpop.f32.mrb[0].mxu0
  %3476 = vmatprep.mubr.f32.mxu0 0.0
  %3477 = vmatmul.mubr.f32.gmra.mrb[0].mxu0 %v3139
  %v3478 = vpop.f32.mrb[0].mxu0
  %v3479 = vadd.f32 0.0, %v3478
  %v3480 = vpop.f32.mrb[0].mxu0
  %3481 = vmatprep.mubr.f32.mxu0 0.0
  %3482 = vmatmul.mubr.f32.gmra.mrb[0].mxu0 %v3142
  %v3483 = vpop.f32.mrb[0].mxu0
  %v3484 = vadd.f32 0.0, %v3483
  %v3485 = vpop.f32.mrb[0].mxu0
  %3486 = vmatprep.mubr.f32.mxu0 0.0
  %3487 = vmatmul.mubr.f32.gmra.mrb[0].mxu0 %v3145
  %v3488 = vpop.f32.mrb[0].mxu0
  %v3489 = vadd.f32 0.0, %v3488
  %v3490 = vpop.f32.mrb[0].mxu0
  %3491 = vmatprep.mubr.f32.mxu0 0.0
  %3492 = vmatmul.mubr.f32.gmra.mrb[0].mxu0 %v3148
  %v3493 = vpop.f32.mrb[0].mxu0
  %v3494 = vadd.f32 0.0, %v3493
  %v3495 = vpop.f32.mrb[0].mxu0
  %3496 = vmatprep.mubr.f32.mxu0 0.0
  %3497 = vmatmul.mubr.f32.gmra.mrb[0].mxu0 %v3151
  %v3498 = vpop.f32.mrb[0].mxu0
  %v3499 = vadd.f32 0.0, %v3498
  %v3500 = vpop.f32.mrb[0].mxu0
  %3501 = vmatprep.mubr.f32.mxu0 0.0
  %3502 = vmatmul.mubr.f32.gmra.mrb[0].mxu0 %v3154
  %v3503 = vpop.f32.mrb[0].mxu0
  %v3504 = vadd.f32 0.0, %v3503
  %v3505 = vpop.f32.mrb[0].mxu0
  %3506 = vmatprep.mubr.f32.mxu0 0.0
  %3507 = vmatmul.mubr.f32.gmra.mrb[0].mxu0 %v3157
  %v3508 = vpop.f32.mrb[0].mxu0
  %v3509 = vadd.f32 0.0, %v3508
  %v3510 = vpop.f32.mrb[0].mxu0
  %3511 = vmatprep.mubr.f32.mxu0 0.0
  %3512 = vmatmul.mubr.f32.gmra.mrb[0].mxu0 %v3160
  %v3513 = vpop.f32.mrb[0].mxu0
  %v3514 = vadd.f32 0.0, %v3513
  %v3515 = vpop.f32.mrb[0].mxu0
  %3516 = vmatprep.mubr.f32.mxu0 0.0
  %3517 = vmatmul.mubr.f32.gmra.mrb[0].mxu0 %v3163
  %v3518 = vpop.f32.mrb[0].mxu0
  %v3519 = vadd.f32 0.0, %v3518
  %v3520 = vpop.f32.mrb[0].mxu0
  %3521 = vmatprep.mubr.f32.mxu0 0.0
  %3522 = vmatmul.mubr.f32.gmra.mrb[0].mxu0 %v3166
  %v3523 = vpop.f32.mrb[0].mxu0
  %v3524 = vadd.f32 0.0, %v3523
  %v3525 = vpop.f32.mrb[0].mxu0
  %3526 = vmatprep.mubr.f32.mxu0 0.0
  %3527 = vmatmul.mubr.f32.gmra.mrb[0].mxu0 %v3169
  %v3528 = vpop.f32.mrb[0].mxu0
  %v3529 = vadd.f32 0.0, %v3528
  %v3530 = vpop.f32.mrb[0].mxu0
  %3531 = vmatprep.mubr.f32.mxu0 0.0
  %3532 = vmatmul.mubr.f32.gmra.mrb[0].mxu0 %v3172
  %v3533 = vpop.f32.mrb[0].mxu0
  %v3534 = vadd.f32 0.0, %v3533
  %v3535 = vpop.f32.mrb[0].mxu0
  %3536 = vmatprep.mubr.f32.mxu0 0.0
  %3537 = vmatmul.mubr.f32.gmra.mrb[0].mxu0 %v3175
  %v3538 = vpop.f32.mrb[0].mxu0
  %v3539 = vadd.f32 0.0, %v3538
  %v3540 = vpop.f32.mrb[0].mxu0
  %3541 = vmatprep.mubr.f32.mxu0 0.0
  %3542 = vmatmul.mubr.f32.gmra.mrb[0].mxu0 %v3178
  %v3543 = vpop.f32.mrb[0].mxu0
  %v3544 = vadd.f32 0.0, %v3543
  %v3545 = vpop.f32.mrb[0].mxu0
  %3546 = vmatprep.mubr.f32.mxu0 0.0
  %3547 = vmatmul.mubr.f32.gmra.mrb[0].mxu0 %v3181
  %v3548 = vpop.f32.mrb[0].mxu0
  %v3549 = vadd.f32 0.0, %v3548
  %v3550 = vpop.f32.mrb[0].mxu0
  %3551 = vmatprep.mubr.f32.mxu0 0.0
  %3552 = vmatmul.mubr.f32.gmra.mrb[0].mxu0 %v3184
  %v3553 = vpop.f32.mrb[0].mxu0
  %v3554 = vadd.f32 0.0, %v3553
  %v3555 = vpop.f32.mrb[0].mxu0
  %3556 = vmatprep.mubr.f32.mxu0 0.0
  %3557 = vmatmul.mubr.f32.gmra.mrb[0].mxu0 %v3187
  %v3558 = vpop.f32.mrb[0].mxu0
  %v3559 = vadd.f32 0.0, %v3558
  %v3560 = vpop.f32.mrb[0].mxu0
  %3561 = vmatprep.mubr.f32.mxu0 0.0
  %3562 = vmatmul.mubr.f32.gmra.mrb[0].mxu0 %v3190
  %v3563 = vpop.f32.mrb[0].mxu0
  %v3564 = vadd.f32 0.0, %v3563
  %v3565 = vpop.f32.mrb[0].mxu0
  %3566 = vmatprep.mubr.f32.mxu0 0.0
  %3567 = vmatmul.mubr.f32.gmra.mrb[0].mxu0 %v3193
  %v3568 = vpop.f32.mrb[0].mxu0
  %v3569 = vadd.f32 0.0, %v3568
  %v3570 = vpop.f32.mrb[0].mxu0
  %3571 = vmatprep.mubr.f32.mxu0 0.0
  %3572 = vmatmul.mubr.f32.gmra.mrb[0].mxu0 %v3196
  %v3573 = vpop.f32.mrb[0].mxu0
  %v3574 = vadd.f32 0.0, %v3573
  %v3575 = vpop.f32.mrb[0].mxu0
  %3576 = vmatprep.mubr.f32.mxu0 0.0
  %3577 = vmatmul.mubr.f32.gmra.mrb[0].mxu0 %v3199
  %v3578 = vpop.f32.mrb[0].mxu0
  %v3579 = vadd.f32 0.0, %v3578
  %v3580 = vpop.f32.mrb[0].mxu0
  %3581 = vmatprep.mubr.f32.mxu0 0.0
  %3582 = vmatmul.mubr.f32.gmra.mrb[0].mxu0 %v3202
  %v3583 = vpop.f32.mrb[0].mxu0
  %v3584 = vadd.f32 0.0, %v3583
  %v3585 = vpop.f32.mrb[0].mxu0
  %3586 = vmatprep.mubr.f32.mxu0 0.0
  %3587 = vmatmul.mubr.f32.gmra.mrb[0].mxu0 %v3205
  %v3588 = vpop.f32.mrb[0].mxu0
  %v3589 = vadd.f32 0.0, %v3588
  %v3590 = vpop.f32.mrb[0].mxu0
  %3591 = vdwg.mxu0
  %vm3592 = vcmp.gt.f32.partialorder %v3274, 0.0
  %vm3593 = vcmp.gt.f32.partialorder %v3279, 0.0
  %vm3594 = vcmp.gt.f32.partialorder %v3284, 0.0
  %vm3595 = vcmp.gt.f32.partialorder %v3289, 0.0
  %vm3596 = vcmp.gt.f32.partialorder %v3294, 0.0
  %vm3597 = vcmp.gt.f32.partialorder %v3299, 0.0
  %vm3598 = vcmp.gt.f32.partialorder %v3304, 0.0
  %vm3599 = vcmp.gt.f32.partialorder %v3309, 0.0
  %vm3600 = vcmp.gt.f32.partialorder %v3314, 0.0
  %vm3601 = vcmp.gt.f32.partialorder %v3319, 0.0
  %vm3602 = vcmp.gt.f32.partialorder %v3324, 0.0
  %vm3603 = vcmp.gt.f32.partialorder %v3329, 0.0
  %vm3604 = vcmp.gt.f32.partialorder %v3334, 0.0
  %vm3605 = vcmp.gt.f32.partialorder %v3339, 0.0
  %vm3606 = vcmp.gt.f32.partialorder %v3344, 0.0
  %vm3607 = vcmp.gt.f32.partialorder %v3349, 0.0
  %vm3608 = vcmp.gt.f32.partialorder %v3354, 0.0
  %vm3609 = vcmp.gt.f32.partialorder %v3359, 0.0
  %vm3610 = vcmp.gt.f32.partialorder %v3364, 0.0
  %vm3611 = vcmp.gt.f32.partialorder %v3369, 0.0
  %vm3612 = vcmp.gt.f32.partialorder %v3374, 0.0
  %vm3613 = vcmp.gt.f32.partialorder %v3379, 0.0
  %vm3614 = vcmp.gt.f32.partialorder %v3384, 0.0
  %vm3615 = vcmp.gt.f32.partialorder %v3389, 0.0
  %vm3616 = vcmp.gt.f32.partialorder %v3394, 0.0
  %vm3617 = vcmp.gt.f32.partialorder %v3399, 0.0
  %vm3618 = vcmp.gt.f32.partialorder %v3404, 0.0
  %vm3619 = vcmp.gt.f32.partialorder %v3409, 0.0
  %vm3620 = vcmp.gt.f32.partialorder %v3414, 0.0
  %vm3621 = vcmp.gt.f32.partialorder %v3419, 0.0
  %vm3622 = vcmp.gt.f32.partialorder %v3424, 0.0
  %vm3623 = vcmp.gt.f32.partialorder %v3429, 0.0
  %vm3624 = vcmp.gt.f32.partialorder %v3434, 0.0
  %vm3625 = vcmp.gt.f32.partialorder %v3439, 0.0
  %vm3626 = vcmp.gt.f32.partialorder %v3444, 0.0
  %vm3627 = vcmp.gt.f32.partialorder %v3449, 0.0
  %vm3628 = vcmp.gt.f32.partialorder %v3454, 0.0
  %vm3629 = vcmp.gt.f32.partialorder %v3459, 0.0
  %vm3630 = vcmp.gt.f32.partialorder %v3464, 0.0
  %vm3631 = vcmp.gt.f32.partialorder %v3469, 0.0
  %vm3632 = vcmp.gt.f32.partialorder %v3474, 0.0
  %vm3633 = vcmp.gt.f32.partialorder %v3479, 0.0
  %vm3634 = vcmp.gt.f32.partialorder %v3484, 0.0
  %vm3635 = vcmp.gt.f32.partialorder %v3489, 0.0
  %vm3636 = vcmp.gt.f32.partialorder %v3494, 0.0
  %vm3637 = vcmp.gt.f32.partialorder %v3499, 0.0
  %vm3638 = vcmp.gt.f32.partialorder %v3504, 0.0
  %vm3639 = vcmp.gt.f32.partialorder %v3509, 0.0
  %vm3640 = vcmp.gt.f32.partialorder %v3514, 0.0
  %vm3641 = vcmp.gt.f32.partialorder %v3519, 0.0
  %vm3642 = vcmp.gt.f32.partialorder %v3524, 0.0
  %vm3643 = vcmp.gt.f32.partialorder %v3529, 0.0
  %vm3644 = vcmp.gt.f32.partialorder %v3534, 0.0
  %vm3645 = vcmp.gt.f32.partialorder %v3539, 0.0
  %vm3646 = vcmp.gt.f32.partialorder %v3544, 0.0
  %vm3647 = vcmp.gt.f32.partialorder %v3549, 0.0
  %vm3648 = vcmp.gt.f32.partialorder %v3554, 0.0
  %vm3649 = vcmp.gt.f32.partialorder %v3559, 0.0
  %vm3650 = vcmp.gt.f32.partialorder %v3564, 0.0
  %vm3651 = vcmp.gt.f32.partialorder %v3569, 0.0
  %vm3652 = vcmp.gt.f32.partialorder %v3574, 0.0
  %vm3653 = vcmp.gt.f32.partialorder %v3579, 0.0
  %vm3654 = vcmp.gt.f32.partialorder %v3584, 0.0
  %vm3655 = vcmp.gt.f32.partialorder %v3589, 0.0
  %v3656 = vmul.f32 %v3274, 0.2
  %v3657 = vmul.f32 %v3279, 0.2
  %v3658 = vmul.f32 %v3284, 0.2
  %v3659 = vmul.f32 %v3289, 0.2
  %v3660 = vmul.f32 %v3294, 0.2
  %v3661 = vmul.f32 %v3299, 0.2
  %v3662 = vmul.f32 %v3304, 0.2
  %v3663 = vmul.f32 %v3309, 0.2
  %v3664 = vmul.f32 %v3314, 0.2
  %v3665 = vmul.f32 %v3319, 0.2
  %v3666 = vmul.f32 %v3324, 0.2
  %v3667 = vmul.f32 %v3329, 0.2
  %v3668 = vmul.f32 %v3334, 0.2
  %v3669 = vmul.f32 %v3339, 0.2
  %v3670 = vmul.f32 %v3344, 0.2
  %v3671 = vmul.f32 %v3349, 0.2
  %v3672 = vmul.f32 %v3354, 0.2
  %v3673 = vmul.f32 %v3359, 0.2
  %v3674 = vmul.f32 %v3364, 0.2
  %v3675 = vmul.f32 %v3369, 0.2
  %v3676 = vmul.f32 %v3374, 0.2
  %v3677 = vmul.f32 %v3379, 0.2
  %v3678 = vmul.f32 %v3384, 0.2
  %v3679 = vmul.f32 %v3389, 0.2
  %v3680 = vmul.f32 %v3394, 0.2
  %v3681 = vmul.f32 %v3399, 0.2
  %v3682 = vmul.f32 %v3404, 0.2
  %v3683 = vmul.f32 %v3409, 0.2
  %v3684 = vmul.f32 %v3414, 0.2
  %v3685 = vmul.f32 %v3419, 0.2
  %v3686 = vmul.f32 %v3424, 0.2
  %v3687 = vmul.f32 %v3429, 0.2
  %v3688 = vmul.f32 %v3434, 0.2
  %v3689 = vmul.f32 %v3439, 0.2
  %v3690 = vmul.f32 %v3444, 0.2
  %v3691 = vmul.f32 %v3449, 0.2
  %v3692 = vmul.f32 %v3454, 0.2
  %v3693 = vmul.f32 %v3459, 0.2
  %v3694 = vmul.f32 %v3464, 0.2
  %v3695 = vmul.f32 %v3469, 0.2
  %v3696 = vmul.f32 %v3474, 0.2
  %v3697 = vmul.f32 %v3479, 0.2
  %v3698 = vmul.f32 %v3484, 0.2
  %v3699 = vmul.f32 %v3489, 0.2
  %v3700 = vmul.f32 %v3494, 0.2
  %v3701 = vmul.f32 %v3499, 0.2
  %v3702 = vmul.f32 %v3504, 0.2
  %v3703 = vmul.f32 %v3509, 0.2
  %v3704 = vmul.f32 %v3514, 0.2
  %v3705 = vmul.f32 %v3519, 0.2
  %v3706 = vmul.f32 %v3524, 0.2
  %v3707 = vmul.f32 %v3529, 0.2
  %v3708 = vmul.f32 %v3534, 0.2
  %v3709 = vmul.f32 %v3539, 0.2
  %v3710 = vmul.f32 %v3544, 0.2
  %v3711 = vmul.f32 %v3549, 0.2
  %v3712 = vmul.f32 %v3554, 0.2
  %v3713 = vmul.f32 %v3559, 0.2
  %v3714 = vmul.f32 %v3564, 0.2
  %v3715 = vmul.f32 %v3569, 0.2
  %v3716 = vmul.f32 %v3574, 0.2
  %v3717 = vmul.f32 %v3579, 0.2
  %v3718 = vmul.f32 %v3584, 0.2
  %v3719 = vmul.f32 %v3589, 0.2
  %v3720 = vsel %vm3592, %v3274, %v3656
  %v3721 = vsel %vm3593, %v3279, %v3657
  %v3722 = vsel %vm3594, %v3284, %v3658
  %v3723 = vsel %vm3595, %v3289, %v3659
  %v3724 = vsel %vm3596, %v3294, %v3660
  %v3725 = vsel %vm3597, %v3299, %v3661
  %v3726 = vsel %vm3598, %v3304, %v3662
  %v3727 = vsel %vm3599, %v3309, %v3663
  %v3728 = vsel %vm3600, %v3314, %v3664
  %v3729 = vsel %vm3601, %v3319, %v3665
  %v3730 = vsel %vm3602, %v3324, %v3666
  %v3731 = vsel %vm3603, %v3329, %v3667
  %v3732 = vsel %vm3604, %v3334, %v3668
  %v3733 = vsel %vm3605, %v3339, %v3669
  %v3734 = vsel %vm3606, %v3344, %v3670
  %v3735 = vsel %vm3607, %v3349, %v3671
  %v3736 = vsel %vm3608, %v3354, %v3672
  %v3737 = vsel %vm3609, %v3359, %v3673
  %v3738 = vsel %vm3610, %v3364, %v3674
  %v3739 = vsel %vm3611, %v3369, %v3675
  %v3740 = vsel %vm3612, %v3374, %v3676
  %v3741 = vsel %vm3613, %v3379, %v3677
  %v3742 = vsel %vm3614, %v3384, %v3678
  %v3743 = vsel %vm3615, %v3389, %v3679
  %v3744 = vsel %vm3616, %v3394, %v3680
  %v3745 = vsel %vm3617, %v3399, %v3681
  %v3746 = vsel %vm3618, %v3404, %v3682
  %v3747 = vsel %vm3619, %v3409, %v3683
  %v3748 = vsel %vm3620, %v3414, %v3684
  %v3749 = vsel %vm3621, %v3419, %v3685
  %v3750 = vsel %vm3622, %v3424, %v3686
  %v3751 = vsel %vm3623, %v3429, %v3687
  %v3752 = vsel %vm3624, %v3434, %v3688
  %v3753 = vsel %vm3625, %v3439, %v3689
  %v3754 = vsel %vm3626, %v3444, %v3690
  %v3755 = vsel %vm3627, %v3449, %v3691
  %v3756 = vsel %vm3628, %v3454, %v3692
  %v3757 = vsel %vm3629, %v3459, %v3693
  %v3758 = vsel %vm3630, %v3464, %v3694
  %v3759 = vsel %vm3631, %v3469, %v3695
  %v3760 = vsel %vm3632, %v3474, %v3696
  %v3761 = vsel %vm3633, %v3479, %v3697
  %v3762 = vsel %vm3634, %v3484, %v3698
  %v3763 = vsel %vm3635, %v3489, %v3699
  %v3764 = vsel %vm3636, %v3494, %v3700
  %v3765 = vsel %vm3637, %v3499, %v3701
  %v3766 = vsel %vm3638, %v3504, %v3702
  %v3767 = vsel %vm3639, %v3509, %v3703
  %v3768 = vsel %vm3640, %v3514, %v3704
  %v3769 = vsel %vm3641, %v3519, %v3705
  %v3770 = vsel %vm3642, %v3524, %v3706
  %v3771 = vsel %vm3643, %v3529, %v3707
  %v3772 = vsel %vm3644, %v3534, %v3708
  %v3773 = vsel %vm3645, %v3539, %v3709
  %v3774 = vsel %vm3646, %v3544, %v3710
  %v3775 = vsel %vm3647, %v3549, %v3711
  %v3776 = vsel %vm3648, %v3554, %v3712
  %v3777 = vsel %vm3649, %v3559, %v3713
  %v3778 = vsel %vm3650, %v3564, %v3714
  %v3779 = vsel %vm3651, %v3569, %v3715
  %v3780 = vsel %vm3652, %v3574, %v3716
  %v3781 = vsel %vm3653, %v3579, %v3717
  %v3782 = vsel %vm3654, %v3584, %v3718
  %v3783 = vsel %vm3655, %v3589, %v3719
  %v3784 = vpack.c.bf16 %v3721, %v3720
  %v3785 = vpack.c.bf16 %v3723, %v3722
  %v3786 = vpack.c.bf16 %v3725, %v3724
  %v3787 = vpack.c.bf16 %v3727, %v3726
  %v3788 = vpack.c.bf16 %v3729, %v3728
  %v3789 = vpack.c.bf16 %v3731, %v3730
  %v3790 = vpack.c.bf16 %v3733, %v3732
  %v3791 = vpack.c.bf16 %v3735, %v3734
  %v3792 = vpack.c.bf16 %v3737, %v3736
  %v3793 = vpack.c.bf16 %v3739, %v3738
  %v3794 = vpack.c.bf16 %v3741, %v3740
  %v3795 = vpack.c.bf16 %v3743, %v3742
  %v3796 = vpack.c.bf16 %v3745, %v3744
  %v3797 = vpack.c.bf16 %v3747, %v3746
  %v3798 = vpack.c.bf16 %v3749, %v3748
  %v3799 = vpack.c.bf16 %v3751, %v3750
  %v3800 = vpack.c.bf16 %v3753, %v3752
  %v3801 = vpack.c.bf16 %v3755, %v3754
  %v3802 = vpack.c.bf16 %v3757, %v3756
  %v3803 = vpack.c.bf16 %v3759, %v3758
  %v3804 = vpack.c.bf16 %v3761, %v3760
  %v3805 = vpack.c.bf16 %v3763, %v3762
  %v3806 = vpack.c.bf16 %v3765, %v3764
  %v3807 = vpack.c.bf16 %v3767, %v3766
  %v3808 = vpack.c.bf16 %v3769, %v3768
  %v3809 = vpack.c.bf16 %v3771, %v3770
  %v3810 = vpack.c.bf16 %v3773, %v3772
  %v3811 = vpack.c.bf16 %v3775, %v3774
  %v3812 = vpack.c.bf16 %v3777, %v3776
  %v3813 = vpack.c.bf16 %v3779, %v3778
  %v3814 = vpack.c.bf16 %v3781, %v3780
  %v3815 = vpack.c.bf16 %v3783, %v3782
  %3816 = vmatprep.subr.bf16.mxu0 0
  %3817 = vmatpush1.bf16.msra.mxu0 %v3784
  %3818 = vmatprep.subr.bf16.mxu0 0
  %3819 = vmatpush1.bf16.msra.mxu0 %v3785
  %3820 = vmatprep.subr.bf16.mxu0 0
  %3821 = vmatpush1.bf16.msra.mxu0 %v3786
  %3822 = vmatprep.subr.bf16.mxu0 0
  %3823 = vmatpush1.bf16.msra.mxu0 %v3787
  %3824 = vmatprep.subr.bf16.mxu0 0
  %3825 = vmatpush1.bf16.msra.mxu0 %v3788
  %3826 = vmatprep.subr.bf16.mxu0 0
  %3827 = vmatpush1.bf16.msra.mxu0 %v3789
  %3828 = vmatprep.subr.bf16.mxu0 0
  %3829 = vmatpush1.bf16.msra.mxu0 %v3790
  %3830 = vmatprep.subr.bf16.mxu0 0
  %3831 = vmatpush1.bf16.msra.mxu0 %v3791
  %3832 = vmatprep.subr.bf16.mxu0 0
  %3833 = vmatpush1.bf16.msra.mxu0 %v3792
  %3834 = vmatprep.subr.bf16.mxu0 0
  %3835 = vmatpush1.bf16.msra.mxu0 %v3793
  %3836 = vmatprep.subr.bf16.mxu0 0
  %3837 = vmatpush1.bf16.msra.mxu0 %v3794
  %3838 = vmatprep.subr.bf16.mxu0 0
  %3839 = vmatpush1.bf16.msra.mxu0 %v3795
  %3840 = vmatprep.subr.bf16.mxu0 0
  %3841 = vmatpush1.bf16.msra.mxu0 %v3796
  %3842 = vmatprep.subr.bf16.mxu0 0
  %3843 = vmatpush1.bf16.msra.mxu0 %v3797
  %3844 = vmatprep.subr.bf16.mxu0 0
  %3845 = vmatpush1.bf16.msra.mxu0 %v3798
  %3846 = vmatprep.subr.bf16.mxu0 0
  %3847 = vmatpush1.bf16.msra.mxu0 %v3799
  %3848 = vmatprep.mubr.bf16.mxu0 %v603
  %3849 = vmatmul.mubr.bf16.gmra.mrb[0].mxu0 %v602
  %v3850 = vpop.f32.mrb[0].mxu0
  %v3851 = vadd.f32 0.0, %v3850
  %v3852 = vpop.f32.mrb[0].mxu0
  %v3853 = vpop.f32.mrb[0].mxu0
  %v3854 = vadd.f32 0.0, %v3853
  %v3855 = vpop.f32.mrb[0].mxu0
  %3856 = vmatprep.mubr.bf16.mxu0 %v607
  %3857 = vmatmul.mubr.bf16.gmra.mrb[0].mxu0 %v606
  %v3858 = vpop.f32.mrb[0].mxu0
  %v3859 = vadd.f32 0.0, %v3858
  %v3860 = vpop.f32.mrb[0].mxu0
  %v3861 = vpop.f32.mrb[0].mxu0
  %v3862 = vadd.f32 0.0, %v3861
  %v3863 = vpop.f32.mrb[0].mxu0
  %3864 = vmatprep.mubr.bf16.mxu0 %v611
  %3865 = vmatmul.mubr.bf16.gmra.mrb[0].mxu0 %v610
  %v3866 = vpop.f32.mrb[0].mxu0
  %v3867 = vadd.f32 0.0, %v3866
  %v3868 = vpop.f32.mrb[0].mxu0
  %v3869 = vpop.f32.mrb[0].mxu0
  %v3870 = vadd.f32 0.0, %v3869
  %v3871 = vpop.f32.mrb[0].mxu0
  %3872 = vmatprep.mubr.bf16.mxu0 %v615
  %3873 = vmatmul.mubr.bf16.gmra.mrb[0].mxu0 %v614
  %v3874 = vpop.f32.mrb[0].mxu0
  %v3875 = vadd.f32 0.0, %v3874
  %v3876 = vpop.f32.mrb[0].mxu0
  %v3877 = vpop.f32.mrb[0].mxu0
  %v3878 = vadd.f32 0.0, %v3877
  %v3879 = vpop.f32.mrb[0].mxu0
  %3880 = vmatprep.mubr.bf16.mxu0 %v619
  %3881 = vmatmul.mubr.bf16.gmra.mrb[0].mxu0 %v618
  %v3882 = vpop.f32.mrb[0].mxu0
  %v3883 = vadd.f32 0.0, %v3882
  %v3884 = vpop.f32.mrb[0].mxu0
  %v3885 = vpop.f32.mrb[0].mxu0
  %v3886 = vadd.f32 0.0, %v3885
  %v3887 = vpop.f32.mrb[0].mxu0
  %3888 = vmatprep.mubr.bf16.mxu0 %v623
  %3889 = vmatmul.mubr.bf16.gmra.mrb[0].mxu0 %v622
  %v3890 = vpop.f32.mrb[0].mxu0
  %v3891 = vadd.f32 0.0, %v3890
  %v3892 = vpop.f32.mrb[0].mxu0
  %v3893 = vpop.f32.mrb[0].mxu0
  %v3894 = vadd.f32 0.0, %v3893
  %v3895 = vpop.f32.mrb[0].mxu0
  %3896 = vmatprep.mubr.bf16.mxu0 %v627
  %3897 = vmatmul.mubr.bf16.gmra.mrb[0].mxu0 %v626
  %v3898 = vpop.f32.mrb[0].mxu0
  %v3899 = vadd.f32 0.0, %v3898
  %v3900 = vpop.f32.mrb[0].mxu0
  %v3901 = vpop.f32.mrb[0].mxu0
  %v3902 = vadd.f32 0.0, %v3901
  %v3903 = vpop.f32.mrb[0].mxu0
  %3904 = vmatprep.mubr.bf16.mxu0 %v631
  %3905 = vmatmul.mubr.bf16.gmra.mrb[0].mxu0 %v630
  %v3906 = vpop.f32.mrb[0].mxu0
  %v3907 = vadd.f32 0.0, %v3906
  %v3908 = vpop.f32.mrb[0].mxu0
  %v3909 = vpop.f32.mrb[0].mxu0
  %v3910 = vadd.f32 0.0, %v3909
  %v3911 = vpop.f32.mrb[0].mxu0
  %3912 = vmatprep.mubr.bf16.mxu0 %v635
  %3913 = vmatmul.mubr.bf16.gmra.mrb[0].mxu0 %v634
  %v3914 = vpop.f32.mrb[0].mxu0
  %v3915 = vadd.f32 0.0, %v3914
  %v3916 = vpop.f32.mrb[0].mxu0
  %v3917 = vpop.f32.mrb[0].mxu0
  %v3918 = vadd.f32 0.0, %v3917
  %v3919 = vpop.f32.mrb[0].mxu0
  %3920 = vmatprep.mubr.bf16.mxu0 %v639
  %3921 = vmatmul.mubr.bf16.gmra.mrb[0].mxu0 %v638
  %v3922 = vpop.f32.mrb[0].mxu0
  %v3923 = vadd.f32 0.0, %v3922
  %v3924 = vpop.f32.mrb[0].mxu0
  %v3925 = vpop.f32.mrb[0].mxu0
  %v3926 = vadd.f32 0.0, %v3925
  %v3927 = vpop.f32.mrb[0].mxu0
  %3928 = vmatprep.mubr.bf16.mxu0 %v643
  %3929 = vmatmul.mubr.bf16.gmra.mrb[0].mxu0 %v642
  %v3930 = vpop.f32.mrb[0].mxu0
  %v3931 = vadd.f32 0.0, %v3930
  %v3932 = vpop.f32.mrb[0].mxu0
  %v3933 = vpop.f32.mrb[0].mxu0
  %v3934 = vadd.f32 0.0, %v3933
  %v3935 = vpop.f32.mrb[0].mxu0
  %3936 = vmatprep.mubr.bf16.mxu0 %v647
  %3937 = vmatmul.mubr.bf16.gmra.mrb[0].mxu0 %v646
  %v3938 = vpop.f32.mrb[0].mxu0
  %v3939 = vadd.f32 0.0, %v3938
  %v3940 = vpop.f32.mrb[0].mxu0
  %v3941 = vpop.f32.mrb[0].mxu0
  %v3942 = vadd.f32 0.0, %v3941
  %v3943 = vpop.f32.mrb[0].mxu0
  %3944 = vmatprep.mubr.bf16.mxu0 %v651
  %3945 = vmatmul.mubr.bf16.gmra.mrb[0].mxu0 %v650
  %v3946 = vpop.f32.mrb[0].mxu0
  %v3947 = vadd.f32 0.0, %v3946
  %v3948 = vpop.f32.mrb[0].mxu0
  %v3949 = vpop.f32.mrb[0].mxu0
  %v3950 = vadd.f32 0.0, %v3949
  %v3951 = vpop.f32.mrb[0].mxu0
  %3952 = vmatprep.mubr.bf16.mxu0 %v655
  %3953 = vmatmul.mubr.bf16.gmra.mrb[0].mxu0 %v654
  %v3954 = vpop.f32.mrb[0].mxu0
  %v3955 = vadd.f32 0.0, %v3954
  %v3956 = vpop.f32.mrb[0].mxu0
  %v3957 = vpop.f32.mrb[0].mxu0
  %v3958 = vadd.f32 0.0, %v3957
  %v3959 = vpop.f32.mrb[0].mxu0
  %3960 = vmatprep.mubr.bf16.mxu0 %v659
  %3961 = vmatmul.mubr.bf16.gmra.mrb[0].mxu0 %v658
  %v3962 = vpop.f32.mrb[0].mxu0
  %v3963 = vadd.f32 0.0, %v3962
  %v3964 = vpop.f32.mrb[0].mxu0
  %v3965 = vpop.f32.mrb[0].mxu0
  %v3966 = vadd.f32 0.0, %v3965
  %v3967 = vpop.f32.mrb[0].mxu0
  %3968 = vmatprep.mubr.bf16.mxu0 %v663
  %3969 = vmatmul.mubr.bf16.gmra.mrb[0].mxu0 %v662
  %v3970 = vpop.f32.mrb[0].mxu0
  %v3971 = vadd.f32 0.0, %v3970
  %v3972 = vpop.f32.mrb[0].mxu0
  %v3973 = vpop.f32.mrb[0].mxu0
  %v3974 = vadd.f32 0.0, %v3973
  %v3975 = vpop.f32.mrb[0].mxu0
  %3976 = vmatprep.mubr.bf16.mxu0 %v667
  %3977 = vmatmul.mubr.bf16.gmra.mrb[0].mxu0 %v666
  %v3978 = vpop.f32.mrb[0].mxu0
  %v3979 = vadd.f32 0.0, %v3978
  %v3980 = vpop.f32.mrb[0].mxu0
  %v3981 = vpop.f32.mrb[0].mxu0
  %v3982 = vadd.f32 0.0, %v3981
  %v3983 = vpop.f32.mrb[0].mxu0
  %3984 = vmatprep.mubr.bf16.mxu0 %v671
  %3985 = vmatmul.mubr.bf16.gmra.mrb[0].mxu0 %v670
  %v3986 = vpop.f32.mrb[0].mxu0
  %v3987 = vadd.f32 0.0, %v3986
  %v3988 = vpop.f32.mrb[0].mxu0
  %v3989 = vpop.f32.mrb[0].mxu0
  %v3990 = vadd.f32 0.0, %v3989
  %v3991 = vpop.f32.mrb[0].mxu0
  %3992 = vmatprep.mubr.bf16.mxu0 %v675
  %3993 = vmatmul.mubr.bf16.gmra.mrb[0].mxu0 %v674
  %v3994 = vpop.f32.mrb[0].mxu0
  %v3995 = vadd.f32 0.0, %v3994
  %v3996 = vpop.f32.mrb[0].mxu0
  %v3997 = vpop.f32.mrb[0].mxu0
  %v3998 = vadd.f32 0.0, %v3997
  %v3999 = vpop.f32.mrb[0].mxu0
  %4000 = vmatprep.mubr.bf16.mxu0 %v679
  %4001 = vmatmul.mubr.bf16.gmra.mrb[0].mxu0 %v678
  %v4002 = vpop.f32.mrb[0].mxu0
  %v4003 = vadd.f32 0.0, %v4002
  %v4004 = vpop.f32.mrb[0].mxu0
  %v4005 = vpop.f32.mrb[0].mxu0
  %v4006 = vadd.f32 0.0, %v4005
  %v4007 = vpop.f32.mrb[0].mxu0
  %4008 = vmatprep.mubr.bf16.mxu0 %v683
  %4009 = vmatmul.mubr.bf16.gmra.mrb[0].mxu0 %v682
  %v4010 = vpop.f32.mrb[0].mxu0
  %v4011 = vadd.f32 0.0, %v4010
  %v4012 = vpop.f32.mrb[0].mxu0
  %v4013 = vpop.f32.mrb[0].mxu0
  %v4014 = vadd.f32 0.0, %v4013
  %v4015 = vpop.f32.mrb[0].mxu0
  %4016 = vmatprep.mubr.bf16.mxu0 %v687
  %4017 = vmatmul.mubr.bf16.gmra.mrb[0].mxu0 %v686
  %v4018 = vpop.f32.mrb[0].mxu0
  %v4019 = vadd.f32 0.0, %v4018
  %v4020 = vpop.f32.mrb[0].mxu0
  %v4021 = vpop.f32.mrb[0].mxu0
  %v4022 = vadd.f32 0.0, %v4021
  %v4023 = vpop.f32.mrb[0].mxu0
  %4024 = vmatprep.mubr.bf16.mxu0 %v691
  %4025 = vmatmul.mubr.bf16.gmra.mrb[0].mxu0 %v690
  %v4026 = vpop.f32.mrb[0].mxu0
  %v4027 = vadd.f32 0.0, %v4026
  %v4028 = vpop.f32.mrb[0].mxu0
  %v4029 = vpop.f32.mrb[0].mxu0
  %v4030 = vadd.f32 0.0, %v4029
  %v4031 = vpop.f32.mrb[0].mxu0
  %4032 = vmatprep.mubr.bf16.mxu0 %v695
  %4033 = vmatmul.mubr.bf16.gmra.mrb[0].mxu0 %v694
  %v4034 = vpop.f32.mrb[0].mxu0
  %v4035 = vadd.f32 0.0, %v4034
  %v4036 = vpop.f32.mrb[0].mxu0
  %v4037 = vpop.f32.mrb[0].mxu0
  %v4038 = vadd.f32 0.0, %v4037
  %v4039 = vpop.f32.mrb[0].mxu0
  %4040 = vmatprep.mubr.bf16.mxu0 %v699
  %4041 = vmatmul.mubr.bf16.gmra.mrb[0].mxu0 %v698
  %v4042 = vpop.f32.mrb[0].mxu0
  %v4043 = vadd.f32 0.0, %v4042
  %v4044 = vpop.f32.mrb[0].mxu0
  %v4045 = vpop.f32.mrb[0].mxu0
  %v4046 = vadd.f32 0.0, %v4045
  %v4047 = vpop.f32.mrb[0].mxu0
  %4048 = vmatprep.mubr.bf16.mxu0 %v703
  %4049 = vmatmul.mubr.bf16.gmra.mrb[0].mxu0 %v702
  %v4050 = vpop.f32.mrb[0].mxu0
  %v4051 = vadd.f32 0.0, %v4050
  %v4052 = vpop.f32.mrb[0].mxu0
  %v4053 = vpop.f32.mrb[0].mxu0
  %v4054 = vadd.f32 0.0, %v4053
  %v4055 = vpop.f32.mrb[0].mxu0
  %4056 = vmatprep.mubr.bf16.mxu0 %v707
  %4057 = vmatmul.mubr.bf16.gmra.mrb[0].mxu0 %v706
  %v4058 = vpop.f32.mrb[0].mxu0
  %v4059 = vadd.f32 0.0, %v4058
  %v4060 = vpop.f32.mrb[0].mxu0
  %v4061 = vpop.f32.mrb[0].mxu0
  %v4062 = vadd.f32 0.0, %v4061
  %v4063 = vpop.f32.mrb[0].mxu0
  %4064 = vmatprep.mubr.bf16.mxu0 %v711
  %4065 = vmatmul.mubr.bf16.gmra.mrb[0].mxu0 %v710
  %v4066 = vpop.f32.mrb[0].mxu0
  %v4067 = vadd.f32 0.0, %v4066
  %v4068 = vpop.f32.mrb[0].mxu0
  %v4069 = vpop.f32.mrb[0].mxu0
  %v4070 = vadd.f32 0.0, %v4069
  %v4071 = vpop.f32.mrb[0].mxu0
  %4072 = vmatprep.mubr.bf16.mxu0 %v715
  %4073 = vmatmul.mubr.bf16.gmra.mrb[0].mxu0 %v714
  %v4074 = vpop.f32.mrb[0].mxu0
  %v4075 = vadd.f32 0.0, %v4074
  %v4076 = vpop.f32.mrb[0].mxu0
  %v4077 = vpop.f32.mrb[0].mxu0
  %v4078 = vadd.f32 0.0, %v4077
  %v4079 = vpop.f32.mrb[0].mxu0
  %4080 = vmatprep.mubr.bf16.mxu0 %v719
  %4081 = vmatmul.mubr.bf16.gmra.mrb[0].mxu0 %v718
  %v4082 = vpop.f32.mrb[0].mxu0
  %v4083 = vadd.f32 0.0, %v4082
  %v4084 = vpop.f32.mrb[0].mxu0
  %v4085 = vpop.f32.mrb[0].mxu0
  %v4086 = vadd.f32 0.0, %v4085
  %v4087 = vpop.f32.mrb[0].mxu0
  %4088 = vmatprep.mubr.bf16.mxu0 %v723
  %4089 = vmatmul.mubr.bf16.gmra.mrb[0].mxu0 %v722
  %v4090 = vpop.f32.mrb[0].mxu0
  %v4091 = vadd.f32 0.0, %v4090
  %v4092 = vpop.f32.mrb[0].mxu0
  %v4093 = vpop.f32.mrb[0].mxu0
  %v4094 = vadd.f32 0.0, %v4093
  %v4095 = vpop.f32.mrb[0].mxu0
  %4096 = vmatprep.mubr.bf16.mxu0 %v727
  %4097 = vmatmul.mubr.bf16.gmra.mrb[0].mxu0 %v726
  %v4098 = vpop.f32.mrb[0].mxu0
  %v4099 = vadd.f32 0.0, %v4098
  %v4100 = vpop.f32.mrb[0].mxu0
  %v4101 = vpop.f32.mrb[0].mxu0
  %v4102 = vadd.f32 0.0, %v4101
  %v4103 = vpop.f32.mrb[0].mxu0
  %4104 = vdwg.mxu0
  %4105 = vmatprep.subr.bf16.mxu0 0
  %4106 = vmatpush1.bf16.msra.mxu0 %v3800
  %4107 = vmatprep.subr.bf16.mxu0 0
  %4108 = vmatpush1.bf16.msra.mxu0 %v3801
  %4109 = vmatprep.subr.bf16.mxu0 0
  %4110 = vmatpush1.bf16.msra.mxu0 %v3802
  %4111 = vmatprep.subr.bf16.mxu0 0
  %4112 = vmatpush1.bf16.msra.mxu0 %v3803
  %4113 = vmatprep.subr.bf16.mxu0 0
  %4114 = vmatpush1.bf16.msra.mxu0 %v3804
  %4115 = vmatprep.subr.bf16.mxu0 0
  %4116 = vmatpush1.bf16.msra.mxu0 %v3805
  %4117 = vmatprep.subr.bf16.mxu0 0
  %4118 = vmatpush1.bf16.msra.mxu0 %v3806
  %4119 = vmatprep.subr.bf16.mxu0 0
  %4120 = vmatpush1.bf16.msra.mxu0 %v3807
  %4121 = vmatprep.subr.bf16.mxu0 0
  %4122 = vmatpush1.bf16.msra.mxu0 %v3808
  %4123 = vmatprep.subr.bf16.mxu0 0
  %4124 = vmatpush1.bf16.msra.mxu0 %v3809
  %4125 = vmatprep.subr.bf16.mxu0 0
  %4126 = vmatpush1.bf16.msra.mxu0 %v3810
  %4127 = vmatprep.subr.bf16.mxu0 0
  %4128 = vmatpush1.bf16.msra.mxu0 %v3811
  %4129 = vmatprep.subr.bf16.mxu0 0
  %4130 = vmatpush1.bf16.msra.mxu0 %v3812
  %4131 = vmatprep.subr.bf16.mxu0 0
  %4132 = vmatpush1.bf16.msra.mxu0 %v3813
  %4133 = vmatprep.subr.bf16.mxu0 0
  %4134 = vmatpush1.bf16.msra.mxu0 %v3814
  %4135 = vmatprep.subr.bf16.mxu0 0
  %4136 = vmatpush1.bf16.msra.mxu0 %v3815
  %4137 = vmatprep.mubr.bf16.mxu0 %v605
  %4138 = vmatmul.mubr.bf16.gmra.mrb[0].mxu0 %v604
  %v4139 = vpop.f32.mrb[0].mxu0
  %v4140 = vadd.f32 %v3851, %v4139
  %v4141 = vpop.f32.mrb[0].mxu0
  %v4142 = vpop.f32.mrb[0].mxu0
  %v4143 = vadd.f32 %v3854, %v4142
  %v4144 = vpop.f32.mrb[0].mxu0
  %4145 = vmatprep.mubr.bf16.mxu0 %v609
  %4146 = vmatmul.mubr.bf16.gmra.mrb[0].mxu0 %v608
  %v4147 = vpop.f32.mrb[0].mxu0
  %v4148 = vadd.f32 %v3859, %v4147
  %v4149 = vpop.f32.mrb[0].mxu0
  %v4150 = vpop.f32.mrb[0].mxu0
  %v4151 = vadd.f32 %v3862, %v4150
  %v4152 = vpop.f32.mrb[0].mxu0
  %4153 = vmatprep.mubr.bf16.mxu0 %v613
  %4154 = vmatmul.mubr.bf16.gmra.mrb[0].mxu0 %v612
  %v4155 = vpop.f32.mrb[0].mxu0
  %v4156 = vadd.f32 %v3867, %v4155
  %v4157 = vpop.f32.mrb[0].mxu0
  %v4158 = vpop.f32.mrb[0].mxu0
  %v4159 = vadd.f32 %v3870, %v4158
  %v4160 = vpop.f32.mrb[0].mxu0
  %4161 = vmatprep.mubr.bf16.mxu0 %v617
  %4162 = vmatmul.mubr.bf16.gmra.mrb[0].mxu0 %v616
  %v4163 = vpop.f32.mrb[0].mxu0
  %v4164 = vadd.f32 %v3875, %v4163
  %v4165 = vpop.f32.mrb[0].mxu0
  %v4166 = vpop.f32.mrb[0].mxu0
  %v4167 = vadd.f32 %v3878, %v4166
  %v4168 = vpop.f32.mrb[0].mxu0
  %4169 = vmatprep.mubr.bf16.mxu0 %v621
  %4170 = vmatmul.mubr.bf16.gmra.mrb[0].mxu0 %v620
  %v4171 = vpop.f32.mrb[0].mxu0
  %v4172 = vadd.f32 %v3883, %v4171
  %v4173 = vpop.f32.mrb[0].mxu0
  %v4174 = vpop.f32.mrb[0].mxu0
  %v4175 = vadd.f32 %v3886, %v4174
  %v4176 = vpop.f32.mrb[0].mxu0
  %4177 = vmatprep.mubr.bf16.mxu0 %v625
  %4178 = vmatmul.mubr.bf16.gmra.mrb[0].mxu0 %v624
  %v4179 = vpop.f32.mrb[0].mxu0
  %v4180 = vadd.f32 %v3891, %v4179
  %v4181 = vpop.f32.mrb[0].mxu0
  %v4182 = vpop.f32.mrb[0].mxu0
  %v4183 = vadd.f32 %v3894, %v4182
  %v4184 = vpop.f32.mrb[0].mxu0
  %4185 = vmatprep.mubr.bf16.mxu0 %v629
  %4186 = vmatmul.mubr.bf16.gmra.mrb[0].mxu0 %v628
  %v4187 = vpop.f32.mrb[0].mxu0
  %v4188 = vadd.f32 %v3899, %v4187
  %v4189 = vpop.f32.mrb[0].mxu0
  %v4190 = vpop.f32.mrb[0].mxu0
  %v4191 = vadd.f32 %v3902, %v4190
  %v4192 = vpop.f32.mrb[0].mxu0
  %4193 = vmatprep.mubr.bf16.mxu0 %v633
  %4194 = vmatmul.mubr.bf16.gmra.mrb[0].mxu0 %v632
  %v4195 = vpop.f32.mrb[0].mxu0
  %v4196 = vadd.f32 %v3907, %v4195
  %v4197 = vpop.f32.mrb[0].mxu0
  %v4198 = vpop.f32.mrb[0].mxu0
  %v4199 = vadd.f32 %v3910, %v4198
  %v4200 = vpop.f32.mrb[0].mxu0
  %4201 = vmatprep.mubr.bf16.mxu0 %v637
  %4202 = vmatmul.mubr.bf16.gmra.mrb[0].mxu0 %v636
  %v4203 = vpop.f32.mrb[0].mxu0
  %v4204 = vadd.f32 %v3915, %v4203
  %v4205 = vpop.f32.mrb[0].mxu0
  %v4206 = vpop.f32.mrb[0].mxu0
  %v4207 = vadd.f32 %v3918, %v4206
  %v4208 = vpop.f32.mrb[0].mxu0
  %4209 = vmatprep.mubr.bf16.mxu0 %v641
  %4210 = vmatmul.mubr.bf16.gmra.mrb[0].mxu0 %v640
  %v4211 = vpop.f32.mrb[0].mxu0
  %v4212 = vadd.f32 %v3923, %v4211
  %v4213 = vpop.f32.mrb[0].mxu0
  %v4214 = vpop.f32.mrb[0].mxu0
  %v4215 = vadd.f32 %v3926, %v4214
  %v4216 = vpop.f32.mrb[0].mxu0
  %4217 = vmatprep.mubr.bf16.mxu0 %v645
  %4218 = vmatmul.mubr.bf16.gmra.mrb[0].mxu0 %v644
  %v4219 = vpop.f32.mrb[0].mxu0
  %v4220 = vadd.f32 %v3931, %v4219
  %v4221 = vpop.f32.mrb[0].mxu0
  %v4222 = vpop.f32.mrb[0].mxu0
  %v4223 = vadd.f32 %v3934, %v4222
  %v4224 = vpop.f32.mrb[0].mxu0
  %4225 = vmatprep.mubr.bf16.mxu0 %v649
  %4226 = vmatmul.mubr.bf16.gmra.mrb[0].mxu0 %v648
  %v4227 = vpop.f32.mrb[0].mxu0
  %v4228 = vadd.f32 %v3939, %v4227
  %v4229 = vpop.f32.mrb[0].mxu0
  %v4230 = vpop.f32.mrb[0].mxu0
  %v4231 = vadd.f32 %v3942, %v4230
  %v4232 = vpop.f32.mrb[0].mxu0
  %4233 = vmatprep.mubr.bf16.mxu0 %v653
  %4234 = vmatmul.mubr.bf16.gmra.mrb[0].mxu0 %v652
  %v4235 = vpop.f32.mrb[0].mxu0
  %v4236 = vadd.f32 %v3947, %v4235
  %v4237 = vpop.f32.mrb[0].mxu0
  %v4238 = vpop.f32.mrb[0].mxu0
  %v4239 = vadd.f32 %v3950, %v4238
  %v4240 = vpop.f32.mrb[0].mxu0
  %4241 = vmatprep.mubr.bf16.mxu0 %v657
  %4242 = vmatmul.mubr.bf16.gmra.mrb[0].mxu0 %v656
  %v4243 = vpop.f32.mrb[0].mxu0
  %v4244 = vadd.f32 %v3955, %v4243
  %v4245 = vpop.f32.mrb[0].mxu0
  %v4246 = vpop.f32.mrb[0].mxu0
  %v4247 = vadd.f32 %v3958, %v4246
  %v4248 = vpop.f32.mrb[0].mxu0
  %4249 = vmatprep.mubr.bf16.mxu0 %v661
  %4250 = vmatmul.mubr.bf16.gmra.mrb[0].mxu0 %v660
  %v4251 = vpop.f32.mrb[0].mxu0
  %v4252 = vadd.f32 %v3963, %v4251
  %v4253 = vpop.f32.mrb[0].mxu0
  %v4254 = vpop.f32.mrb[0].mxu0
  %v4255 = vadd.f32 %v3966, %v4254
  %v4256 = vpop.f32.mrb[0].mxu0
  %4257 = vmatprep.mubr.bf16.mxu0 %v665
  %4258 = vmatmul.mubr.bf16.gmra.mrb[0].mxu0 %v664
  %v4259 = vpop.f32.mrb[0].mxu0
  %v4260 = vadd.f32 %v3971, %v4259
  %v4261 = vpop.f32.mrb[0].mxu0
  %v4262 = vpop.f32.mrb[0].mxu0
  %v4263 = vadd.f32 %v3974, %v4262
  %v4264 = vpop.f32.mrb[0].mxu0
  %4265 = vmatprep.mubr.bf16.mxu0 %v669
  %4266 = vmatmul.mubr.bf16.gmra.mrb[0].mxu0 %v668
  %v4267 = vpop.f32.mrb[0].mxu0
  %v4268 = vadd.f32 %v3979, %v4267
  %v4269 = vpop.f32.mrb[0].mxu0
  %v4270 = vpop.f32.mrb[0].mxu0
  %v4271 = vadd.f32 %v3982, %v4270
  %v4272 = vpop.f32.mrb[0].mxu0
  %4273 = vmatprep.mubr.bf16.mxu0 %v673
  %4274 = vmatmul.mubr.bf16.gmra.mrb[0].mxu0 %v672
  %v4275 = vpop.f32.mrb[0].mxu0
  %v4276 = vadd.f32 %v3987, %v4275
  %v4277 = vpop.f32.mrb[0].mxu0
  %v4278 = vpop.f32.mrb[0].mxu0
  %v4279 = vadd.f32 %v3990, %v4278
  %v4280 = vpop.f32.mrb[0].mxu0
  %4281 = vmatprep.mubr.bf16.mxu0 %v677
  %4282 = vmatmul.mubr.bf16.gmra.mrb[0].mxu0 %v676
  %v4283 = vpop.f32.mrb[0].mxu0
  %v4284 = vadd.f32 %v3995, %v4283
  %v4285 = vpop.f32.mrb[0].mxu0
  %v4286 = vpop.f32.mrb[0].mxu0
  %v4287 = vadd.f32 %v3998, %v4286
  %v4288 = vpop.f32.mrb[0].mxu0
  %4289 = vmatprep.mubr.bf16.mxu0 %v681
  %4290 = vmatmul.mubr.bf16.gmra.mrb[0].mxu0 %v680
  %v4291 = vpop.f32.mrb[0].mxu0
  %v4292 = vadd.f32 %v4003, %v4291
  %v4293 = vpop.f32.mrb[0].mxu0
  %v4294 = vpop.f32.mrb[0].mxu0
  %v4295 = vadd.f32 %v4006, %v4294
  %v4296 = vpop.f32.mrb[0].mxu0
  %4297 = vmatprep.mubr.bf16.mxu0 %v685
  %4298 = vmatmul.mubr.bf16.gmra.mrb[0].mxu0 %v684
  %v4299 = vpop.f32.mrb[0].mxu0
  %v4300 = vadd.f32 %v4011, %v4299
  %v4301 = vpop.f32.mrb[0].mxu0
  %v4302 = vpop.f32.mrb[0].mxu0
  %v4303 = vadd.f32 %v4014, %v4302
  %v4304 = vpop.f32.mrb[0].mxu0
  %4305 = vmatprep.mubr.bf16.mxu0 %v689
  %4306 = vmatmul.mubr.bf16.gmra.mrb[0].mxu0 %v688
  %v4307 = vpop.f32.mrb[0].mxu0
  %v4308 = vadd.f32 %v4019, %v4307
  %v4309 = vpop.f32.mrb[0].mxu0
  %v4310 = vpop.f32.mrb[0].mxu0
  %v4311 = vadd.f32 %v4022, %v4310
  %v4312 = vpop.f32.mrb[0].mxu0
  %4313 = vmatprep.mubr.bf16.mxu0 %v693
  %4314 = vmatmul.mubr.bf16.gmra.mrb[0].mxu0 %v692
  %v4315 = vpop.f32.mrb[0].mxu0
  %v4316 = vadd.f32 %v4027, %v4315
  %v4317 = vpop.f32.mrb[0].mxu0
  %v4318 = vpop.f32.mrb[0].mxu0
  %v4319 = vadd.f32 %v4030, %v4318
  %v4320 = vpop.f32.mrb[0].mxu0
  %4321 = vmatprep.mubr.bf16.mxu0 %v697
  %4322 = vmatmul.mubr.bf16.gmra.mrb[0].mxu0 %v696
  %v4323 = vpop.f32.mrb[0].mxu0
  %v4324 = vadd.f32 %v4035, %v4323
  %v4325 = vpop.f32.mrb[0].mxu0
  %v4326 = vpop.f32.mrb[0].mxu0
  %v4327 = vadd.f32 %v4038, %v4326
  %v4328 = vpop.f32.mrb[0].mxu0
  %4329 = vmatprep.mubr.bf16.mxu0 %v701
  %4330 = vmatmul.mubr.bf16.gmra.mrb[0].mxu0 %v700
  %v4331 = vpop.f32.mrb[0].mxu0
  %v4332 = vadd.f32 %v4043, %v4331
  %v4333 = vpop.f32.mrb[0].mxu0
  %v4334 = vpop.f32.mrb[0].mxu0
  %v4335 = vadd.f32 %v4046, %v4334
  %v4336 = vpop.f32.mrb[0].mxu0
  %4337 = vmatprep.mubr.bf16.mxu0 %v705
  %4338 = vmatmul.mubr.bf16.gmra.mrb[0].mxu0 %v704
  %v4339 = vpop.f32.mrb[0].mxu0
  %v4340 = vadd.f32 %v4051, %v4339
  %v4341 = vpop.f32.mrb[0].mxu0
  %v4342 = vpop.f32.mrb[0].mxu0
  %v4343 = vadd.f32 %v4054, %v4342
  %v4344 = vpop.f32.mrb[0].mxu0
  %4345 = vmatprep.mubr.bf16.mxu0 %v709
  %4346 = vmatmul.mubr.bf16.gmra.mrb[0].mxu0 %v708
  %v4347 = vpop.f32.mrb[0].mxu0
  %v4348 = vadd.f32 %v4059, %v4347
  %v4349 = vpop.f32.mrb[0].mxu0
  %v4350 = vpop.f32.mrb[0].mxu0
  %v4351 = vadd.f32 %v4062, %v4350
  %v4352 = vpop.f32.mrb[0].mxu0
  %4353 = vmatprep.mubr.bf16.mxu0 %v713
  %4354 = vmatmul.mubr.bf16.gmra.mrb[0].mxu0 %v712
  %v4355 = vpop.f32.mrb[0].mxu0
  %v4356 = vadd.f32 %v4067, %v4355
  %v4357 = vpop.f32.mrb[0].mxu0
  %v4358 = vpop.f32.mrb[0].mxu0
  %v4359 = vadd.f32 %v4070, %v4358
  %v4360 = vpop.f32.mrb[0].mxu0
  %4361 = vmatprep.mubr.bf16.mxu0 %v717
  %4362 = vmatmul.mubr.bf16.gmra.mrb[0].mxu0 %v716
  %v4363 = vpop.f32.mrb[0].mxu0
  %v4364 = vadd.f32 %v4075, %v4363
  %v4365 = vpop.f32.mrb[0].mxu0
  %v4366 = vpop.f32.mrb[0].mxu0
  %v4367 = vadd.f32 %v4078, %v4366
  %v4368 = vpop.f32.mrb[0].mxu0
  %4369 = vmatprep.mubr.bf16.mxu0 %v721
  %4370 = vmatmul.mubr.bf16.gmra.mrb[0].mxu0 %v720
  %v4371 = vpop.f32.mrb[0].mxu0
  %v4372 = vadd.f32 %v4083, %v4371
  %v4373 = vpop.f32.mrb[0].mxu0
  %v4374 = vpop.f32.mrb[0].mxu0
  %v4375 = vadd.f32 %v4086, %v4374
  %v4376 = vpop.f32.mrb[0].mxu0
  %4377 = vmatprep.mubr.bf16.mxu0 %v725
  %4378 = vmatmul.mubr.bf16.gmra.mrb[0].mxu0 %v724
  %v4379 = vpop.f32.mrb[0].mxu0
  %v4380 = vadd.f32 %v4091, %v4379
  %v4381 = vpop.f32.mrb[0].mxu0
  %v4382 = vpop.f32.mrb[0].mxu0
  %v4383 = vadd.f32 %v4094, %v4382
  %v4384 = vpop.f32.mrb[0].mxu0
  %4385 = vmatprep.mubr.bf16.mxu0 %v729
  %4386 = vmatmul.mubr.bf16.gmra.mrb[0].mxu0 %v728
  %v4387 = vpop.f32.mrb[0].mxu0
  %v4388 = vadd.f32 %v4099, %v4387
  %v4389 = vpop.f32.mrb[0].mxu0
  %v4390 = vpop.f32.mrb[0].mxu0
  %v4391 = vadd.f32 %v4102, %v4390
  %v4392 = vpop.f32.mrb[0].mxu0
  %4393 = vdwg.mxu0
  %v4394 = vld [vmem:[%s4] sm:$0xff]
  %v4395 = vld [vmem:[%s4 + $0x8] sm:$0xff]
  %v4397 = vsel %vm1630, %v4140, 0
  %v4400 = vsel %vm1630, %v4143, 0
  %v4403 = vsel %vm1630, %v4148, 0
  %v4406 = vsel %vm1630, %v4151, 0
  %v4409 = vsel %vm1630, %v4156, 0
  %v4412 = vsel %vm1630, %v4159, 0
  %v4415 = vsel %vm1630, %v4164, 0
  %v4418 = vsel %vm1630, %v4167, 0
  %v4421 = vsel %vm1630, %v4172, 0
  %v4424 = vsel %vm1630, %v4175, 0
  %v4427 = vsel %vm1630, %v4180, 0
  %v4430 = vsel %vm1630, %v4183, 0
  %v4433 = vsel %vm1630, %v4188, 0
  %v4436 = vsel %vm1630, %v4191, 0
  %v4439 = vsel %vm1630, %v4196, 0
  %v4442 = vsel %vm1630, %v4199, 0
  %v4445 = vsel %vm1630, %v4204, 0
  %v4448 = vsel %vm1630, %v4207, 0
  %v4451 = vsel %vm1630, %v4212, 0
  %v4454 = vsel %vm1630, %v4215, 0
  %v4457 = vsel %vm1630, %v4220, 0
  %v4460 = vsel %vm1630, %v4223, 0
  %v4463 = vsel %vm1630, %v4228, 0
  %v4466 = vsel %vm1630, %v4231, 0
  %v4469 = vsel %vm1630, %v4236, 0
  %v4472 = vsel %vm1630, %v4239, 0
  %v4475 = vsel %vm1630, %v4244, 0
  %v4478 = vsel %vm1630, %v4247, 0
  %v4481 = vsel %vm1630, %v4252, 0
  %v4484 = vsel %vm1630, %v4255, 0
  %v4487 = vsel %vm1630, %v4260, 0
  %v4490 = vsel %vm1630, %v4263, 0
  %v4493 = vsel %vm1630, %v4268, 0
  %v4496 = vsel %vm1630, %v4271, 0
  %v4499 = vsel %vm1630, %v4276, 0
  %v4502 = vsel %vm1630, %v4279, 0
  %v4505 = vsel %vm1630, %v4284, 0
  %v4508 = vsel %vm1630, %v4287, 0
  %v4511 = vsel %vm1630, %v4292, 0
  %v4514 = vsel %vm1630, %v4295, 0
  %v4517 = vsel %vm1630, %v4300, 0
  %v4520 = vsel %vm1630, %v4303, 0
  %v4523 = vsel %vm1630, %v4308, 0
  %v4526 = vsel %vm1630, %v4311, 0
  %v4529 = vsel %vm1630, %v4316, 0
  %v4532 = vsel %vm1630, %v4319, 0
  %v4535 = vsel %vm1630, %v4324, 0
  %v4538 = vsel %vm1630, %v4327, 0
  %v4541 = vsel %vm1630, %v4332, 0
  %v4544 = vsel %vm1630, %v4335, 0
  %v4547 = vsel %vm1630, %v4340, 0
  %v4550 = vsel %vm1630, %v4343, 0
  %v4553 = vsel %vm1630, %v4348, 0
  %v4556 = vsel %vm1630, %v4351, 0
  %v4559 = vsel %vm1630, %v4356, 0
  %v4562 = vsel %vm1630, %v4359, 0
  %v4565 = vsel %vm1630, %v4364, 0
  %v4568 = vsel %vm1630, %v4367, 0
  %v4571 = vsel %vm1630, %v4372, 0
  %v4574 = vsel %vm1630, %v4375, 0
  %v4577 = vsel %vm1630, %v4380, 0
  %v4580 = vsel %vm1630, %v4383, 0
  %v4583 = vsel %vm1630, %v4388, 0
  %v4586 = vsel %vm1630, %v4391, 0
  %4588 = vmatprep.subr.mxu0 0.0
  %4589 = vmatpush1.msra.mxu0 %v4394
  %4590 = vmatprep.subr.mxu0 0.0
  %4591 = vmatpush1.msra.mxu0 %v4395
  %4592 = vmatprep.subr.mxu0 0.0
  %4593 = vmatpush1.msra.mxu0 0.0
  %4594 = vmatprep.subr.mxu0 0.0
  %4595 = vmatpush1.msra.mxu0 0.0
  %4596 = vmatprep.subr.mxu0 0.0
  %4597 = vmatpush1.msra.mxu0 0.0
  %4598 = vmatprep.subr.mxu0 0.0
  %4599 = vmatpush1.msra.mxu0 0.0
  %4600 = vmatprep.subr.mxu0 0.0
  %4601 = vmatpush1.msra.mxu0 0.0
  %4602 = vmatprep.subr.mxu0 0.0
  %4603 = vmatpush1.msra.mxu0 0.0
  %4604 = vmatprep.subr.mxu0 0.0
  %4605 = vmatpush1.msra.mxu0 0.0
  %4606 = vmatprep.subr.mxu0 0.0
  %4607 = vmatpush1.msra.mxu0 0.0
  %4608 = vmatprep.subr.mxu0 0.0
  %4609 = vmatpush1.msra.mxu0 0.0
  %4610 = vmatprep.subr.mxu0 0.0
  %4611 = vmatpush1.msra.mxu0 0.0
  %4612 = vmatprep.subr.mxu0 0.0
  %4613 = vmatpush1.msra.mxu0 0.0
  %4614 = vmatprep.subr.mxu0 0.0
  %4615 = vmatpush1.msra.mxu0 0.0
  %4616 = vmatprep.subr.mxu0 0.0
  %4617 = vmatpush1.msra.mxu0 0.0
  %4618 = vmatprep.subr.mxu0 0.0
  %4619 = vmatpush1.msra.mxu0 0.0
  %4620 = vmatprep.subr.mxu0 0.0
  %4621 = vmatpush1.msra.mxu0 0.0
  %4622 = vmatprep.subr.mxu0 0.0
  %4623 = vmatpush1.msra.mxu0 0.0
  %4624 = vmatprep.subr.mxu0 0.0
  %4625 = vmatpush1.msra.mxu0 0.0
  %4626 = vmatprep.subr.mxu0 0.0
  %4627 = vmatpush1.msra.mxu0 0.0
  %4628 = vmatprep.subr.mxu0 0.0
  %4629 = vmatpush1.msra.mxu0 0.0
  %4630 = vmatprep.subr.mxu0 0.0
  %4631 = vmatpush1.msra.mxu0 0.0
  %4632 = vmatprep.subr.mxu0 0.0
  %4633 = vmatpush1.msra.mxu0 0.0
  %4634 = vmatprep.subr.mxu0 0.0
  %4635 = vmatpush1.msra.mxu0 0.0
  %4636 = vmatprep.subr.mxu0 0.0
  %4637 = vmatpush1.msra.mxu0 0.0
  %4638 = vmatprep.subr.mxu0 0.0
  %4639 = vmatpush1.msra.mxu0 0.0
  %4640 = vmatprep.subr.mxu0 0.0
  %4641 = vmatpush1.msra.mxu0 0.0
  %4642 = vmatprep.subr.mxu0 0.0
  %4643 = vmatpush1.msra.mxu0 0.0
  %4644 = vmatprep.subr.mxu0 0.0
  %4645 = vmatpush1.msra.mxu0 0.0
  %4646 = vmatprep.subr.mxu0 0.0
  %4647 = vmatpush1.msra.mxu0 0.0
  %4648 = vmatprep.subr.mxu0 0.0
  %4649 = vmatpush1.msra.mxu0 0.0
  %4650 = vmatprep.subr.mxu0 0.0
  %4651 = vmatpush1.msra.mxu0 0.0
  %4652 = vmatprep.mubr.f32.mxu0 0.0
  %4653 = vmatmul.mubr.f32.gmra.mrb[0].mxu0 %v4397
  %v4654 = vpop.f32.mrb[0].mxu0
  %v4655 = vadd.f32 0.0, %v4654
  %v4656 = vpop.f32.mrb[0].mxu0
  %4657 = vmatprep.mubr.f32.mxu0 0.0
  %4658 = vmatmul.mubr.f32.gmra.mrb[0].mxu0 %v4400
  %v4659 = vpop.f32.mrb[0].mxu0
  %v4660 = vadd.f32 0.0, %v4659
  %v4661 = vpop.f32.mrb[0].mxu0
  %4662 = vmatprep.mubr.f32.mxu0 0.0
  %4663 = vmatmul.mubr.f32.gmra.mrb[0].mxu0 %v4403
  %v4664 = vpop.f32.mrb[0].mxu0
  %v4665 = vadd.f32 0.0, %v4664
  %v4666 = vpop.f32.mrb[0].mxu0
  %4667 = vmatprep.mubr.f32.mxu0 0.0
  %4668 = vmatmul.mubr.f32.gmra.mrb[0].mxu0 %v4406
  %v4669 = vpop.f32.mrb[0].mxu0
  %v4670 = vadd.f32 0.0, %v4669
  %v4671 = vpop.f32.mrb[0].mxu0
  %4672 = vmatprep.mubr.f32.mxu0 0.0
  %4673 = vmatmul.mubr.f32.gmra.mrb[0].mxu0 %v4409
  %v4674 = vpop.f32.mrb[0].mxu0
  %v4675 = vadd.f32 0.0, %v4674
  %v4676 = vpop.f32.mrb[0].mxu0
  %4677 = vmatprep.mubr.f32.mxu0 0.0
  %4678 = vmatmul.mubr.f32.gmra.mrb[0].mxu0 %v4412
  %v4679 = vpop.f32.mrb[0].mxu0
  %v4680 = vadd.f32 0.0, %v4679
  %v4681 = vpop.f32.mrb[0].mxu0
  %4682 = vmatprep.mubr.f32.mxu0 0.0
  %4683 = vmatmul.mubr.f32.gmra.mrb[0].mxu0 %v4415
  %v4684 = vpop.f32.mrb[0].mxu0
  %v4685 = vadd.f32 0.0, %v4684
  %v4686 = vpop.f32.mrb[0].mxu0
  %4687 = vmatprep.mubr.f32.mxu0 0.0
  %4688 = vmatmul.mubr.f32.gmra.mrb[0].mxu0 %v4418
  %v4689 = vpop.f32.mrb[0].mxu0
  %v4690 = vadd.f32 0.0, %v4689
  %v4691 = vpop.f32.mrb[0].mxu0
  %4692 = vmatprep.mubr.f32.mxu0 0.0
  %4693 = vmatmul.mubr.f32.gmra.mrb[0].mxu0 %v4421
  %v4694 = vpop.f32.mrb[0].mxu0
  %v4695 = vadd.f32 0.0, %v4694
  %v4696 = vpop.f32.mrb[0].mxu0
  %4697 = vmatprep.mubr.f32.mxu0 0.0
  %4698 = vmatmul.mubr.f32.gmra.mrb[0].mxu0 %v4424
  %v4699 = vpop.f32.mrb[0].mxu0
  %v4700 = vadd.f32 0.0, %v4699
  %v4701 = vpop.f32.mrb[0].mxu0
  %4702 = vmatprep.mubr.f32.mxu0 0.0
  %4703 = vmatmul.mubr.f32.gmra.mrb[0].mxu0 %v4427
  %v4704 = vpop.f32.mrb[0].mxu0
  %v4705 = vadd.f32 0.0, %v4704
  %v4706 = vpop.f32.mrb[0].mxu0
  %4707 = vmatprep.mubr.f32.mxu0 0.0
  %4708 = vmatmul.mubr.f32.gmra.mrb[0].mxu0 %v4430
  %v4709 = vpop.f32.mrb[0].mxu0
  %v4710 = vadd.f32 0.0, %v4709
  %v4711 = vpop.f32.mrb[0].mxu0
  %4712 = vmatprep.mubr.f32.mxu0 0.0
  %4713 = vmatmul.mubr.f32.gmra.mrb[0].mxu0 %v4433
  %v4714 = vpop.f32.mrb[0].mxu0
  %v4715 = vadd.f32 0.0, %v4714
  %v4716 = vpop.f32.mrb[0].mxu0
  %4717 = vmatprep.mubr.f32.mxu0 0.0
  %4718 = vmatmul.mubr.f32.gmra.mrb[0].mxu0 %v4436
  %v4719 = vpop.f32.mrb[0].mxu0
  %v4720 = vadd.f32 0.0, %v4719
  %v4721 = vpop.f32.mrb[0].mxu0
  %4722 = vmatprep.mubr.f32.mxu0 0.0
  %4723 = vmatmul.mubr.f32.gmra.mrb[0].mxu0 %v4439
  %v4724 = vpop.f32.mrb[0].mxu0
  %v4725 = vadd.f32 0.0, %v4724
  %v4726 = vpop.f32.mrb[0].mxu0
  %4727 = vmatprep.mubr.f32.mxu0 0.0
  %4728 = vmatmul.mubr.f32.gmra.mrb[0].mxu0 %v4442
  %v4729 = vpop.f32.mrb[0].mxu0
  %v4730 = vadd.f32 0.0, %v4729
  %v4731 = vpop.f32.mrb[0].mxu0
  %4732 = vmatprep.mubr.f32.mxu0 0.0
  %4733 = vmatmul.mubr.f32.gmra.mrb[0].mxu0 %v4445
  %v4734 = vpop.f32.mrb[0].mxu0
  %v4735 = vadd.f32 0.0, %v4734
  %v4736 = vpop.f32.mrb[0].mxu0
  %4737 = vmatprep.mubr.f32.mxu0 0.0
  %4738 = vmatmul.mubr.f32.gmra.mrb[0].mxu0 %v4448
  %v4739 = vpop.f32.mrb[0].mxu0
  %v4740 = vadd.f32 0.0, %v4739
  %v4741 = vpop.f32.mrb[0].mxu0
  %4742 = vmatprep.mubr.f32.mxu0 0.0
  %4743 = vmatmul.mubr.f32.gmra.mrb[0].mxu0 %v4451
  %v4744 = vpop.f32.mrb[0].mxu0
  %v4745 = vadd.f32 0.0, %v4744
  %v4746 = vpop.f32.mrb[0].mxu0
  %4747 = vmatprep.mubr.f32.mxu0 0.0
  %4748 = vmatmul.mubr.f32.gmra.mrb[0].mxu0 %v4454
  %v4749 = vpop.f32.mrb[0].mxu0
  %v4750 = vadd.f32 0.0, %v4749
  %v4751 = vpop.f32.mrb[0].mxu0
  %4752 = vmatprep.mubr.f32.mxu0 0.0
  %4753 = vmatmul.mubr.f32.gmra.mrb[0].mxu0 %v4457
  %v4754 = vpop.f32.mrb[0].mxu0
  %v4755 = vadd.f32 0.0, %v4754
  %v4756 = vpop.f32.mrb[0].mxu0
  %4757 = vmatprep.mubr.f32.mxu0 0.0
  %4758 = vmatmul.mubr.f32.gmra.mrb[0].mxu0 %v4460
  %v4759 = vpop.f32.mrb[0].mxu0
  %v4760 = vadd.f32 0.0, %v4759
  %v4761 = vpop.f32.mrb[0].mxu0
  %4762 = vmatprep.mubr.f32.mxu0 0.0
  %4763 = vmatmul.mubr.f32.gmra.mrb[0].mxu0 %v4463
  %v4764 = vpop.f32.mrb[0].mxu0
  %v4765 = vadd.f32 0.0, %v4764
  %v4766 = vpop.f32.mrb[0].mxu0
  %4767 = vmatprep.mubr.f32.mxu0 0.0
  %4768 = vmatmul.mubr.f32.gmra.mrb[0].mxu0 %v4466
  %v4769 = vpop.f32.mrb[0].mxu0
  %v4770 = vadd.f32 0.0, %v4769
  %v4771 = vpop.f32.mrb[0].mxu0
  %4772 = vmatprep.mubr.f32.mxu0 0.0
  %4773 = vmatmul.mubr.f32.gmra.mrb[0].mxu0 %v4469
  %v4774 = vpop.f32.mrb[0].mxu0
  %v4775 = vadd.f32 0.0, %v4774
  %v4776 = vpop.f32.mrb[0].mxu0
  %4777 = vmatprep.mubr.f32.mxu0 0.0
  %4778 = vmatmul.mubr.f32.gmra.mrb[0].mxu0 %v4472
  %v4779 = vpop.f32.mrb[0].mxu0
  %v4780 = vadd.f32 0.0, %v4779
  %v4781 = vpop.f32.mrb[0].mxu0
  %4782 = vmatprep.mubr.f32.mxu0 0.0
  %4783 = vmatmul.mubr.f32.gmra.mrb[0].mxu0 %v4475
  %v4784 = vpop.f32.mrb[0].mxu0
  %v4785 = vadd.f32 0.0, %v4784
  %v4786 = vpop.f32.mrb[0].mxu0
  %4787 = vmatprep.mubr.f32.mxu0 0.0
  %4788 = vmatmul.mubr.f32.gmra.mrb[0].mxu0 %v4478
  %v4789 = vpop.f32.mrb[0].mxu0
  %v4790 = vadd.f32 0.0, %v4789
  %v4791 = vpop.f32.mrb[0].mxu0
  %4792 = vmatprep.mubr.f32.mxu0 0.0
  %4793 = vmatmul.mubr.f32.gmra.mrb[0].mxu0 %v4481
  %v4794 = vpop.f32.mrb[0].mxu0
  %v4795 = vadd.f32 0.0, %v4794
  %v4796 = vpop.f32.mrb[0].mxu0
  %4797 = vmatprep.mubr.f32.mxu0 0.0
  %4798 = vmatmul.mubr.f32.gmra.mrb[0].mxu0 %v4484
  %v4799 = vpop.f32.mrb[0].mxu0
  %v4800 = vadd.f32 0.0, %v4799
  %v4801 = vpop.f32.mrb[0].mxu0
  %4802 = vmatprep.mubr.f32.mxu0 0.0
  %4803 = vmatmul.mubr.f32.gmra.mrb[0].mxu0 %v4487
  %v4804 = vpop.f32.mrb[0].mxu0
  %v4805 = vadd.f32 0.0, %v4804
  %v4806 = vpop.f32.mrb[0].mxu0
  %4807 = vmatprep.mubr.f32.mxu0 0.0
  %4808 = vmatmul.mubr.f32.gmra.mrb[0].mxu0 %v4490
  %v4809 = vpop.f32.mrb[0].mxu0
  %v4810 = vadd.f32 0.0, %v4809
  %v4811 = vpop.f32.mrb[0].mxu0
  %4812 = vmatprep.mubr.f32.mxu0 0.0
  %4813 = vmatmul.mubr.f32.gmra.mrb[0].mxu0 %v4493
  %v4814 = vpop.f32.mrb[0].mxu0
  %v4815 = vadd.f32 0.0, %v4814
  %v4816 = vpop.f32.mrb[0].mxu0
  %4817 = vmatprep.mubr.f32.mxu0 0.0
  %4818 = vmatmul.mubr.f32.gmra.mrb[0].mxu0 %v4496
  %v4819 = vpop.f32.mrb[0].mxu0
  %v4820 = vadd.f32 0.0, %v4819
  %v4821 = vpop.f32.mrb[0].mxu0
  %4822 = vmatprep.mubr.f32.mxu0 0.0
  %4823 = vmatmul.mubr.f32.gmra.mrb[0].mxu0 %v4499
  %v4824 = vpop.f32.mrb[0].mxu0
  %v4825 = vadd.f32 0.0, %v4824
  %v4826 = vpop.f32.mrb[0].mxu0
  %4827 = vmatprep.mubr.f32.mxu0 0.0
  %4828 = vmatmul.mubr.f32.gmra.mrb[0].mxu0 %v4502
  %v4829 = vpop.f32.mrb[0].mxu0
  %v4830 = vadd.f32 0.0, %v4829
  %v4831 = vpop.f32.mrb[0].mxu0
  %4832 = vmatprep.mubr.f32.mxu0 0.0
  %4833 = vmatmul.mubr.f32.gmra.mrb[0].mxu0 %v4505
  %v4834 = vpop.f32.mrb[0].mxu0
  %v4835 = vadd.f32 0.0, %v4834
  %v4836 = vpop.f32.mrb[0].mxu0
  %4837 = vmatprep.mubr.f32.mxu0 0.0
  %4838 = vmatmul.mubr.f32.gmra.mrb[0].mxu0 %v4508
  %v4839 = vpop.f32.mrb[0].mxu0
  %v4840 = vadd.f32 0.0, %v4839
  %v4841 = vpop.f32.mrb[0].mxu0
  %4842 = vmatprep.mubr.f32.mxu0 0.0
  %4843 = vmatmul.mubr.f32.gmra.mrb[0].mxu0 %v4511
  %v4844 = vpop.f32.mrb[0].mxu0
  %v4845 = vadd.f32 0.0, %v4844
  %v4846 = vpop.f32.mrb[0].mxu0
  %4847 = vmatprep.mubr.f32.mxu0 0.0
  %4848 = vmatmul.mubr.f32.gmra.mrb[0].mxu0 %v4514
  %v4849 = vpop.f32.mrb[0].mxu0
  %v4850 = vadd.f32 0.0, %v4849
  %v4851 = vpop.f32.mrb[0].mxu0
  %4852 = vmatprep.mubr.f32.mxu0 0.0
  %4853 = vmatmul.mubr.f32.gmra.mrb[0].mxu0 %v4517
  %v4854 = vpop.f32.mrb[0].mxu0
  %v4855 = vadd.f32 0.0, %v4854
  %v4856 = vpop.f32.mrb[0].mxu0
  %4857 = vmatprep.mubr.f32.mxu0 0.0
  %4858 = vmatmul.mubr.f32.gmra.mrb[0].mxu0 %v4520
  %v4859 = vpop.f32.mrb[0].mxu0
  %v4860 = vadd.f32 0.0, %v4859
  %v4861 = vpop.f32.mrb[0].mxu0
  %4862 = vmatprep.mubr.f32.mxu0 0.0
  %4863 = vmatmul.mubr.f32.gmra.mrb[0].mxu0 %v4523
  %v4864 = vpop.f32.mrb[0].mxu0
  %v4865 = vadd.f32 0.0, %v4864
  %v4866 = vpop.f32.mrb[0].mxu0
  %4867 = vmatprep.mubr.f32.mxu0 0.0
  %4868 = vmatmul.mubr.f32.gmra.mrb[0].mxu0 %v4526
  %v4869 = vpop.f32.mrb[0].mxu0
  %v4870 = vadd.f32 0.0, %v4869
  %v4871 = vpop.f32.mrb[0].mxu0
  %4872 = vmatprep.mubr.f32.mxu0 0.0
  %4873 = vmatmul.mubr.f32.gmra.mrb[0].mxu0 %v4529
  %v4874 = vpop.f32.mrb[0].mxu0
  %v4875 = vadd.f32 0.0, %v4874
  %v4876 = vpop.f32.mrb[0].mxu0
  %4877 = vmatprep.mubr.f32.mxu0 0.0
  %4878 = vmatmul.mubr.f32.gmra.mrb[0].mxu0 %v4532
  %v4879 = vpop.f32.mrb[0].mxu0
  %v4880 = vadd.f32 0.0, %v4879
  %v4881 = vpop.f32.mrb[0].mxu0
  %4882 = vmatprep.mubr.f32.mxu0 0.0
  %4883 = vmatmul.mubr.f32.gmra.mrb[0].mxu0 %v4535
  %v4884 = vpop.f32.mrb[0].mxu0
  %v4885 = vadd.f32 0.0, %v4884
  %v4886 = vpop.f32.mrb[0].mxu0
  %4887 = vmatprep.mubr.f32.mxu0 0.0
  %4888 = vmatmul.mubr.f32.gmra.mrb[0].mxu0 %v4538
  %v4889 = vpop.f32.mrb[0].mxu0
  %v4890 = vadd.f32 0.0, %v4889
  %v4891 = vpop.f32.mrb[0].mxu0
  %4892 = vmatprep.mubr.f32.mxu0 0.0
  %4893 = vmatmul.mubr.f32.gmra.mrb[0].mxu0 %v4541
  %v4894 = vpop.f32.mrb[0].mxu0
  %v4895 = vadd.f32 0.0, %v4894
  %v4896 = vpop.f32.mrb[0].mxu0
  %4897 = vmatprep.mubr.f32.mxu0 0.0
  %4898 = vmatmul.mubr.f32.gmra.mrb[0].mxu0 %v4544
  %v4899 = vpop.f32.mrb[0].mxu0
  %v4900 = vadd.f32 0.0, %v4899
  %v4901 = vpop.f32.mrb[0].mxu0
  %4902 = vmatprep.mubr.f32.mxu0 0.0
  %4903 = vmatmul.mubr.f32.gmra.mrb[0].mxu0 %v4547
  %v4904 = vpop.f32.mrb[0].mxu0
  %v4905 = vadd.f32 0.0, %v4904
  %v4906 = vpop.f32.mrb[0].mxu0
  %4907 = vmatprep.mubr.f32.mxu0 0.0
  %4908 = vmatmul.mubr.f32.gmra.mrb[0].mxu0 %v4550
  %v4909 = vpop.f32.mrb[0].mxu0
  %v4910 = vadd.f32 0.0, %v4909
  %v4911 = vpop.f32.mrb[0].mxu0
  %4912 = vmatprep.mubr.f32.mxu0 0.0
  %4913 = vmatmul.mubr.f32.gmra.mrb[0].mxu0 %v4553
  %v4914 = vpop.f32.mrb[0].mxu0
  %v4915 = vadd.f32 0.0, %v4914
  %v4916 = vpop.f32.mrb[0].mxu0
  %4917 = vmatprep.mubr.f32.mxu0 0.0
  %4918 = vmatmul.mubr.f32.gmra.mrb[0].mxu0 %v4556
  %v4919 = vpop.f32.mrb[0].mxu0
  %v4920 = vadd.f32 0.0, %v4919
  %v4921 = vpop.f32.mrb[0].mxu0
  %4922 = vmatprep.mubr.f32.mxu0 0.0
  %4923 = vmatmul.mubr.f32.gmra.mrb[0].mxu0 %v4559
  %v4924 = vpop.f32.mrb[0].mxu0
  %v4925 = vadd.f32 0.0, %v4924
  %v4926 = vpop.f32.mrb[0].mxu0
  %4927 = vmatprep.mubr.f32.mxu0 0.0
  %4928 = vmatmul.mubr.f32.gmra.mrb[0].mxu0 %v4562
  %v4929 = vpop.f32.mrb[0].mxu0
  %v4930 = vadd.f32 0.0, %v4929
  %v4931 = vpop.f32.mrb[0].mxu0
  %4932 = vmatprep.mubr.f32.mxu0 0.0
  %4933 = vmatmul.mubr.f32.gmra.mrb[0].mxu0 %v4565
  %v4934 = vpop.f32.mrb[0].mxu0
  %v4935 = vadd.f32 0.0, %v4934
  %v4936 = vpop.f32.mrb[0].mxu0
  %4937 = vmatprep.mubr.f32.mxu0 0.0
  %4938 = vmatmul.mubr.f32.gmra.mrb[0].mxu0 %v4568
  %v4939 = vpop.f32.mrb[0].mxu0
  %v4940 = vadd.f32 0.0, %v4939
  %v4941 = vpop.f32.mrb[0].mxu0
  %4942 = vmatprep.mubr.f32.mxu0 0.0
  %4943 = vmatmul.mubr.f32.gmra.mrb[0].mxu0 %v4571
  %v4944 = vpop.f32.mrb[0].mxu0
  %v4945 = vadd.f32 0.0, %v4944
  %v4946 = vpop.f32.mrb[0].mxu0
  %4947 = vmatprep.mubr.f32.mxu0 0.0
  %4948 = vmatmul.mubr.f32.gmra.mrb[0].mxu0 %v4574
  %v4949 = vpop.f32.mrb[0].mxu0
  %v4950 = vadd.f32 0.0, %v4949
  %v4951 = vpop.f32.mrb[0].mxu0
  %4952 = vmatprep.mubr.f32.mxu0 0.0
  %4953 = vmatmul.mubr.f32.gmra.mrb[0].mxu0 %v4577
  %v4954 = vpop.f32.mrb[0].mxu0
  %v4955 = vadd.f32 0.0, %v4954
  %v4956 = vpop.f32.mrb[0].mxu0
  %4957 = vmatprep.mubr.f32.mxu0 0.0
  %4958 = vmatmul.mubr.f32.gmra.mrb[0].mxu0 %v4580
  %v4959 = vpop.f32.mrb[0].mxu0
  %v4960 = vadd.f32 0.0, %v4959
  %v4961 = vpop.f32.mrb[0].mxu0
  %4962 = vmatprep.mubr.f32.mxu0 0.0
  %4963 = vmatmul.mubr.f32.gmra.mrb[0].mxu0 %v4583
  %v4964 = vpop.f32.mrb[0].mxu0
  %v4965 = vadd.f32 0.0, %v4964
  %v4966 = vpop.f32.mrb[0].mxu0
  %4967 = vmatprep.mubr.f32.mxu0 0.0
  %4968 = vmatmul.mubr.f32.gmra.mrb[0].mxu0 %v4586
  %v4969 = vpop.f32.mrb[0].mxu0
  %v4970 = vadd.f32 0.0, %v4969
  %v4971 = vpop.f32.mrb[0].mxu0
  %4972 = vdwg.mxu0
  %4973 = vst.msk [vmem:[%s6] sm:$0xff] %vm1630, %v4655
  %4974 = vst.msk [vmem:[%s6 + $0x8] sm:$0xff] %vm1630, %v4660
  %4975 = vst.msk [vmem:[%s6 + $0x10] sm:$0xff] %vm1630, %v4665
  %4976 = vst.msk [vmem:[%s6 + $0x18] sm:$0xff] %vm1630, %v4670
  %4977 = vst.msk [vmem:[%s6 + $0x20] sm:$0xff] %vm1630, %v4675
  %4978 = vst.msk [vmem:[%s6 + $0x28] sm:$0xff] %vm1630, %v4680
  %4979 = vst.msk [vmem:[%s6 + $0x30] sm:$0xff] %vm1630, %v4685
  %4980 = vst.msk [vmem:[%s6 + $0x38] sm:$0xff] %vm1630, %v4690
  %4981 = vst.msk [vmem:[%s6 + $0x40] sm:$0xff] %vm1630, %v4695
  %4982 = vst.msk [vmem:[%s6 + $0x48] sm:$0xff] %vm1630, %v4700
  %4983 = vst.msk [vmem:[%s6 + $0x50] sm:$0xff] %vm1630, %v4705
  %4984 = vst.msk [vmem:[%s6 + $0x58] sm:$0xff] %vm1630, %v4710
  %4985 = vst.msk [vmem:[%s6 + $0x60] sm:$0xff] %vm1630, %v4715
  %4986 = vst.msk [vmem:[%s6 + $0x68] sm:$0xff] %vm1630, %v4720
  %4987 = vst.msk [vmem:[%s6 + $0x70] sm:$0xff] %vm1630, %v4725
  %4988 = vst.msk [vmem:[%s6 + $0x78] sm:$0xff] %vm1630, %v4730
  %4989 = vst.msk [vmem:[%s6 + $0x80] sm:$0xff] %vm1630, %v4735
  %4990 = vst.msk [vmem:[%s6 + $0x88] sm:$0xff] %vm1630, %v4740
  %4991 = vst.msk [vmem:[%s6 + $0x90] sm:$0xff] %vm1630, %v4745
  %4992 = vst.msk [vmem:[%s6 + $0x98] sm:$0xff] %vm1630, %v4750
  %4993 = vst.msk [vmem:[%s6 + $0xa0] sm:$0xff] %vm1630, %v4755
  %4994 = vst.msk [vmem:[%s6 + $0xa8] sm:$0xff] %vm1630, %v4760
  %4995 = vst.msk [vmem:[%s6 + $0xb0] sm:$0xff] %vm1630, %v4765
  %4996 = vst.msk [vmem:[%s6 + $0xb8] sm:$0xff] %vm1630, %v4770
  %4997 = vst.msk [vmem:[%s6 + $0xc0] sm:$0xff] %vm1630, %v4775
  %4998 = vst.msk [vmem:[%s6 + $0xc8] sm:$0xff] %vm1630, %v4780
  %4999 = vst.msk [vmem:[%s6 + $0xd0] sm:$0xff] %vm1630, %v4785
  %5000 = vst.msk [vmem:[%s6 + $0xd8] sm:$0xff] %vm1630, %v4790
  %5001 = vst.msk [vmem:[%s6 + $0xe0] sm:$0xff] %vm1630, %v4795
  %5002 = vst.msk [vmem:[%s6 + $0xe8] sm:$0xff] %vm1630, %v4800
  %5003 = vst.msk [vmem:[%s6 + $0xf0] sm:$0xff] %vm1630, %v4805
  %5004 = vst.msk [vmem:[%s6 + $0xf8] sm:$0xff] %vm1630, %v4810
  %5005 = vst.msk [vmem:[%s6 + $0x100] sm:$0xff] %vm1630, %v4815
  %5006 = vst.msk [vmem:[%s6 + $0x108] sm:$0xff] %vm1630, %v4820
  %5007 = vst.msk [vmem:[%s6 + $0x110] sm:$0xff] %vm1630, %v4825
  %5008 = vst.msk [vmem:[%s6 + $0x118] sm:$0xff] %vm1630, %v4830
  %5009 = vst.msk [vmem:[%s6 + $0x120] sm:$0xff] %vm1630, %v4835
  %5010 = vst.msk [vmem:[%s6 + $0x128] sm:$0xff] %vm1630, %v4840
  %5011 = vst.msk [vmem:[%s6 + $0x130] sm:$0xff] %vm1630, %v4845
  %5012 = vst.msk [vmem:[%s6 + $0x138] sm:$0xff] %vm1630, %v4850
  %5013 = vst.msk [vmem:[%s6 + $0x140] sm:$0xff] %vm1630, %v4855
  %5014 = vst.msk [vmem:[%s6 + $0x148] sm:$0xff] %vm1630, %v4860
  %5015 = vst.msk [vmem:[%s6 + $0x150] sm:$0xff] %vm1630, %v4865
  %5016 = vst.msk [vmem:[%s6 + $0x158] sm:$0xff] %vm1630, %v4870
  %5017 = vst.msk [vmem:[%s6 + $0x160] sm:$0xff] %vm1630, %v4875
  %5018 = vst.msk [vmem:[%s6 + $0x168] sm:$0xff] %vm1630, %v4880
  %5019 = vst.msk [vmem:[%s6 + $0x170] sm:$0xff] %vm1630, %v4885
  %5020 = vst.msk [vmem:[%s6 + $0x178] sm:$0xff] %vm1630, %v4890
  %5021 = vst.msk [vmem:[%s6 + $0x180] sm:$0xff] %vm1630, %v4895
  %5022 = vst.msk [vmem:[%s6 + $0x188] sm:$0xff] %vm1630, %v4900
  %5023 = vst.msk [vmem:[%s6 + $0x190] sm:$0xff] %vm1630, %v4905
  %5024 = vst.msk [vmem:[%s6 + $0x198] sm:$0xff] %vm1630, %v4910
  %5025 = vst.msk [vmem:[%s6 + $0x1a0] sm:$0xff] %vm1630, %v4915
  %5026 = vst.msk [vmem:[%s6 + $0x1a8] sm:$0xff] %vm1630, %v4920
  %5027 = vst.msk [vmem:[%s6 + $0x1b0] sm:$0xff] %vm1630, %v4925
  %5028 = vst.msk [vmem:[%s6 + $0x1b8] sm:$0xff] %vm1630, %v4930
  %5029 = vst.msk [vmem:[%s6 + $0x1c0] sm:$0xff] %vm1630, %v4935
  %5030 = vst.msk [vmem:[%s6 + $0x1c8] sm:$0xff] %vm1630, %v4940
  %5031 = vst.msk [vmem:[%s6 + $0x1d0] sm:$0xff] %vm1630, %v4945
  %5032 = vst.msk [vmem:[%s6 + $0x1d8] sm:$0xff] %vm1630, %v4950
  %5033 = vst.msk [vmem:[%s6 + $0x1e0] sm:$0xff] %vm1630, %v4955
  %5034 = vst.msk [vmem:[%s6 + $0x1e8] sm:$0xff] %vm1630, %v4960
  %5035 = vst.msk [vmem:[%s6 + $0x1f0] sm:$0xff] %vm1630, %v4965
  %5036 = vst.msk [vmem:[%s6 + $0x1f8] sm:$0xff] %vm1630, %v4970
  %v5037 = vld [vmem:[%s5] sm:$0xff]
  %v5038 = vld [vmem:[%s5 + $0x8] sm:$0xff]
  %v5039 = vld [vmem:[%s5 + $0x10] sm:$0xff]
  %v5040 = vld [vmem:[%s5 + $0x18] sm:$0xff]
  %v5041 = vld [vmem:[%s5 + $0x20] sm:$0xff]
  %v5042 = vld [vmem:[%s5 + $0x28] sm:$0xff]
  %v5043 = vld [vmem:[%s5 + $0x30] sm:$0xff]
  %v5044 = vld [vmem:[%s5 + $0x38] sm:$0xff]
  %v5045 = vld [vmem:[%s5 + $0x40] sm:$0xff]
  %v5046 = vld [vmem:[%s5 + $0x48] sm:$0xff]
  %v5047 = vld [vmem:[%s5 + $0x50] sm:$0xff]
  %v5048 = vld [vmem:[%s5 + $0x58] sm:$0xff]
  %v5049 = vld [vmem:[%s5 + $0x60] sm:$0xff]
  %v5050 = vld [vmem:[%s5 + $0x68] sm:$0xff]
  %v5051 = vld [vmem:[%s5 + $0x70] sm:$0xff]
  %v5052 = vld [vmem:[%s5 + $0x78] sm:$0xff]
  %v5053 = vld [vmem:[%s5 + $0x80] sm:$0xff]
  %v5054 = vld [vmem:[%s5 + $0x88] sm:$0xff]
  %v5055 = vld [vmem:[%s5 + $0x90] sm:$0xff]
  %v5056 = vld [vmem:[%s5 + $0x98] sm:$0xff]
  %v5057 = vld [vmem:[%s5 + $0xa0] sm:$0xff]
  %v5058 = vld [vmem:[%s5 + $0xa8] sm:$0xff]
  %v5059 = vld [vmem:[%s5 + $0xb0] sm:$0xff]
  %v5060 = vld [vmem:[%s5 + $0xb8] sm:$0xff]
  %v5061 = vld [vmem:[%s5 + $0xc0] sm:$0xff]
  %v5062 = vld [vmem:[%s5 + $0xc8] sm:$0xff]
  %v5063 = vld [vmem:[%s5 + $0xd0] sm:$0xff]
  %v5064 = vld [vmem:[%s5 + $0xd8] sm:$0xff]
  %v5065 = vld [vmem:[%s5 + $0xe0] sm:$0xff]
  %v5066 = vld [vmem:[%s5 + $0xe8] sm:$0xff]
  %v5067 = vld [vmem:[%s5 + $0xf0] sm:$0xff]
  %v5068 = vld [vmem:[%s5 + $0xf8] sm:$0xff]
  %v5069 = vld [vmem:[%s5 + $0x100] sm:$0xff]
  %v5070 = vld [vmem:[%s5 + $0x108] sm:$0xff]
  %v5071 = vld [vmem:[%s5 + $0x110] sm:$0xff]
  %v5072 = vld [vmem:[%s5 + $0x118] sm:$0xff]
  %v5073 = vld [vmem:[%s5 + $0x120] sm:$0xff]
  %v5074 = vld [vmem:[%s5 + $0x128] sm:$0xff]
  %v5075 = vld [vmem:[%s5 + $0x130] sm:$0xff]
  %v5076 = vld [vmem:[%s5 + $0x138] sm:$0xff]
  %v5077 = vld [vmem:[%s5 + $0x140] sm:$0xff]
  %v5078 = vld [vmem:[%s5 + $0x148] sm:$0xff]
  %v5079 = vld [vmem:[%s5 + $0x150] sm:$0xff]
  %v5080 = vld [vmem:[%s5 + $0x158] sm:$0xff]
  %v5081 = vld [vmem:[%s5 + $0x160] sm:$0xff]
  %v5082 = vld [vmem:[%s5 + $0x168] sm:$0xff]
  %v5083 = vld [vmem:[%s5 + $0x170] sm:$0xff]
  %v5084 = vld [vmem:[%s5 + $0x178] sm:$0xff]
  %v5085 = vld [vmem:[%s5 + $0x180] sm:$0xff]
  %v5086 = vld [vmem:[%s5 + $0x188] sm:$0xff]
  %v5087 = vld [vmem:[%s5 + $0x190] sm:$0xff]
  %v5088 = vld [vmem:[%s5 + $0x198] sm:$0xff]
  %v5089 = vld [vmem:[%s5 + $0x1a0] sm:$0xff]
  %v5090 = vld [vmem:[%s5 + $0x1a8] sm:$0xff]
  %v5091 = vld [vmem:[%s5 + $0x1b0] sm:$0xff]
  %v5092 = vld [vmem:[%s5 + $0x1b8] sm:$0xff]
  %v5093 = vld [vmem:[%s5 + $0x1c0] sm:$0xff]
  %v5094 = vld [vmem:[%s5 + $0x1c8] sm:$0xff]
  %v5095 = vld [vmem:[%s5 + $0x1d0] sm:$0xff]
  %v5096 = vld [vmem:[%s5 + $0x1d8] sm:$0xff]
  %v5097 = vld [vmem:[%s5 + $0x1e0] sm:$0xff]
  %v5098 = vld [vmem:[%s5 + $0x1e8] sm:$0xff]
  %v5099 = vld [vmem:[%s5 + $0x1f0] sm:$0xff]
  %v5100 = vld [vmem:[%s5 + $0x1f8] sm:$0xff]
  %v5101 = vmul.f32 %v4655, 1.442695
  %v5102 = vpow.pop %v5101
  %v5103 = vmul.f32 %v4660, 1.442695
  %v5104 = vpow.pop %v5103
  %v5105 = vmul.f32 %v4665, 1.442695
  %v5106 = vpow.pop %v5105
  %v5107 = vmul.f32 %v4670, 1.442695
  %v5108 = vpow.pop %v5107
  %v5109 = vmul.f32 %v4675, 1.442695
  %v5110 = vpow.pop %v5109
  %v5111 = vmul.f32 %v4680, 1.442695
  %v5112 = vpow.pop %v5111
  %v5113 = vmul.f32 %v4685, 1.442695
  %v5114 = vpow.pop %v5113
  %v5115 = vmul.f32 %v4690, 1.442695
  %v5116 = vpow.pop %v5115
  %v5117 = vmul.f32 %v4695, 1.442695
  %v5118 = vpow.pop %v5117
  %v5119 = vmul.f32 %v4700, 1.442695
  %v5120 = vpow.pop %v5119
  %v5121 = vmul.f32 %v4705, 1.442695
  %v5122 = vpow.pop %v5121
  %v5123 = vmul.f32 %v4710, 1.442695
  %v5124 = vpow.pop %v5123
  %v5125 = vmul.f32 %v4715, 1.442695
  %v5126 = vpow.pop %v5125
  %v5127 = vmul.f32 %v4720, 1.442695
  %v5128 = vpow.pop %v5127
  %v5129 = vmul.f32 %v4725, 1.442695
  %v5130 = vpow.pop %v5129
  %v5131 = vmul.f32 %v4730, 1.442695
  %v5132 = vpow.pop %v5131
  %v5133 = vmul.f32 %v4735, 1.442695
  %v5134 = vpow.pop %v5133
  %v5135 = vmul.f32 %v4740, 1.442695
  %v5136 = vpow.pop %v5135
  %v5137 = vmul.f32 %v4745, 1.442695
  %v5138 = vpow.pop %v5137
  %v5139 = vmul.f32 %v4750, 1.442695
  %v5140 = vpow.pop %v5139
  %v5141 = vmul.f32 %v4755, 1.442695
  %v5142 = vpow.pop %v5141
  %v5143 = vmul.f32 %v4760, 1.442695
  %v5144 = vpow.pop %v5143
  %v5145 = vmul.f32 %v4765, 1.442695
  %v5146 = vpow.pop %v5145
  %v5147 = vmul.f32 %v4770, 1.442695
  %v5148 = vpow.pop %v5147
  %v5149 = vmul.f32 %v4775, 1.442695
  %v5150 = vpow.pop %v5149
  %v5151 = vmul.f32 %v4780, 1.442695
  %v5152 = vpow.pop %v5151
  %v5153 = vmul.f32 %v4785, 1.442695
  %v5154 = vpow.pop %v5153
  %v5155 = vmul.f32 %v4790, 1.442695
  %v5156 = vpow.pop %v5155
  %v5157 = vmul.f32 %v4795, 1.442695
  %v5158 = vpow.pop %v5157
  %v5159 = vmul.f32 %v4800, 1.442695
  %v5160 = vpow.pop %v5159
  %v5161 = vmul.f32 %v4805, 1.442695
  %v5162 = vpow.pop %v5161
  %v5163 = vmul.f32 %v4810, 1.442695
  %v5164 = vpow.pop %v5163
  %v5165 = vmul.f32 %v4815, 1.442695
  %v5166 = vpow.pop %v5165
  %v5167 = vmul.f32 %v4820, 1.442695
  %v5168 = vpow.pop %v5167
  %v5169 = vmul.f32 %v4825, 1.442695
  %v5170 = vpow.pop %v5169
  %v5171 = vmul.f32 %v4830, 1.442695
  %v5172 = vpow.pop %v5171
  %v5173 = vmul.f32 %v4835, 1.442695
  %v5174 = vpow.pop %v5173
  %v5175 = vmul.f32 %v4840, 1.442695
  %v5176 = vpow.pop %v5175
  %v5177 = vmul.f32 %v4845, 1.442695
  %v5178 = vpow.pop %v5177
  %v5179 = vmul.f32 %v4850, 1.442695
  %v5180 = vpow.pop %v5179
  %v5181 = vmul.f32 %v4855, 1.442695
  %v5182 = vpow.pop %v5181
  %v5183 = vmul.f32 %v4860, 1.442695
  %v5184 = vpow.pop %v5183
  %v5185 = vmul.f32 %v4865, 1.442695
  %v5186 = vpow.pop %v5185
  %v5187 = vmul.f32 %v4870, 1.442695
  %v5188 = vpow.pop %v5187
  %v5189 = vmul.f32 %v4875, 1.442695
  %v5190 = vpow.pop %v5189
  %v5191 = vmul.f32 %v4880, 1.442695
  %v5192 = vpow.pop %v5191
  %v5193 = vmul.f32 %v4885, 1.442695
  %v5194 = vpow.pop %v5193
  %v5195 = vmul.f32 %v4890, 1.442695
  %v5196 = vpow.pop %v5195
  %v5197 = vmul.f32 %v4895, 1.442695
  %v5198 = vpow.pop %v5197
  %v5199 = vmul.f32 %v4900, 1.442695
  %v5200 = vpow.pop %v5199
  %v5201 = vmul.f32 %v4905, 1.442695
  %v5202 = vpow.pop %v5201
  %v5203 = vmul.f32 %v4910, 1.442695
  %v5204 = vpow.pop %v5203
  %v5205 = vmul.f32 %v4915, 1.442695
  %v5206 = vpow.pop %v5205
  %v5207 = vmul.f32 %v4920, 1.442695
  %v5208 = vpow.pop %v5207
  %v5209 = vmul.f32 %v4925, 1.442695
  %v5210 = vpow.pop %v5209
  %v5211 = vmul.f32 %v4930, 1.442695
  %v5212 = vpow.pop %v5211
  %v5213 = vmul.f32 %v4935, 1.442695
  %v5214 = vpow.pop %v5213
  %v5215 = vmul.f32 %v4940, 1.442695
  %v5216 = vpow.pop %v5215
  %v5217 = vmul.f32 %v4945, 1.442695
  %v5218 = vpow.pop %v5217
  %v5219 = vmul.f32 %v4950, 1.442695
  %v5220 = vpow.pop %v5219
  %v5221 = vmul.f32 %v4955, 1.442695
  %v5222 = vpow.pop %v5221
  %v5223 = vmul.f32 %v4960, 1.442695
  %v5224 = vpow.pop %v5223
  %v5225 = vmul.f32 %v4965, 1.442695
  %v5226 = vpow.pop %v5225
  %v5227 = vmul.f32 %v4970, 1.442695
  %v5228 = vpow.pop %v5227
  %5293 = vrot.lane.b32.xlu0 %v5102, 120
  %v5294 = vpop.permute.xlu0 %5293
  %5295 = vrot.lane.b32.xlu0 %v5104, 120
  %v5296 = vpop.permute.xlu0 %5295
  %5297 = vrot.lane.b32.xlu0 %v5106, 120
  %v5298 = vpop.permute.xlu0 %5297
  %5299 = vrot.lane.b32.xlu0 %v5108, 120
  %v5300 = vpop.permute.xlu0 %5299
  %5301 = vrot.lane.b32.xlu0 %v5110, 120
  %v5302 = vpop.permute.xlu0 %5301
  %5303 = vrot.lane.b32.xlu0 %v5112, 120
  %v5304 = vpop.permute.xlu0 %5303
  %5305 = vrot.lane.b32.xlu0 %v5114, 120
  %v5306 = vpop.permute.xlu0 %5305
  %5307 = vrot.lane.b32.xlu0 %v5116, 120
  %v5308 = vpop.permute.xlu0 %5307
  %5309 = vrot.lane.b32.xlu0 %v5118, 120
  %v5310 = vpop.permute.xlu0 %5309
  %5311 = vrot.lane.b32.xlu0 %v5120, 120
  %v5312 = vpop.permute.xlu0 %5311
  %5313 = vrot.lane.b32.xlu0 %v5122, 120
  %v5314 = vpop.permute.xlu0 %5313
  %5315 = vrot.lane.b32.xlu0 %v5124, 120
  %v5316 = vpop.permute.xlu0 %5315
  %5317 = vrot.lane.b32.xlu0 %v5126, 120
  %v5318 = vpop.permute.xlu0 %5317
  %5319 = vrot.lane.b32.xlu0 %v5128, 120
  %v5320 = vpop.permute.xlu0 %5319
  %5321 = vrot.lane.b32.xlu0 %v5130, 120
  %v5322 = vpop.permute.xlu0 %5321
  %5323 = vrot.lane.b32.xlu0 %v5132, 120
  %v5324 = vpop.permute.xlu0 %5323
  %5325 = vrot.lane.b32.xlu0 %v5134, 120
  %v5326 = vpop.permute.xlu0 %5325
  %5327 = vrot.lane.b32.xlu0 %v5136, 120
  %v5328 = vpop.permute.xlu0 %5327
  %5329 = vrot.lane.b32.xlu0 %v5138, 120
  %v5330 = vpop.permute.xlu0 %5329
  %5331 = vrot.lane.b32.xlu0 %v5140, 120
  %v5332 = vpop.permute.xlu0 %5331
  %5333 = vrot.lane.b32.xlu0 %v5142, 120
  %v5334 = vpop.permute.xlu0 %5333
  %5335 = vrot.lane.b32.xlu0 %v5144, 120
  %v5336 = vpop.permute.xlu0 %5335
  %5337 = vrot.lane.b32.xlu0 %v5146, 120
  %v5338 = vpop.permute.xlu0 %5337
  %5339 = vrot.lane.b32.xlu0 %v5148, 120
  %v5340 = vpop.permute.xlu0 %5339
  %5341 = vrot.lane.b32.xlu0 %v5150, 120
  %v5342 = vpop.permute.xlu0 %5341
  %5343 = vrot.lane.b32.xlu0 %v5152, 120
  %v5344 = vpop.permute.xlu0 %5343
  %5345 = vrot.lane.b32.xlu0 %v5154, 120
  %v5346 = vpop.permute.xlu0 %5345
  %5347 = vrot.lane.b32.xlu0 %v5156, 120
  %v5348 = vpop.permute.xlu0 %5347
  %5349 = vrot.lane.b32.xlu0 %v5158, 120
  %v5350 = vpop.permute.xlu0 %5349
  %5351 = vrot.lane.b32.xlu0 %v5160, 120
  %v5352 = vpop.permute.xlu0 %5351
  %5353 = vrot.lane.b32.xlu0 %v5162, 120
  %v5354 = vpop.permute.xlu0 %5353
  %5355 = vrot.lane.b32.xlu0 %v5164, 120
  %v5356 = vpop.permute.xlu0 %5355
  %5357 = vrot.lane.b32.xlu0 %v5166, 120
  %v5358 = vpop.permute.xlu0 %5357
  %5359 = vrot.lane.b32.xlu0 %v5168, 120
  %v5360 = vpop.permute.xlu0 %5359
  %5361 = vrot.lane.b32.xlu0 %v5170, 120
  %v5362 = vpop.permute.xlu0 %5361
  %5363 = vrot.lane.b32.xlu0 %v5172, 120
  %v5364 = vpop.permute.xlu0 %5363
  %5365 = vrot.lane.b32.xlu0 %v5174, 120
  %v5366 = vpop.permute.xlu0 %5365
  %5367 = vrot.lane.b32.xlu0 %v5176, 120
  %v5368 = vpop.permute.xlu0 %5367
  %5369 = vrot.lane.b32.xlu0 %v5178, 120
  %v5370 = vpop.permute.xlu0 %5369
  %5371 = vrot.lane.b32.xlu0 %v5180, 120
  %v5372 = vpop.permute.xlu0 %5371
  %5373 = vrot.lane.b32.xlu0 %v5182, 120
  %v5374 = vpop.permute.xlu0 %5373
  %5375 = vrot.lane.b32.xlu0 %v5184, 120
  %v5376 = vpop.permute.xlu0 %5375
  %5377 = vrot.lane.b32.xlu0 %v5186, 120
  %v5378 = vpop.permute.xlu0 %5377
  %5379 = vrot.lane.b32.xlu0 %v5188, 120
  %v5380 = vpop.permute.xlu0 %5379
  %5381 = vrot.lane.b32.xlu0 %v5190, 120
  %v5382 = vpop.permute.xlu0 %5381
  %5383 = vrot.lane.b32.xlu0 %v5192, 120
  %v5384 = vpop.permute.xlu0 %5383
  %5385 = vrot.lane.b32.xlu0 %v5194, 120
  %v5386 = vpop.permute.xlu0 %5385
  %5387 = vrot.lane.b32.xlu0 %v5196, 120
  %v5388 = vpop.permute.xlu0 %5387
  %5389 = vrot.lane.b32.xlu0 %v5198, 120
  %v5390 = vpop.permute.xlu0 %5389
  %5391 = vrot.lane.b32.xlu0 %v5200, 120
  %v5392 = vpop.permute.xlu0 %5391
  %5393 = vrot.lane.b32.xlu0 %v5202, 120
  %v5394 = vpop.permute.xlu0 %5393
  %5395 = vrot.lane.b32.xlu0 %v5204, 120
  %v5396 = vpop.permute.xlu0 %5395
  %5397 = vrot.lane.b32.xlu0 %v5206, 120
  %v5398 = vpop.permute.xlu0 %5397
  %5399 = vrot.lane.b32.xlu0 %v5208, 120
  %v5400 = vpop.permute.xlu0 %5399
  %5401 = vrot.lane.b32.xlu0 %v5210, 120
  %v5402 = vpop.permute.xlu0 %5401
  %5403 = vrot.lane.b32.xlu0 %v5212, 120
  %v5404 = vpop.permute.xlu0 %5403
  %5405 = vrot.lane.b32.xlu0 %v5214, 120
  %v5406 = vpop.permute.xlu0 %5405
  %5407 = vrot.lane.b32.xlu0 %v5216, 120
  %v5408 = vpop.permute.xlu0 %5407
  %5409 = vrot.lane.b32.xlu0 %v5218, 120
  %v5410 = vpop.permute.xlu0 %5409
  %5411 = vrot.lane.b32.xlu0 %v5220, 120
  %v5412 = vpop.permute.xlu0 %5411
  %5413 = vrot.lane.b32.xlu0 %v5222, 120
  %v5414 = vpop.permute.xlu0 %5413
  %5415 = vrot.lane.b32.xlu0 %v5224, 120
  %v5416 = vpop.permute.xlu0 %5415
  %5417 = vrot.lane.b32.xlu0 %v5226, 120
  %v5418 = vpop.permute.xlu0 %5417
  %5419 = vrot.lane.b32.xlu0 %v5228, 120
  %v5420 = vpop.permute.xlu0 %5419
  %v5485 = vmul.f32 %v5037, %v5294
  %v5486 = vmul.f32 %v5038, %v5296
  %v5487 = vmul.f32 %v5039, %v5298
  %v5488 = vmul.f32 %v5040, %v5300
  %v5489 = vmul.f32 %v5041, %v5302
  %v5490 = vmul.f32 %v5042, %v5304
  %v5491 = vmul.f32 %v5043, %v5306
  %v5492 = vmul.f32 %v5044, %v5308
  %v5493 = vmul.f32 %v5045, %v5310
  %v5494 = vmul.f32 %v5046, %v5312
  %v5495 = vmul.f32 %v5047, %v5314
  %v5496 = vmul.f32 %v5048, %v5316
  %v5497 = vmul.f32 %v5049, %v5318
  %v5498 = vmul.f32 %v5050, %v5320
  %v5499 = vmul.f32 %v5051, %v5322
  %v5500 = vmul.f32 %v5052, %v5324
  %v5501 = vmul.f32 %v5053, %v5326
  %v5502 = vmul.f32 %v5054, %v5328
  %v5503 = vmul.f32 %v5055, %v5330
  %v5504 = vmul.f32 %v5056, %v5332
  %v5505 = vmul.f32 %v5057, %v5334
  %v5506 = vmul.f32 %v5058, %v5336
  %v5507 = vmul.f32 %v5059, %v5338
  %v5508 = vmul.f32 %v5060, %v5340
  %v5509 = vmul.f32 %v5061, %v5342
  %v5510 = vmul.f32 %v5062, %v5344
  %v5511 = vmul.f32 %v5063, %v5346
  %v5512 = vmul.f32 %v5064, %v5348
  %v5513 = vmul.f32 %v5065, %v5350
  %v5514 = vmul.f32 %v5066, %v5352
  %v5515 = vmul.f32 %v5067, %v5354
  %v5516 = vmul.f32 %v5068, %v5356
  %v5517 = vmul.f32 %v5069, %v5358
  %v5518 = vmul.f32 %v5070, %v5360
  %v5519 = vmul.f32 %v5071, %v5362
  %v5520 = vmul.f32 %v5072, %v5364
  %v5521 = vmul.f32 %v5073, %v5366
  %v5522 = vmul.f32 %v5074, %v5368
  %v5523 = vmul.f32 %v5075, %v5370
  %v5524 = vmul.f32 %v5076, %v5372
  %v5525 = vmul.f32 %v5077, %v5374
  %v5526 = vmul.f32 %v5078, %v5376
  %v5527 = vmul.f32 %v5079, %v5378
  %v5528 = vmul.f32 %v5080, %v5380
  %v5529 = vmul.f32 %v5081, %v5382
  %v5530 = vmul.f32 %v5082, %v5384
  %v5531 = vmul.f32 %v5083, %v5386
  %v5532 = vmul.f32 %v5084, %v5388
  %v5533 = vmul.f32 %v5085, %v5390
  %v5534 = vmul.f32 %v5086, %v5392
  %v5535 = vmul.f32 %v5087, %v5394
  %v5536 = vmul.f32 %v5088, %v5396
  %v5537 = vmul.f32 %v5089, %v5398
  %v5538 = vmul.f32 %v5090, %v5400
  %v5539 = vmul.f32 %v5091, %v5402
  %v5540 = vmul.f32 %v5092, %v5404
  %v5541 = vmul.f32 %v5093, %v5406
  %v5542 = vmul.f32 %v5094, %v5408
  %v5543 = vmul.f32 %v5095, %v5410
  %v5544 = vmul.f32 %v5096, %v5412
  %v5545 = vmul.f32 %v5097, %v5414
  %v5546 = vmul.f32 %v5098, %v5416
  %v5547 = vmul.f32 %v5099, %v5418
  %v5548 = vmul.f32 %v5100, %v5420
  %v5549 = vadd.f32 %v5485, %v4655
  %v5550 = vadd.f32 %v5486, %v4660
  %v5551 = vadd.f32 %v5487, %v4665
  %v5552 = vadd.f32 %v5488, %v4670
  %v5553 = vadd.f32 %v5489, %v4675
  %v5554 = vadd.f32 %v5490, %v4680
  %v5555 = vadd.f32 %v5491, %v4685
  %v5556 = vadd.f32 %v5492, %v4690
  %v5557 = vadd.f32 %v5493, %v4695
  %v5558 = vadd.f32 %v5494, %v4700
  %v5559 = vadd.f32 %v5495, %v4705
  %v5560 = vadd.f32 %v5496, %v4710
  %v5561 = vadd.f32 %v5497, %v4715
  %v5562 = vadd.f32 %v5498, %v4720
  %v5563 = vadd.f32 %v5499, %v4725
  %v5564 = vadd.f32 %v5500, %v4730
  %v5565 = vadd.f32 %v5501, %v4735
  %v5566 = vadd.f32 %v5502, %v4740
  %v5567 = vadd.f32 %v5503, %v4745
  %v5568 = vadd.f32 %v5504, %v4750
  %v5569 = vadd.f32 %v5505, %v4755
  %v5570 = vadd.f32 %v5506, %v4760
  %v5571 = vadd.f32 %v5507, %v4765
  %v5572 = vadd.f32 %v5508, %v4770
  %v5573 = vadd.f32 %v5509, %v4775
  %v5574 = vadd.f32 %v5510, %v4780
  %v5575 = vadd.f32 %v5511, %v4785
  %v5576 = vadd.f32 %v5512, %v4790
  %v5577 = vadd.f32 %v5513, %v4795
  %v5578 = vadd.f32 %v5514, %v4800
  %v5579 = vadd.f32 %v5515, %v4805
  %v5580 = vadd.f32 %v5516, %v4810
  %v5581 = vadd.f32 %v5517, %v4815
  %v5582 = vadd.f32 %v5518, %v4820
  %v5583 = vadd.f32 %v5519, %v4825
  %v5584 = vadd.f32 %v5520, %v4830
  %v5585 = vadd.f32 %v5521, %v4835
  %v5586 = vadd.f32 %v5522, %v4840
  %v5587 = vadd.f32 %v5523, %v4845
  %v5588 = vadd.f32 %v5524, %v4850
  %v5589 = vadd.f32 %v5525, %v4855
  %v5590 = vadd.f32 %v5526, %v4860
  %v5591 = vadd.f32 %v5527, %v4865
  %v5592 = vadd.f32 %v5528, %v4870
  %v5593 = vadd.f32 %v5529, %v4875
  %v5594 = vadd.f32 %v5530, %v4880
  %v5595 = vadd.f32 %v5531, %v4885
  %v5596 = vadd.f32 %v5532, %v4890
  %v5597 = vadd.f32 %v5533, %v4895
  %v5598 = vadd.f32 %v5534, %v4900
  %v5599 = vadd.f32 %v5535, %v4905
  %v5600 = vadd.f32 %v5536, %v4910
  %v5601 = vadd.f32 %v5537, %v4915
  %v5602 = vadd.f32 %v5538, %v4920
  %v5603 = vadd.f32 %v5539, %v4925
  %v5604 = vadd.f32 %v5540, %v4930
  %v5605 = vadd.f32 %v5541, %v4935
  %v5606 = vadd.f32 %v5542, %v4940
  %v5607 = vadd.f32 %v5543, %v4945
  %v5608 = vadd.f32 %v5544, %v4950
  %v5609 = vadd.f32 %v5545, %v4955
  %v5610 = vadd.f32 %v5546, %v4960
  %v5611 = vadd.f32 %v5547, %v4965
  %v5612 = vadd.f32 %v5548, %v4970
  %vm5613 = vcmask 64512
  %5614 = vst.msk [vmem:[%s7] sm:$0xff] %vm5613, %v5549
  %5615 = vst.msk [vmem:[%s7 + $0x8] sm:$0xff] %vm5613, %v5550
  %5616 = vst.msk [vmem:[%s7 + $0x10] sm:$0xff] %vm5613, %v5551
  %5617 = vst.msk [vmem:[%s7 + $0x18] sm:$0xff] %vm5613, %v5552
  %5618 = vst.msk [vmem:[%s7 + $0x20] sm:$0xff] %vm5613, %v5553
  %5619 = vst.msk [vmem:[%s7 + $0x28] sm:$0xff] %vm5613, %v5554
  %5620 = vst.msk [vmem:[%s7 + $0x30] sm:$0xff] %vm5613, %v5555
  %5621 = vst.msk [vmem:[%s7 + $0x38] sm:$0xff] %vm5613, %v5556
  %5622 = vst.msk [vmem:[%s7 + $0x40] sm:$0xff] %vm5613, %v5557
  %5623 = vst.msk [vmem:[%s7 + $0x48] sm:$0xff] %vm5613, %v5558
  %5624 = vst.msk [vmem:[%s7 + $0x50] sm:$0xff] %vm5613, %v5559
  %5625 = vst.msk [vmem:[%s7 + $0x58] sm:$0xff] %vm5613, %v5560
  %5626 = vst.msk [vmem:[%s7 + $0x60] sm:$0xff] %vm5613, %v5561
  %5627 = vst.msk [vmem:[%s7 + $0x68] sm:$0xff] %vm5613, %v5562
  %5628 = vst.msk [vmem:[%s7 + $0x70] sm:$0xff] %vm5613, %v5563
  %5629 = vst.msk [vmem:[%s7 + $0x78] sm:$0xff] %vm5613, %v5564
  %5630 = vst.msk [vmem:[%s7 + $0x80] sm:$0xff] %vm5613, %v5565
  %5631 = vst.msk [vmem:[%s7 + $0x88] sm:$0xff] %vm5613, %v5566
  %5632 = vst.msk [vmem:[%s7 + $0x90] sm:$0xff] %vm5613, %v5567
  %5633 = vst.msk [vmem:[%s7 + $0x98] sm:$0xff] %vm5613, %v5568
  %5634 = vst.msk [vmem:[%s7 + $0xa0] sm:$0xff] %vm5613, %v5569
  %5635 = vst.msk [vmem:[%s7 + $0xa8] sm:$0xff] %vm5613, %v5570
  %5636 = vst.msk [vmem:[%s7 + $0xb0] sm:$0xff] %vm5613, %v5571
  %5637 = vst.msk [vmem:[%s7 + $0xb8] sm:$0xff] %vm5613, %v5572
  %5638 = vst.msk [vmem:[%s7 + $0xc0] sm:$0xff] %vm5613, %v5573
  %5639 = vst.msk [vmem:[%s7 + $0xc8] sm:$0xff] %vm5613, %v5574
  %5640 = vst.msk [vmem:[%s7 + $0xd0] sm:$0xff] %vm5613, %v5575
  %5641 = vst.msk [vmem:[%s7 + $0xd8] sm:$0xff] %vm5613, %v5576
  %5642 = vst.msk [vmem:[%s7 + $0xe0] sm:$0xff] %vm5613, %v5577
  %5643 = vst.msk [vmem:[%s7 + $0xe8] sm:$0xff] %vm5613, %v5578
  %5644 = vst.msk [vmem:[%s7 + $0xf0] sm:$0xff] %vm5613, %v5579
  %5645 = vst.msk [vmem:[%s7 + $0xf8] sm:$0xff] %vm5613, %v5580
  %5646 = vst.msk [vmem:[%s7 + $0x100] sm:$0xff] %vm5613, %v5581
  %5647 = vst.msk [vmem:[%s7 + $0x108] sm:$0xff] %vm5613, %v5582
  %5648 = vst.msk [vmem:[%s7 + $0x110] sm:$0xff] %vm5613, %v5583
  %5649 = vst.msk [vmem:[%s7 + $0x118] sm:$0xff] %vm5613, %v5584
  %5650 = vst.msk [vmem:[%s7 + $0x120] sm:$0xff] %vm5613, %v5585
  %5651 = vst.msk [vmem:[%s7 + $0x128] sm:$0xff] %vm5613, %v5586
  %5652 = vst.msk [vmem:[%s7 + $0x130] sm:$0xff] %vm5613, %v5587
  %5653 = vst.msk [vmem:[%s7 + $0x138] sm:$0xff] %vm5613, %v5588
  %5654 = vst.msk [vmem:[%s7 + $0x140] sm:$0xff] %vm5613, %v5589
  %5655 = vst.msk [vmem:[%s7 + $0x148] sm:$0xff] %vm5613, %v5590
  %5656 = vst.msk [vmem:[%s7 + $0x150] sm:$0xff] %vm5613, %v5591
  %5657 = vst.msk [vmem:[%s7 + $0x158] sm:$0xff] %vm5613, %v5592
  %5658 = vst.msk [vmem:[%s7 + $0x160] sm:$0xff] %vm5613, %v5593
  %5659 = vst.msk [vmem:[%s7 + $0x168] sm:$0xff] %vm5613, %v5594
  %5660 = vst.msk [vmem:[%s7 + $0x170] sm:$0xff] %vm5613, %v5595
  %5661 = vst.msk [vmem:[%s7 + $0x178] sm:$0xff] %vm5613, %v5596
  %5662 = vst.msk [vmem:[%s7 + $0x180] sm:$0xff] %vm5613, %v5597
  %5663 = vst.msk [vmem:[%s7 + $0x188] sm:$0xff] %vm5613, %v5598
  %5664 = vst.msk [vmem:[%s7 + $0x190] sm:$0xff] %vm5613, %v5599
  %5665 = vst.msk [vmem:[%s7 + $0x198] sm:$0xff] %vm5613, %v5600
  %5666 = vst.msk [vmem:[%s7 + $0x1a0] sm:$0xff] %vm5613, %v5601
  %5667 = vst.msk [vmem:[%s7 + $0x1a8] sm:$0xff] %vm5613, %v5602
  %5668 = vst.msk [vmem:[%s7 + $0x1b0] sm:$0xff] %vm5613, %v5603
  %5669 = vst.msk [vmem:[%s7 + $0x1b8] sm:$0xff] %vm5613, %v5604
  %5670 = vst.msk [vmem:[%s7 + $0x1c0] sm:$0xff] %vm5613, %v5605
  %5671 = vst.msk [vmem:[%s7 + $0x1c8] sm:$0xff] %vm5613, %v5606
  %5672 = vst.msk [vmem:[%s7 + $0x1d0] sm:$0xff] %vm5613, %v5607
  %5673 = vst.msk [vmem:[%s7 + $0x1d8] sm:$0xff] %vm5613, %v5608
  %5674 = vst.msk [vmem:[%s7 + $0x1e0] sm:$0xff] %vm5613, %v5609
  %5675 = vst.msk [vmem:[%s7 + $0x1e8] sm:$0xff] %vm5613, %v5610
  %5676 = vst.msk [vmem:[%s7 + $0x1f0] sm:$0xff] %vm5613, %v5611
  %5677 = vst.msk [vmem:[%s7 + $0x1f8] sm:$0xff] %vm5613, %v5612
  // Predicated region
  $region26: #{gvade_forward.2} parent=0 // pred_check
    _
  $region27: #{gvade_forward.2} parent=0 // pred_check_branch
    %5679 = sbr.rel (0) target = $region29
  $region28: #{gvade_forward.2} parent=0 // pred_region
    _
  $region29: #{gvade_forward.2} parent=0 // pred_fallthru
    _
  // Predicated region
  $region30: #{gvade_forward.2} parent=0 // pred_check
    _
  $region31: #{gvade_forward.2} parent=0 // pred_check_branch
    %5681 = sbr.rel (0) target = $region33
  $region32: #{gvade_forward.2} parent=0 // pred_region
    _
  $region33: #{gvade_forward.2} parent=0 // pred_fallthru
    _
  // Predicated region
  $region34: #{gvade_forward.2} parent=0 // pred_check
    _
  $region35: #{gvade_forward.2} parent=0 // pred_check_branch
    %5683 = sbr.rel (0) target = $region37
  $region36: #{gvade_forward.2} parent=0 // pred_region
    _
  $region37: #{gvade_forward.2} parent=0 // pred_fallthru
    _
  // Predicated region
  $region38: #{gvade_forward.2} parent=0 // pred_check
    _
  $region39: #{gvade_forward.2} parent=0 // pred_check_branch
    %5685 = sbr.rel (0) target = $region41
  $region40: #{gvade_forward.2} parent=0 // pred_region
    _
  $region41: #{gvade_forward.2} parent=0 // pred_fallthru
    _

</llo_original>
